<compile_context>
chip_gen: v5e
topology: v5e:2x2
jax: 0.10.0
libtpu: 0.0.40
codegen_flags: <defaults>
</compile_context>

<pallas_src>
import functools

import jax
import jax.numpy as jnp
from jax.experimental import pallas as pl
from jax.experimental.pallas import tpu as pltpu

K = 5  # Conv1d kernel size used by every cnn_liu stage.


# ---------------- Fused Pallas kernel ----------------

def _mf_cnn_kernel(x_ref,
                   w1_ref, b1_ref, w2_ref, b2_ref, w3_ref, b3_ref,
                   wfc1_ref, bfc1_ref, wfc23_ref, bfc23_ref,
                   o_ref,
                   y1_ref, h1_ref, y2_ref, h2_ref, y3_ref,
                   *, bsz, s0, p3):
    """MF_CNN forward for one block of `bsz` samples (grid axis = batch blocks).

    x_ref    : (B*S0, Cin) f32, B samples stacked along sublanes (stride S0 each).
    w*_ref   : (K, Cin, Cout) bf16 conv tap matrices; b*_ref: (1, Cout) f32.
    wfc1_ref : (32*p3, 128) bf16, rows permuted to (l, c) order; bfc1: (1, 128) f32.
    wfc23_ref: (128, 128) bf16 = W2 @ W3 ; bfc23_ref: (1, 128) f32 = b2 @ W3 + b3.
    y*_ref   : f32 pre-pool conv scratch; h*_ref: f32 pooled-slab scratch.
    """
    s1, s2 = s0 // 2, s0 // 4

    def conv_acc(src_ref, w_ref, rows_in, y_ref):
        # y[r] = sum_k src[r+k] @ W_k : K full-slab MXU matmuls accumulated into the
        # f32 scratch. No per-sample loop, no im2col lane-concatenate.
        m = rows_in - (K - 1)
        y_ref[pl.ds(0, m), :] = jnp.dot(
            src_ref[pl.ds(0, m), :].astype(jnp.bfloat16), w_ref[0],
            preferred_element_type=jnp.float32)
        for k in range(1, K):
            y_ref[pl.ds(0, m), :] += jnp.dot(
                src_ref[pl.ds(k, m), :].astype(jnp.bfloat16), w_ref[k],
                preferred_element_type=jnp.float32)

    def pool_relu(y_ref, b_ref, rows_out):
        # maxpool(kernel=2, stride=2) via one flat stride-2 read pair over the stacked
        # slab (per-sample stride is even by construction, so the read stays sample
        # aligned); bias after the max, then ReLU.
        y = jnp.maximum(y_ref[pl.ds(0, rows_out, stride=2), :],
                        y_ref[pl.ds(1, rows_out, stride=2), :]) + b_ref[...]
        return jnp.maximum(y, 0.0)

    conv_acc(x_ref, w1_ref, bsz * s0, y1_ref)            # stage-1 conv
    h1_ref[...] = pool_relu(y1_ref, b1_ref, bsz * s1)    # stage-1 pool -> (B*S1, 64)
    conv_acc(h1_ref, w2_ref, bsz * s1, y2_ref)           # stage-2 conv
    h2_ref[...] = pool_relu(y2_ref, b2_ref, bsz * s2)    # stage-2 pool -> (B*S2, 32)
    conv_acc(h2_ref, w3_ref, bsz * s2, y3_ref)           # stage-3 conv

    # Stage-3 pool fused with torch's channel-major flatten: pooled position l of every
    # sample lands in lanes [l*32, (l+1)*32) of a (B, 32*p3) matrix, so fc1 is ONE
    # MXU matmul (wfc1 rows are pre-permuted to this (l, c) order).
    pieces = []
    for l in range(p3):
        v = jnp.maximum(y3_ref[pl.ds(2 * l, bsz, stride=s2), :],
                        y3_ref[pl.ds(2 * l + 1, bsz, stride=s2), :]) + b3_ref[...]
        pieces.append(jnp.maximum(v, 0.0).astype(jnp.bfloat16))
    h3 = jnp.concatenate(pieces, axis=1)                 # (B, 32*p3) bf16

    h = jnp.maximum(jnp.dot(h3, wfc1_ref[...], preferred_element_type=jnp.float32)
                    + bfc1_ref[...], 0.0)                # sk = relu(fc1(x)), (B,128) f32
    # out = sk + fc3(fc2(sk)), with fc2.fc3 folded offline into one affine map.
    o_ref[...] = h + jnp.dot(h.astype(jnp.bfloat16), wfc23_ref[...],
                             preferred_element_type=jnp.float32) + bfc23_ref[...]


# ---------------- Parameter preprocessing (layout / folding, done once per call) ----------------

def _prep_params(p, hidden):
    def conv_taps(w):  # torch (Cout, Cin, K) -> (K, Cin, Cout) bf16 tap matrices
        return jnp.transpose(w, (2, 1, 0)).astype(jnp.bfloat16)

    # fc1: torch flattens (N, 32, hidden) channel-major (column = c*hidden + l); the
    # kernel builds (l, c)-ordered features, so permute rows to (hidden*32, 128).
    wfc1 = (p["fc1_w"].reshape(32, hidden, 128).transpose(1, 0, 2)
            .reshape(hidden * 32, 128).astype(jnp.bfloat16))
    # fc2 -> fc3 has no nonlinearity in between: fold IN F32, then cast once to bf16.
    # (bf16 matmul operands with f32 accumulation; expected error << 5e-2 at these
    # magnitudes — inputs with very large dynamic range would widen it.)
    wfc23 = (p["fc2_w"] @ p["fc3_w"]).astype(jnp.bfloat16)
    bfc23 = p["fc2_b"] @ p["fc3_w"] + p["fc3_b"]
    return (conv_taps(p["conv1_w"]), p["conv1_b"].reshape(1, -1),
            conv_taps(p["conv2_w"]), p["conv2_b"].reshape(1, -1),
            conv_taps(p["conv3_w"]), p["conv3_b"].reshape(1, -1),
            wfc1, p["fc1_b"].reshape(1, -1),
            wfc23, bfc23.reshape(1, -1))


# ---------------- Forward pass (Pallas) ----------------

@functools.partial(jax.jit, static_argnames=("block_b",))
def mf_cnn_forward(x_ncl, params, block_b=8):
    """Pallas MF_CNN.forward. x_ncl: (N, Cin, L) float32 (PyTorch layout) -> (N, 128)."""
    n, cin, l0 = x_ncl.shape
    lc1 = l0 - (K - 1); p1 = lc1 // 2
    lc2 = p1 - (K - 1); p2 = lc2 // 2
    lc3 = p2 - (K - 1); p3 = lc3 // 2
    assert p3 >= 1, "input too short for three conv(k=5)+pool(2) stages"
    assert 32 * p3 == params["fc1_w"].shape[0], "input length inconsistent with fc1"

    # Per-sample stride: round L0 up to a multiple of 8 so the stacked slab's sample
    # stride stays even after every pool (flat stride-2 pooling stays sample aligned
    # for ANY L0 — no even-length requirement on the conv outputs themselves).
    s0 = ((l0 + 7) // 8) * 8
    assert s0 % 8 == 0
    bsz = int(block_b)
    n_pad = ((n + bsz - 1) // bsz) * bsz

    # NCL -> NLC (channels on lanes), pad length to S0 and batch to a multiple of B,
    # then stack samples along sublanes: (n_pad*S0, Cin).
    x = jnp.transpose(x_ncl.astype(jnp.float32), (0, 2, 1))
    x = jnp.pad(x, ((0, n_pad - n), (0, s0 - l0), (0, 0)))
    x = x.reshape(n_pad * s0, cin)

    weights = _prep_params(params, p3)

    def whole(a):  # whole-array block, constant index map (weights stay VMEM-resident)
        return pl.BlockSpec(a.shape, lambda i, nd=a.ndim: (0,) * nd)

    in_specs = ([pl.BlockSpec((bsz * s0, cin), lambda i: (i, 0))]
                + [whole(a) for a in weights])
    out_specs = pl.BlockSpec((bsz, 128), lambda i: (i, 0))   # lane-dense multi-row block

    s1, s2 = s0 // 2, s0 // 4
    grid = (n_pad // bsz,)

    scratch_shapes = [
        pltpu.VMEM((bsz * s0, 64), jnp.float32),   # stage-1 pre-pool conv
        pltpu.VMEM((bsz * s1, 64), jnp.float32),   # stage-1 pooled slab
        pltpu.VMEM((bsz * s1, 32), jnp.float32),   # stage-2 pre-pool conv
        pltpu.VMEM((bsz * s2, 32), jnp.float32),   # stage-2 pooled slab
        pltpu.VMEM((bsz * s2, 32), jnp.float32),   # stage-3 pre-pool conv
    ]

    # Explicit VMEM budget with headroom (weights + in/out blocks counted as
    # double-buffered); kept below v7x's 64 MiB physical VMEM.
    weight_bytes = sum(int(a.size) * a.dtype.itemsize for a in weights)
    scratch_bytes = sum(4 * bsz * r * c for r, c in
                        ((s0, 64), (s1, 64), (s1, 32), (s2, 32), (s2, 32)))
    block_bytes = bsz * s0 * cin * 4 + bsz * 128 * 4
    need = scratch_bytes + 2 * (block_bytes + weight_bytes)
    vmem_limit = int(min(48 * 1024 * 1024, 2 * need + (8 << 20)))

    m1 = bsz * s0 - (K - 1); m2 = bsz * s1 - (K - 1); m3 = bsz * s2 - (K - 1)
    flops = grid[0] * (2 * K * (m1 * cin * 64 + m2 * 64 * 32 + m3 * 32 * 32)
                       + 2 * bsz * (32 * p3 * 128 + 128 * 128))
    bytes_accessed = int(x.size) * 4 + n_pad * 128 * 4 + weight_bytes

    kernel = functools.partial(_mf_cnn_kernel, bsz=bsz, s0=s0, p3=p3)
    out = pl.pallas_call(
        kernel,
        out_shape=jax.ShapeDtypeStruct((n_pad, 128), jnp.float32),
        grid=grid,
        in_specs=in_specs,
        out_specs=out_specs,
        scratch_shapes=scratch_shapes,
        compiler_params=pltpu.CompilerParams(
            dimension_semantics=("parallel",),     # batch blocks across v7x TensorCores
            vmem_limit_bytes=vmem_limit),
        cost_estimate=pl.CostEstimate(flops=int(flops), transcendentals=0,
                                      bytes_accessed=int(bytes_accessed)),
    )(x, *weights)
    return out[:n]


# ---------------- Parameter init (deterministic, PyTorch-style uniform) ----------------

def init_params(key, in_channel, hidden_size):
    def uniform(k, shape, bound):
        return jax.random.uniform(k, shape, jnp.float32, -bound, bound)

    keys = jax.random.split(key, 12)
    p = {}
    chans = [(in_channel, 64), (64, 32), (32, 32)]
    for i, (cin, cout) in enumerate(chans):
        bound = 1.0 / (cin * K) ** 0.5
        p[f"conv{i+1}_w"] = uniform(keys[2 * i], (cout, cin, K), bound)   # torch (Cout, Cin, K)
        p[f"conv{i+1}_b"] = uniform(keys[2 * i + 1], (cout,), bound)
    fcs = [(32 * hidden_size, 128), (128, 128), (128, 128)]
    for i, (fin, fout) in enumerate(fcs):
        bound = 1.0 / fin ** 0.5
        p[f"fc{i+1}_w"] = uniform(keys[6 + 2 * i], (fin, fout), bound)    # stored as (in, out)
        p[f"fc{i+1}_b"] = uniform(keys[7 + 2 * i], (fout,), bound)
    return p


# ---------------- Pure-JAX reference (matches the PyTorch forward) ----------------

def mf_cnn_reference(x_ncl, p):
    x = x_ncl.astype(jnp.float32)

    def stage(x, w, b):
        y = jax.lax.conv_general_dilated(
            x, w, window_strides=(1,), padding="VALID",
            dimension_numbers=("NCH", "OIH", "NCH"))
        y = y + b[None, :, None]
        n, c, l = y.shape
        pool = l // 2
        y = y[:, :, :2 * pool].reshape(n, c, pool, 2).max(axis=3)
        return jnp.maximum(y, 0.0)

    x = stage(x, p["conv1_w"], p["conv1_b"])
    x = stage(x, p["conv2_w"], p["conv2_b"])
    x = stage(x, p["conv3_w"], p["conv3_b"])
    x = x.reshape(x.shape[0], -1)                       # channel-major flatten (torch .view)
    h = jnp.maximum(x @ p["fc1_w"] + p["fc1_b"], 0.0)
    sk = h
    h = h @ p["fc2_w"] + p["fc2_b"]
    h = h @ p["fc3_w"] + p["fc3_b"]
    return h + sk


if __name__ == "__main__":
    # Small shapes consistent with the module structure:
    # in_channel=8, hidden_size=4  =>  input length L0 = 8*hidden + 28 = 60
    # (three conv(k=5)+pool(2) stages shrink 60 -> 28 -> 12 -> 4, so fc1 in = 32*4).
    # N=16 with B=8 gives a 2-step "parallel" grid (both v7x TensorCores busy).
    N, IN_CH, HIDDEN = 16, 8, 4
    L0 = 8 * HIDDEN + 28
    key = jax.random.PRNGKey(0)
    kx, kp = jax.random.split(key)
    x = jax.random.normal(kx, (N, IN_CH, L0), jnp.float32)
    params = init_params(kp, IN_CH, HIDDEN)

    out = jax.block_until_ready(mf_cnn_forward(x, params, block_b=8))
    ref = jax.block_until_ready(mf_cnn_reference(x, params))
    assert out.shape == (N, 128), out.shape
    max_err = float(jnp.max(jnp.abs(out - ref)))
    assert jnp.allclose(out, ref, rtol=5e-2, atol=5e-2), max_err
    print("KERNEL_OK")
</pallas_src>

<mosaic_0001>
module attributes {stable_mosaic.version = 11 : i64} {
  func.func @_mf_cnn_kernel(%arg0: i32, %arg1: memref<512x8xf32, #tpu.memory_space<vmem>>, %arg2: memref<5x8x64xbf16, #tpu.memory_space<vmem>>, %arg3: memref<1x64xf32, #tpu.memory_space<vmem>>, %arg4: memref<5x64x32xbf16, #tpu.memory_space<vmem>>, %arg5: memref<1x32xf32, #tpu.memory_space<vmem>>, %arg6: memref<5x32x32xbf16, #tpu.memory_space<vmem>>, %arg7: memref<1x32xf32, #tpu.memory_space<vmem>>, %arg8: memref<128x128xbf16, #tpu.memory_space<vmem>>, %arg9: memref<1x128xf32, #tpu.memory_space<vmem>>, %arg10: memref<128x128xbf16, #tpu.memory_space<vmem>>, %arg11: memref<1x128xf32, #tpu.memory_space<vmem>>, %arg12: memref<8x128xf32, #tpu.memory_space<vmem>>, %arg13: memref<512x64xf32, #tpu.memory_space<vmem>>, %arg14: memref<256x64xf32, #tpu.memory_space<vmem>>, %arg15: memref<256x32xf32, #tpu.memory_space<vmem>>, %arg16: memref<128x32xf32, #tpu.memory_space<vmem>>, %arg17: memref<128x32xf32, #tpu.memory_space<vmem>>) attributes {dimension_semantics = [#tpu.dimension_semantics<parallel>], iteration_bounds = array<i64: 2>, scalar_prefetch = 0 : i64, scratch_operands = 5 : i64, tpu.core_type = #tpu.core_type<tc>, window_params = [{transform_indices = @transform_0, window_bounds = array<i64: 512, 8>}, {pipeline_mode = #tpu.pipeline_mode<synchronous>, transform_indices = @transform_1, window_bounds = array<i64: 5, 8, 64>}, {pipeline_mode = #tpu.pipeline_mode<synchronous>, transform_indices = @transform_2, window_bounds = array<i64: 1, 64>}, {pipeline_mode = #tpu.pipeline_mode<synchronous>, transform_indices = @transform_3, window_bounds = array<i64: 5, 64, 32>}, {pipeline_mode = #tpu.pipeline_mode<synchronous>, transform_indices = @transform_4, window_bounds = array<i64: 1, 32>}, {pipeline_mode = #tpu.pipeline_mode<synchronous>, transform_indices = @transform_5, window_bounds = array<i64: 5, 32, 32>}, {pipeline_mode = #tpu.pipeline_mode<synchronous>, transform_indices = @transform_6, window_bounds = array<i64: 1, 32>}, {pipeline_mode = #tpu.pipeline_mode<synchronous>, transform_indices = @transform_7, window_bounds = array<i64: 128, 128>}, {pipeline_mode = #tpu.pipeline_mode<synchronous>, transform_indices = @transform_8, window_bounds = array<i64: 1, 128>}, {pipeline_mode = #tpu.pipeline_mode<synchronous>, transform_indices = @transform_9, window_bounds = array<i64: 128, 128>}, {pipeline_mode = #tpu.pipeline_mode<synchronous>, transform_indices = @transform_10, window_bounds = array<i64: 1, 128>}, {transform_indices = @transform_11, window_bounds = array<i64: 8, 128>}]} {
    %c0 = arith.constant 0 : index
    %c0_0 = arith.constant 0 : index
    %0 = vector.load %arg1[%c0, %c0_0] : memref<512x8xf32, #tpu.memory_space<vmem>>, vector<508x8xf32>
    %1 = arith.truncf %0 : vector<508x8xf32> to vector<508x8xbf16>
    %c0_1 = arith.constant 0 : index
    %c0_2 = arith.constant 0 : index
    %c0_3 = arith.constant 0 : index
    %2 = vector.load %arg2[%c0_1, %c0_2, %c0_3] : memref<5x8x64xbf16, #tpu.memory_space<vmem>>, vector<1x8x64xbf16>
    %3 = vector.shape_cast %2 : vector<1x8x64xbf16> to vector<8x64xbf16>
    %cst = arith.constant dense<0.000000e+00> : vector<508x64xf32>
    %4 = tpu.matmul %1, %3, %cst {dimension_numbers = #tpu.dot_dimension_numbers<[1], [0], [0], [1], [0, 0, 1, 1], [], []>} : vector<508x8xbf16>, vector<8x64xbf16>, vector<508x64xf32> -> vector<508x64xf32>
    %c0_4 = arith.constant 0 : index
    %c0_5 = arith.constant 0 : index
    %5 = vector.load %arg13[%c0_4, %c0_5] : memref<512x64xf32, #tpu.memory_space<vmem>>, vector<508x64xf32>
    tpu.vector_store %arg13[%c0_4, %c0_5], %4 {strides = array<i32>} : memref<512x64xf32, #tpu.memory_space<vmem>>, vector<508x64xf32>,
    %c0_6 = arith.constant 0 : index
    %c0_7 = arith.constant 0 : index
    %6 = vector.load %arg13[%c0_6, %c0_7] : memref<512x64xf32, #tpu.memory_space<vmem>>, vector<508x64xf32>
    %c1 = arith.constant 1 : index
    %c0_8 = arith.constant 0 : index
    %7 = vector.load %arg1[%c1, %c0_8] : memref<512x8xf32, #tpu.memory_space<vmem>>, vector<508x8xf32>
    %8 = arith.truncf %7 : vector<508x8xf32> to vector<508x8xbf16>
    %c1_9 = arith.constant 1 : index
    %c0_10 = arith.constant 0 : index
    %c0_11 = arith.constant 0 : index
    %9 = vector.load %arg2[%c1_9, %c0_10, %c0_11] : memref<5x8x64xbf16, #tpu.memory_space<vmem>>, vector<1x8x64xbf16>
    %10 = vector.shape_cast %9 : vector<1x8x64xbf16> to vector<8x64xbf16>
    %cst_12 = arith.constant dense<0.000000e+00> : vector<508x64xf32>
    %11 = tpu.matmul %8, %10, %cst_12 {dimension_numbers = #tpu.dot_dimension_numbers<[1], [0], [0], [1], [0, 0, 1, 1], [], []>} : vector<508x8xbf16>, vector<8x64xbf16>, vector<508x64xf32> -> vector<508x64xf32>
    %12 = arith.addf %6, %11 : vector<508x64xf32>
    %c0_13 = arith.constant 0 : index
    %c0_14 = arith.constant 0 : index
    %13 = vector.load %arg13[%c0_13, %c0_14] : memref<512x64xf32, #tpu.memory_space<vmem>>, vector<508x64xf32>
    tpu.vector_store %arg13[%c0_13, %c0_14], %12 {strides = array<i32>} : memref<512x64xf32, #tpu.memory_space<vmem>>, vector<508x64xf32>,
    %c0_15 = arith.constant 0 : index
    %c0_16 = arith.constant 0 : index
    %14 = vector.load %arg13[%c0_15, %c0_16] : memref<512x64xf32, #tpu.memory_space<vmem>>, vector<508x64xf32>
    %c2 = arith.constant 2 : index
    %c0_17 = arith.constant 0 : index
    %15 = vector.load %arg1[%c2, %c0_17] : memref<512x8xf32, #tpu.memory_space<vmem>>, vector<508x8xf32>
    %16 = arith.truncf %15 : vector<508x8xf32> to vector<508x8xbf16>
    %c2_18 = arith.constant 2 : index
    %c0_19 = arith.constant 0 : index
    %c0_20 = arith.constant 0 : index
    %17 = vector.load %arg2[%c2_18, %c0_19, %c0_20] : memref<5x8x64xbf16, #tpu.memory_space<vmem>>, vector<1x8x64xbf16>
    %18 = vector.shape_cast %17 : vector<1x8x64xbf16> to vector<8x64xbf16>
    %cst_21 = arith.constant dense<0.000000e+00> : vector<508x64xf32>
    %19 = tpu.matmul %16, %18, %cst_21 {dimension_numbers = #tpu.dot_dimension_numbers<[1], [0], [0], [1], [0, 0, 1, 1], [], []>} : vector<508x8xbf16>, vector<8x64xbf16>, vector<508x64xf32> -> vector<508x64xf32>
    %20 = arith.addf %14, %19 : vector<508x64xf32>
    %c0_22 = arith.constant 0 : index
    %c0_23 = arith.constant 0 : index
    %21 = vector.load %arg13[%c0_22, %c0_23] : memref<512x64xf32, #tpu.memory_space<vmem>>, vector<508x64xf32>
    tpu.vector_store %arg13[%c0_22, %c0_23], %20 {strides = array<i32>} : memref<512x64xf32, #tpu.memory_space<vmem>>, vector<508x64xf32>,
    %c0_24 = arith.constant 0 : index
    %c0_25 = arith.constant 0 : index
    %22 = vector.load %arg13[%c0_24, %c0_25] : memref<512x64xf32, #tpu.memory_space<vmem>>, vector<508x64xf32>
    %c3 = arith.constant 3 : index
    %c0_26 = arith.constant 0 : index
    %23 = vector.load %arg1[%c3, %c0_26] : memref<512x8xf32, #tpu.memory_space<vmem>>, vector<508x8xf32>
    %24 = arith.truncf %23 : vector<508x8xf32> to vector<508x8xbf16>
    %c3_27 = arith.constant 3 : index
    %c0_28 = arith.constant 0 : index
    %c0_29 = arith.constant 0 : index
    %25 = vector.load %arg2[%c3_27, %c0_28, %c0_29] : memref<5x8x64xbf16, #tpu.memory_space<vmem>>, vector<1x8x64xbf16>
    %26 = vector.shape_cast %25 : vector<1x8x64xbf16> to vector<8x64xbf16>
    %cst_30 = arith.constant dense<0.000000e+00> : vector<508x64xf32>
    %27 = tpu.matmul %24, %26, %cst_30 {dimension_numbers = #tpu.dot_dimension_numbers<[1], [0], [0], [1], [0, 0, 1, 1], [], []>} : vector<508x8xbf16>, vector<8x64xbf16>, vector<508x64xf32> -> vector<508x64xf32>
    %28 = arith.addf %22, %27 : vector<508x64xf32>
    %c0_31 = arith.constant 0 : index
    %c0_32 = arith.constant 0 : index
    %29 = vector.load %arg13[%c0_31, %c0_32] : memref<512x64xf32, #tpu.memory_space<vmem>>, vector<508x64xf32>
    tpu.vector_store %arg13[%c0_31, %c0_32], %28 {strides = array<i32>} : memref<512x64xf32, #tpu.memory_space<vmem>>, vector<508x64xf32>,
    %c0_33 = arith.constant 0 : index
    %c0_34 = arith.constant 0 : index
    %30 = vector.load %arg13[%c0_33, %c0_34] : memref<512x64xf32, #tpu.memory_space<vmem>>, vector<508x64xf32>
    %c4 = arith.constant 4 : index
    %c0_35 = arith.constant 0 : index
    %31 = vector.load %arg1[%c4, %c0_35] : memref<512x8xf32, #tpu.memory_space<vmem>>, vector<508x8xf32>
    %32 = arith.truncf %31 : vector<508x8xf32> to vector<508x8xbf16>
    %c4_36 = arith.constant 4 : index
    %c0_37 = arith.constant 0 : index
    %c0_38 = arith.constant 0 : index
    %33 = vector.load %arg2[%c4_36, %c0_37, %c0_38] : memref<5x8x64xbf16, #tpu.memory_space<vmem>>, vector<1x8x64xbf16>
    %34 = vector.shape_cast %33 : vector<1x8x64xbf16> to vector<8x64xbf16>
    %cst_39 = arith.constant dense<0.000000e+00> : vector<508x64xf32>
    %35 = tpu.matmul %32, %34, %cst_39 {dimension_numbers = #tpu.dot_dimension_numbers<[1], [0], [0], [1], [0, 0, 1, 1], [], []>} : vector<508x8xbf16>, vector<8x64xbf16>, vector<508x64xf32> -> vector<508x64xf32>
    %36 = arith.addf %30, %35 : vector<508x64xf32>
    %c0_40 = arith.constant 0 : index
    %c0_41 = arith.constant 0 : index
    %37 = vector.load %arg13[%c0_40, %c0_41] : memref<512x64xf32, #tpu.memory_space<vmem>>, vector<508x64xf32>
    tpu.vector_store %arg13[%c0_40, %c0_41], %36 {strides = array<i32>} : memref<512x64xf32, #tpu.memory_space<vmem>>, vector<508x64xf32>,
    %c0_42 = arith.constant 0 : index
    %c0_43 = arith.constant 0 : index
    %38 = tpu.strided_load %arg13[%c0_42, %c0_43] {strides = array<i32: 2, 1>} : memref<512x64xf32, #tpu.memory_space<vmem>>, vector<256x64xf32>
    %c1_44 = arith.constant 1 : index
    %c0_45 = arith.constant 0 : index
    %39 = tpu.strided_load %arg13[%c1_44, %c0_45] {strides = array<i32: 2, 1>} : memref<512x64xf32, #tpu.memory_space<vmem>>, vector<256x64xf32>
    %40 = arith.maximumf %38, %39 : vector<256x64xf32>
    %c0_46 = arith.constant 0 : index
    %c0_47 = arith.constant 0 : index
    %41 = vector.load %arg3[%c0_46, %c0_47] : memref<1x64xf32, #tpu.memory_space<vmem>>, vector<1x64xf32>
    %42 = vector.broadcast %41 : vector<1x64xf32> to vector<256x64xf32>
    %43 = arith.addf %40, %42 : vector<256x64xf32>
    %cst_48 = arith.constant 0.000000e+00 : f32
    %44 = vector.broadcast %cst_48 : f32 to vector<256x64xf32>
    %45 = arith.maximumf %43, %44 : vector<256x64xf32>
    %c0_49 = arith.constant 0 : index
    %c0_50 = arith.constant 0 : index
    %46 = vector.load %arg14[%c0_49, %c0_50] : memref<256x64xf32, #tpu.memory_space<vmem>>, vector<256x64xf32>
    tpu.vector_store %arg14[%c0_49, %c0_50], %45 {strides = array<i32>} : memref<256x64xf32, #tpu.memory_space<vmem>>, vector<256x64xf32>,
    %c0_51 = arith.constant 0 : index
    %c0_52 = arith.constant 0 : index
    %47 = vector.load %arg14[%c0_51, %c0_52] : memref<256x64xf32, #tpu.memory_space<vmem>>, vector<252x64xf32>
    %48 = arith.truncf %47 : vector<252x64xf32> to vector<252x64xbf16>
    %c0_53 = arith.constant 0 : index
    %c0_54 = arith.constant 0 : index
    %c0_55 = arith.constant 0 : index
    %49 = vector.load %arg4[%c0_53, %c0_54, %c0_55] : memref<5x64x32xbf16, #tpu.memory_space<vmem>>, vector<1x64x32xbf16>
    %50 = vector.shape_cast %49 : vector<1x64x32xbf16> to vector<64x32xbf16>
    %cst_56 = arith.constant dense<0.000000e+00> : vector<252x32xf32>
    %51 = tpu.matmul %48, %50, %cst_56 {dimension_numbers = #tpu.dot_dimension_numbers<[1], [0], [0], [1], [0, 0, 1, 1], [], []>} : vector<252x64xbf16>, vector<64x32xbf16>, vector<252x32xf32> -> vector<252x32xf32>
    %c0_57 = arith.constant 0 : index
    %c0_58 = arith.constant 0 : index
    %52 = vector.load %arg15[%c0_57, %c0_58] : memref<256x32xf32, #tpu.memory_space<vmem>>, vector<252x32xf32>
    tpu.vector_store %arg15[%c0_57, %c0_58], %51 {strides = array<i32>} : memref<256x32xf32, #tpu.memory_space<vmem>>, vector<252x32xf32>,
    %c0_59 = arith.constant 0 : index
    %c0_60 = arith.constant 0 : index
    %53 = vector.load %arg15[%c0_59, %c0_60] : memref<256x32xf32, #tpu.memory_space<vmem>>, vector<252x32xf32>
    %c1_61 = arith.constant 1 : index
    %c0_62 = arith.constant 0 : index
    %54 = vector.load %arg14[%c1_61, %c0_62] : memref<256x64xf32, #tpu.memory_space<vmem>>, vector<252x64xf32>
    %55 = arith.truncf %54 : vector<252x64xf32> to vector<252x64xbf16>
    %c1_63 = arith.constant 1 : index
    %c0_64 = arith.constant 0 : index
    %c0_65 = arith.constant 0 : index
    %56 = vector.load %arg4[%c1_63, %c0_64, %c0_65] : memref<5x64x32xbf16, #tpu.memory_space<vmem>>, vector<1x64x32xbf16>
    %57 = vector.shape_cast %56 : vector<1x64x32xbf16> to vector<64x32xbf16>
    %cst_66 = arith.constant dense<0.000000e+00> : vector<252x32xf32>
    %58 = tpu.matmul %55, %57, %cst_66 {dimension_numbers = #tpu.dot_dimension_numbers<[1], [0], [0], [1], [0, 0, 1, 1], [], []>} : vector<252x64xbf16>, vector<64x32xbf16>, vector<252x32xf32> -> vector<252x32xf32>
    %59 = arith.addf %53, %58 : vector<252x32xf32>
    %c0_67 = arith.constant 0 : index
    %c0_68 = arith.constant 0 : index
    %60 = vector.load %arg15[%c0_67, %c0_68] : memref<256x32xf32, #tpu.memory_space<vmem>>, vector<252x32xf32>
    tpu.vector_store %arg15[%c0_67, %c0_68], %59 {strides = array<i32>} : memref<256x32xf32, #tpu.memory_space<vmem>>, vector<252x32xf32>,
    %c0_69 = arith.constant 0 : index
    %c0_70 = arith.constant 0 : index
    %61 = vector.load %arg15[%c0_69, %c0_70] : memref<256x32xf32, #tpu.memory_space<vmem>>, vector<252x32xf32>
    %c2_71 = arith.constant 2 : index
    %c0_72 = arith.constant 0 : index
    %62 = vector.load %arg14[%c2_71, %c0_72] : memref<256x64xf32, #tpu.memory_space<vmem>>, vector<252x64xf32>
    %63 = arith.truncf %62 : vector<252x64xf32> to vector<252x64xbf16>
    %c2_73 = arith.constant 2 : index
    %c0_74 = arith.constant 0 : index
    %c0_75 = arith.constant 0 : index
    %64 = vector.load %arg4[%c2_73, %c0_74, %c0_75] : memref<5x64x32xbf16, #tpu.memory_space<vmem>>, vector<1x64x32xbf16>
    %65 = vector.shape_cast %64 : vector<1x64x32xbf16> to vector<64x32xbf16>
    %cst_76 = arith.constant dense<0.000000e+00> : vector<252x32xf32>
    %66 = tpu.matmul %63, %65, %cst_76 {dimension_numbers = #tpu.dot_dimension_numbers<[1], [0], [0], [1], [0, 0, 1, 1], [], []>} : vector<252x64xbf16>, vector<64x32xbf16>, vector<252x32xf32> -> vector<252x32xf32>
    %67 = arith.addf %61, %66 : vector<252x32xf32>
    %c0_77 = arith.constant 0 : index
    %c0_78 = arith.constant 0 : index
    %68 = vector.load %arg15[%c0_77, %c0_78] : memref<256x32xf32, #tpu.memory_space<vmem>>, vector<252x32xf32>
    tpu.vector_store %arg15[%c0_77, %c0_78], %67 {strides = array<i32>} : memref<256x32xf32, #tpu.memory_space<vmem>>, vector<252x32xf32>,
    %c0_79 = arith.constant 0 : index
    %c0_80 = arith.constant 0 : index
    %69 = vector.load %arg15[%c0_79, %c0_80] : memref<256x32xf32, #tpu.memory_space<vmem>>, vector<252x32xf32>
    %c3_81 = arith.constant 3 : index
    %c0_82 = arith.constant 0 : index
    %70 = vector.load %arg14[%c3_81, %c0_82] : memref<256x64xf32, #tpu.memory_space<vmem>>, vector<252x64xf32>
    %71 = arith.truncf %70 : vector<252x64xf32> to vector<252x64xbf16>
    %c3_83 = arith.constant 3 : index
    %c0_84 = arith.constant 0 : index
    %c0_85 = arith.constant 0 : index
    %72 = vector.load %arg4[%c3_83, %c0_84, %c0_85] : memref<5x64x32xbf16, #tpu.memory_space<vmem>>, vector<1x64x32xbf16>
    %73 = vector.shape_cast %72 : vector<1x64x32xbf16> to vector<64x32xbf16>
    %cst_86 = arith.constant dense<0.000000e+00> : vector<252x32xf32>
    %74 = tpu.matmul %71, %73, %cst_86 {dimension_numbers = #tpu.dot_dimension_numbers<[1], [0], [0], [1], [0, 0, 1, 1], [], []>} : vector<252x64xbf16>, vector<64x32xbf16>, vector<252x32xf32> -> vector<252x32xf32>
    %75 = arith.addf %69, %74 : vector<252x32xf32>
    %c0_87 = arith.constant 0 : index
    %c0_88 = arith.constant 0 : index
    %76 = vector.load %arg15[%c0_87, %c0_88] : memref<256x32xf32, #tpu.memory_space<vmem>>, vector<252x32xf32>
    tpu.vector_store %arg15[%c0_87, %c0_88], %75 {strides = array<i32>} : memref<256x32xf32, #tpu.memory_space<vmem>>, vector<252x32xf32>,
    %c0_89 = arith.constant 0 : index
    %c0_90 = arith.constant 0 : index
    %77 = vector.load %arg15[%c0_89, %c0_90] : memref<256x32xf32, #tpu.memory_space<vmem>>, vector<252x32xf32>
    %c4_91 = arith.constant 4 : index
    %c0_92 = arith.constant 0 : index
    %78 = vector.load %arg14[%c4_91, %c0_92] : memref<256x64xf32, #tpu.memory_space<vmem>>, vector<252x64xf32>
    %79 = arith.truncf %78 : vector<252x64xf32> to vector<252x64xbf16>
    %c4_93 = arith.constant 4 : index
    %c0_94 = arith.constant 0 : index
    %c0_95 = arith.constant 0 : index
    %80 = vector.load %arg4[%c4_93, %c0_94, %c0_95] : memref<5x64x32xbf16, #tpu.memory_space<vmem>>, vector<1x64x32xbf16>
    %81 = vector.shape_cast %80 : vector<1x64x32xbf16> to vector<64x32xbf16>
    %cst_96 = arith.constant dense<0.000000e+00> : vector<252x32xf32>
    %82 = tpu.matmul %79, %81, %cst_96 {dimension_numbers = #tpu.dot_dimension_numbers<[1], [0], [0], [1], [0, 0, 1, 1], [], []>} : vector<252x64xbf16>, vector<64x32xbf16>, vector<252x32xf32> -> vector<252x32xf32>
    %83 = arith.addf %77, %82 : vector<252x32xf32>
    %c0_97 = arith.constant 0 : index
    %c0_98 = arith.constant 0 : index
    %84 = vector.load %arg15[%c0_97, %c0_98] : memref<256x32xf32, #tpu.memory_space<vmem>>, vector<252x32xf32>
    tpu.vector_store %arg15[%c0_97, %c0_98], %83 {strides = array<i32>} : memref<256x32xf32, #tpu.memory_space<vmem>>, vector<252x32xf32>,
    %c0_99 = arith.constant 0 : index
    %c0_100 = arith.constant 0 : index
    %85 = tpu.strided_load %arg15[%c0_99, %c0_100] {strides = array<i32: 2, 1>} : memref<256x32xf32, #tpu.memory_space<vmem>>, vector<128x32xf32>
    %c1_101 = arith.constant 1 : index
    %c0_102 = arith.constant 0 : index
    %86 = tpu.strided_load %arg15[%c1_101, %c0_102] {strides = array<i32: 2, 1>} : memref<256x32xf32, #tpu.memory_space<vmem>>, vector<128x32xf32>
    %87 = arith.maximumf %85, %86 : vector<128x32xf32>
    %c0_103 = arith.constant 0 : index
    %c0_104 = arith.constant 0 : index
    %88 = vector.load %arg5[%c0_103, %c0_104] : memref<1x32xf32, #tpu.memory_space<vmem>>, vector<1x32xf32>
    %89 = vector.broadcast %88 : vector<1x32xf32> to vector<128x32xf32>
    %90 = arith.addf %87, %89 : vector<128x32xf32>
    %cst_105 = arith.constant 0.000000e+00 : f32
    %91 = vector.broadcast %cst_105 : f32 to vector<128x32xf32>
    %92 = arith.maximumf %90, %91 : vector<128x32xf32>
    %c0_106 = arith.constant 0 : index
    %c0_107 = arith.constant 0 : index
    %93 = vector.load %arg16[%c0_106, %c0_107] : memref<128x32xf32, #tpu.memory_space<vmem>>, vector<128x32xf32>
    tpu.vector_store %arg16[%c0_106, %c0_107], %92 {strides = array<i32>} : memref<128x32xf32, #tpu.memory_space<vmem>>, vector<128x32xf32>,
    %c0_108 = arith.constant 0 : index
    %c0_109 = arith.constant 0 : index
    %94 = vector.load %arg16[%c0_108, %c0_109] : memref<128x32xf32, #tpu.memory_space<vmem>>, vector<124x32xf32>
    %95 = arith.truncf %94 : vector<124x32xf32> to vector<124x32xbf16>
    %c0_110 = arith.constant 0 : index
    %c0_111 = arith.constant 0 : index
    %c0_112 = arith.constant 0 : index
    %96 = vector.load %arg6[%c0_110, %c0_111, %c0_112] : memref<5x32x32xbf16, #tpu.memory_space<vmem>>, vector<1x32x32xbf16>
    %97 = vector.shape_cast %96 : vector<1x32x32xbf16> to vector<32x32xbf16>
    %cst_113 = arith.constant dense<0.000000e+00> : vector<124x32xf32>
    %98 = tpu.matmul %95, %97, %cst_113 {dimension_numbers = #tpu.dot_dimension_numbers<[1], [0], [0], [1], [0, 0, 1, 1], [], []>} : vector<124x32xbf16>, vector<32x32xbf16>, vector<124x32xf32> -> vector<124x32xf32>
    %c0_114 = arith.constant 0 : index
    %c0_115 = arith.constant 0 : index
    %99 = vector.load %arg17[%c0_114, %c0_115] : memref<128x32xf32, #tpu.memory_space<vmem>>, vector<124x32xf32>
    tpu.vector_store %arg17[%c0_114, %c0_115], %98 {strides = array<i32>} : memref<128x32xf32, #tpu.memory_space<vmem>>, vector<124x32xf32>,
    %c0_116 = arith.constant 0 : index
    %c0_117 = arith.constant 0 : index
    %100 = vector.load %arg17[%c0_116, %c0_117] : memref<128x32xf32, #tpu.memory_space<vmem>>, vector<124x32xf32>
    %c1_118 = arith.constant 1 : index
    %c0_119 = arith.constant 0 : index
    %101 = vector.load %arg16[%c1_118, %c0_119] : memref<128x32xf32, #tpu.memory_space<vmem>>, vector<124x32xf32>
    %102 = arith.truncf %101 : vector<124x32xf32> to vector<124x32xbf16>
    %c1_120 = arith.constant 1 : index
    %c0_121 = arith.constant 0 : index
    %c0_122 = arith.constant 0 : index
    %103 = vector.load %arg6[%c1_120, %c0_121, %c0_122] : memref<5x32x32xbf16, #tpu.memory_space<vmem>>, vector<1x32x32xbf16>
    %104 = vector.shape_cast %103 : vector<1x32x32xbf16> to vector<32x32xbf16>
    %cst_123 = arith.constant dense<0.000000e+00> : vector<124x32xf32>
    %105 = tpu.matmul %102, %104, %cst_123 {dimension_numbers = #tpu.dot_dimension_numbers<[1], [0], [0], [1], [0, 0, 1, 1], [], []>} : vector<124x32xbf16>, vector<32x32xbf16>, vector<124x32xf32> -> vector<124x32xf32>
    %106 = arith.addf %100, %105 : vector<124x32xf32>
    %c0_124 = arith.constant 0 : index
    %c0_125 = arith.constant 0 : index
    %107 = vector.load %arg17[%c0_124, %c0_125] : memref<128x32xf32, #tpu.memory_space<vmem>>, vector<124x32xf32>
    tpu.vector_store %arg17[%c0_124, %c0_125], %106 {strides = array<i32>} : memref<128x32xf32, #tpu.memory_space<vmem>>, vector<124x32xf32>,
    %c0_126 = arith.constant 0 : index
    %c0_127 = arith.constant 0 : index
    %108 = vector.load %arg17[%c0_126, %c0_127] : memref<128x32xf32, #tpu.memory_space<vmem>>, vector<124x32xf32>
    %c2_128 = arith.constant 2 : index
    %c0_129 = arith.constant 0 : index
    %109 = vector.load %arg16[%c2_128, %c0_129] : memref<128x32xf32, #tpu.memory_space<vmem>>, vector<124x32xf32>
    %110 = arith.truncf %109 : vector<124x32xf32> to vector<124x32xbf16>
    %c2_130 = arith.constant 2 : index
    %c0_131 = arith.constant 0 : index
    %c0_132 = arith.constant 0 : index
    %111 = vector.load %arg6[%c2_130, %c0_131, %c0_132] : memref<5x32x32xbf16, #tpu.memory_space<vmem>>, vector<1x32x32xbf16>
    %112 = vector.shape_cast %111 : vector<1x32x32xbf16> to vector<32x32xbf16>
    %cst_133 = arith.constant dense<0.000000e+00> : vector<124x32xf32>
    %113 = tpu.matmul %110, %112, %cst_133 {dimension_numbers = #tpu.dot_dimension_numbers<[1], [0], [0], [1], [0, 0, 1, 1], [], []>} : vector<124x32xbf16>, vector<32x32xbf16>, vector<124x32xf32> -> vector<124x32xf32>
    %114 = arith.addf %108, %113 : vector<124x32xf32>
    %c0_134 = arith.constant 0 : index
    %c0_135 = arith.constant 0 : index
    %115 = vector.load %arg17[%c0_134, %c0_135] : memref<128x32xf32, #tpu.memory_space<vmem>>, vector<124x32xf32>
    tpu.vector_store %arg17[%c0_134, %c0_135], %114 {strides = array<i32>} : memref<128x32xf32, #tpu.memory_space<vmem>>, vector<124x32xf32>,
    %c0_136 = arith.constant 0 : index
    %c0_137 = arith.constant 0 : index
    %116 = vector.load %arg17[%c0_136, %c0_137] : memref<128x32xf32, #tpu.memory_space<vmem>>, vector<124x32xf32>
    %c3_138 = arith.constant 3 : index
    %c0_139 = arith.constant 0 : index
    %117 = vector.load %arg16[%c3_138, %c0_139] : memref<128x32xf32, #tpu.memory_space<vmem>>, vector<124x32xf32>
    %118 = arith.truncf %117 : vector<124x32xf32> to vector<124x32xbf16>
    %c3_140 = arith.constant 3 : index
    %c0_141 = arith.constant 0 : index
    %c0_142 = arith.constant 0 : index
    %119 = vector.load %arg6[%c3_140, %c0_141, %c0_142] : memref<5x32x32xbf16, #tpu.memory_space<vmem>>, vector<1x32x32xbf16>
    %120 = vector.shape_cast %119 : vector<1x32x32xbf16> to vector<32x32xbf16>
    %cst_143 = arith.constant dense<0.000000e+00> : vector<124x32xf32>
    %121 = tpu.matmul %118, %120, %cst_143 {dimension_numbers = #tpu.dot_dimension_numbers<[1], [0], [0], [1], [0, 0, 1, 1], [], []>} : vector<124x32xbf16>, vector<32x32xbf16>, vector<124x32xf32> -> vector<124x32xf32>
    %122 = arith.addf %116, %121 : vector<124x32xf32>
    %c0_144 = arith.constant 0 : index
    %c0_145 = arith.constant 0 : index
    %123 = vector.load %arg17[%c0_144, %c0_145] : memref<128x32xf32, #tpu.memory_space<vmem>>, vector<124x32xf32>
    tpu.vector_store %arg17[%c0_144, %c0_145], %122 {strides = array<i32>} : memref<128x32xf32, #tpu.memory_space<vmem>>, vector<124x32xf32>,
    %c0_146 = arith.constant 0 : index
    %c0_147 = arith.constant 0 : index
    %124 = vector.load %arg17[%c0_146, %c0_147] : memref<128x32xf32, #tpu.memory_space<vmem>>, vector<124x32xf32>
    %c4_148 = arith.constant 4 : index
    %c0_149 = arith.constant 0 : index
    %125 = vector.load %arg16[%c4_148, %c0_149] : memref<128x32xf32, #tpu.memory_space<vmem>>, vector<124x32xf32>
    %126 = arith.truncf %125 : vector<124x32xf32> to vector<124x32xbf16>
    %c4_150 = arith.constant 4 : index
    %c0_151 = arith.constant 0 : index
    %c0_152 = arith.constant 0 : index
    %127 = vector.load %arg6[%c4_150, %c0_151, %c0_152] : memref<5x32x32xbf16, #tpu.memory_space<vmem>>, vector<1x32x32xbf16>
    %128 = vector.shape_cast %127 : vector<1x32x32xbf16> to vector<32x32xbf16>
    %cst_153 = arith.constant dense<0.000000e+00> : vector<124x32xf32>
    %129 = tpu.matmul %126, %128, %cst_153 {dimension_numbers = #tpu.dot_dimension_numbers<[1], [0], [0], [1], [0, 0, 1, 1], [], []>} : vector<124x32xbf16>, vector<32x32xbf16>, vector<124x32xf32> -> vector<124x32xf32>
    %130 = arith.addf %124, %129 : vector<124x32xf32>
    %c0_154 = arith.constant 0 : index
    %c0_155 = arith.constant 0 : index
    %131 = vector.load %arg17[%c0_154, %c0_155] : memref<128x32xf32, #tpu.memory_space<vmem>>, vector<124x32xf32>
    tpu.vector_store %arg17[%c0_154, %c0_155], %130 {strides = array<i32>} : memref<128x32xf32, #tpu.memory_space<vmem>>, vector<124x32xf32>,
    %c0_156 = arith.constant 0 : index
    %c0_157 = arith.constant 0 : index
    %132 = tpu.strided_load %arg17[%c0_156, %c0_157] {strides = array<i32: 16, 1>} : memref<128x32xf32, #tpu.memory_space<vmem>>, vector<8x32xf32>
    %c1_158 = arith.constant 1 : index
    %c0_159 = arith.constant 0 : index
    %133 = tpu.strided_load %arg17[%c1_158, %c0_159] {strides = array<i32: 16, 1>} : memref<128x32xf32, #tpu.memory_space<vmem>>, vector<8x32xf32>
    %134 = arith.maximumf %132, %133 : vector<8x32xf32>
    %c0_160 = arith.constant 0 : index
    %c0_161 = arith.constant 0 : index
    %135 = vector.load %arg7[%c0_160, %c0_161] : memref<1x32xf32, #tpu.memory_space<vmem>>, vector<1x32xf32>
    %136 = vector.broadcast %135 : vector<1x32xf32> to vector<8x32xf32>
    %137 = arith.addf %134, %136 : vector<8x32xf32>
    %cst_162 = arith.constant 0.000000e+00 : f32
    %138 = vector.broadcast %cst_162 : f32 to vector<8x32xf32>
    %139 = arith.maximumf %137, %138 : vector<8x32xf32>
    %140 = arith.truncf %139 : vector<8x32xf32> to vector<8x32xbf16>
    %c2_163 = arith.constant 2 : index
    %c0_164 = arith.constant 0 : index
    %141 = tpu.strided_load %arg17[%c2_163, %c0_164] {strides = array<i32: 16, 1>} : memref<128x32xf32, #tpu.memory_space<vmem>>, vector<8x32xf32>
    %c3_165 = arith.constant 3 : index
    %c0_166 = arith.constant 0 : index
    %142 = tpu.strided_load %arg17[%c3_165, %c0_166] {strides = array<i32: 16, 1>} : memref<128x32xf32, #tpu.memory_space<vmem>>, vector<8x32xf32>
    %143 = arith.maximumf %141, %142 : vector<8x32xf32>
    %c0_167 = arith.constant 0 : index
    %c0_168 = arith.constant 0 : index
    %144 = vector.load %arg7[%c0_167, %c0_168] : memref<1x32xf32, #tpu.memory_space<vmem>>, vector<1x32xf32>
    %145 = vector.broadcast %144 : vector<1x32xf32> to vector<8x32xf32>
    %146 = arith.addf %143, %145 : vector<8x32xf32>
    %cst_169 = arith.constant 0.000000e+00 : f32
    %147 = vector.broadcast %cst_169 : f32 to vector<8x32xf32>
    %148 = arith.maximumf %146, %147 : vector<8x32xf32>
    %149 = arith.truncf %148 : vector<8x32xf32> to vector<8x32xbf16>
    %c4_170 = arith.constant 4 : index
    %c0_171 = arith.constant 0 : index
    %150 = tpu.strided_load %arg17[%c4_170, %c0_171] {strides = array<i32: 16, 1>} : memref<128x32xf32, #tpu.memory_space<vmem>>, vector<8x32xf32>
    %c5 = arith.constant 5 : index
    %c0_172 = arith.constant 0 : index
    %151 = tpu.strided_load %arg17[%c5, %c0_172] {strides = array<i32: 16, 1>} : memref<128x32xf32, #tpu.memory_space<vmem>>, vector<8x32xf32>
    %152 = arith.maximumf %150, %151 : vector<8x32xf32>
    %c0_173 = arith.constant 0 : index
    %c0_174 = arith.constant 0 : index
    %153 = vector.load %arg7[%c0_173, %c0_174] : memref<1x32xf32, #tpu.memory_space<vmem>>, vector<1x32xf32>
    %154 = vector.broadcast %153 : vector<1x32xf32> to vector<8x32xf32>
    %155 = arith.addf %152, %154 : vector<8x32xf32>
    %cst_175 = arith.constant 0.000000e+00 : f32
    %156 = vector.broadcast %cst_175 : f32 to vector<8x32xf32>
    %157 = arith.maximumf %155, %156 : vector<8x32xf32>
    %158 = arith.truncf %157 : vector<8x32xf32> to vector<8x32xbf16>
    %c6 = arith.constant 6 : index
    %c0_176 = arith.constant 0 : index
    %159 = tpu.strided_load %arg17[%c6, %c0_176] {strides = array<i32: 16, 1>} : memref<128x32xf32, #tpu.memory_space<vmem>>, vector<8x32xf32>
    %c7 = arith.constant 7 : index
    %c0_177 = arith.constant 0 : index
    %160 = tpu.strided_load %arg17[%c7, %c0_177] {strides = array<i32: 16, 1>} : memref<128x32xf32, #tpu.memory_space<vmem>>, vector<8x32xf32>
    %161 = arith.maximumf %159, %160 : vector<8x32xf32>
    %c0_178 = arith.constant 0 : index
    %c0_179 = arith.constant 0 : index
    %162 = vector.load %arg7[%c0_178, %c0_179] : memref<1x32xf32, #tpu.memory_space<vmem>>, vector<1x32xf32>
    %163 = vector.broadcast %162 : vector<1x32xf32> to vector<8x32xf32>
    %164 = arith.addf %161, %163 : vector<8x32xf32>
    %cst_180 = arith.constant 0.000000e+00 : f32
    %165 = vector.broadcast %cst_180 : f32 to vector<8x32xf32>
    %166 = arith.maximumf %164, %165 : vector<8x32xf32>
    %167 = arith.truncf %166 : vector<8x32xf32> to vector<8x32xbf16>
    %168 = tpu.concatenate %140, %149, %158, %167 in 1 : vector<8x32xbf16>, vector<8x32xbf16>, vector<8x32xbf16>, vector<8x32xbf16> -> vector<8x128xbf16>
    %c0_181 = arith.constant 0 : index
    %c0_182 = arith.constant 0 : index
    %169 = vector.load %arg8[%c0_181, %c0_182] : memref<128x128xbf16, #tpu.memory_space<vmem>>, vector<128x128xbf16>
    %cst_183 = arith.constant dense<0.000000e+00> : vector<8x128xf32>
    %170 = tpu.matmul %168, %169, %cst_183 {dimension_numbers = #tpu.dot_dimension_numbers<[1], [0], [0], [1], [0, 0, 1, 1], [], []>} : vector<8x128xbf16>, vector<128x128xbf16>, vector<8x128xf32> -> vector<8x128xf32>
    %c0_184 = arith.constant 0 : index
    %c0_185 = arith.constant 0 : index
    %171 = vector.load %arg9[%c0_184, %c0_185] : memref<1x128xf32, #tpu.memory_space<vmem>>, vector<1x128xf32>
    %172 = vector.broadcast %171 : vector<1x128xf32> to vector<8x128xf32>
    %173 = arith.addf %170, %172 : vector<8x128xf32>
    %cst_186 = arith.constant 0.000000e+00 : f32
    %174 = vector.broadcast %cst_186 : f32 to vector<8x128xf32>
    %175 = arith.maximumf %173, %174 : vector<8x128xf32>
    %176 = arith.truncf %175 : vector<8x128xf32> to vector<8x128xbf16>
    %c0_187 = arith.constant 0 : index
    %c0_188 = arith.constant 0 : index
    %177 = vector.load %arg10[%c0_187, %c0_188] : memref<128x128xbf16, #tpu.memory_space<vmem>>, vector<128x128xbf16>
    %cst_189 = arith.constant dense<0.000000e+00> : vector<8x128xf32>
    %178 = tpu.matmul %176, %177, %cst_189 {dimension_numbers = #tpu.dot_dimension_numbers<[1], [0], [0], [1], [0, 0, 1, 1], [], []>} : vector<8x128xbf16>, vector<128x128xbf16>, vector<8x128xf32> -> vector<8x128xf32>
    %179 = arith.addf %175, %178 : vector<8x128xf32>
    %c0_190 = arith.constant 0 : index
    %c0_191 = arith.constant 0 : index
    %180 = vector.load %arg11[%c0_190, %c0_191] : memref<1x128xf32, #tpu.memory_space<vmem>>, vector<1x128xf32>
    %181 = vector.broadcast %180 : vector<1x128xf32> to vector<8x128xf32>
    %182 = arith.addf %179, %181 : vector<8x128xf32>
    %c0_192 = arith.constant 0 : index
    %c0_193 = arith.constant 0 : index
    %183 = vector.load %arg12[%c0_192, %c0_193] : memref<8x128xf32, #tpu.memory_space<vmem>>, vector<8x128xf32>
    tpu.vector_store %arg12[%c0_192, %c0_193], %182 {strides = array<i32>} : memref<8x128xf32, #tpu.memory_space<vmem>>, vector<8x128xf32>,
    return
  }
  func.func @transform_0(%arg0: i32) -> (i32, i32) {
    %c0_i32 = arith.constant 0 : i32
    %c0_i32_0 = arith.constant 0 : i32
    return %arg0, %c0_i32 : i32, i32
  }
  func.func @transform_1(%arg0: i32) -> (i32, i32, i32) {
    %c0_i32 = arith.constant 0 : i32
    %c0_i32_0 = arith.constant 0 : i32
    %c0_i32_1 = arith.constant 0 : i32
    %c0_i32_2 = arith.constant 0 : i32
    return %c0_i32, %c0_i32_0, %c0_i32_1 : i32, i32, i32
  }
  func.func @transform_2(%arg0: i32) -> (i32, i32) {
    %c0_i32 = arith.constant 0 : i32
    %c0_i32_0 = arith.constant 0 : i32
    %c0_i32_1 = arith.constant 0 : i32
    return %c0_i32, %c0_i32_0 : i32, i32
  }
  func.func @transform_3(%arg0: i32) -> (i32, i32, i32) {
    %c0_i32 = arith.constant 0 : i32
    %c0_i32_0 = arith.constant 0 : i32
    %c0_i32_1 = arith.constant 0 : i32
    %c0_i32_2 = arith.constant 0 : i32
    return %c0_i32, %c0_i32_0, %c0_i32_1 : i32, i32, i32
  }
  func.func @transform_4(%arg0: i32) -> (i32, i32) {
    %c0_i32 = arith.constant 0 : i32
    %c0_i32_0 = arith.constant 0 : i32
    %c0_i32_1 = arith.constant 0 : i32
    return %c0_i32, %c0_i32_0 : i32, i32
  }
  func.func @transform_5(%arg0: i32) -> (i32, i32, i32) {
    %c0_i32 = arith.constant 0 : i32
    %c0_i32_0 = arith.constant 0 : i32
    %c0_i32_1 = arith.constant 0 : i32
    %c0_i32_2 = arith.constant 0 : i32
    return %c0_i32, %c0_i32_0, %c0_i32_1 : i32, i32, i32
  }
  func.func @transform_6(%arg0: i32) -> (i32, i32) {
    %c0_i32 = arith.constant 0 : i32
    %c0_i32_0 = arith.constant 0 : i32
    %c0_i32_1 = arith.constant 0 : i32
    return %c0_i32, %c0_i32_0 : i32, i32
  }
  func.func @transform_7(%arg0: i32) -> (i32, i32) {
    %c0_i32 = arith.constant 0 : i32
    %c0_i32_0 = arith.constant 0 : i32
    %c0_i32_1 = arith.constant 0 : i32
    return %c0_i32, %c0_i32_0 : i32, i32
  }
  func.func @transform_8(%arg0: i32) -> (i32, i32) {
    %c0_i32 = arith.constant 0 : i32
    %c0_i32_0 = arith.constant 0 : i32
    %c0_i32_1 = arith.constant 0 : i32
    return %c0_i32, %c0_i32_0 : i32, i32
  }
  func.func @transform_9(%arg0: i32) -> (i32, i32) {
    %c0_i32 = arith.constant 0 : i32
    %c0_i32_0 = arith.constant 0 : i32
    %c0_i32_1 = arith.constant 0 : i32
    return %c0_i32, %c0_i32_0 : i32, i32
  }
  func.func @transform_10(%arg0: i32) -> (i32, i32) {
    %c0_i32 = arith.constant 0 : i32
    %c0_i32_0 = arith.constant 0 : i32
    %c0_i32_1 = arith.constant 0 : i32
    return %c0_i32, %c0_i32_0 : i32, i32
  }
  func.func @transform_11(%arg0: i32) -> (i32, i32) {
    %c0_i32 = arith.constant 0 : i32
    %c0_i32_0 = arith.constant 0 : i32
    return %arg0, %c0_i32 : i32, i32
  }
}

</mosaic_0001>

<llo_original>
// kernel: mf_cnn_forward.1
$region0: #{mf_cnn_forward.1}
  #allocation0 [shape = 'u32[]', space=smem, size = 0x4, offset = 0x4, fixed_abs, tag = 'smem constant byte address 0x4 - core index']
  #allocation1 [shape = 'u32[72,128]{1,0:T(1,128)}', space=vmem, size = 0x9000, scoped, tag = 'internal scratch']
  #allocation2 [shape = 'f32[512,64]{1,0:T(8,128)}', space=vmem, size = 0x40000, scoped, tag = 'scratch operand']
  #allocation3 [shape = 'f32[256,64]{1,0:T(8,128)}', space=vmem, size = 0x20000, scoped, tag = 'scratch operand']
  #allocation4 [shape = 'f32[256,32]{1,0:T(8,128)}', space=vmem, size = 0x20000, scoped, tag = 'scratch operand']
  #allocation5 [shape = 'f32[128,32]{1,0:T(8,128)}', space=vmem, size = 0x10000, scoped, tag = 'scratch operand']
  #allocation6 [shape = 'f32[128,32]{1,0:T(8,128)}', space=vmem, size = 0x10000, scoped, tag = 'scratch operand']
  %s0 = inlined_call_operand.vmem [shape: f32[1024,8], index: 0, kind: input, shape index: {}]
  %s1 = inlined_call_operand.vmem [shape: bf16[5,8,64], index: 1, kind: input, shape index: {}]
  %s2 = inlined_call_operand.vmem [shape: f32[1,64], index: 2, kind: input, shape index: {}]
  %s3 = inlined_call_operand.vmem [shape: bf16[5,64,32], index: 3, kind: input, shape index: {}]
  %s4 = inlined_call_operand.vmem [shape: f32[1,32], index: 4, kind: input, shape index: {}]
  %s5 = inlined_call_operand.vmem [shape: bf16[5,32,32], index: 5, kind: input, shape index: {}]
  %s6 = inlined_call_operand.vmem [shape: f32[1,32], index: 6, kind: input, shape index: {}]
  %s7 = inlined_call_operand.vmem [shape: bf16[128,128], index: 7, kind: input, shape index: {}]
  %s8 = inlined_call_operand.vmem [shape: f32[1,128], index: 8, kind: input, shape index: {}]
  %s9 = inlined_call_operand.vmem [shape: bf16[128,128], index: 9, kind: input, shape index: {}]
  %s10 = inlined_call_operand.vmem [shape: f32[1,128], index: 10, kind: input, shape index: {}]
  %s11 = inlined_call_operand.hbm [shape: f32[16,128], index: 11, kind: output, shape index: {}]
  %s12 = sld [smem:[#allocation0]]
  $region77: #{mf_cnn_forward.1} parent=0
    _
  %s14 = ssub.s32 1, %s12
  %s15 = scalar_select 0, %s14, %s12
  $region1: #{mf_cnn_forward.1} parent=0
    #allocation7 [shape = 'u8[8192]{0}', space=vmem, size = 0x2000, scoped, tag = 'output window, operand 0']
    #allocation8 [shape = 's32[2]{0}', space=sflag, size = 0x8, scoped, tag = 'scoped memory for mf_cnn_forward.1']
    %16 = vsyncpa [#allocation8], 0
    %s17 = scalar_lea.sflag [#allocation8], 1
    %18 = vsyncpa %s17, 0
    loop: start=0, step=1, limit=4
    $region2: #{mf_cnn_forward.1} parent=1 // loop_pre_header
      _
    $region3: #{mf_cnn_forward.1} parent=1 // loop_header
      %s20 = sphi 0, %s24
      %p21 = scmp.ge.s32.totalorder %s20, 4
      %s30 = sphi 0, %s32
      %s33 = sphi 0, %s30
      %s34 = sphi 0, %s33
      %s50 = sphi 0, %s34
      %s54 = sphi 0, %s54
      %s56 = sphi 0, %s54
      %s57 = sphi 0, %s56
      %s71 = sphi 0, %s57
      %s75 = sphi 0, %s75
      %s77 = sphi 0, %s75
      %s78 = sphi 0, %s77
      %s92 = sphi 0, %s78
      %s96 = sphi 0, %s96
      %s98 = sphi 0, %s96
      %s99 = sphi 0, %s98
      %s113 = sphi 0, %s99
      %s117 = sphi 0, %s117
      %s119 = sphi 0, %s117
      %s120 = sphi 0, %s119
      %s134 = sphi 0, %s120
      %s138 = sphi 0, %s138
      %s140 = sphi 0, %s138
      %s141 = sphi 0, %s140
      %s155 = sphi 0, %s141
      %s159 = sphi 0, %s159
      %s161 = sphi 0, %s159
      %s162 = sphi 0, %s161
      %s176 = sphi 0, %s162
      %s180 = sphi 0, %s180
      %s182 = sphi 0, %s180
      %s183 = sphi 0, %s182
      %s197 = sphi 0, %s183
      %s201 = sphi 0, %s201
      %s203 = sphi 0, %s201
      %s204 = sphi 0, %s203
      %s218 = sphi 0, %s204
      %s222 = sphi 0, %s222
      %s224 = sphi 0, %s222
      %s225 = sphi 0, %s224
      %s239 = sphi 0, %s225
      %s243 = sphi 0, %s243
      %s245 = sphi 0, %s243
      %s246 = sphi 0, %s245
      %s260 = sphi 0, %s246
      %s266 = sphi 0, %s268
      %s269 = sphi 0, %s266
      %s270 = sphi 0, %s269
      %s286 = sphi 0, %s270
    $region4: #{mf_cnn_forward.1} parent=1 // loop_header_branch
      %23 = sbr.rel (%p21) target = $region8
    $region5: #{mf_cnn_forward.1} parent=1 // loop_body
      %s25 = ssub.s32 %s20, 1
      %s26 = ssub.s32 %s20, 2
      %s27 = sadd.s32 %s20, 1
      %s28 = ssub.s32 %s20, %s27
      %p29 = scmp.eq.s32.totalorder %s28, 0
      %s31 = sadd.s32 %s30, 1
      %s32 = scalar_select %p29, %s30, %s31
      %p35 = pneg %p29
      %p36 = scmp.eq.s32.totalorder %s20, 1
      %p37 = por %p35, %p36
      %p38 = scmp.ne.s32.totalorder %s30, %s33
      %p39 = scmp.eq.s32.totalorder %s20, 0
      %p40 = por %p38, %p39
      %p41 = scmp.ne.s32.totalorder %s30, %s33
      %p42 = scmp.eq.s32.totalorder %s25, 1
      %p43 = por %p41, %p42
      %p44 = scmp.ne.s32.totalorder %s33, %s34
      %p45 = scmp.eq.s32.totalorder %s25, 0
      %p46 = por %p44, %p45
      %p47 = scmp.ne.s32.totalorder %s33, %s34
      %p48 = scmp.eq.s32.totalorder %s26, 1
      %p49 = por %p47, %p48
      %p51 = scmp.ne.s32.totalorder %s34, %s50
      %p52 = scmp.eq.s32.totalorder %s26, 0
      %p53 = por %p51, %p52
      %s55 = sadd.s32 %s54, 1
      %p58 = scmp.eq.s32.totalorder %s20, 1
      %p59 = scmp.ne.s32.totalorder %s54, %s56
      %p60 = scmp.eq.s32.totalorder %s20, 0
      %p61 = por %p59, %p60
      %p62 = scmp.ne.s32.totalorder %s54, %s56
      %p63 = scmp.eq.s32.totalorder %s25, 1
      %p64 = por %p62, %p63
      %p65 = scmp.ne.s32.totalorder %s56, %s57
      %p66 = scmp.eq.s32.totalorder %s25, 0
      %p67 = por %p65, %p66
      %p68 = scmp.ne.s32.totalorder %s56, %s57
      %p69 = scmp.eq.s32.totalorder %s26, 1
      %p70 = por %p68, %p69
      %p72 = scmp.ne.s32.totalorder %s57, %s71
      %p73 = scmp.eq.s32.totalorder %s26, 0
      %p74 = por %p72, %p73
      %s76 = sadd.s32 %s75, 1
      %p79 = scmp.eq.s32.totalorder %s20, 1
      %p80 = scmp.ne.s32.totalorder %s75, %s77
      %p81 = scmp.eq.s32.totalorder %s20, 0
      %p82 = por %p80, %p81
      %p83 = scmp.ne.s32.totalorder %s75, %s77
      %p84 = scmp.eq.s32.totalorder %s25, 1
      %p85 = por %p83, %p84
      %p86 = scmp.ne.s32.totalorder %s77, %s78
      %p87 = scmp.eq.s32.totalorder %s25, 0
      %p88 = por %p86, %p87
      %p89 = scmp.ne.s32.totalorder %s77, %s78
      %p90 = scmp.eq.s32.totalorder %s26, 1
      %p91 = por %p89, %p90
      %p93 = scmp.ne.s32.totalorder %s78, %s92
      %p94 = scmp.eq.s32.totalorder %s26, 0
      %p95 = por %p93, %p94
      %s97 = sadd.s32 %s96, 1
      %p100 = scmp.eq.s32.totalorder %s20, 1
      %p101 = scmp.ne.s32.totalorder %s96, %s98
      %p102 = scmp.eq.s32.totalorder %s20, 0
      %p103 = por %p101, %p102
      %p104 = scmp.ne.s32.totalorder %s96, %s98
      %p105 = scmp.eq.s32.totalorder %s25, 1
      %p106 = por %p104, %p105
      %p107 = scmp.ne.s32.totalorder %s98, %s99
      %p108 = scmp.eq.s32.totalorder %s25, 0
      %p109 = por %p107, %p108
      %p110 = scmp.ne.s32.totalorder %s98, %s99
      %p111 = scmp.eq.s32.totalorder %s26, 1
      %p112 = por %p110, %p111
      %p114 = scmp.ne.s32.totalorder %s99, %s113
      %p115 = scmp.eq.s32.totalorder %s26, 0
      %p116 = por %p114, %p115
      %s118 = sadd.s32 %s117, 1
      %p121 = scmp.eq.s32.totalorder %s20, 1
      %p122 = scmp.ne.s32.totalorder %s117, %s119
      %p123 = scmp.eq.s32.totalorder %s20, 0
      %p124 = por %p122, %p123
      %p125 = scmp.ne.s32.totalorder %s117, %s119
      %p126 = scmp.eq.s32.totalorder %s25, 1
      %p127 = por %p125, %p126
      %p128 = scmp.ne.s32.totalorder %s119, %s120
      %p129 = scmp.eq.s32.totalorder %s25, 0
      %p130 = por %p128, %p129
      %p131 = scmp.ne.s32.totalorder %s119, %s120
      %p132 = scmp.eq.s32.totalorder %s26, 1
      %p133 = por %p131, %p132
      %p135 = scmp.ne.s32.totalorder %s120, %s134
      %p136 = scmp.eq.s32.totalorder %s26, 0
      %p137 = por %p135, %p136
      %s139 = sadd.s32 %s138, 1
      %p142 = scmp.eq.s32.totalorder %s20, 1
      %p143 = scmp.ne.s32.totalorder %s138, %s140
      %p144 = scmp.eq.s32.totalorder %s20, 0
      %p145 = por %p143, %p144
      %p146 = scmp.ne.s32.totalorder %s138, %s140
      %p147 = scmp.eq.s32.totalorder %s25, 1
      %p148 = por %p146, %p147
      %p149 = scmp.ne.s32.totalorder %s140, %s141
      %p150 = scmp.eq.s32.totalorder %s25, 0
      %p151 = por %p149, %p150
      %p152 = scmp.ne.s32.totalorder %s140, %s141
      %p153 = scmp.eq.s32.totalorder %s26, 1
      %p154 = por %p152, %p153
      %p156 = scmp.ne.s32.totalorder %s141, %s155
      %p157 = scmp.eq.s32.totalorder %s26, 0
      %p158 = por %p156, %p157
      %s160 = sadd.s32 %s159, 1
      %p163 = scmp.eq.s32.totalorder %s20, 1
      %p164 = scmp.ne.s32.totalorder %s159, %s161
      %p165 = scmp.eq.s32.totalorder %s20, 0
      %p166 = por %p164, %p165
      %p167 = scmp.ne.s32.totalorder %s159, %s161
      %p168 = scmp.eq.s32.totalorder %s25, 1
      %p169 = por %p167, %p168
      %p170 = scmp.ne.s32.totalorder %s161, %s162
      %p171 = scmp.eq.s32.totalorder %s25, 0
      %p172 = por %p170, %p171
      %p173 = scmp.ne.s32.totalorder %s161, %s162
      %p174 = scmp.eq.s32.totalorder %s26, 1
      %p175 = por %p173, %p174
      %p177 = scmp.ne.s32.totalorder %s162, %s176
      %p178 = scmp.eq.s32.totalorder %s26, 0
      %p179 = por %p177, %p178
      %s181 = sadd.s32 %s180, 1
      %p184 = scmp.eq.s32.totalorder %s20, 1
      %p185 = scmp.ne.s32.totalorder %s180, %s182
      %p186 = scmp.eq.s32.totalorder %s20, 0
      %p187 = por %p185, %p186
      %p188 = scmp.ne.s32.totalorder %s180, %s182
      %p189 = scmp.eq.s32.totalorder %s25, 1
      %p190 = por %p188, %p189
      %p191 = scmp.ne.s32.totalorder %s182, %s183
      %p192 = scmp.eq.s32.totalorder %s25, 0
      %p193 = por %p191, %p192
      %p194 = scmp.ne.s32.totalorder %s182, %s183
      %p195 = scmp.eq.s32.totalorder %s26, 1
      %p196 = por %p194, %p195
      %p198 = scmp.ne.s32.totalorder %s183, %s197
      %p199 = scmp.eq.s32.totalorder %s26, 0
      %p200 = por %p198, %p199
      %s202 = sadd.s32 %s201, 1
      %p205 = scmp.eq.s32.totalorder %s20, 1
      %p206 = scmp.ne.s32.totalorder %s201, %s203
      %p207 = scmp.eq.s32.totalorder %s20, 0
      %p208 = por %p206, %p207
      %p209 = scmp.ne.s32.totalorder %s201, %s203
      %p210 = scmp.eq.s32.totalorder %s25, 1
      %p211 = por %p209, %p210
      %p212 = scmp.ne.s32.totalorder %s203, %s204
      %p213 = scmp.eq.s32.totalorder %s25, 0
      %p214 = por %p212, %p213
      %p215 = scmp.ne.s32.totalorder %s203, %s204
      %p216 = scmp.eq.s32.totalorder %s26, 1
      %p217 = por %p215, %p216
      %p219 = scmp.ne.s32.totalorder %s204, %s218
      %p220 = scmp.eq.s32.totalorder %s26, 0
      %p221 = por %p219, %p220
      %s223 = sadd.s32 %s222, 1
      %p226 = scmp.eq.s32.totalorder %s20, 1
      %p227 = scmp.ne.s32.totalorder %s222, %s224
      %p228 = scmp.eq.s32.totalorder %s20, 0
      %p229 = por %p227, %p228
      %p230 = scmp.ne.s32.totalorder %s222, %s224
      %p231 = scmp.eq.s32.totalorder %s25, 1
      %p232 = por %p230, %p231
      %p233 = scmp.ne.s32.totalorder %s224, %s225
      %p234 = scmp.eq.s32.totalorder %s25, 0
      %p235 = por %p233, %p234
      %p236 = scmp.ne.s32.totalorder %s224, %s225
      %p237 = scmp.eq.s32.totalorder %s26, 1
      %p238 = por %p236, %p237
      %p240 = scmp.ne.s32.totalorder %s225, %s239
      %p241 = scmp.eq.s32.totalorder %s26, 0
      %p242 = por %p240, %p241
      %s244 = sadd.s32 %s243, 1
      %p247 = scmp.eq.s32.totalorder %s20, 1
      %p248 = scmp.ne.s32.totalorder %s243, %s245
      %p249 = scmp.eq.s32.totalorder %s20, 0
      %p250 = por %p248, %p249
      %p251 = scmp.ne.s32.totalorder %s243, %s245
      %p252 = scmp.eq.s32.totalorder %s25, 1
      %p253 = por %p251, %p252
      %p254 = scmp.ne.s32.totalorder %s245, %s246
      %p255 = scmp.eq.s32.totalorder %s25, 0
      %p256 = por %p254, %p255
      %p257 = scmp.ne.s32.totalorder %s245, %s246
      %p258 = scmp.eq.s32.totalorder %s26, 1
      %p259 = por %p257, %p258
      %p261 = scmp.ne.s32.totalorder %s246, %s260
      %p262 = scmp.eq.s32.totalorder %s26, 0
      %p263 = por %p261, %p262
      %s264 = ssub.s32 %s20, %s27
      %p265 = scmp.eq.s32.totalorder %s264, 0
      %s267 = sadd.s32 %s266, 1
      %s268 = scalar_select %p265, %s266, %s267
      %p271 = pneg %p265
      %p272 = scmp.eq.s32.totalorder %s20, 1
      %p273 = por %p271, %p272
      %p274 = scmp.ne.s32.totalorder %s266, %s269
      %p275 = scmp.eq.s32.totalorder %s20, 0
      %p276 = por %p274, %p275
      %p277 = scmp.ne.s32.totalorder %s266, %s269
      %p278 = scmp.eq.s32.totalorder %s25, 1
      %p279 = por %p277, %p278
      %p280 = scmp.ne.s32.totalorder %s269, %s270
      %p281 = scmp.eq.s32.totalorder %s25, 0
      %p282 = por %p280, %p281
      %p283 = scmp.ne.s32.totalorder %s269, %s270
      %p284 = scmp.eq.s32.totalorder %s26, 1
      %p285 = por %p283, %p284
      %p287 = scmp.ne.s32.totalorder %s270, %s286
      %p288 = scmp.eq.s32.totalorder %s26, 0
      %p289 = por %p287, %p288
      %p290 = scmp.le.s32.totalorder 1, %s20
      %p291 = scmp.lt.s32.totalorder %s20, 3
      %p292 = pnand %p290, %p291
      %p293 = pneg %p292
      // Predicated region
      $region9: #{mf_cnn_forward.1} parent=5 // pred_check
        _
      $region10: #{mf_cnn_forward.1} parent=5 // pred_check_branch
        %295 = sbr.rel (%p292) target = $region12
      $region11: #{mf_cnn_forward.1} parent=5 // pred_region
        %s296 = ssub.s32 %s20, 1
        // Predicated region
        $region13: #{mf_cnn_forward.1} parent=11 // pred_check
          %p297 = pneg %p67
        $region14: #{mf_cnn_forward.1} parent=11 // pred_check_branch
          %299 = sbr.rel (%p297) target = $region16
        $region15: #{mf_cnn_forward.1} parent=11 // pred_region
          _
        $region16: #{mf_cnn_forward.1} parent=11 // pred_fallthru
          _
        // Predicated region
        $region17: #{mf_cnn_forward.1} parent=11 // pred_check
          %p300 = pneg %p88
        $region18: #{mf_cnn_forward.1} parent=11 // pred_check_branch
          %302 = sbr.rel (%p300) target = $region20
        $region19: #{mf_cnn_forward.1} parent=11 // pred_region
          _
        $region20: #{mf_cnn_forward.1} parent=11 // pred_fallthru
          _
        // Predicated region
        $region21: #{mf_cnn_forward.1} parent=11 // pred_check
          %p303 = pneg %p109
        $region22: #{mf_cnn_forward.1} parent=11 // pred_check_branch
          %305 = sbr.rel (%p303) target = $region24
        $region23: #{mf_cnn_forward.1} parent=11 // pred_region
          _
        $region24: #{mf_cnn_forward.1} parent=11 // pred_fallthru
          _
        // Predicated region
        $region25: #{mf_cnn_forward.1} parent=11 // pred_check
          %p306 = pneg %p130
        $region26: #{mf_cnn_forward.1} parent=11 // pred_check_branch
          %308 = sbr.rel (%p306) target = $region28
        $region27: #{mf_cnn_forward.1} parent=11 // pred_region
          _
        $region28: #{mf_cnn_forward.1} parent=11 // pred_fallthru
          _
        // Predicated region
        $region29: #{mf_cnn_forward.1} parent=11 // pred_check
          %p309 = pneg %p151
        $region30: #{mf_cnn_forward.1} parent=11 // pred_check_branch
          %311 = sbr.rel (%p309) target = $region32
        $region31: #{mf_cnn_forward.1} parent=11 // pred_region
          _
        $region32: #{mf_cnn_forward.1} parent=11 // pred_fallthru
          _
        // Predicated region
        $region33: #{mf_cnn_forward.1} parent=11 // pred_check
          %p312 = pneg %p172
        $region34: #{mf_cnn_forward.1} parent=11 // pred_check_branch
          %314 = sbr.rel (%p312) target = $region36
        $region35: #{mf_cnn_forward.1} parent=11 // pred_region
          _
        $region36: #{mf_cnn_forward.1} parent=11 // pred_fallthru
          _
        // Predicated region
        $region37: #{mf_cnn_forward.1} parent=11 // pred_check
          %p315 = pneg %p193
        $region38: #{mf_cnn_forward.1} parent=11 // pred_check_branch
          %317 = sbr.rel (%p315) target = $region40
        $region39: #{mf_cnn_forward.1} parent=11 // pred_region
          _
        $region40: #{mf_cnn_forward.1} parent=11 // pred_fallthru
          _
        // Predicated region
        $region41: #{mf_cnn_forward.1} parent=11 // pred_check
          %p318 = pneg %p214
        $region42: #{mf_cnn_forward.1} parent=11 // pred_check_branch
          %320 = sbr.rel (%p318) target = $region44
        $region43: #{mf_cnn_forward.1} parent=11 // pred_region
          _
        $region44: #{mf_cnn_forward.1} parent=11 // pred_fallthru
          _
        // Predicated region
        $region45: #{mf_cnn_forward.1} parent=11 // pred_check
          %p321 = pneg %p235
        $region46: #{mf_cnn_forward.1} parent=11 // pred_check_branch
          %323 = sbr.rel (%p321) target = $region48
        $region47: #{mf_cnn_forward.1} parent=11 // pred_region
          _
        $region48: #{mf_cnn_forward.1} parent=11 // pred_fallthru
          _
        // Predicated region
        $region49: #{mf_cnn_forward.1} parent=11 // pred_check
          %p324 = pneg %p256
        $region50: #{mf_cnn_forward.1} parent=11 // pred_check_branch
          %326 = sbr.rel (%p324) target = $region52
        $region51: #{mf_cnn_forward.1} parent=11 // pred_region
          _
        $region52: #{mf_cnn_forward.1} parent=11 // pred_fallthru
          _
      $region12: #{mf_cnn_forward.1} parent=5 // pred_fallthru
        _
      %p327 = scmp.lt.s32.totalorder %s20, 2
      // Predicated region
      $region53: #{mf_cnn_forward.1} parent=5 // pred_check
        %p328 = pneg %p327
      $region54: #{mf_cnn_forward.1} parent=5 // pred_check_branch
        %330 = sbr.rel (%p328) target = $region56
      $region55: #{mf_cnn_forward.1} parent=5 // pred_region
        // Predicated region
        $region57: #{mf_cnn_forward.1} parent=55 // pred_check
          %p331 = pneg %p40
        $region58: #{mf_cnn_forward.1} parent=55 // pred_check_branch
          %333 = sbr.rel (%p331) target = $region60
        $region59: #{mf_cnn_forward.1} parent=55 // pred_region
          %s334 = smul.u32 64, %s20
          %p335 = scmp.lt.s32.totalorder %s334, 127
          %s336 = scalar_select %p335, %s334, 127
          %s337 = smul.addr %s336, 8
          %s338 = scalar_lea.vmem %s0, %s337
          %s339 = smul.u32 64, %s20
        $region60: #{mf_cnn_forward.1} parent=55 // pred_fallthru
          _
      $region56: #{mf_cnn_forward.1} parent=5 // pred_fallthru
        _
      %p340 = scmp.le.s32.totalorder 1, %s20
      %p341 = scmp.lt.s32.totalorder %s20, 3
      %p342 = pnand %p340, %p341
      %p343 = pneg %p342
      // Predicated region
      $region61: #{mf_cnn_forward.1} parent=5 // pred_check
        _
      $region62: #{mf_cnn_forward.1} parent=5 // pred_check_branch
        %345 = sbr.rel (%p342) target = $region64
      $region63: #{mf_cnn_forward.1} parent=5 // pred_region
        %s346 = ssub.s32 %s20, 1
        %s347 = smul.u32 64, %s25
        %p348 = scmp.lt.s32.totalorder %s347, 127
        %s349 = scalar_select %p348, %s347, 127
        %s350 = smul.addr %s349, 8
        %s351 = scalar_lea.vmem %s0, %s350
        %p352 = pneg %p46
        %p353 = pneg %p43
        %p354 = pneg %p67
        %p355 = pneg %p64
        %p356 = pneg %p88
        %p357 = pneg %p85
        %p358 = pneg %p109
        %p359 = pneg %p106
        %p360 = pneg %p130
        %p361 = pneg %p127
        %p362 = pneg %p151
        %p363 = pneg %p148
        %p364 = pneg %p172
        %p365 = pneg %p169
        %p366 = pneg %p193
        %p367 = pneg %p190
        %p368 = pneg %p214
        %p369 = pneg %p211
        %p370 = pneg %p235
        %p371 = pneg %p232
        %p372 = pneg %p256
        %p373 = pneg %p253
        %p374 = pneg %p282
        %p375 = pneg %p279
        %s376 = sand.u32 %s269, 1
        %s377 = scalar_lea.sflag [#allocation8], %s376
        %s378 = sand.u32 %s269, 1
        %s379 = smul.addr %s378, 8
        %s380 = scalar_lea.vmem [#allocation7], %s379
        %s381 = smul.u32 64, %s25
        %p382 = scmp.lt.s32.totalorder %s381, 127
        %s383 = scalar_select %p382, %s381, 127
        %s384 = smul.addr %s383, 8
        %s385 = scalar_lea.vmem %s0, %s384
        %s386 = smul.u32 64, %s25
        %v388 = vld [vmem:[%s385] sm:$0xff]
        %v389 = vld [vmem:[%s385 + $0x8] sm:$0xff]
        %v390 = vld [vmem:[%s385 + $0x10] sm:$0xff]
        %v391 = vld [vmem:[%s385 + $0x18] sm:$0xff]
        %v392 = vld [vmem:[%s385 + $0x20] sm:$0xff]
        %v393 = vld [vmem:[%s385 + $0x28] sm:$0xff]
        %v394 = vld [vmem:[%s385 + $0x30] sm:$0xff]
        %v395 = vld [vmem:[%s385 + $0x38] sm:$0xff]
        %v396 = vld [vmem:[%s385 + $0x40] sm:$0xff]
        %v397 = vld [vmem:[%s385 + $0x48] sm:$0xff]
        %v398 = vld [vmem:[%s385 + $0x50] sm:$0xff]
        %v399 = vld [vmem:[%s385 + $0x58] sm:$0xff]
        %v400 = vld [vmem:[%s385 + $0x60] sm:$0xff]
        %v401 = vld [vmem:[%s385 + $0x68] sm:$0xff]
        %v402 = vld [vmem:[%s385 + $0x70] sm:$0xff]
        %v403 = vld [vmem:[%s385 + $0x78] sm:$0xff]
        %v404 = vld [vmem:[%s385 + $0x80] sm:$0xff]
        %v405 = vld [vmem:[%s385 + $0x88] sm:$0xff]
        %v406 = vld [vmem:[%s385 + $0x90] sm:$0xff]
        %v407 = vld [vmem:[%s385 + $0x98] sm:$0xff]
        %v408 = vld [vmem:[%s385 + $0xa0] sm:$0xff]
        %v409 = vld [vmem:[%s385 + $0xa8] sm:$0xff]
        %v410 = vld [vmem:[%s385 + $0xb0] sm:$0xff]
        %v411 = vld [vmem:[%s385 + $0xb8] sm:$0xff]
        %v412 = vld [vmem:[%s385 + $0xc0] sm:$0xff]
        %v413 = vld [vmem:[%s385 + $0xc8] sm:$0xff]
        %v414 = vld [vmem:[%s385 + $0xd0] sm:$0xff]
        %v415 = vld [vmem:[%s385 + $0xd8] sm:$0xff]
        %v416 = vld [vmem:[%s385 + $0xe0] sm:$0xff]
        %v417 = vld [vmem:[%s385 + $0xe8] sm:$0xff]
        %v418 = vld [vmem:[%s385 + $0xf0] sm:$0xff]
        %v419 = vld [vmem:[%s385 + $0xf8] sm:$0xff]
        %v420 = vld [vmem:[%s385 + $0x100] sm:$0xff]
        %v421 = vld [vmem:[%s385 + $0x108] sm:$0xff]
        %v422 = vld [vmem:[%s385 + $0x110] sm:$0xff]
        %v423 = vld [vmem:[%s385 + $0x118] sm:$0xff]
        %v424 = vld [vmem:[%s385 + $0x120] sm:$0xff]
        %v425 = vld [vmem:[%s385 + $0x128] sm:$0xff]
        %v426 = vld [vmem:[%s385 + $0x130] sm:$0xff]
        %v427 = vld [vmem:[%s385 + $0x138] sm:$0xff]
        %v428 = vld [vmem:[%s385 + $0x140] sm:$0xff]
        %v429 = vld [vmem:[%s385 + $0x148] sm:$0xff]
        %v430 = vld [vmem:[%s385 + $0x150] sm:$0xff]
        %v431 = vld [vmem:[%s385 + $0x158] sm:$0xff]
        %v432 = vld [vmem:[%s385 + $0x160] sm:$0xff]
        %v433 = vld [vmem:[%s385 + $0x168] sm:$0xff]
        %v434 = vld [vmem:[%s385 + $0x170] sm:$0xff]
        %v435 = vld [vmem:[%s385 + $0x178] sm:$0xff]
        %v436 = vld [vmem:[%s385 + $0x180] sm:$0xff]
        %v437 = vld [vmem:[%s385 + $0x188] sm:$0xff]
        %v438 = vld [vmem:[%s385 + $0x190] sm:$0xff]
        %v439 = vld [vmem:[%s385 + $0x198] sm:$0xff]
        %v440 = vld [vmem:[%s385 + $0x1a0] sm:$0xff]
        %v441 = vld [vmem:[%s385 + $0x1a8] sm:$0xff]
        %v442 = vld [vmem:[%s385 + $0x1b0] sm:$0xff]
        %v443 = vld [vmem:[%s385 + $0x1b8] sm:$0xff]
        %v444 = vld [vmem:[%s385 + $0x1c0] sm:$0xff]
        %v445 = vld [vmem:[%s385 + $0x1c8] sm:$0xff]
        %v446 = vld [vmem:[%s385 + $0x1d0] sm:$0xff]
        %v447 = vld [vmem:[%s385 + $0x1d8] sm:$0xff]
        %v448 = vld [vmem:[%s385 + $0x1e0] sm:$0xff]
        %v449 = vld [vmem:[%s385 + $0x1e8] sm:$0xff]
        %v450 = vld [vmem:[%s385 + $0x1f0] sm:$0xff]
        %v451 = vld [vmem:[%s385 + $0x1f8] sm:$0xf]
        %v452 = vpack.c.bf16 %v389, %v388
        %v453 = vpack.c.bf16 %v391, %v390
        %v454 = vpack.c.bf16 %v393, %v392
        %v455 = vpack.c.bf16 %v395, %v394
        %v456 = vpack.c.bf16 %v397, %v396
        %v457 = vpack.c.bf16 %v399, %v398
        %v458 = vpack.c.bf16 %v401, %v400
        %v459 = vpack.c.bf16 %v403, %v402
        %v460 = vpack.c.bf16 %v405, %v404
        %v461 = vpack.c.bf16 %v407, %v406
        %v462 = vpack.c.bf16 %v409, %v408
        %v463 = vpack.c.bf16 %v411, %v410
        %v464 = vpack.c.bf16 %v413, %v412
        %v465 = vpack.c.bf16 %v415, %v414
        %v466 = vpack.c.bf16 %v417, %v416
        %v467 = vpack.c.bf16 %v419, %v418
        %v468 = vpack.c.bf16 %v421, %v420
        %v469 = vpack.c.bf16 %v423, %v422
        %v470 = vpack.c.bf16 %v425, %v424
        %v471 = vpack.c.bf16 %v427, %v426
        %v472 = vpack.c.bf16 %v429, %v428
        %v473 = vpack.c.bf16 %v431, %v430
        %v474 = vpack.c.bf16 %v433, %v432
        %v475 = vpack.c.bf16 %v435, %v434
        %v476 = vpack.c.bf16 %v437, %v436
        %v477 = vpack.c.bf16 %v439, %v438
        %v478 = vpack.c.bf16 %v441, %v440
        %v479 = vpack.c.bf16 %v443, %v442
        %v480 = vpack.c.bf16 %v445, %v444
        %v481 = vpack.c.bf16 %v447, %v446
        %v482 = vpack.c.bf16 %v449, %v448
        %v483 = vpack.c.bf16 %v451, %v450
        %v484 = vld [vmem:[%s1] sm:$0xf]
        %vm485 = vcmask 64512
        %v487 = vsel %vm485, %v452, 0
        %v490 = vsel %vm485, %v453, 0
        %v493 = vsel %vm485, %v454, 0
        %v496 = vsel %vm485, %v455, 0
        %v499 = vsel %vm485, %v456, 0
        %v502 = vsel %vm485, %v457, 0
        %v505 = vsel %vm485, %v458, 0
        %v508 = vsel %vm485, %v459, 0
        %v511 = vsel %vm485, %v460, 0
        %v514 = vsel %vm485, %v461, 0
        %v517 = vsel %vm485, %v462, 0
        %v520 = vsel %vm485, %v463, 0
        %v523 = vsel %vm485, %v464, 0
        %v526 = vsel %vm485, %v465, 0
        %v529 = vsel %vm485, %v466, 0
        %v532 = vsel %vm485, %v467, 0
        %v535 = vsel %vm485, %v468, 0
        %v538 = vsel %vm485, %v469, 0
        %v541 = vsel %vm485, %v470, 0
        %v544 = vsel %vm485, %v471, 0
        %v547 = vsel %vm485, %v472, 0
        %v550 = vsel %vm485, %v473, 0
        %v553 = vsel %vm485, %v474, 0
        %v556 = vsel %vm485, %v475, 0
        %v559 = vsel %vm485, %v476, 0
        %v562 = vsel %vm485, %v477, 0
        %v565 = vsel %vm485, %v478, 0
        %v568 = vsel %vm485, %v479, 0
        %v571 = vsel %vm485, %v480, 0
        %v574 = vsel %vm485, %v481, 0
        %v577 = vsel %vm485, %v482, 0
        %v580 = vsel %vm485, %v483, 0
        %vm582 = vcmask 1043456
        %v584 = vsel %vm582, %v484, 0
        %586 = vmatpush.bf16.msra.mxu0 0
        %587 = vmatpush.bf16.msra.mxu0 0
        %588 = vmatpush.bf16.msra.mxu0 0
        %589 = vmatpush.bf16.msra.mxu0 0
        %590 = vmatpush.bf16.msra.mxu0 0
        %591 = vmatpush.bf16.msra.mxu0 0
        %592 = vmatpush.bf16.msra.mxu0 0
        %593 = vmatpush.bf16.msra.mxu0 %v584
        %594 = vmatmul.bf16.gmra.mxu0 %v487
        %v595 = vpop.f32.mrf.mxu0
        %v596 = vadd.f32 0.0, %v595
        %v597 = vpop.f32.mrf.mxu0
        %v598 = vadd.f32 0.0, %v597
        %599 = vmatmul.bf16.gmra.mxu0 %v490
        %v600 = vpop.f32.mrf.mxu0
        %v601 = vadd.f32 0.0, %v600
        %v602 = vpop.f32.mrf.mxu0
        %v603 = vadd.f32 0.0, %v602
        %604 = vmatmul.bf16.gmra.mxu0 %v493
        %v605 = vpop.f32.mrf.mxu0
        %v606 = vadd.f32 0.0, %v605
        %v607 = vpop.f32.mrf.mxu0
        %v608 = vadd.f32 0.0, %v607
        %609 = vmatmul.bf16.gmra.mxu0 %v496
        %v610 = vpop.f32.mrf.mxu0
        %v611 = vadd.f32 0.0, %v610
        %v612 = vpop.f32.mrf.mxu0
        %v613 = vadd.f32 0.0, %v612
        %614 = vmatmul.bf16.gmra.mxu0 %v499
        %v615 = vpop.f32.mrf.mxu0
        %v616 = vadd.f32 0.0, %v615
        %v617 = vpop.f32.mrf.mxu0
        %v618 = vadd.f32 0.0, %v617
        %619 = vmatmul.bf16.gmra.mxu0 %v502
        %v620 = vpop.f32.mrf.mxu0
        %v621 = vadd.f32 0.0, %v620
        %v622 = vpop.f32.mrf.mxu0
        %v623 = vadd.f32 0.0, %v622
        %624 = vmatmul.bf16.gmra.mxu0 %v505
        %v625 = vpop.f32.mrf.mxu0
        %v626 = vadd.f32 0.0, %v625
        %v627 = vpop.f32.mrf.mxu0
        %v628 = vadd.f32 0.0, %v627
        %629 = vmatmul.bf16.gmra.mxu0 %v508
        %v630 = vpop.f32.mrf.mxu0
        %v631 = vadd.f32 0.0, %v630
        %v632 = vpop.f32.mrf.mxu0
        %v633 = vadd.f32 0.0, %v632
        %634 = vmatmul.bf16.gmra.mxu0 %v511
        %v635 = vpop.f32.mrf.mxu0
        %v636 = vadd.f32 0.0, %v635
        %v637 = vpop.f32.mrf.mxu0
        %v638 = vadd.f32 0.0, %v637
        %639 = vmatmul.bf16.gmra.mxu0 %v514
        %v640 = vpop.f32.mrf.mxu0
        %v641 = vadd.f32 0.0, %v640
        %v642 = vpop.f32.mrf.mxu0
        %v643 = vadd.f32 0.0, %v642
        %644 = vmatmul.bf16.gmra.mxu0 %v517
        %v645 = vpop.f32.mrf.mxu0
        %v646 = vadd.f32 0.0, %v645
        %v647 = vpop.f32.mrf.mxu0
        %v648 = vadd.f32 0.0, %v647
        %649 = vmatmul.bf16.gmra.mxu0 %v520
        %v650 = vpop.f32.mrf.mxu0
        %v651 = vadd.f32 0.0, %v650
        %v652 = vpop.f32.mrf.mxu0
        %v653 = vadd.f32 0.0, %v652
        %654 = vmatmul.bf16.gmra.mxu0 %v523
        %v655 = vpop.f32.mrf.mxu0
        %v656 = vadd.f32 0.0, %v655
        %v657 = vpop.f32.mrf.mxu0
        %v658 = vadd.f32 0.0, %v657
        %659 = vmatmul.bf16.gmra.mxu0 %v526
        %v660 = vpop.f32.mrf.mxu0
        %v661 = vadd.f32 0.0, %v660
        %v662 = vpop.f32.mrf.mxu0
        %v663 = vadd.f32 0.0, %v662
        %664 = vmatmul.bf16.gmra.mxu0 %v529
        %v665 = vpop.f32.mrf.mxu0
        %v666 = vadd.f32 0.0, %v665
        %v667 = vpop.f32.mrf.mxu0
        %v668 = vadd.f32 0.0, %v667
        %669 = vmatmul.bf16.gmra.mxu0 %v532
        %v670 = vpop.f32.mrf.mxu0
        %v671 = vadd.f32 0.0, %v670
        %v672 = vpop.f32.mrf.mxu0
        %v673 = vadd.f32 0.0, %v672
        %674 = vmatmul.bf16.gmra.mxu0 %v535
        %v675 = vpop.f32.mrf.mxu0
        %v676 = vadd.f32 0.0, %v675
        %v677 = vpop.f32.mrf.mxu0
        %v678 = vadd.f32 0.0, %v677
        %679 = vmatmul.bf16.gmra.mxu0 %v538
        %v680 = vpop.f32.mrf.mxu0
        %v681 = vadd.f32 0.0, %v680
        %v682 = vpop.f32.mrf.mxu0
        %v683 = vadd.f32 0.0, %v682
        %684 = vmatmul.bf16.gmra.mxu0 %v541
        %v685 = vpop.f32.mrf.mxu0
        %v686 = vadd.f32 0.0, %v685
        %v687 = vpop.f32.mrf.mxu0
        %v688 = vadd.f32 0.0, %v687
        %689 = vmatmul.bf16.gmra.mxu0 %v544
        %v690 = vpop.f32.mrf.mxu0
        %v691 = vadd.f32 0.0, %v690
        %v692 = vpop.f32.mrf.mxu0
        %v693 = vadd.f32 0.0, %v692
        %694 = vmatmul.bf16.gmra.mxu0 %v547
        %v695 = vpop.f32.mrf.mxu0
        %v696 = vadd.f32 0.0, %v695
        %v697 = vpop.f32.mrf.mxu0
        %v698 = vadd.f32 0.0, %v697
        %699 = vmatmul.bf16.gmra.mxu0 %v550
        %v700 = vpop.f32.mrf.mxu0
        %v701 = vadd.f32 0.0, %v700
        %v702 = vpop.f32.mrf.mxu0
        %v703 = vadd.f32 0.0, %v702
        %704 = vmatmul.bf16.gmra.mxu0 %v553
        %v705 = vpop.f32.mrf.mxu0
        %v706 = vadd.f32 0.0, %v705
        %v707 = vpop.f32.mrf.mxu0
        %v708 = vadd.f32 0.0, %v707
        %709 = vmatmul.bf16.gmra.mxu0 %v556
        %v710 = vpop.f32.mrf.mxu0
        %v711 = vadd.f32 0.0, %v710
        %v712 = vpop.f32.mrf.mxu0
        %v713 = vadd.f32 0.0, %v712
        %714 = vmatmul.bf16.gmra.mxu0 %v559
        %v715 = vpop.f32.mrf.mxu0
        %v716 = vadd.f32 0.0, %v715
        %v717 = vpop.f32.mrf.mxu0
        %v718 = vadd.f32 0.0, %v717
        %719 = vmatmul.bf16.gmra.mxu0 %v562
        %v720 = vpop.f32.mrf.mxu0
        %v721 = vadd.f32 0.0, %v720
        %v722 = vpop.f32.mrf.mxu0
        %v723 = vadd.f32 0.0, %v722
        %724 = vmatmul.bf16.gmra.mxu0 %v565
        %v725 = vpop.f32.mrf.mxu0
        %v726 = vadd.f32 0.0, %v725
        %v727 = vpop.f32.mrf.mxu0
        %v728 = vadd.f32 0.0, %v727
        %729 = vmatmul.bf16.gmra.mxu0 %v568
        %v730 = vpop.f32.mrf.mxu0
        %v731 = vadd.f32 0.0, %v730
        %v732 = vpop.f32.mrf.mxu0
        %v733 = vadd.f32 0.0, %v732
        %734 = vmatmul.bf16.gmra.mxu0 %v571
        %v735 = vpop.f32.mrf.mxu0
        %v736 = vadd.f32 0.0, %v735
        %v737 = vpop.f32.mrf.mxu0
        %v738 = vadd.f32 0.0, %v737
        %739 = vmatmul.bf16.gmra.mxu0 %v574
        %v740 = vpop.f32.mrf.mxu0
        %v741 = vadd.f32 0.0, %v740
        %v742 = vpop.f32.mrf.mxu0
        %v743 = vadd.f32 0.0, %v742
        %744 = vmatmul.bf16.gmra.mxu0 %v577
        %v745 = vpop.f32.mrf.mxu0
        %v746 = vadd.f32 0.0, %v745
        %v747 = vpop.f32.mrf.mxu0
        %v748 = vadd.f32 0.0, %v747
        %749 = vmatmul.bf16.gmra.mxu0 %v580
        %v750 = vpop.f32.mrf.mxu0
        %v751 = vadd.f32 0.0, %v750
        %v752 = vpop.f32.mrf.mxu0
        %v753 = vadd.f32 0.0, %v752
        %754 = vdwg.mxu0
        %vm755 = vcmask 523264
        %756 = vst.msk [vmem:[#allocation2] sm:$0xff] %vm755, %v596
        %757 = vst.msk [vmem:[#allocation2 + $0x8] sm:$0xff] %vm755, %v598
        %758 = vst.msk [vmem:[#allocation2 + $0x10] sm:$0xff] %vm755, %v601
        %759 = vst.msk [vmem:[#allocation2 + $0x18] sm:$0xff] %vm755, %v603
        %760 = vst.msk [vmem:[#allocation2 + $0x20] sm:$0xff] %vm755, %v606
        %761 = vst.msk [vmem:[#allocation2 + $0x28] sm:$0xff] %vm755, %v608
        %762 = vst.msk [vmem:[#allocation2 + $0x30] sm:$0xff] %vm755, %v611
        %763 = vst.msk [vmem:[#allocation2 + $0x38] sm:$0xff] %vm755, %v613
        %764 = vst.msk [vmem:[#allocation2 + $0x40] sm:$0xff] %vm755, %v616
        %765 = vst.msk [vmem:[#allocation2 + $0x48] sm:$0xff] %vm755, %v618
        %766 = vst.msk [vmem:[#allocation2 + $0x50] sm:$0xff] %vm755, %v621
        %767 = vst.msk [vmem:[#allocation2 + $0x58] sm:$0xff] %vm755, %v623
        %768 = vst.msk [vmem:[#allocation2 + $0x60] sm:$0xff] %vm755, %v626
        %769 = vst.msk [vmem:[#allocation2 + $0x68] sm:$0xff] %vm755, %v628
        %770 = vst.msk [vmem:[#allocation2 + $0x70] sm:$0xff] %vm755, %v631
        %771 = vst.msk [vmem:[#allocation2 + $0x78] sm:$0xff] %vm755, %v633
        %772 = vst.msk [vmem:[#allocation2 + $0x80] sm:$0xff] %vm755, %v636
        %773 = vst.msk [vmem:[#allocation2 + $0x88] sm:$0xff] %vm755, %v638
        %774 = vst.msk [vmem:[#allocation2 + $0x90] sm:$0xff] %vm755, %v641
        %775 = vst.msk [vmem:[#allocation2 + $0x98] sm:$0xff] %vm755, %v643
        %776 = vst.msk [vmem:[#allocation2 + $0xa0] sm:$0xff] %vm755, %v646
        %777 = vst.msk [vmem:[#allocation2 + $0xa8] sm:$0xff] %vm755, %v648
        %778 = vst.msk [vmem:[#allocation2 + $0xb0] sm:$0xff] %vm755, %v651
        %779 = vst.msk [vmem:[#allocation2 + $0xb8] sm:$0xff] %vm755, %v653
        %780 = vst.msk [vmem:[#allocation2 + $0xc0] sm:$0xff] %vm755, %v656
        %781 = vst.msk [vmem:[#allocation2 + $0xc8] sm:$0xff] %vm755, %v658
        %782 = vst.msk [vmem:[#allocation2 + $0xd0] sm:$0xff] %vm755, %v661
        %783 = vst.msk [vmem:[#allocation2 + $0xd8] sm:$0xff] %vm755, %v663
        %784 = vst.msk [vmem:[#allocation2 + $0xe0] sm:$0xff] %vm755, %v666
        %785 = vst.msk [vmem:[#allocation2 + $0xe8] sm:$0xff] %vm755, %v668
        %786 = vst.msk [vmem:[#allocation2 + $0xf0] sm:$0xff] %vm755, %v671
        %787 = vst.msk [vmem:[#allocation2 + $0xf8] sm:$0xff] %vm755, %v673
        %788 = vst.msk [vmem:[#allocation2 + $0x100] sm:$0xff] %vm755, %v676
        %789 = vst.msk [vmem:[#allocation2 + $0x108] sm:$0xff] %vm755, %v678
        %790 = vst.msk [vmem:[#allocation2 + $0x110] sm:$0xff] %vm755, %v681
        %791 = vst.msk [vmem:[#allocation2 + $0x118] sm:$0xff] %vm755, %v683
        %792 = vst.msk [vmem:[#allocation2 + $0x120] sm:$0xff] %vm755, %v686
        %793 = vst.msk [vmem:[#allocation2 + $0x128] sm:$0xff] %vm755, %v688
        %794 = vst.msk [vmem:[#allocation2 + $0x130] sm:$0xff] %vm755, %v691
        %795 = vst.msk [vmem:[#allocation2 + $0x138] sm:$0xff] %vm755, %v693
        %796 = vst.msk [vmem:[#allocation2 + $0x140] sm:$0xff] %vm755, %v696
        %797 = vst.msk [vmem:[#allocation2 + $0x148] sm:$0xff] %vm755, %v698
        %798 = vst.msk [vmem:[#allocation2 + $0x150] sm:$0xff] %vm755, %v701
        %799 = vst.msk [vmem:[#allocation2 + $0x158] sm:$0xff] %vm755, %v703
        %800 = vst.msk [vmem:[#allocation2 + $0x160] sm:$0xff] %vm755, %v706
        %801 = vst.msk [vmem:[#allocation2 + $0x168] sm:$0xff] %vm755, %v708
        %802 = vst.msk [vmem:[#allocation2 + $0x170] sm:$0xff] %vm755, %v711
        %803 = vst.msk [vmem:[#allocation2 + $0x178] sm:$0xff] %vm755, %v713
        %804 = vst.msk [vmem:[#allocation2 + $0x180] sm:$0xff] %vm755, %v716
        %805 = vst.msk [vmem:[#allocation2 + $0x188] sm:$0xff] %vm755, %v718
        %806 = vst.msk [vmem:[#allocation2 + $0x190] sm:$0xff] %vm755, %v721
        %807 = vst.msk [vmem:[#allocation2 + $0x198] sm:$0xff] %vm755, %v723
        %808 = vst.msk [vmem:[#allocation2 + $0x1a0] sm:$0xff] %vm755, %v726
        %809 = vst.msk [vmem:[#allocation2 + $0x1a8] sm:$0xff] %vm755, %v728
        %810 = vst.msk [vmem:[#allocation2 + $0x1b0] sm:$0xff] %vm755, %v731
        %811 = vst.msk [vmem:[#allocation2 + $0x1b8] sm:$0xff] %vm755, %v733
        %812 = vst.msk [vmem:[#allocation2 + $0x1c0] sm:$0xff] %vm755, %v736
        %813 = vst.msk [vmem:[#allocation2 + $0x1c8] sm:$0xff] %vm755, %v738
        %814 = vst.msk [vmem:[#allocation2 + $0x1d0] sm:$0xff] %vm755, %v741
        %815 = vst.msk [vmem:[#allocation2 + $0x1d8] sm:$0xff] %vm755, %v743
        %816 = vst.msk [vmem:[#allocation2 + $0x1e0] sm:$0xff] %vm755, %v746
        %817 = vst.msk [vmem:[#allocation2 + $0x1e8] sm:$0xff] %vm755, %v748
        %818 = vst.msk [vmem:[#allocation2 + $0x1f0] sm:$0xff] %vm755, %v751
        %vm819 = vcmask 519168
        %820 = vst.msk [vmem:[#allocation2 + $0x1f8] sm:$0xf] %vm819, %v753
        %v821 = vld [vmem:[#allocation2] sm:$0xff]
        %v822 = vld [vmem:[#allocation2 + $0x8] sm:$0xff]
        %v823 = vld [vmem:[#allocation2 + $0x10] sm:$0xff]
        %v824 = vld [vmem:[#allocation2 + $0x18] sm:$0xff]
        %v825 = vld [vmem:[#allocation2 + $0x20] sm:$0xff]
        %v826 = vld [vmem:[#allocation2 + $0x28] sm:$0xff]
        %v827 = vld [vmem:[#allocation2 + $0x30] sm:$0xff]
        %v828 = vld [vmem:[#allocation2 + $0x38] sm:$0xff]
        %v829 = vld [vmem:[#allocation2 + $0x40] sm:$0xff]
        %v830 = vld [vmem:[#allocation2 + $0x48] sm:$0xff]
        %v831 = vld [vmem:[#allocation2 + $0x50] sm:$0xff]
        %v832 = vld [vmem:[#allocation2 + $0x58] sm:$0xff]
        %v833 = vld [vmem:[#allocation2 + $0x60] sm:$0xff]
        %v834 = vld [vmem:[#allocation2 + $0x68] sm:$0xff]
        %v835 = vld [vmem:[#allocation2 + $0x70] sm:$0xff]
        %v836 = vld [vmem:[#allocation2 + $0x78] sm:$0xff]
        %v837 = vld [vmem:[#allocation2 + $0x80] sm:$0xff]
        %v838 = vld [vmem:[#allocation2 + $0x88] sm:$0xff]
        %v839 = vld [vmem:[#allocation2 + $0x90] sm:$0xff]
        %v840 = vld [vmem:[#allocation2 + $0x98] sm:$0xff]
        %v841 = vld [vmem:[#allocation2 + $0xa0] sm:$0xff]
        %v842 = vld [vmem:[#allocation2 + $0xa8] sm:$0xff]
        %v843 = vld [vmem:[#allocation2 + $0xb0] sm:$0xff]
        %v844 = vld [vmem:[#allocation2 + $0xb8] sm:$0xff]
        %v845 = vld [vmem:[#allocation2 + $0xc0] sm:$0xff]
        %v846 = vld [vmem:[#allocation2 + $0xc8] sm:$0xff]
        %v847 = vld [vmem:[#allocation2 + $0xd0] sm:$0xff]
        %v848 = vld [vmem:[#allocation2 + $0xd8] sm:$0xff]
        %v849 = vld [vmem:[#allocation2 + $0xe0] sm:$0xff]
        %v850 = vld [vmem:[#allocation2 + $0xe8] sm:$0xff]
        %v851 = vld [vmem:[#allocation2 + $0xf0] sm:$0xff]
        %v852 = vld [vmem:[#allocation2 + $0xf8] sm:$0xff]
        %v853 = vld [vmem:[#allocation2 + $0x100] sm:$0xff]
        %v854 = vld [vmem:[#allocation2 + $0x108] sm:$0xff]
        %v855 = vld [vmem:[#allocation2 + $0x110] sm:$0xff]
        %v856 = vld [vmem:[#allocation2 + $0x118] sm:$0xff]
        %v857 = vld [vmem:[#allocation2 + $0x120] sm:$0xff]
        %v858 = vld [vmem:[#allocation2 + $0x128] sm:$0xff]
        %v859 = vld [vmem:[#allocation2 + $0x130] sm:$0xff]
        %v860 = vld [vmem:[#allocation2 + $0x138] sm:$0xff]
        %v861 = vld [vmem:[#allocation2 + $0x140] sm:$0xff]
        %v862 = vld [vmem:[#allocation2 + $0x148] sm:$0xff]
        %v863 = vld [vmem:[#allocation2 + $0x150] sm:$0xff]
        %v864 = vld [vmem:[#allocation2 + $0x158] sm:$0xff]
        %v865 = vld [vmem:[#allocation2 + $0x160] sm:$0xff]
        %v866 = vld [vmem:[#allocation2 + $0x168] sm:$0xff]
        %v867 = vld [vmem:[#allocation2 + $0x170] sm:$0xff]
        %v868 = vld [vmem:[#allocation2 + $0x178] sm:$0xff]
        %v869 = vld [vmem:[#allocation2 + $0x180] sm:$0xff]
        %v870 = vld [vmem:[#allocation2 + $0x188] sm:$0xff]
        %v871 = vld [vmem:[#allocation2 + $0x190] sm:$0xff]
        %v872 = vld [vmem:[#allocation2 + $0x198] sm:$0xff]
        %v873 = vld [vmem:[#allocation2 + $0x1a0] sm:$0xff]
        %v874 = vld [vmem:[#allocation2 + $0x1a8] sm:$0xff]
        %v875 = vld [vmem:[#allocation2 + $0x1b0] sm:$0xff]
        %v876 = vld [vmem:[#allocation2 + $0x1b8] sm:$0xff]
        %v877 = vld [vmem:[#allocation2 + $0x1c0] sm:$0xff]
        %v878 = vld [vmem:[#allocation2 + $0x1c8] sm:$0xff]
        %v879 = vld [vmem:[#allocation2 + $0x1d0] sm:$0xff]
        %v880 = vld [vmem:[#allocation2 + $0x1d8] sm:$0xff]
        %v881 = vld [vmem:[#allocation2 + $0x1e0] sm:$0xff]
        %v882 = vld [vmem:[#allocation2 + $0x1e8] sm:$0xff]
        %v883 = vld [vmem:[#allocation2 + $0x1f0] sm:$0xff]
        %v884 = vld [vmem:[#allocation2 + $0x1f8] sm:$0xf]
        %v885 = vld [vmem:[%s385 + $0x1] sm:$0xff]
        %v886 = vld [vmem:[%s385 + $0x9] sm:$0xff]
        %v887 = vld [vmem:[%s385 + $0x11] sm:$0xff]
        %v888 = vld [vmem:[%s385 + $0x19] sm:$0xff]
        %v889 = vld [vmem:[%s385 + $0x21] sm:$0xff]
        %v890 = vld [vmem:[%s385 + $0x29] sm:$0xff]
        %v891 = vld [vmem:[%s385 + $0x31] sm:$0xff]
        %v892 = vld [vmem:[%s385 + $0x39] sm:$0xff]
        %v893 = vld [vmem:[%s385 + $0x41] sm:$0xff]
        %v894 = vld [vmem:[%s385 + $0x49] sm:$0xff]
        %v895 = vld [vmem:[%s385 + $0x51] sm:$0xff]
        %v896 = vld [vmem:[%s385 + $0x59] sm:$0xff]
        %v897 = vld [vmem:[%s385 + $0x61] sm:$0xff]
        %v898 = vld [vmem:[%s385 + $0x69] sm:$0xff]
        %v899 = vld [vmem:[%s385 + $0x71] sm:$0xff]
        %v900 = vld [vmem:[%s385 + $0x79] sm:$0xff]
        %v901 = vld [vmem:[%s385 + $0x81] sm:$0xff]
        %v902 = vld [vmem:[%s385 + $0x89] sm:$0xff]
        %v903 = vld [vmem:[%s385 + $0x91] sm:$0xff]
        %v904 = vld [vmem:[%s385 + $0x99] sm:$0xff]
        %v905 = vld [vmem:[%s385 + $0xa1] sm:$0xff]
        %v906 = vld [vmem:[%s385 + $0xa9] sm:$0xff]
        %v907 = vld [vmem:[%s385 + $0xb1] sm:$0xff]
        %v908 = vld [vmem:[%s385 + $0xb9] sm:$0xff]
        %v909 = vld [vmem:[%s385 + $0xc1] sm:$0xff]
        %v910 = vld [vmem:[%s385 + $0xc9] sm:$0xff]
        %v911 = vld [vmem:[%s385 + $0xd1] sm:$0xff]
        %v912 = vld [vmem:[%s385 + $0xd9] sm:$0xff]
        %v913 = vld [vmem:[%s385 + $0xe1] sm:$0xff]
        %v914 = vld [vmem:[%s385 + $0xe9] sm:$0xff]
        %v915 = vld [vmem:[%s385 + $0xf1] sm:$0xff]
        %v916 = vld [vmem:[%s385 + $0xf9] sm:$0xff]
        %v917 = vld [vmem:[%s385 + $0x101] sm:$0xff]
        %v918 = vld [vmem:[%s385 + $0x109] sm:$0xff]
        %v919 = vld [vmem:[%s385 + $0x111] sm:$0xff]
        %v920 = vld [vmem:[%s385 + $0x119] sm:$0xff]
        %v921 = vld [vmem:[%s385 + $0x121] sm:$0xff]
        %v922 = vld [vmem:[%s385 + $0x129] sm:$0xff]
        %v923 = vld [vmem:[%s385 + $0x131] sm:$0xff]
        %v924 = vld [vmem:[%s385 + $0x139] sm:$0xff]
        %v925 = vld [vmem:[%s385 + $0x141] sm:$0xff]
        %v926 = vld [vmem:[%s385 + $0x149] sm:$0xff]
        %v927 = vld [vmem:[%s385 + $0x151] sm:$0xff]
        %v928 = vld [vmem:[%s385 + $0x159] sm:$0xff]
        %v929 = vld [vmem:[%s385 + $0x161] sm:$0xff]
        %v930 = vld [vmem:[%s385 + $0x169] sm:$0xff]
        %v931 = vld [vmem:[%s385 + $0x171] sm:$0xff]
        %v932 = vld [vmem:[%s385 + $0x179] sm:$0xff]
        %v933 = vld [vmem:[%s385 + $0x181] sm:$0xff]
        %v934 = vld [vmem:[%s385 + $0x189] sm:$0xff]
        %v935 = vld [vmem:[%s385 + $0x191] sm:$0xff]
        %v936 = vld [vmem:[%s385 + $0x199] sm:$0xff]
        %v937 = vld [vmem:[%s385 + $0x1a1] sm:$0xff]
        %v938 = vld [vmem:[%s385 + $0x1a9] sm:$0xff]
        %v939 = vld [vmem:[%s385 + $0x1b1] sm:$0xff]
        %v940 = vld [vmem:[%s385 + $0x1b9] sm:$0xff]
        %v941 = vld [vmem:[%s385 + $0x1c1] sm:$0xff]
        %v942 = vld [vmem:[%s385 + $0x1c9] sm:$0xff]
        %v943 = vld [vmem:[%s385 + $0x1d1] sm:$0xff]
        %v944 = vld [vmem:[%s385 + $0x1d9] sm:$0xff]
        %v945 = vld [vmem:[%s385 + $0x1e1] sm:$0xff]
        %v946 = vld [vmem:[%s385 + $0x1e9] sm:$0xff]
        %v947 = vld [vmem:[%s385 + $0x1f1] sm:$0xff]
        %v948 = vld [vmem:[%s385 + $0x1f9] sm:$0xf]
        %v949 = vpack.c.bf16 %v886, %v885
        %v950 = vpack.c.bf16 %v888, %v887
        %v951 = vpack.c.bf16 %v890, %v889
        %v952 = vpack.c.bf16 %v892, %v891
        %v953 = vpack.c.bf16 %v894, %v893
        %v954 = vpack.c.bf16 %v896, %v895
        %v955 = vpack.c.bf16 %v898, %v897
        %v956 = vpack.c.bf16 %v900, %v899
        %v957 = vpack.c.bf16 %v902, %v901
        %v958 = vpack.c.bf16 %v904, %v903
        %v959 = vpack.c.bf16 %v906, %v905
        %v960 = vpack.c.bf16 %v908, %v907
        %v961 = vpack.c.bf16 %v910, %v909
        %v962 = vpack.c.bf16 %v912, %v911
        %v963 = vpack.c.bf16 %v914, %v913
        %v964 = vpack.c.bf16 %v916, %v915
        %v965 = vpack.c.bf16 %v918, %v917
        %v966 = vpack.c.bf16 %v920, %v919
        %v967 = vpack.c.bf16 %v922, %v921
        %v968 = vpack.c.bf16 %v924, %v923
        %v969 = vpack.c.bf16 %v926, %v925
        %v970 = vpack.c.bf16 %v928, %v927
        %v971 = vpack.c.bf16 %v930, %v929
        %v972 = vpack.c.bf16 %v932, %v931
        %v973 = vpack.c.bf16 %v934, %v933
        %v974 = vpack.c.bf16 %v936, %v935
        %v975 = vpack.c.bf16 %v938, %v937
        %v976 = vpack.c.bf16 %v940, %v939
        %v977 = vpack.c.bf16 %v942, %v941
        %v978 = vpack.c.bf16 %v944, %v943
        %v979 = vpack.c.bf16 %v946, %v945
        %v980 = vpack.c.bf16 %v948, %v947
        %s981 = scalar_lea.vmem %s1, 4
        %v982 = vld [vmem:[%s981] sm:$0xf]
        %v984 = vsel %vm485, %v949, 0
        %v987 = vsel %vm485, %v950, 0
        %v990 = vsel %vm485, %v951, 0
        %v993 = vsel %vm485, %v952, 0
        %v996 = vsel %vm485, %v953, 0
        %v999 = vsel %vm485, %v954, 0
        %v1002 = vsel %vm485, %v955, 0
        %v1005 = vsel %vm485, %v956, 0
        %v1008 = vsel %vm485, %v957, 0
        %v1011 = vsel %vm485, %v958, 0
        %v1014 = vsel %vm485, %v959, 0
        %v1017 = vsel %vm485, %v960, 0
        %v1020 = vsel %vm485, %v961, 0
        %v1023 = vsel %vm485, %v962, 0
        %v1026 = vsel %vm485, %v963, 0
        %v1029 = vsel %vm485, %v964, 0
        %v1032 = vsel %vm485, %v965, 0
        %v1035 = vsel %vm485, %v966, 0
        %v1038 = vsel %vm485, %v967, 0
        %v1041 = vsel %vm485, %v968, 0
        %v1044 = vsel %vm485, %v969, 0
        %v1047 = vsel %vm485, %v970, 0
        %v1050 = vsel %vm485, %v971, 0
        %v1053 = vsel %vm485, %v972, 0
        %v1056 = vsel %vm485, %v973, 0
        %v1059 = vsel %vm485, %v974, 0
        %v1062 = vsel %vm485, %v975, 0
        %v1065 = vsel %vm485, %v976, 0
        %v1068 = vsel %vm485, %v977, 0
        %v1071 = vsel %vm485, %v978, 0
        %v1074 = vsel %vm485, %v979, 0
        %v1077 = vsel %vm485, %v980, 0
        %v1080 = vsel %vm582, %v982, 0
        %1082 = vmatpush.bf16.msra.mxu0 0
        %1083 = vmatpush.bf16.msra.mxu0 0
        %1084 = vmatpush.bf16.msra.mxu0 0
        %1085 = vmatpush.bf16.msra.mxu0 0
        %1086 = vmatpush.bf16.msra.mxu0 0
        %1087 = vmatpush.bf16.msra.mxu0 0
        %1088 = vmatpush.bf16.msra.mxu0 0
        %1089 = vmatpush.bf16.msra.mxu0 %v1080
        %1090 = vmatmul.bf16.gmra.mxu0 %v984
        %v1091 = vpop.f32.mrf.mxu0
        %v1092 = vadd.f32 0.0, %v1091
        %v1093 = vpop.f32.mrf.mxu0
        %v1094 = vadd.f32 0.0, %v1093
        %1095 = vmatmul.bf16.gmra.mxu0 %v987
        %v1096 = vpop.f32.mrf.mxu0
        %v1097 = vadd.f32 0.0, %v1096
        %v1098 = vpop.f32.mrf.mxu0
        %v1099 = vadd.f32 0.0, %v1098
        %1100 = vmatmul.bf16.gmra.mxu0 %v990
        %v1101 = vpop.f32.mrf.mxu0
        %v1102 = vadd.f32 0.0, %v1101
        %v1103 = vpop.f32.mrf.mxu0
        %v1104 = vadd.f32 0.0, %v1103
        %1105 = vmatmul.bf16.gmra.mxu0 %v993
        %v1106 = vpop.f32.mrf.mxu0
        %v1107 = vadd.f32 0.0, %v1106
        %v1108 = vpop.f32.mrf.mxu0
        %v1109 = vadd.f32 0.0, %v1108
        %1110 = vmatmul.bf16.gmra.mxu0 %v996
        %v1111 = vpop.f32.mrf.mxu0
        %v1112 = vadd.f32 0.0, %v1111
        %v1113 = vpop.f32.mrf.mxu0
        %v1114 = vadd.f32 0.0, %v1113
        %1115 = vmatmul.bf16.gmra.mxu0 %v999
        %v1116 = vpop.f32.mrf.mxu0
        %v1117 = vadd.f32 0.0, %v1116
        %v1118 = vpop.f32.mrf.mxu0
        %v1119 = vadd.f32 0.0, %v1118
        %1120 = vmatmul.bf16.gmra.mxu0 %v1002
        %v1121 = vpop.f32.mrf.mxu0
        %v1122 = vadd.f32 0.0, %v1121
        %v1123 = vpop.f32.mrf.mxu0
        %v1124 = vadd.f32 0.0, %v1123
        %1125 = vmatmul.bf16.gmra.mxu0 %v1005
        %v1126 = vpop.f32.mrf.mxu0
        %v1127 = vadd.f32 0.0, %v1126
        %v1128 = vpop.f32.mrf.mxu0
        %v1129 = vadd.f32 0.0, %v1128
        %1130 = vmatmul.bf16.gmra.mxu0 %v1008
        %v1131 = vpop.f32.mrf.mxu0
        %v1132 = vadd.f32 0.0, %v1131
        %v1133 = vpop.f32.mrf.mxu0
        %v1134 = vadd.f32 0.0, %v1133
        %1135 = vmatmul.bf16.gmra.mxu0 %v1011
        %v1136 = vpop.f32.mrf.mxu0
        %v1137 = vadd.f32 0.0, %v1136
        %v1138 = vpop.f32.mrf.mxu0
        %v1139 = vadd.f32 0.0, %v1138
        %1140 = vmatmul.bf16.gmra.mxu0 %v1014
        %v1141 = vpop.f32.mrf.mxu0
        %v1142 = vadd.f32 0.0, %v1141
        %v1143 = vpop.f32.mrf.mxu0
        %v1144 = vadd.f32 0.0, %v1143
        %1145 = vmatmul.bf16.gmra.mxu0 %v1017
        %v1146 = vpop.f32.mrf.mxu0
        %v1147 = vadd.f32 0.0, %v1146
        %v1148 = vpop.f32.mrf.mxu0
        %v1149 = vadd.f32 0.0, %v1148
        %1150 = vmatmul.bf16.gmra.mxu0 %v1020
        %v1151 = vpop.f32.mrf.mxu0
        %v1152 = vadd.f32 0.0, %v1151
        %v1153 = vpop.f32.mrf.mxu0
        %v1154 = vadd.f32 0.0, %v1153
        %1155 = vmatmul.bf16.gmra.mxu0 %v1023
        %v1156 = vpop.f32.mrf.mxu0
        %v1157 = vadd.f32 0.0, %v1156
        %v1158 = vpop.f32.mrf.mxu0
        %v1159 = vadd.f32 0.0, %v1158
        %1160 = vmatmul.bf16.gmra.mxu0 %v1026
        %v1161 = vpop.f32.mrf.mxu0
        %v1162 = vadd.f32 0.0, %v1161
        %v1163 = vpop.f32.mrf.mxu0
        %v1164 = vadd.f32 0.0, %v1163
        %1165 = vmatmul.bf16.gmra.mxu0 %v1029
        %v1166 = vpop.f32.mrf.mxu0
        %v1167 = vadd.f32 0.0, %v1166
        %v1168 = vpop.f32.mrf.mxu0
        %v1169 = vadd.f32 0.0, %v1168
        %1170 = vmatmul.bf16.gmra.mxu0 %v1032
        %v1171 = vpop.f32.mrf.mxu0
        %v1172 = vadd.f32 0.0, %v1171
        %v1173 = vpop.f32.mrf.mxu0
        %v1174 = vadd.f32 0.0, %v1173
        %1175 = vmatmul.bf16.gmra.mxu0 %v1035
        %v1176 = vpop.f32.mrf.mxu0
        %v1177 = vadd.f32 0.0, %v1176
        %v1178 = vpop.f32.mrf.mxu0
        %v1179 = vadd.f32 0.0, %v1178
        %1180 = vmatmul.bf16.gmra.mxu0 %v1038
        %v1181 = vpop.f32.mrf.mxu0
        %v1182 = vadd.f32 0.0, %v1181
        %v1183 = vpop.f32.mrf.mxu0
        %v1184 = vadd.f32 0.0, %v1183
        %1185 = vmatmul.bf16.gmra.mxu0 %v1041
        %v1186 = vpop.f32.mrf.mxu0
        %v1187 = vadd.f32 0.0, %v1186
        %v1188 = vpop.f32.mrf.mxu0
        %v1189 = vadd.f32 0.0, %v1188
        %1190 = vmatmul.bf16.gmra.mxu0 %v1044
        %v1191 = vpop.f32.mrf.mxu0
        %v1192 = vadd.f32 0.0, %v1191
        %v1193 = vpop.f32.mrf.mxu0
        %v1194 = vadd.f32 0.0, %v1193
        %1195 = vmatmul.bf16.gmra.mxu0 %v1047
        %v1196 = vpop.f32.mrf.mxu0
        %v1197 = vadd.f32 0.0, %v1196
        %v1198 = vpop.f32.mrf.mxu0
        %v1199 = vadd.f32 0.0, %v1198
        %1200 = vmatmul.bf16.gmra.mxu0 %v1050
        %v1201 = vpop.f32.mrf.mxu0
        %v1202 = vadd.f32 0.0, %v1201
        %v1203 = vpop.f32.mrf.mxu0
        %v1204 = vadd.f32 0.0, %v1203
        %1205 = vmatmul.bf16.gmra.mxu0 %v1053
        %v1206 = vpop.f32.mrf.mxu0
        %v1207 = vadd.f32 0.0, %v1206
        %v1208 = vpop.f32.mrf.mxu0
        %v1209 = vadd.f32 0.0, %v1208
        %1210 = vmatmul.bf16.gmra.mxu0 %v1056
        %v1211 = vpop.f32.mrf.mxu0
        %v1212 = vadd.f32 0.0, %v1211
        %v1213 = vpop.f32.mrf.mxu0
        %v1214 = vadd.f32 0.0, %v1213
        %1215 = vmatmul.bf16.gmra.mxu0 %v1059
        %v1216 = vpop.f32.mrf.mxu0
        %v1217 = vadd.f32 0.0, %v1216
        %v1218 = vpop.f32.mrf.mxu0
        %v1219 = vadd.f32 0.0, %v1218
        %1220 = vmatmul.bf16.gmra.mxu0 %v1062
        %v1221 = vpop.f32.mrf.mxu0
        %v1222 = vadd.f32 0.0, %v1221
        %v1223 = vpop.f32.mrf.mxu0
        %v1224 = vadd.f32 0.0, %v1223
        %1225 = vmatmul.bf16.gmra.mxu0 %v1065
        %v1226 = vpop.f32.mrf.mxu0
        %v1227 = vadd.f32 0.0, %v1226
        %v1228 = vpop.f32.mrf.mxu0
        %v1229 = vadd.f32 0.0, %v1228
        %1230 = vmatmul.bf16.gmra.mxu0 %v1068
        %v1231 = vpop.f32.mrf.mxu0
        %v1232 = vadd.f32 0.0, %v1231
        %v1233 = vpop.f32.mrf.mxu0
        %v1234 = vadd.f32 0.0, %v1233
        %1235 = vmatmul.bf16.gmra.mxu0 %v1071
        %v1236 = vpop.f32.mrf.mxu0
        %v1237 = vadd.f32 0.0, %v1236
        %v1238 = vpop.f32.mrf.mxu0
        %v1239 = vadd.f32 0.0, %v1238
        %1240 = vmatmul.bf16.gmra.mxu0 %v1074
        %v1241 = vpop.f32.mrf.mxu0
        %v1242 = vadd.f32 0.0, %v1241
        %v1243 = vpop.f32.mrf.mxu0
        %v1244 = vadd.f32 0.0, %v1243
        %1245 = vmatmul.bf16.gmra.mxu0 %v1077
        %v1246 = vpop.f32.mrf.mxu0
        %v1247 = vadd.f32 0.0, %v1246
        %v1248 = vpop.f32.mrf.mxu0
        %v1249 = vadd.f32 0.0, %v1248
        %1250 = vdwg.mxu0
        %v1251 = vadd.f32 %v821, %v1092
        %v1252 = vadd.f32 %v822, %v1094
        %v1253 = vadd.f32 %v823, %v1097
        %v1254 = vadd.f32 %v824, %v1099
        %v1255 = vadd.f32 %v825, %v1102
        %v1256 = vadd.f32 %v826, %v1104
        %v1257 = vadd.f32 %v827, %v1107
        %v1258 = vadd.f32 %v828, %v1109
        %v1259 = vadd.f32 %v829, %v1112
        %v1260 = vadd.f32 %v830, %v1114
        %v1261 = vadd.f32 %v831, %v1117
        %v1262 = vadd.f32 %v832, %v1119
        %v1263 = vadd.f32 %v833, %v1122
        %v1264 = vadd.f32 %v834, %v1124
        %v1265 = vadd.f32 %v835, %v1127
        %v1266 = vadd.f32 %v836, %v1129
        %v1267 = vadd.f32 %v837, %v1132
        %v1268 = vadd.f32 %v838, %v1134
        %v1269 = vadd.f32 %v839, %v1137
        %v1270 = vadd.f32 %v840, %v1139
        %v1271 = vadd.f32 %v841, %v1142
        %v1272 = vadd.f32 %v842, %v1144
        %v1273 = vadd.f32 %v843, %v1147
        %v1274 = vadd.f32 %v844, %v1149
        %v1275 = vadd.f32 %v845, %v1152
        %v1276 = vadd.f32 %v846, %v1154
        %v1277 = vadd.f32 %v847, %v1157
        %v1278 = vadd.f32 %v848, %v1159
        %v1279 = vadd.f32 %v849, %v1162
        %v1280 = vadd.f32 %v850, %v1164
        %v1281 = vadd.f32 %v851, %v1167
        %v1282 = vadd.f32 %v852, %v1169
        %v1283 = vadd.f32 %v853, %v1172
        %v1284 = vadd.f32 %v854, %v1174
        %v1285 = vadd.f32 %v855, %v1177
        %v1286 = vadd.f32 %v856, %v1179
        %v1287 = vadd.f32 %v857, %v1182
        %v1288 = vadd.f32 %v858, %v1184
        %v1289 = vadd.f32 %v859, %v1187
        %v1290 = vadd.f32 %v860, %v1189
        %v1291 = vadd.f32 %v861, %v1192
        %v1292 = vadd.f32 %v862, %v1194
        %v1293 = vadd.f32 %v863, %v1197
        %v1294 = vadd.f32 %v864, %v1199
        %v1295 = vadd.f32 %v865, %v1202
        %v1296 = vadd.f32 %v866, %v1204
        %v1297 = vadd.f32 %v867, %v1207
        %v1298 = vadd.f32 %v868, %v1209
        %v1299 = vadd.f32 %v869, %v1212
        %v1300 = vadd.f32 %v870, %v1214
        %v1301 = vadd.f32 %v871, %v1217
        %v1302 = vadd.f32 %v872, %v1219
        %v1303 = vadd.f32 %v873, %v1222
        %v1304 = vadd.f32 %v874, %v1224
        %v1305 = vadd.f32 %v875, %v1227
        %v1306 = vadd.f32 %v876, %v1229
        %v1307 = vadd.f32 %v877, %v1232
        %v1308 = vadd.f32 %v878, %v1234
        %v1309 = vadd.f32 %v879, %v1237
        %v1310 = vadd.f32 %v880, %v1239
        %v1311 = vadd.f32 %v881, %v1242
        %v1312 = vadd.f32 %v882, %v1244
        %v1313 = vadd.f32 %v883, %v1247
        %v1314 = vadd.f32 %v884, %v1249
        %1315 = vst.msk [vmem:[#allocation2] sm:$0xff] %vm755, %v1251
        %1316 = vst.msk [vmem:[#allocation2 + $0x8] sm:$0xff] %vm755, %v1252
        %1317 = vst.msk [vmem:[#allocation2 + $0x10] sm:$0xff] %vm755, %v1253
        %1318 = vst.msk [vmem:[#allocation2 + $0x18] sm:$0xff] %vm755, %v1254
        %1319 = vst.msk [vmem:[#allocation2 + $0x20] sm:$0xff] %vm755, %v1255
        %1320 = vst.msk [vmem:[#allocation2 + $0x28] sm:$0xff] %vm755, %v1256
        %1321 = vst.msk [vmem:[#allocation2 + $0x30] sm:$0xff] %vm755, %v1257
        %1322 = vst.msk [vmem:[#allocation2 + $0x38] sm:$0xff] %vm755, %v1258
        %1323 = vst.msk [vmem:[#allocation2 + $0x40] sm:$0xff] %vm755, %v1259
        %1324 = vst.msk [vmem:[#allocation2 + $0x48] sm:$0xff] %vm755, %v1260
        %1325 = vst.msk [vmem:[#allocation2 + $0x50] sm:$0xff] %vm755, %v1261
        %1326 = vst.msk [vmem:[#allocation2 + $0x58] sm:$0xff] %vm755, %v1262
        %1327 = vst.msk [vmem:[#allocation2 + $0x60] sm:$0xff] %vm755, %v1263
        %1328 = vst.msk [vmem:[#allocation2 + $0x68] sm:$0xff] %vm755, %v1264
        %1329 = vst.msk [vmem:[#allocation2 + $0x70] sm:$0xff] %vm755, %v1265
        %1330 = vst.msk [vmem:[#allocation2 + $0x78] sm:$0xff] %vm755, %v1266
        %1331 = vst.msk [vmem:[#allocation2 + $0x80] sm:$0xff] %vm755, %v1267
        %1332 = vst.msk [vmem:[#allocation2 + $0x88] sm:$0xff] %vm755, %v1268
        %1333 = vst.msk [vmem:[#allocation2 + $0x90] sm:$0xff] %vm755, %v1269
        %1334 = vst.msk [vmem:[#allocation2 + $0x98] sm:$0xff] %vm755, %v1270
        %1335 = vst.msk [vmem:[#allocation2 + $0xa0] sm:$0xff] %vm755, %v1271
        %1336 = vst.msk [vmem:[#allocation2 + $0xa8] sm:$0xff] %vm755, %v1272
        %1337 = vst.msk [vmem:[#allocation2 + $0xb0] sm:$0xff] %vm755, %v1273
        %1338 = vst.msk [vmem:[#allocation2 + $0xb8] sm:$0xff] %vm755, %v1274
        %1339 = vst.msk [vmem:[#allocation2 + $0xc0] sm:$0xff] %vm755, %v1275
        %1340 = vst.msk [vmem:[#allocation2 + $0xc8] sm:$0xff] %vm755, %v1276
        %1341 = vst.msk [vmem:[#allocation2 + $0xd0] sm:$0xff] %vm755, %v1277
        %1342 = vst.msk [vmem:[#allocation2 + $0xd8] sm:$0xff] %vm755, %v1278
        %1343 = vst.msk [vmem:[#allocation2 + $0xe0] sm:$0xff] %vm755, %v1279
        %1344 = vst.msk [vmem:[#allocation2 + $0xe8] sm:$0xff] %vm755, %v1280
        %1345 = vst.msk [vmem:[#allocation2 + $0xf0] sm:$0xff] %vm755, %v1281
        %1346 = vst.msk [vmem:[#allocation2 + $0xf8] sm:$0xff] %vm755, %v1282
        %1347 = vst.msk [vmem:[#allocation2 + $0x100] sm:$0xff] %vm755, %v1283
        %1348 = vst.msk [vmem:[#allocation2 + $0x108] sm:$0xff] %vm755, %v1284
        %1349 = vst.msk [vmem:[#allocation2 + $0x110] sm:$0xff] %vm755, %v1285
        %1350 = vst.msk [vmem:[#allocation2 + $0x118] sm:$0xff] %vm755, %v1286
        %1351 = vst.msk [vmem:[#allocation2 + $0x120] sm:$0xff] %vm755, %v1287
        %1352 = vst.msk [vmem:[#allocation2 + $0x128] sm:$0xff] %vm755, %v1288
        %1353 = vst.msk [vmem:[#allocation2 + $0x130] sm:$0xff] %vm755, %v1289
        %1354 = vst.msk [vmem:[#allocation2 + $0x138] sm:$0xff] %vm755, %v1290
        %1355 = vst.msk [vmem:[#allocation2 + $0x140] sm:$0xff] %vm755, %v1291
        %1356 = vst.msk [vmem:[#allocation2 + $0x148] sm:$0xff] %vm755, %v1292
        %1357 = vst.msk [vmem:[#allocation2 + $0x150] sm:$0xff] %vm755, %v1293
        %1358 = vst.msk [vmem:[#allocation2 + $0x158] sm:$0xff] %vm755, %v1294
        %1359 = vst.msk [vmem:[#allocation2 + $0x160] sm:$0xff] %vm755, %v1295
        %1360 = vst.msk [vmem:[#allocation2 + $0x168] sm:$0xff] %vm755, %v1296
        %1361 = vst.msk [vmem:[#allocation2 + $0x170] sm:$0xff] %vm755, %v1297
        %1362 = vst.msk [vmem:[#allocation2 + $0x178] sm:$0xff] %vm755, %v1298
        %1363 = vst.msk [vmem:[#allocation2 + $0x180] sm:$0xff] %vm755, %v1299
        %1364 = vst.msk [vmem:[#allocation2 + $0x188] sm:$0xff] %vm755, %v1300
        %1365 = vst.msk [vmem:[#allocation2 + $0x190] sm:$0xff] %vm755, %v1301
        %1366 = vst.msk [vmem:[#allocation2 + $0x198] sm:$0xff] %vm755, %v1302
        %1367 = vst.msk [vmem:[#allocation2 + $0x1a0] sm:$0xff] %vm755, %v1303
        %1368 = vst.msk [vmem:[#allocation2 + $0x1a8] sm:$0xff] %vm755, %v1304
        %1369 = vst.msk [vmem:[#allocation2 + $0x1b0] sm:$0xff] %vm755, %v1305
        %1370 = vst.msk [vmem:[#allocation2 + $0x1b8] sm:$0xff] %vm755, %v1306
        %1371 = vst.msk [vmem:[#allocation2 + $0x1c0] sm:$0xff] %vm755, %v1307
        %1372 = vst.msk [vmem:[#allocation2 + $0x1c8] sm:$0xff] %vm755, %v1308
        %1373 = vst.msk [vmem:[#allocation2 + $0x1d0] sm:$0xff] %vm755, %v1309
        %1374 = vst.msk [vmem:[#allocation2 + $0x1d8] sm:$0xff] %vm755, %v1310
        %1375 = vst.msk [vmem:[#allocation2 + $0x1e0] sm:$0xff] %vm755, %v1311
        %1376 = vst.msk [vmem:[#allocation2 + $0x1e8] sm:$0xff] %vm755, %v1312
        %1377 = vst.msk [vmem:[#allocation2 + $0x1f0] sm:$0xff] %vm755, %v1313
        %1378 = vst.msk [vmem:[#allocation2 + $0x1f8] sm:$0xf] %vm819, %v1314
        %v1379 = vld [vmem:[#allocation2] sm:$0xff]
        %v1380 = vld [vmem:[#allocation2 + $0x8] sm:$0xff]
        %v1381 = vld [vmem:[#allocation2 + $0x10] sm:$0xff]
        %v1382 = vld [vmem:[#allocation2 + $0x18] sm:$0xff]
        %v1383 = vld [vmem:[#allocation2 + $0x20] sm:$0xff]
        %v1384 = vld [vmem:[#allocation2 + $0x28] sm:$0xff]
        %v1385 = vld [vmem:[#allocation2 + $0x30] sm:$0xff]
        %v1386 = vld [vmem:[#allocation2 + $0x38] sm:$0xff]
        %v1387 = vld [vmem:[#allocation2 + $0x40] sm:$0xff]
        %v1388 = vld [vmem:[#allocation2 + $0x48] sm:$0xff]
        %v1389 = vld [vmem:[#allocation2 + $0x50] sm:$0xff]
        %v1390 = vld [vmem:[#allocation2 + $0x58] sm:$0xff]
        %v1391 = vld [vmem:[#allocation2 + $0x60] sm:$0xff]
        %v1392 = vld [vmem:[#allocation2 + $0x68] sm:$0xff]
        %v1393 = vld [vmem:[#allocation2 + $0x70] sm:$0xff]
        %v1394 = vld [vmem:[#allocation2 + $0x78] sm:$0xff]
        %v1395 = vld [vmem:[#allocation2 + $0x80] sm:$0xff]
        %v1396 = vld [vmem:[#allocation2 + $0x88] sm:$0xff]
        %v1397 = vld [vmem:[#allocation2 + $0x90] sm:$0xff]
        %v1398 = vld [vmem:[#allocation2 + $0x98] sm:$0xff]
        %v1399 = vld [vmem:[#allocation2 + $0xa0] sm:$0xff]
        %v1400 = vld [vmem:[#allocation2 + $0xa8] sm:$0xff]
        %v1401 = vld [vmem:[#allocation2 + $0xb0] sm:$0xff]
        %v1402 = vld [vmem:[#allocation2 + $0xb8] sm:$0xff]
        %v1403 = vld [vmem:[#allocation2 + $0xc0] sm:$0xff]
        %v1404 = vld [vmem:[#allocation2 + $0xc8] sm:$0xff]
        %v1405 = vld [vmem:[#allocation2 + $0xd0] sm:$0xff]
        %v1406 = vld [vmem:[#allocation2 + $0xd8] sm:$0xff]
        %v1407 = vld [vmem:[#allocation2 + $0xe0] sm:$0xff]
        %v1408 = vld [vmem:[#allocation2 + $0xe8] sm:$0xff]
        %v1409 = vld [vmem:[#allocation2 + $0xf0] sm:$0xff]
        %v1410 = vld [vmem:[#allocation2 + $0xf8] sm:$0xff]
        %v1411 = vld [vmem:[#allocation2 + $0x100] sm:$0xff]
        %v1412 = vld [vmem:[#allocation2 + $0x108] sm:$0xff]
        %v1413 = vld [vmem:[#allocation2 + $0x110] sm:$0xff]
        %v1414 = vld [vmem:[#allocation2 + $0x118] sm:$0xff]
        %v1415 = vld [vmem:[#allocation2 + $0x120] sm:$0xff]
        %v1416 = vld [vmem:[#allocation2 + $0x128] sm:$0xff]
        %v1417 = vld [vmem:[#allocation2 + $0x130] sm:$0xff]
        %v1418 = vld [vmem:[#allocation2 + $0x138] sm:$0xff]
        %v1419 = vld [vmem:[#allocation2 + $0x140] sm:$0xff]
        %v1420 = vld [vmem:[#allocation2 + $0x148] sm:$0xff]
        %v1421 = vld [vmem:[#allocation2 + $0x150] sm:$0xff]
        %v1422 = vld [vmem:[#allocation2 + $0x158] sm:$0xff]
        %v1423 = vld [vmem:[#allocation2 + $0x160] sm:$0xff]
        %v1424 = vld [vmem:[#allocation2 + $0x168] sm:$0xff]
        %v1425 = vld [vmem:[#allocation2 + $0x170] sm:$0xff]
        %v1426 = vld [vmem:[#allocation2 + $0x178] sm:$0xff]
        %v1427 = vld [vmem:[#allocation2 + $0x180] sm:$0xff]
        %v1428 = vld [vmem:[#allocation2 + $0x188] sm:$0xff]
        %v1429 = vld [vmem:[#allocation2 + $0x190] sm:$0xff]
        %v1430 = vld [vmem:[#allocation2 + $0x198] sm:$0xff]
        %v1431 = vld [vmem:[#allocation2 + $0x1a0] sm:$0xff]
        %v1432 = vld [vmem:[#allocation2 + $0x1a8] sm:$0xff]
        %v1433 = vld [vmem:[#allocation2 + $0x1b0] sm:$0xff]
        %v1434 = vld [vmem:[#allocation2 + $0x1b8] sm:$0xff]
        %v1435 = vld [vmem:[#allocation2 + $0x1c0] sm:$0xff]
        %v1436 = vld [vmem:[#allocation2 + $0x1c8] sm:$0xff]
        %v1437 = vld [vmem:[#allocation2 + $0x1d0] sm:$0xff]
        %v1438 = vld [vmem:[#allocation2 + $0x1d8] sm:$0xff]
        %v1439 = vld [vmem:[#allocation2 + $0x1e0] sm:$0xff]
        %v1440 = vld [vmem:[#allocation2 + $0x1e8] sm:$0xff]
        %v1441 = vld [vmem:[#allocation2 + $0x1f0] sm:$0xff]
        %v1442 = vld [vmem:[#allocation2 + $0x1f8] sm:$0xf]
        %v1443 = vld [vmem:[%s385 + $0x2] sm:$0xff]
        %v1444 = vld [vmem:[%s385 + $0xa] sm:$0xff]
        %v1445 = vld [vmem:[%s385 + $0x12] sm:$0xff]
        %v1446 = vld [vmem:[%s385 + $0x1a] sm:$0xff]
        %v1447 = vld [vmem:[%s385 + $0x22] sm:$0xff]
        %v1448 = vld [vmem:[%s385 + $0x2a] sm:$0xff]
        %v1449 = vld [vmem:[%s385 + $0x32] sm:$0xff]
        %v1450 = vld [vmem:[%s385 + $0x3a] sm:$0xff]
        %v1451 = vld [vmem:[%s385 + $0x42] sm:$0xff]
        %v1452 = vld [vmem:[%s385 + $0x4a] sm:$0xff]
        %v1453 = vld [vmem:[%s385 + $0x52] sm:$0xff]
        %v1454 = vld [vmem:[%s385 + $0x5a] sm:$0xff]
        %v1455 = vld [vmem:[%s385 + $0x62] sm:$0xff]
        %v1456 = vld [vmem:[%s385 + $0x6a] sm:$0xff]
        %v1457 = vld [vmem:[%s385 + $0x72] sm:$0xff]
        %v1458 = vld [vmem:[%s385 + $0x7a] sm:$0xff]
        %v1459 = vld [vmem:[%s385 + $0x82] sm:$0xff]
        %v1460 = vld [vmem:[%s385 + $0x8a] sm:$0xff]
        %v1461 = vld [vmem:[%s385 + $0x92] sm:$0xff]
        %v1462 = vld [vmem:[%s385 + $0x9a] sm:$0xff]
        %v1463 = vld [vmem:[%s385 + $0xa2] sm:$0xff]
        %v1464 = vld [vmem:[%s385 + $0xaa] sm:$0xff]
        %v1465 = vld [vmem:[%s385 + $0xb2] sm:$0xff]
        %v1466 = vld [vmem:[%s385 + $0xba] sm:$0xff]
        %v1467 = vld [vmem:[%s385 + $0xc2] sm:$0xff]
        %v1468 = vld [vmem:[%s385 + $0xca] sm:$0xff]
        %v1469 = vld [vmem:[%s385 + $0xd2] sm:$0xff]
        %v1470 = vld [vmem:[%s385 + $0xda] sm:$0xff]
        %v1471 = vld [vmem:[%s385 + $0xe2] sm:$0xff]
        %v1472 = vld [vmem:[%s385 + $0xea] sm:$0xff]
        %v1473 = vld [vmem:[%s385 + $0xf2] sm:$0xff]
        %v1474 = vld [vmem:[%s385 + $0xfa] sm:$0xff]
        %v1475 = vld [vmem:[%s385 + $0x102] sm:$0xff]
        %v1476 = vld [vmem:[%s385 + $0x10a] sm:$0xff]
        %v1477 = vld [vmem:[%s385 + $0x112] sm:$0xff]
        %v1478 = vld [vmem:[%s385 + $0x11a] sm:$0xff]
        %v1479 = vld [vmem:[%s385 + $0x122] sm:$0xff]
        %v1480 = vld [vmem:[%s385 + $0x12a] sm:$0xff]
        %v1481 = vld [vmem:[%s385 + $0x132] sm:$0xff]
        %v1482 = vld [vmem:[%s385 + $0x13a] sm:$0xff]
        %v1483 = vld [vmem:[%s385 + $0x142] sm:$0xff]
        %v1484 = vld [vmem:[%s385 + $0x14a] sm:$0xff]
        %v1485 = vld [vmem:[%s385 + $0x152] sm:$0xff]
        %v1486 = vld [vmem:[%s385 + $0x15a] sm:$0xff]
        %v1487 = vld [vmem:[%s385 + $0x162] sm:$0xff]
        %v1488 = vld [vmem:[%s385 + $0x16a] sm:$0xff]
        %v1489 = vld [vmem:[%s385 + $0x172] sm:$0xff]
        %v1490 = vld [vmem:[%s385 + $0x17a] sm:$0xff]
        %v1491 = vld [vmem:[%s385 + $0x182] sm:$0xff]
        %v1492 = vld [vmem:[%s385 + $0x18a] sm:$0xff]
        %v1493 = vld [vmem:[%s385 + $0x192] sm:$0xff]
        %v1494 = vld [vmem:[%s385 + $0x19a] sm:$0xff]
        %v1495 = vld [vmem:[%s385 + $0x1a2] sm:$0xff]
        %v1496 = vld [vmem:[%s385 + $0x1aa] sm:$0xff]
        %v1497 = vld [vmem:[%s385 + $0x1b2] sm:$0xff]
        %v1498 = vld [vmem:[%s385 + $0x1ba] sm:$0xff]
        %v1499 = vld [vmem:[%s385 + $0x1c2] sm:$0xff]
        %v1500 = vld [vmem:[%s385 + $0x1ca] sm:$0xff]
        %v1501 = vld [vmem:[%s385 + $0x1d2] sm:$0xff]
        %v1502 = vld [vmem:[%s385 + $0x1da] sm:$0xff]
        %v1503 = vld [vmem:[%s385 + $0x1e2] sm:$0xff]
        %v1504 = vld [vmem:[%s385 + $0x1ea] sm:$0xff]
        %v1505 = vld [vmem:[%s385 + $0x1f2] sm:$0xff]
        %v1506 = vld [vmem:[%s385 + $0x1fa] sm:$0xf]
        %v1507 = vpack.c.bf16 %v1444, %v1443
        %v1508 = vpack.c.bf16 %v1446, %v1445
        %v1509 = vpack.c.bf16 %v1448, %v1447
        %v1510 = vpack.c.bf16 %v1450, %v1449
        %v1511 = vpack.c.bf16 %v1452, %v1451
        %v1512 = vpack.c.bf16 %v1454, %v1453
        %v1513 = vpack.c.bf16 %v1456, %v1455
        %v1514 = vpack.c.bf16 %v1458, %v1457
        %v1515 = vpack.c.bf16 %v1460, %v1459
        %v1516 = vpack.c.bf16 %v1462, %v1461
        %v1517 = vpack.c.bf16 %v1464, %v1463
        %v1518 = vpack.c.bf16 %v1466, %v1465
        %v1519 = vpack.c.bf16 %v1468, %v1467
        %v1520 = vpack.c.bf16 %v1470, %v1469
        %v1521 = vpack.c.bf16 %v1472, %v1471
        %v1522 = vpack.c.bf16 %v1474, %v1473
        %v1523 = vpack.c.bf16 %v1476, %v1475
        %v1524 = vpack.c.bf16 %v1478, %v1477
        %v1525 = vpack.c.bf16 %v1480, %v1479
        %v1526 = vpack.c.bf16 %v1482, %v1481
        %v1527 = vpack.c.bf16 %v1484, %v1483
        %v1528 = vpack.c.bf16 %v1486, %v1485
        %v1529 = vpack.c.bf16 %v1488, %v1487
        %v1530 = vpack.c.bf16 %v1490, %v1489
        %v1531 = vpack.c.bf16 %v1492, %v1491
        %v1532 = vpack.c.bf16 %v1494, %v1493
        %v1533 = vpack.c.bf16 %v1496, %v1495
        %v1534 = vpack.c.bf16 %v1498, %v1497
        %v1535 = vpack.c.bf16 %v1500, %v1499
        %v1536 = vpack.c.bf16 %v1502, %v1501
        %v1537 = vpack.c.bf16 %v1504, %v1503
        %v1538 = vpack.c.bf16 %v1506, %v1505
        %s1539 = scalar_lea.vmem %s1, 8
        %v1540 = vld [vmem:[%s1539] sm:$0xf]
        %v1542 = vsel %vm485, %v1507, 0
        %v1545 = vsel %vm485, %v1508, 0
        %v1548 = vsel %vm485, %v1509, 0
        %v1551 = vsel %vm485, %v1510, 0
        %v1554 = vsel %vm485, %v1511, 0
        %v1557 = vsel %vm485, %v1512, 0
        %v1560 = vsel %vm485, %v1513, 0
        %v1563 = vsel %vm485, %v1514, 0
        %v1566 = vsel %vm485, %v1515, 0
        %v1569 = vsel %vm485, %v1516, 0
        %v1572 = vsel %vm485, %v1517, 0
        %v1575 = vsel %vm485, %v1518, 0
        %v1578 = vsel %vm485, %v1519, 0
        %v1581 = vsel %vm485, %v1520, 0
        %v1584 = vsel %vm485, %v1521, 0
        %v1587 = vsel %vm485, %v1522, 0
        %v1590 = vsel %vm485, %v1523, 0
        %v1593 = vsel %vm485, %v1524, 0
        %v1596 = vsel %vm485, %v1525, 0
        %v1599 = vsel %vm485, %v1526, 0
        %v1602 = vsel %vm485, %v1527, 0
        %v1605 = vsel %vm485, %v1528, 0
        %v1608 = vsel %vm485, %v1529, 0
        %v1611 = vsel %vm485, %v1530, 0
        %v1614 = vsel %vm485, %v1531, 0
        %v1617 = vsel %vm485, %v1532, 0
        %v1620 = vsel %vm485, %v1533, 0
        %v1623 = vsel %vm485, %v1534, 0
        %v1626 = vsel %vm485, %v1535, 0
        %v1629 = vsel %vm485, %v1536, 0
        %v1632 = vsel %vm485, %v1537, 0
        %v1635 = vsel %vm485, %v1538, 0
        %v1638 = vsel %vm582, %v1540, 0
        %1640 = vmatpush.bf16.msra.mxu0 0
        %1641 = vmatpush.bf16.msra.mxu0 0
        %1642 = vmatpush.bf16.msra.mxu0 0
        %1643 = vmatpush.bf16.msra.mxu0 0
        %1644 = vmatpush.bf16.msra.mxu0 0
        %1645 = vmatpush.bf16.msra.mxu0 0
        %1646 = vmatpush.bf16.msra.mxu0 0
        %1647 = vmatpush.bf16.msra.mxu0 %v1638
        %1648 = vmatmul.bf16.gmra.mxu0 %v1542
        %v1649 = vpop.f32.mrf.mxu0
        %v1650 = vadd.f32 0.0, %v1649
        %v1651 = vpop.f32.mrf.mxu0
        %v1652 = vadd.f32 0.0, %v1651
        %1653 = vmatmul.bf16.gmra.mxu0 %v1545
        %v1654 = vpop.f32.mrf.mxu0
        %v1655 = vadd.f32 0.0, %v1654
        %v1656 = vpop.f32.mrf.mxu0
        %v1657 = vadd.f32 0.0, %v1656
        %1658 = vmatmul.bf16.gmra.mxu0 %v1548
        %v1659 = vpop.f32.mrf.mxu0
        %v1660 = vadd.f32 0.0, %v1659
        %v1661 = vpop.f32.mrf.mxu0
        %v1662 = vadd.f32 0.0, %v1661
        %1663 = vmatmul.bf16.gmra.mxu0 %v1551
        %v1664 = vpop.f32.mrf.mxu0
        %v1665 = vadd.f32 0.0, %v1664
        %v1666 = vpop.f32.mrf.mxu0
        %v1667 = vadd.f32 0.0, %v1666
        %1668 = vmatmul.bf16.gmra.mxu0 %v1554
        %v1669 = vpop.f32.mrf.mxu0
        %v1670 = vadd.f32 0.0, %v1669
        %v1671 = vpop.f32.mrf.mxu0
        %v1672 = vadd.f32 0.0, %v1671
        %1673 = vmatmul.bf16.gmra.mxu0 %v1557
        %v1674 = vpop.f32.mrf.mxu0
        %v1675 = vadd.f32 0.0, %v1674
        %v1676 = vpop.f32.mrf.mxu0
        %v1677 = vadd.f32 0.0, %v1676
        %1678 = vmatmul.bf16.gmra.mxu0 %v1560
        %v1679 = vpop.f32.mrf.mxu0
        %v1680 = vadd.f32 0.0, %v1679
        %v1681 = vpop.f32.mrf.mxu0
        %v1682 = vadd.f32 0.0, %v1681
        %1683 = vmatmul.bf16.gmra.mxu0 %v1563
        %v1684 = vpop.f32.mrf.mxu0
        %v1685 = vadd.f32 0.0, %v1684
        %v1686 = vpop.f32.mrf.mxu0
        %v1687 = vadd.f32 0.0, %v1686
        %1688 = vmatmul.bf16.gmra.mxu0 %v1566
        %v1689 = vpop.f32.mrf.mxu0
        %v1690 = vadd.f32 0.0, %v1689
        %v1691 = vpop.f32.mrf.mxu0
        %v1692 = vadd.f32 0.0, %v1691
        %1693 = vmatmul.bf16.gmra.mxu0 %v1569
        %v1694 = vpop.f32.mrf.mxu0
        %v1695 = vadd.f32 0.0, %v1694
        %v1696 = vpop.f32.mrf.mxu0
        %v1697 = vadd.f32 0.0, %v1696
        %1698 = vmatmul.bf16.gmra.mxu0 %v1572
        %v1699 = vpop.f32.mrf.mxu0
        %v1700 = vadd.f32 0.0, %v1699
        %v1701 = vpop.f32.mrf.mxu0
        %v1702 = vadd.f32 0.0, %v1701
        %1703 = vmatmul.bf16.gmra.mxu0 %v1575
        %v1704 = vpop.f32.mrf.mxu0
        %v1705 = vadd.f32 0.0, %v1704
        %v1706 = vpop.f32.mrf.mxu0
        %v1707 = vadd.f32 0.0, %v1706
        %1708 = vmatmul.bf16.gmra.mxu0 %v1578
        %v1709 = vpop.f32.mrf.mxu0
        %v1710 = vadd.f32 0.0, %v1709
        %v1711 = vpop.f32.mrf.mxu0
        %v1712 = vadd.f32 0.0, %v1711
        %1713 = vmatmul.bf16.gmra.mxu0 %v1581
        %v1714 = vpop.f32.mrf.mxu0
        %v1715 = vadd.f32 0.0, %v1714
        %v1716 = vpop.f32.mrf.mxu0
        %v1717 = vadd.f32 0.0, %v1716
        %1718 = vmatmul.bf16.gmra.mxu0 %v1584
        %v1719 = vpop.f32.mrf.mxu0
        %v1720 = vadd.f32 0.0, %v1719
        %v1721 = vpop.f32.mrf.mxu0
        %v1722 = vadd.f32 0.0, %v1721
        %1723 = vmatmul.bf16.gmra.mxu0 %v1587
        %v1724 = vpop.f32.mrf.mxu0
        %v1725 = vadd.f32 0.0, %v1724
        %v1726 = vpop.f32.mrf.mxu0
        %v1727 = vadd.f32 0.0, %v1726
        %1728 = vmatmul.bf16.gmra.mxu0 %v1590
        %v1729 = vpop.f32.mrf.mxu0
        %v1730 = vadd.f32 0.0, %v1729
        %v1731 = vpop.f32.mrf.mxu0
        %v1732 = vadd.f32 0.0, %v1731
        %1733 = vmatmul.bf16.gmra.mxu0 %v1593
        %v1734 = vpop.f32.mrf.mxu0
        %v1735 = vadd.f32 0.0, %v1734
        %v1736 = vpop.f32.mrf.mxu0
        %v1737 = vadd.f32 0.0, %v1736
        %1738 = vmatmul.bf16.gmra.mxu0 %v1596
        %v1739 = vpop.f32.mrf.mxu0
        %v1740 = vadd.f32 0.0, %v1739
        %v1741 = vpop.f32.mrf.mxu0
        %v1742 = vadd.f32 0.0, %v1741
        %1743 = vmatmul.bf16.gmra.mxu0 %v1599
        %v1744 = vpop.f32.mrf.mxu0
        %v1745 = vadd.f32 0.0, %v1744
        %v1746 = vpop.f32.mrf.mxu0
        %v1747 = vadd.f32 0.0, %v1746
        %1748 = vmatmul.bf16.gmra.mxu0 %v1602
        %v1749 = vpop.f32.mrf.mxu0
        %v1750 = vadd.f32 0.0, %v1749
        %v1751 = vpop.f32.mrf.mxu0
        %v1752 = vadd.f32 0.0, %v1751
        %1753 = vmatmul.bf16.gmra.mxu0 %v1605
        %v1754 = vpop.f32.mrf.mxu0
        %v1755 = vadd.f32 0.0, %v1754
        %v1756 = vpop.f32.mrf.mxu0
        %v1757 = vadd.f32 0.0, %v1756
        %1758 = vmatmul.bf16.gmra.mxu0 %v1608
        %v1759 = vpop.f32.mrf.mxu0
        %v1760 = vadd.f32 0.0, %v1759
        %v1761 = vpop.f32.mrf.mxu0
        %v1762 = vadd.f32 0.0, %v1761
        %1763 = vmatmul.bf16.gmra.mxu0 %v1611
        %v1764 = vpop.f32.mrf.mxu0
        %v1765 = vadd.f32 0.0, %v1764
        %v1766 = vpop.f32.mrf.mxu0
        %v1767 = vadd.f32 0.0, %v1766
        %1768 = vmatmul.bf16.gmra.mxu0 %v1614
        %v1769 = vpop.f32.mrf.mxu0
        %v1770 = vadd.f32 0.0, %v1769
        %v1771 = vpop.f32.mrf.mxu0
        %v1772 = vadd.f32 0.0, %v1771
        %1773 = vmatmul.bf16.gmra.mxu0 %v1617
        %v1774 = vpop.f32.mrf.mxu0
        %v1775 = vadd.f32 0.0, %v1774
        %v1776 = vpop.f32.mrf.mxu0
        %v1777 = vadd.f32 0.0, %v1776
        %1778 = vmatmul.bf16.gmra.mxu0 %v1620
        %v1779 = vpop.f32.mrf.mxu0
        %v1780 = vadd.f32 0.0, %v1779
        %v1781 = vpop.f32.mrf.mxu0
        %v1782 = vadd.f32 0.0, %v1781
        %1783 = vmatmul.bf16.gmra.mxu0 %v1623
        %v1784 = vpop.f32.mrf.mxu0
        %v1785 = vadd.f32 0.0, %v1784
        %v1786 = vpop.f32.mrf.mxu0
        %v1787 = vadd.f32 0.0, %v1786
        %1788 = vmatmul.bf16.gmra.mxu0 %v1626
        %v1789 = vpop.f32.mrf.mxu0
        %v1790 = vadd.f32 0.0, %v1789
        %v1791 = vpop.f32.mrf.mxu0
        %v1792 = vadd.f32 0.0, %v1791
        %1793 = vmatmul.bf16.gmra.mxu0 %v1629
        %v1794 = vpop.f32.mrf.mxu0
        %v1795 = vadd.f32 0.0, %v1794
        %v1796 = vpop.f32.mrf.mxu0
        %v1797 = vadd.f32 0.0, %v1796
        %1798 = vmatmul.bf16.gmra.mxu0 %v1632
        %v1799 = vpop.f32.mrf.mxu0
        %v1800 = vadd.f32 0.0, %v1799
        %v1801 = vpop.f32.mrf.mxu0
        %v1802 = vadd.f32 0.0, %v1801
        %1803 = vmatmul.bf16.gmra.mxu0 %v1635
        %v1804 = vpop.f32.mrf.mxu0
        %v1805 = vadd.f32 0.0, %v1804
        %v1806 = vpop.f32.mrf.mxu0
        %v1807 = vadd.f32 0.0, %v1806
        %1808 = vdwg.mxu0
        %v1809 = vadd.f32 %v1379, %v1650
        %v1810 = vadd.f32 %v1380, %v1652
        %v1811 = vadd.f32 %v1381, %v1655
        %v1812 = vadd.f32 %v1382, %v1657
        %v1813 = vadd.f32 %v1383, %v1660
        %v1814 = vadd.f32 %v1384, %v1662
        %v1815 = vadd.f32 %v1385, %v1665
        %v1816 = vadd.f32 %v1386, %v1667
        %v1817 = vadd.f32 %v1387, %v1670
        %v1818 = vadd.f32 %v1388, %v1672
        %v1819 = vadd.f32 %v1389, %v1675
        %v1820 = vadd.f32 %v1390, %v1677
        %v1821 = vadd.f32 %v1391, %v1680
        %v1822 = vadd.f32 %v1392, %v1682
        %v1823 = vadd.f32 %v1393, %v1685
        %v1824 = vadd.f32 %v1394, %v1687
        %v1825 = vadd.f32 %v1395, %v1690
        %v1826 = vadd.f32 %v1396, %v1692
        %v1827 = vadd.f32 %v1397, %v1695
        %v1828 = vadd.f32 %v1398, %v1697
        %v1829 = vadd.f32 %v1399, %v1700
        %v1830 = vadd.f32 %v1400, %v1702
        %v1831 = vadd.f32 %v1401, %v1705
        %v1832 = vadd.f32 %v1402, %v1707
        %v1833 = vadd.f32 %v1403, %v1710
        %v1834 = vadd.f32 %v1404, %v1712
        %v1835 = vadd.f32 %v1405, %v1715
        %v1836 = vadd.f32 %v1406, %v1717
        %v1837 = vadd.f32 %v1407, %v1720
        %v1838 = vadd.f32 %v1408, %v1722
        %v1839 = vadd.f32 %v1409, %v1725
        %v1840 = vadd.f32 %v1410, %v1727
        %v1841 = vadd.f32 %v1411, %v1730
        %v1842 = vadd.f32 %v1412, %v1732
        %v1843 = vadd.f32 %v1413, %v1735
        %v1844 = vadd.f32 %v1414, %v1737
        %v1845 = vadd.f32 %v1415, %v1740
        %v1846 = vadd.f32 %v1416, %v1742
        %v1847 = vadd.f32 %v1417, %v1745
        %v1848 = vadd.f32 %v1418, %v1747
        %v1849 = vadd.f32 %v1419, %v1750
        %v1850 = vadd.f32 %v1420, %v1752
        %v1851 = vadd.f32 %v1421, %v1755
        %v1852 = vadd.f32 %v1422, %v1757
        %v1853 = vadd.f32 %v1423, %v1760
        %v1854 = vadd.f32 %v1424, %v1762
        %v1855 = vadd.f32 %v1425, %v1765
        %v1856 = vadd.f32 %v1426, %v1767
        %v1857 = vadd.f32 %v1427, %v1770
        %v1858 = vadd.f32 %v1428, %v1772
        %v1859 = vadd.f32 %v1429, %v1775
        %v1860 = vadd.f32 %v1430, %v1777
        %v1861 = vadd.f32 %v1431, %v1780
        %v1862 = vadd.f32 %v1432, %v1782
        %v1863 = vadd.f32 %v1433, %v1785
        %v1864 = vadd.f32 %v1434, %v1787
        %v1865 = vadd.f32 %v1435, %v1790
        %v1866 = vadd.f32 %v1436, %v1792
        %v1867 = vadd.f32 %v1437, %v1795
        %v1868 = vadd.f32 %v1438, %v1797
        %v1869 = vadd.f32 %v1439, %v1800
        %v1870 = vadd.f32 %v1440, %v1802
        %v1871 = vadd.f32 %v1441, %v1805
        %v1872 = vadd.f32 %v1442, %v1807
        %1873 = vst.msk [vmem:[#allocation2] sm:$0xff] %vm755, %v1809
        %1874 = vst.msk [vmem:[#allocation2 + $0x8] sm:$0xff] %vm755, %v1810
        %1875 = vst.msk [vmem:[#allocation2 + $0x10] sm:$0xff] %vm755, %v1811
        %1876 = vst.msk [vmem:[#allocation2 + $0x18] sm:$0xff] %vm755, %v1812
        %1877 = vst.msk [vmem:[#allocation2 + $0x20] sm:$0xff] %vm755, %v1813
        %1878 = vst.msk [vmem:[#allocation2 + $0x28] sm:$0xff] %vm755, %v1814
        %1879 = vst.msk [vmem:[#allocation2 + $0x30] sm:$0xff] %vm755, %v1815
        %1880 = vst.msk [vmem:[#allocation2 + $0x38] sm:$0xff] %vm755, %v1816
        %1881 = vst.msk [vmem:[#allocation2 + $0x40] sm:$0xff] %vm755, %v1817
        %1882 = vst.msk [vmem:[#allocation2 + $0x48] sm:$0xff] %vm755, %v1818
        %1883 = vst.msk [vmem:[#allocation2 + $0x50] sm:$0xff] %vm755, %v1819
        %1884 = vst.msk [vmem:[#allocation2 + $0x58] sm:$0xff] %vm755, %v1820
        %1885 = vst.msk [vmem:[#allocation2 + $0x60] sm:$0xff] %vm755, %v1821
        %1886 = vst.msk [vmem:[#allocation2 + $0x68] sm:$0xff] %vm755, %v1822
        %1887 = vst.msk [vmem:[#allocation2 + $0x70] sm:$0xff] %vm755, %v1823
        %1888 = vst.msk [vmem:[#allocation2 + $0x78] sm:$0xff] %vm755, %v1824
        %1889 = vst.msk [vmem:[#allocation2 + $0x80] sm:$0xff] %vm755, %v1825
        %1890 = vst.msk [vmem:[#allocation2 + $0x88] sm:$0xff] %vm755, %v1826
        %1891 = vst.msk [vmem:[#allocation2 + $0x90] sm:$0xff] %vm755, %v1827
        %1892 = vst.msk [vmem:[#allocation2 + $0x98] sm:$0xff] %vm755, %v1828
        %1893 = vst.msk [vmem:[#allocation2 + $0xa0] sm:$0xff] %vm755, %v1829
        %1894 = vst.msk [vmem:[#allocation2 + $0xa8] sm:$0xff] %vm755, %v1830
        %1895 = vst.msk [vmem:[#allocation2 + $0xb0] sm:$0xff] %vm755, %v1831
        %1896 = vst.msk [vmem:[#allocation2 + $0xb8] sm:$0xff] %vm755, %v1832
        %1897 = vst.msk [vmem:[#allocation2 + $0xc0] sm:$0xff] %vm755, %v1833
        %1898 = vst.msk [vmem:[#allocation2 + $0xc8] sm:$0xff] %vm755, %v1834
        %1899 = vst.msk [vmem:[#allocation2 + $0xd0] sm:$0xff] %vm755, %v1835
        %1900 = vst.msk [vmem:[#allocation2 + $0xd8] sm:$0xff] %vm755, %v1836
        %1901 = vst.msk [vmem:[#allocation2 + $0xe0] sm:$0xff] %vm755, %v1837
        %1902 = vst.msk [vmem:[#allocation2 + $0xe8] sm:$0xff] %vm755, %v1838
        %1903 = vst.msk [vmem:[#allocation2 + $0xf0] sm:$0xff] %vm755, %v1839
        %1904 = vst.msk [vmem:[#allocation2 + $0xf8] sm:$0xff] %vm755, %v1840
        %1905 = vst.msk [vmem:[#allocation2 + $0x100] sm:$0xff] %vm755, %v1841
        %1906 = vst.msk [vmem:[#allocation2 + $0x108] sm:$0xff] %vm755, %v1842
        %1907 = vst.msk [vmem:[#allocation2 + $0x110] sm:$0xff] %vm755, %v1843
        %1908 = vst.msk [vmem:[#allocation2 + $0x118] sm:$0xff] %vm755, %v1844
        %1909 = vst.msk [vmem:[#allocation2 + $0x120] sm:$0xff] %vm755, %v1845
        %1910 = vst.msk [vmem:[#allocation2 + $0x128] sm:$0xff] %vm755, %v1846
        %1911 = vst.msk [vmem:[#allocation2 + $0x130] sm:$0xff] %vm755, %v1847
        %1912 = vst.msk [vmem:[#allocation2 + $0x138] sm:$0xff] %vm755, %v1848
        %1913 = vst.msk [vmem:[#allocation2 + $0x140] sm:$0xff] %vm755, %v1849
        %1914 = vst.msk [vmem:[#allocation2 + $0x148] sm:$0xff] %vm755, %v1850
        %1915 = vst.msk [vmem:[#allocation2 + $0x150] sm:$0xff] %vm755, %v1851
        %1916 = vst.msk [vmem:[#allocation2 + $0x158] sm:$0xff] %vm755, %v1852
        %1917 = vst.msk [vmem:[#allocation2 + $0x160] sm:$0xff] %vm755, %v1853
        %1918 = vst.msk [vmem:[#allocation2 + $0x168] sm:$0xff] %vm755, %v1854
        %1919 = vst.msk [vmem:[#allocation2 + $0x170] sm:$0xff] %vm755, %v1855
        %1920 = vst.msk [vmem:[#allocation2 + $0x178] sm:$0xff] %vm755, %v1856
        %1921 = vst.msk [vmem:[#allocation2 + $0x180] sm:$0xff] %vm755, %v1857
        %1922 = vst.msk [vmem:[#allocation2 + $0x188] sm:$0xff] %vm755, %v1858
        %1923 = vst.msk [vmem:[#allocation2 + $0x190] sm:$0xff] %vm755, %v1859
        %1924 = vst.msk [vmem:[#allocation2 + $0x198] sm:$0xff] %vm755, %v1860
        %1925 = vst.msk [vmem:[#allocation2 + $0x1a0] sm:$0xff] %vm755, %v1861
        %1926 = vst.msk [vmem:[#allocation2 + $0x1a8] sm:$0xff] %vm755, %v1862
        %1927 = vst.msk [vmem:[#allocation2 + $0x1b0] sm:$0xff] %vm755, %v1863
        %1928 = vst.msk [vmem:[#allocation2 + $0x1b8] sm:$0xff] %vm755, %v1864
        %1929 = vst.msk [vmem:[#allocation2 + $0x1c0] sm:$0xff] %vm755, %v1865
        %1930 = vst.msk [vmem:[#allocation2 + $0x1c8] sm:$0xff] %vm755, %v1866
        %1931 = vst.msk [vmem:[#allocation2 + $0x1d0] sm:$0xff] %vm755, %v1867
        %1932 = vst.msk [vmem:[#allocation2 + $0x1d8] sm:$0xff] %vm755, %v1868
        %1933 = vst.msk [vmem:[#allocation2 + $0x1e0] sm:$0xff] %vm755, %v1869
        %1934 = vst.msk [vmem:[#allocation2 + $0x1e8] sm:$0xff] %vm755, %v1870
        %1935 = vst.msk [vmem:[#allocation2 + $0x1f0] sm:$0xff] %vm755, %v1871
        %1936 = vst.msk [vmem:[#allocation2 + $0x1f8] sm:$0xf] %vm819, %v1872
        %v1937 = vld [vmem:[#allocation2] sm:$0xff]
        %v1938 = vld [vmem:[#allocation2 + $0x8] sm:$0xff]
        %v1939 = vld [vmem:[#allocation2 + $0x10] sm:$0xff]
        %v1940 = vld [vmem:[#allocation2 + $0x18] sm:$0xff]
        %v1941 = vld [vmem:[#allocation2 + $0x20] sm:$0xff]
        %v1942 = vld [vmem:[#allocation2 + $0x28] sm:$0xff]
        %v1943 = vld [vmem:[#allocation2 + $0x30] sm:$0xff]
        %v1944 = vld [vmem:[#allocation2 + $0x38] sm:$0xff]
        %v1945 = vld [vmem:[#allocation2 + $0x40] sm:$0xff]
        %v1946 = vld [vmem:[#allocation2 + $0x48] sm:$0xff]
        %v1947 = vld [vmem:[#allocation2 + $0x50] sm:$0xff]
        %v1948 = vld [vmem:[#allocation2 + $0x58] sm:$0xff]
        %v1949 = vld [vmem:[#allocation2 + $0x60] sm:$0xff]
        %v1950 = vld [vmem:[#allocation2 + $0x68] sm:$0xff]
        %v1951 = vld [vmem:[#allocation2 + $0x70] sm:$0xff]
        %v1952 = vld [vmem:[#allocation2 + $0x78] sm:$0xff]
        %v1953 = vld [vmem:[#allocation2 + $0x80] sm:$0xff]
        %v1954 = vld [vmem:[#allocation2 + $0x88] sm:$0xff]
        %v1955 = vld [vmem:[#allocation2 + $0x90] sm:$0xff]
        %v1956 = vld [vmem:[#allocation2 + $0x98] sm:$0xff]
        %v1957 = vld [vmem:[#allocation2 + $0xa0] sm:$0xff]
        %v1958 = vld [vmem:[#allocation2 + $0xa8] sm:$0xff]
        %v1959 = vld [vmem:[#allocation2 + $0xb0] sm:$0xff]
        %v1960 = vld [vmem:[#allocation2 + $0xb8] sm:$0xff]
        %v1961 = vld [vmem:[#allocation2 + $0xc0] sm:$0xff]
        %v1962 = vld [vmem:[#allocation2 + $0xc8] sm:$0xff]
        %v1963 = vld [vmem:[#allocation2 + $0xd0] sm:$0xff]
        %v1964 = vld [vmem:[#allocation2 + $0xd8] sm:$0xff]
        %v1965 = vld [vmem:[#allocation2 + $0xe0] sm:$0xff]
        %v1966 = vld [vmem:[#allocation2 + $0xe8] sm:$0xff]
        %v1967 = vld [vmem:[#allocation2 + $0xf0] sm:$0xff]
        %v1968 = vld [vmem:[#allocation2 + $0xf8] sm:$0xff]
        %v1969 = vld [vmem:[#allocation2 + $0x100] sm:$0xff]
        %v1970 = vld [vmem:[#allocation2 + $0x108] sm:$0xff]
        %v1971 = vld [vmem:[#allocation2 + $0x110] sm:$0xff]
        %v1972 = vld [vmem:[#allocation2 + $0x118] sm:$0xff]
        %v1973 = vld [vmem:[#allocation2 + $0x120] sm:$0xff]
        %v1974 = vld [vmem:[#allocation2 + $0x128] sm:$0xff]
        %v1975 = vld [vmem:[#allocation2 + $0x130] sm:$0xff]
        %v1976 = vld [vmem:[#allocation2 + $0x138] sm:$0xff]
        %v1977 = vld [vmem:[#allocation2 + $0x140] sm:$0xff]
        %v1978 = vld [vmem:[#allocation2 + $0x148] sm:$0xff]
        %v1979 = vld [vmem:[#allocation2 + $0x150] sm:$0xff]
        %v1980 = vld [vmem:[#allocation2 + $0x158] sm:$0xff]
        %v1981 = vld [vmem:[#allocation2 + $0x160] sm:$0xff]
        %v1982 = vld [vmem:[#allocation2 + $0x168] sm:$0xff]
        %v1983 = vld [vmem:[#allocation2 + $0x170] sm:$0xff]
        %v1984 = vld [vmem:[#allocation2 + $0x178] sm:$0xff]
        %v1985 = vld [vmem:[#allocation2 + $0x180] sm:$0xff]
        %v1986 = vld [vmem:[#allocation2 + $0x188] sm:$0xff]
        %v1987 = vld [vmem:[#allocation2 + $0x190] sm:$0xff]
        %v1988 = vld [vmem:[#allocation2 + $0x198] sm:$0xff]
        %v1989 = vld [vmem:[#allocation2 + $0x1a0] sm:$0xff]
        %v1990 = vld [vmem:[#allocation2 + $0x1a8] sm:$0xff]
        %v1991 = vld [vmem:[#allocation2 + $0x1b0] sm:$0xff]
        %v1992 = vld [vmem:[#allocation2 + $0x1b8] sm:$0xff]
        %v1993 = vld [vmem:[#allocation2 + $0x1c0] sm:$0xff]
        %v1994 = vld [vmem:[#allocation2 + $0x1c8] sm:$0xff]
        %v1995 = vld [vmem:[#allocation2 + $0x1d0] sm:$0xff]
        %v1996 = vld [vmem:[#allocation2 + $0x1d8] sm:$0xff]
        %v1997 = vld [vmem:[#allocation2 + $0x1e0] sm:$0xff]
        %v1998 = vld [vmem:[#allocation2 + $0x1e8] sm:$0xff]
        %v1999 = vld [vmem:[#allocation2 + $0x1f0] sm:$0xff]
        %v2000 = vld [vmem:[#allocation2 + $0x1f8] sm:$0xf]
        %v2001 = vld [vmem:[%s385 + $0x3] sm:$0xff]
        %v2002 = vld [vmem:[%s385 + $0xb] sm:$0xff]
        %v2003 = vld [vmem:[%s385 + $0x13] sm:$0xff]
        %v2004 = vld [vmem:[%s385 + $0x1b] sm:$0xff]
        %v2005 = vld [vmem:[%s385 + $0x23] sm:$0xff]
        %v2006 = vld [vmem:[%s385 + $0x2b] sm:$0xff]
        %v2007 = vld [vmem:[%s385 + $0x33] sm:$0xff]
        %v2008 = vld [vmem:[%s385 + $0x3b] sm:$0xff]
        %v2009 = vld [vmem:[%s385 + $0x43] sm:$0xff]
        %v2010 = vld [vmem:[%s385 + $0x4b] sm:$0xff]
        %v2011 = vld [vmem:[%s385 + $0x53] sm:$0xff]
        %v2012 = vld [vmem:[%s385 + $0x5b] sm:$0xff]
        %v2013 = vld [vmem:[%s385 + $0x63] sm:$0xff]
        %v2014 = vld [vmem:[%s385 + $0x6b] sm:$0xff]
        %v2015 = vld [vmem:[%s385 + $0x73] sm:$0xff]
        %v2016 = vld [vmem:[%s385 + $0x7b] sm:$0xff]
        %v2017 = vld [vmem:[%s385 + $0x83] sm:$0xff]
        %v2018 = vld [vmem:[%s385 + $0x8b] sm:$0xff]
        %v2019 = vld [vmem:[%s385 + $0x93] sm:$0xff]
        %v2020 = vld [vmem:[%s385 + $0x9b] sm:$0xff]
        %v2021 = vld [vmem:[%s385 + $0xa3] sm:$0xff]
        %v2022 = vld [vmem:[%s385 + $0xab] sm:$0xff]
        %v2023 = vld [vmem:[%s385 + $0xb3] sm:$0xff]
        %v2024 = vld [vmem:[%s385 + $0xbb] sm:$0xff]
        %v2025 = vld [vmem:[%s385 + $0xc3] sm:$0xff]
        %v2026 = vld [vmem:[%s385 + $0xcb] sm:$0xff]
        %v2027 = vld [vmem:[%s385 + $0xd3] sm:$0xff]
        %v2028 = vld [vmem:[%s385 + $0xdb] sm:$0xff]
        %v2029 = vld [vmem:[%s385 + $0xe3] sm:$0xff]
        %v2030 = vld [vmem:[%s385 + $0xeb] sm:$0xff]
        %v2031 = vld [vmem:[%s385 + $0xf3] sm:$0xff]
        %v2032 = vld [vmem:[%s385 + $0xfb] sm:$0xff]
        %v2033 = vld [vmem:[%s385 + $0x103] sm:$0xff]
        %v2034 = vld [vmem:[%s385 + $0x10b] sm:$0xff]
        %v2035 = vld [vmem:[%s385 + $0x113] sm:$0xff]
        %v2036 = vld [vmem:[%s385 + $0x11b] sm:$0xff]
        %v2037 = vld [vmem:[%s385 + $0x123] sm:$0xff]
        %v2038 = vld [vmem:[%s385 + $0x12b] sm:$0xff]
        %v2039 = vld [vmem:[%s385 + $0x133] sm:$0xff]
        %v2040 = vld [vmem:[%s385 + $0x13b] sm:$0xff]
        %v2041 = vld [vmem:[%s385 + $0x143] sm:$0xff]
        %v2042 = vld [vmem:[%s385 + $0x14b] sm:$0xff]
        %v2043 = vld [vmem:[%s385 + $0x153] sm:$0xff]
        %v2044 = vld [vmem:[%s385 + $0x15b] sm:$0xff]
        %v2045 = vld [vmem:[%s385 + $0x163] sm:$0xff]
        %v2046 = vld [vmem:[%s385 + $0x16b] sm:$0xff]
        %v2047 = vld [vmem:[%s385 + $0x173] sm:$0xff]
        %v2048 = vld [vmem:[%s385 + $0x17b] sm:$0xff]
        %v2049 = vld [vmem:[%s385 + $0x183] sm:$0xff]
        %v2050 = vld [vmem:[%s385 + $0x18b] sm:$0xff]
        %v2051 = vld [vmem:[%s385 + $0x193] sm:$0xff]
        %v2052 = vld [vmem:[%s385 + $0x19b] sm:$0xff]
        %v2053 = vld [vmem:[%s385 + $0x1a3] sm:$0xff]
        %v2054 = vld [vmem:[%s385 + $0x1ab] sm:$0xff]
        %v2055 = vld [vmem:[%s385 + $0x1b3] sm:$0xff]
        %v2056 = vld [vmem:[%s385 + $0x1bb] sm:$0xff]
        %v2057 = vld [vmem:[%s385 + $0x1c3] sm:$0xff]
        %v2058 = vld [vmem:[%s385 + $0x1cb] sm:$0xff]
        %v2059 = vld [vmem:[%s385 + $0x1d3] sm:$0xff]
        %v2060 = vld [vmem:[%s385 + $0x1db] sm:$0xff]
        %v2061 = vld [vmem:[%s385 + $0x1e3] sm:$0xff]
        %v2062 = vld [vmem:[%s385 + $0x1eb] sm:$0xff]
        %v2063 = vld [vmem:[%s385 + $0x1f3] sm:$0xff]
        %v2064 = vld [vmem:[%s385 + $0x1fb] sm:$0xf]
        %v2065 = vpack.c.bf16 %v2002, %v2001
        %v2066 = vpack.c.bf16 %v2004, %v2003
        %v2067 = vpack.c.bf16 %v2006, %v2005
        %v2068 = vpack.c.bf16 %v2008, %v2007
        %v2069 = vpack.c.bf16 %v2010, %v2009
        %v2070 = vpack.c.bf16 %v2012, %v2011
        %v2071 = vpack.c.bf16 %v2014, %v2013
        %v2072 = vpack.c.bf16 %v2016, %v2015
        %v2073 = vpack.c.bf16 %v2018, %v2017
        %v2074 = vpack.c.bf16 %v2020, %v2019
        %v2075 = vpack.c.bf16 %v2022, %v2021
        %v2076 = vpack.c.bf16 %v2024, %v2023
        %v2077 = vpack.c.bf16 %v2026, %v2025
        %v2078 = vpack.c.bf16 %v2028, %v2027
        %v2079 = vpack.c.bf16 %v2030, %v2029
        %v2080 = vpack.c.bf16 %v2032, %v2031
        %v2081 = vpack.c.bf16 %v2034, %v2033
        %v2082 = vpack.c.bf16 %v2036, %v2035
        %v2083 = vpack.c.bf16 %v2038, %v2037
        %v2084 = vpack.c.bf16 %v2040, %v2039
        %v2085 = vpack.c.bf16 %v2042, %v2041
        %v2086 = vpack.c.bf16 %v2044, %v2043
        %v2087 = vpack.c.bf16 %v2046, %v2045
        %v2088 = vpack.c.bf16 %v2048, %v2047
        %v2089 = vpack.c.bf16 %v2050, %v2049
        %v2090 = vpack.c.bf16 %v2052, %v2051
        %v2091 = vpack.c.bf16 %v2054, %v2053
        %v2092 = vpack.c.bf16 %v2056, %v2055
        %v2093 = vpack.c.bf16 %v2058, %v2057
        %v2094 = vpack.c.bf16 %v2060, %v2059
        %v2095 = vpack.c.bf16 %v2062, %v2061
        %v2096 = vpack.c.bf16 %v2064, %v2063
        %s2097 = scalar_lea.vmem %s1, 12
        %v2098 = vld [vmem:[%s2097] sm:$0xf]
        %v2100 = vsel %vm485, %v2065, 0
        %v2103 = vsel %vm485, %v2066, 0
        %v2106 = vsel %vm485, %v2067, 0
        %v2109 = vsel %vm485, %v2068, 0
        %v2112 = vsel %vm485, %v2069, 0
        %v2115 = vsel %vm485, %v2070, 0
        %v2118 = vsel %vm485, %v2071, 0
        %v2121 = vsel %vm485, %v2072, 0
        %v2124 = vsel %vm485, %v2073, 0
        %v2127 = vsel %vm485, %v2074, 0
        %v2130 = vsel %vm485, %v2075, 0
        %v2133 = vsel %vm485, %v2076, 0
        %v2136 = vsel %vm485, %v2077, 0
        %v2139 = vsel %vm485, %v2078, 0
        %v2142 = vsel %vm485, %v2079, 0
        %v2145 = vsel %vm485, %v2080, 0
        %v2148 = vsel %vm485, %v2081, 0
        %v2151 = vsel %vm485, %v2082, 0
        %v2154 = vsel %vm485, %v2083, 0
        %v2157 = vsel %vm485, %v2084, 0
        %v2160 = vsel %vm485, %v2085, 0
        %v2163 = vsel %vm485, %v2086, 0
        %v2166 = vsel %vm485, %v2087, 0
        %v2169 = vsel %vm485, %v2088, 0
        %v2172 = vsel %vm485, %v2089, 0
        %v2175 = vsel %vm485, %v2090, 0
        %v2178 = vsel %vm485, %v2091, 0
        %v2181 = vsel %vm485, %v2092, 0
        %v2184 = vsel %vm485, %v2093, 0
        %v2187 = vsel %vm485, %v2094, 0
        %v2190 = vsel %vm485, %v2095, 0
        %v2193 = vsel %vm485, %v2096, 0
        %v2196 = vsel %vm582, %v2098, 0
        %2198 = vmatpush.bf16.msra.mxu0 0
        %2199 = vmatpush.bf16.msra.mxu0 0
        %2200 = vmatpush.bf16.msra.mxu0 0
        %2201 = vmatpush.bf16.msra.mxu0 0
        %2202 = vmatpush.bf16.msra.mxu0 0
        %2203 = vmatpush.bf16.msra.mxu0 0
        %2204 = vmatpush.bf16.msra.mxu0 0
        %2205 = vmatpush.bf16.msra.mxu0 %v2196
        %2206 = vmatmul.bf16.gmra.mxu0 %v2100
        %v2207 = vpop.f32.mrf.mxu0
        %v2208 = vadd.f32 0.0, %v2207
        %v2209 = vpop.f32.mrf.mxu0
        %v2210 = vadd.f32 0.0, %v2209
        %2211 = vmatmul.bf16.gmra.mxu0 %v2103
        %v2212 = vpop.f32.mrf.mxu0
        %v2213 = vadd.f32 0.0, %v2212
        %v2214 = vpop.f32.mrf.mxu0
        %v2215 = vadd.f32 0.0, %v2214
        %2216 = vmatmul.bf16.gmra.mxu0 %v2106
        %v2217 = vpop.f32.mrf.mxu0
        %v2218 = vadd.f32 0.0, %v2217
        %v2219 = vpop.f32.mrf.mxu0
        %v2220 = vadd.f32 0.0, %v2219
        %2221 = vmatmul.bf16.gmra.mxu0 %v2109
        %v2222 = vpop.f32.mrf.mxu0
        %v2223 = vadd.f32 0.0, %v2222
        %v2224 = vpop.f32.mrf.mxu0
        %v2225 = vadd.f32 0.0, %v2224
        %2226 = vmatmul.bf16.gmra.mxu0 %v2112
        %v2227 = vpop.f32.mrf.mxu0
        %v2228 = vadd.f32 0.0, %v2227
        %v2229 = vpop.f32.mrf.mxu0
        %v2230 = vadd.f32 0.0, %v2229
        %2231 = vmatmul.bf16.gmra.mxu0 %v2115
        %v2232 = vpop.f32.mrf.mxu0
        %v2233 = vadd.f32 0.0, %v2232
        %v2234 = vpop.f32.mrf.mxu0
        %v2235 = vadd.f32 0.0, %v2234
        %2236 = vmatmul.bf16.gmra.mxu0 %v2118
        %v2237 = vpop.f32.mrf.mxu0
        %v2238 = vadd.f32 0.0, %v2237
        %v2239 = vpop.f32.mrf.mxu0
        %v2240 = vadd.f32 0.0, %v2239
        %2241 = vmatmul.bf16.gmra.mxu0 %v2121
        %v2242 = vpop.f32.mrf.mxu0
        %v2243 = vadd.f32 0.0, %v2242
        %v2244 = vpop.f32.mrf.mxu0
        %v2245 = vadd.f32 0.0, %v2244
        %2246 = vmatmul.bf16.gmra.mxu0 %v2124
        %v2247 = vpop.f32.mrf.mxu0
        %v2248 = vadd.f32 0.0, %v2247
        %v2249 = vpop.f32.mrf.mxu0
        %v2250 = vadd.f32 0.0, %v2249
        %2251 = vmatmul.bf16.gmra.mxu0 %v2127
        %v2252 = vpop.f32.mrf.mxu0
        %v2253 = vadd.f32 0.0, %v2252
        %v2254 = vpop.f32.mrf.mxu0
        %v2255 = vadd.f32 0.0, %v2254
        %2256 = vmatmul.bf16.gmra.mxu0 %v2130
        %v2257 = vpop.f32.mrf.mxu0
        %v2258 = vadd.f32 0.0, %v2257
        %v2259 = vpop.f32.mrf.mxu0
        %v2260 = vadd.f32 0.0, %v2259
        %2261 = vmatmul.bf16.gmra.mxu0 %v2133
        %v2262 = vpop.f32.mrf.mxu0
        %v2263 = vadd.f32 0.0, %v2262
        %v2264 = vpop.f32.mrf.mxu0
        %v2265 = vadd.f32 0.0, %v2264
        %2266 = vmatmul.bf16.gmra.mxu0 %v2136
        %v2267 = vpop.f32.mrf.mxu0
        %v2268 = vadd.f32 0.0, %v2267
        %v2269 = vpop.f32.mrf.mxu0
        %v2270 = vadd.f32 0.0, %v2269
        %2271 = vmatmul.bf16.gmra.mxu0 %v2139
        %v2272 = vpop.f32.mrf.mxu0
        %v2273 = vadd.f32 0.0, %v2272
        %v2274 = vpop.f32.mrf.mxu0
        %v2275 = vadd.f32 0.0, %v2274
        %2276 = vmatmul.bf16.gmra.mxu0 %v2142
        %v2277 = vpop.f32.mrf.mxu0
        %v2278 = vadd.f32 0.0, %v2277
        %v2279 = vpop.f32.mrf.mxu0
        %v2280 = vadd.f32 0.0, %v2279
        %2281 = vmatmul.bf16.gmra.mxu0 %v2145
        %v2282 = vpop.f32.mrf.mxu0
        %v2283 = vadd.f32 0.0, %v2282
        %v2284 = vpop.f32.mrf.mxu0
        %v2285 = vadd.f32 0.0, %v2284
        %2286 = vmatmul.bf16.gmra.mxu0 %v2148
        %v2287 = vpop.f32.mrf.mxu0
        %v2288 = vadd.f32 0.0, %v2287
        %v2289 = vpop.f32.mrf.mxu0
        %v2290 = vadd.f32 0.0, %v2289
        %2291 = vmatmul.bf16.gmra.mxu0 %v2151
        %v2292 = vpop.f32.mrf.mxu0
        %v2293 = vadd.f32 0.0, %v2292
        %v2294 = vpop.f32.mrf.mxu0
        %v2295 = vadd.f32 0.0, %v2294
        %2296 = vmatmul.bf16.gmra.mxu0 %v2154
        %v2297 = vpop.f32.mrf.mxu0
        %v2298 = vadd.f32 0.0, %v2297
        %v2299 = vpop.f32.mrf.mxu0
        %v2300 = vadd.f32 0.0, %v2299
        %2301 = vmatmul.bf16.gmra.mxu0 %v2157
        %v2302 = vpop.f32.mrf.mxu0
        %v2303 = vadd.f32 0.0, %v2302
        %v2304 = vpop.f32.mrf.mxu0
        %v2305 = vadd.f32 0.0, %v2304
        %2306 = vmatmul.bf16.gmra.mxu0 %v2160
        %v2307 = vpop.f32.mrf.mxu0
        %v2308 = vadd.f32 0.0, %v2307
        %v2309 = vpop.f32.mrf.mxu0
        %v2310 = vadd.f32 0.0, %v2309
        %2311 = vmatmul.bf16.gmra.mxu0 %v2163
        %v2312 = vpop.f32.mrf.mxu0
        %v2313 = vadd.f32 0.0, %v2312
        %v2314 = vpop.f32.mrf.mxu0
        %v2315 = vadd.f32 0.0, %v2314
        %2316 = vmatmul.bf16.gmra.mxu0 %v2166
        %v2317 = vpop.f32.mrf.mxu0
        %v2318 = vadd.f32 0.0, %v2317
        %v2319 = vpop.f32.mrf.mxu0
        %v2320 = vadd.f32 0.0, %v2319
        %2321 = vmatmul.bf16.gmra.mxu0 %v2169
        %v2322 = vpop.f32.mrf.mxu0
        %v2323 = vadd.f32 0.0, %v2322
        %v2324 = vpop.f32.mrf.mxu0
        %v2325 = vadd.f32 0.0, %v2324
        %2326 = vmatmul.bf16.gmra.mxu0 %v2172
        %v2327 = vpop.f32.mrf.mxu0
        %v2328 = vadd.f32 0.0, %v2327
        %v2329 = vpop.f32.mrf.mxu0
        %v2330 = vadd.f32 0.0, %v2329
        %2331 = vmatmul.bf16.gmra.mxu0 %v2175
        %v2332 = vpop.f32.mrf.mxu0
        %v2333 = vadd.f32 0.0, %v2332
        %v2334 = vpop.f32.mrf.mxu0
        %v2335 = vadd.f32 0.0, %v2334
        %2336 = vmatmul.bf16.gmra.mxu0 %v2178
        %v2337 = vpop.f32.mrf.mxu0
        %v2338 = vadd.f32 0.0, %v2337
        %v2339 = vpop.f32.mrf.mxu0
        %v2340 = vadd.f32 0.0, %v2339
        %2341 = vmatmul.bf16.gmra.mxu0 %v2181
        %v2342 = vpop.f32.mrf.mxu0
        %v2343 = vadd.f32 0.0, %v2342
        %v2344 = vpop.f32.mrf.mxu0
        %v2345 = vadd.f32 0.0, %v2344
        %2346 = vmatmul.bf16.gmra.mxu0 %v2184
        %v2347 = vpop.f32.mrf.mxu0
        %v2348 = vadd.f32 0.0, %v2347
        %v2349 = vpop.f32.mrf.mxu0
        %v2350 = vadd.f32 0.0, %v2349
        %2351 = vmatmul.bf16.gmra.mxu0 %v2187
        %v2352 = vpop.f32.mrf.mxu0
        %v2353 = vadd.f32 0.0, %v2352
        %v2354 = vpop.f32.mrf.mxu0
        %v2355 = vadd.f32 0.0, %v2354
        %2356 = vmatmul.bf16.gmra.mxu0 %v2190
        %v2357 = vpop.f32.mrf.mxu0
        %v2358 = vadd.f32 0.0, %v2357
        %v2359 = vpop.f32.mrf.mxu0
        %v2360 = vadd.f32 0.0, %v2359
        %2361 = vmatmul.bf16.gmra.mxu0 %v2193
        %v2362 = vpop.f32.mrf.mxu0
        %v2363 = vadd.f32 0.0, %v2362
        %v2364 = vpop.f32.mrf.mxu0
        %v2365 = vadd.f32 0.0, %v2364
        %2366 = vdwg.mxu0
        %v2367 = vadd.f32 %v1937, %v2208
        %v2368 = vadd.f32 %v1938, %v2210
        %v2369 = vadd.f32 %v1939, %v2213
        %v2370 = vadd.f32 %v1940, %v2215
        %v2371 = vadd.f32 %v1941, %v2218
        %v2372 = vadd.f32 %v1942, %v2220
        %v2373 = vadd.f32 %v1943, %v2223
        %v2374 = vadd.f32 %v1944, %v2225
        %v2375 = vadd.f32 %v1945, %v2228
        %v2376 = vadd.f32 %v1946, %v2230
        %v2377 = vadd.f32 %v1947, %v2233
        %v2378 = vadd.f32 %v1948, %v2235
        %v2379 = vadd.f32 %v1949, %v2238
        %v2380 = vadd.f32 %v1950, %v2240
        %v2381 = vadd.f32 %v1951, %v2243
        %v2382 = vadd.f32 %v1952, %v2245
        %v2383 = vadd.f32 %v1953, %v2248
        %v2384 = vadd.f32 %v1954, %v2250
        %v2385 = vadd.f32 %v1955, %v2253
        %v2386 = vadd.f32 %v1956, %v2255
        %v2387 = vadd.f32 %v1957, %v2258
        %v2388 = vadd.f32 %v1958, %v2260
        %v2389 = vadd.f32 %v1959, %v2263
        %v2390 = vadd.f32 %v1960, %v2265
        %v2391 = vadd.f32 %v1961, %v2268
        %v2392 = vadd.f32 %v1962, %v2270
        %v2393 = vadd.f32 %v1963, %v2273
        %v2394 = vadd.f32 %v1964, %v2275
        %v2395 = vadd.f32 %v1965, %v2278
        %v2396 = vadd.f32 %v1966, %v2280
        %v2397 = vadd.f32 %v1967, %v2283
        %v2398 = vadd.f32 %v1968, %v2285
        %v2399 = vadd.f32 %v1969, %v2288
        %v2400 = vadd.f32 %v1970, %v2290
        %v2401 = vadd.f32 %v1971, %v2293
        %v2402 = vadd.f32 %v1972, %v2295
        %v2403 = vadd.f32 %v1973, %v2298
        %v2404 = vadd.f32 %v1974, %v2300
        %v2405 = vadd.f32 %v1975, %v2303
        %v2406 = vadd.f32 %v1976, %v2305
        %v2407 = vadd.f32 %v1977, %v2308
        %v2408 = vadd.f32 %v1978, %v2310
        %v2409 = vadd.f32 %v1979, %v2313
        %v2410 = vadd.f32 %v1980, %v2315
        %v2411 = vadd.f32 %v1981, %v2318
        %v2412 = vadd.f32 %v1982, %v2320
        %v2413 = vadd.f32 %v1983, %v2323
        %v2414 = vadd.f32 %v1984, %v2325
        %v2415 = vadd.f32 %v1985, %v2328
        %v2416 = vadd.f32 %v1986, %v2330
        %v2417 = vadd.f32 %v1987, %v2333
        %v2418 = vadd.f32 %v1988, %v2335
        %v2419 = vadd.f32 %v1989, %v2338
        %v2420 = vadd.f32 %v1990, %v2340
        %v2421 = vadd.f32 %v1991, %v2343
        %v2422 = vadd.f32 %v1992, %v2345
        %v2423 = vadd.f32 %v1993, %v2348
        %v2424 = vadd.f32 %v1994, %v2350
        %v2425 = vadd.f32 %v1995, %v2353
        %v2426 = vadd.f32 %v1996, %v2355
        %v2427 = vadd.f32 %v1997, %v2358
        %v2428 = vadd.f32 %v1998, %v2360
        %v2429 = vadd.f32 %v1999, %v2363
        %v2430 = vadd.f32 %v2000, %v2365
        %2431 = vst.msk [vmem:[#allocation2] sm:$0xff] %vm755, %v2367
        %2432 = vst.msk [vmem:[#allocation2 + $0x8] sm:$0xff] %vm755, %v2368
        %2433 = vst.msk [vmem:[#allocation2 + $0x10] sm:$0xff] %vm755, %v2369
        %2434 = vst.msk [vmem:[#allocation2 + $0x18] sm:$0xff] %vm755, %v2370
        %2435 = vst.msk [vmem:[#allocation2 + $0x20] sm:$0xff] %vm755, %v2371
        %2436 = vst.msk [vmem:[#allocation2 + $0x28] sm:$0xff] %vm755, %v2372
        %2437 = vst.msk [vmem:[#allocation2 + $0x30] sm:$0xff] %vm755, %v2373
        %2438 = vst.msk [vmem:[#allocation2 + $0x38] sm:$0xff] %vm755, %v2374
        %2439 = vst.msk [vmem:[#allocation2 + $0x40] sm:$0xff] %vm755, %v2375
        %2440 = vst.msk [vmem:[#allocation2 + $0x48] sm:$0xff] %vm755, %v2376
        %2441 = vst.msk [vmem:[#allocation2 + $0x50] sm:$0xff] %vm755, %v2377
        %2442 = vst.msk [vmem:[#allocation2 + $0x58] sm:$0xff] %vm755, %v2378
        %2443 = vst.msk [vmem:[#allocation2 + $0x60] sm:$0xff] %vm755, %v2379
        %2444 = vst.msk [vmem:[#allocation2 + $0x68] sm:$0xff] %vm755, %v2380
        %2445 = vst.msk [vmem:[#allocation2 + $0x70] sm:$0xff] %vm755, %v2381
        %2446 = vst.msk [vmem:[#allocation2 + $0x78] sm:$0xff] %vm755, %v2382
        %2447 = vst.msk [vmem:[#allocation2 + $0x80] sm:$0xff] %vm755, %v2383
        %2448 = vst.msk [vmem:[#allocation2 + $0x88] sm:$0xff] %vm755, %v2384
        %2449 = vst.msk [vmem:[#allocation2 + $0x90] sm:$0xff] %vm755, %v2385
        %2450 = vst.msk [vmem:[#allocation2 + $0x98] sm:$0xff] %vm755, %v2386
        %2451 = vst.msk [vmem:[#allocation2 + $0xa0] sm:$0xff] %vm755, %v2387
        %2452 = vst.msk [vmem:[#allocation2 + $0xa8] sm:$0xff] %vm755, %v2388
        %2453 = vst.msk [vmem:[#allocation2 + $0xb0] sm:$0xff] %vm755, %v2389
        %2454 = vst.msk [vmem:[#allocation2 + $0xb8] sm:$0xff] %vm755, %v2390
        %2455 = vst.msk [vmem:[#allocation2 + $0xc0] sm:$0xff] %vm755, %v2391
        %2456 = vst.msk [vmem:[#allocation2 + $0xc8] sm:$0xff] %vm755, %v2392
        %2457 = vst.msk [vmem:[#allocation2 + $0xd0] sm:$0xff] %vm755, %v2393
        %2458 = vst.msk [vmem:[#allocation2 + $0xd8] sm:$0xff] %vm755, %v2394
        %2459 = vst.msk [vmem:[#allocation2 + $0xe0] sm:$0xff] %vm755, %v2395
        %2460 = vst.msk [vmem:[#allocation2 + $0xe8] sm:$0xff] %vm755, %v2396
        %2461 = vst.msk [vmem:[#allocation2 + $0xf0] sm:$0xff] %vm755, %v2397
        %2462 = vst.msk [vmem:[#allocation2 + $0xf8] sm:$0xff] %vm755, %v2398
        %2463 = vst.msk [vmem:[#allocation2 + $0x100] sm:$0xff] %vm755, %v2399
        %2464 = vst.msk [vmem:[#allocation2 + $0x108] sm:$0xff] %vm755, %v2400
        %2465 = vst.msk [vmem:[#allocation2 + $0x110] sm:$0xff] %vm755, %v2401
        %2466 = vst.msk [vmem:[#allocation2 + $0x118] sm:$0xff] %vm755, %v2402
        %2467 = vst.msk [vmem:[#allocation2 + $0x120] sm:$0xff] %vm755, %v2403
        %2468 = vst.msk [vmem:[#allocation2 + $0x128] sm:$0xff] %vm755, %v2404
        %2469 = vst.msk [vmem:[#allocation2 + $0x130] sm:$0xff] %vm755, %v2405
        %2470 = vst.msk [vmem:[#allocation2 + $0x138] sm:$0xff] %vm755, %v2406
        %2471 = vst.msk [vmem:[#allocation2 + $0x140] sm:$0xff] %vm755, %v2407
        %2472 = vst.msk [vmem:[#allocation2 + $0x148] sm:$0xff] %vm755, %v2408
        %2473 = vst.msk [vmem:[#allocation2 + $0x150] sm:$0xff] %vm755, %v2409
        %2474 = vst.msk [vmem:[#allocation2 + $0x158] sm:$0xff] %vm755, %v2410
        %2475 = vst.msk [vmem:[#allocation2 + $0x160] sm:$0xff] %vm755, %v2411
        %2476 = vst.msk [vmem:[#allocation2 + $0x168] sm:$0xff] %vm755, %v2412
        %2477 = vst.msk [vmem:[#allocation2 + $0x170] sm:$0xff] %vm755, %v2413
        %2478 = vst.msk [vmem:[#allocation2 + $0x178] sm:$0xff] %vm755, %v2414
        %2479 = vst.msk [vmem:[#allocation2 + $0x180] sm:$0xff] %vm755, %v2415
        %2480 = vst.msk [vmem:[#allocation2 + $0x188] sm:$0xff] %vm755, %v2416
        %2481 = vst.msk [vmem:[#allocation2 + $0x190] sm:$0xff] %vm755, %v2417
        %2482 = vst.msk [vmem:[#allocation2 + $0x198] sm:$0xff] %vm755, %v2418
        %2483 = vst.msk [vmem:[#allocation2 + $0x1a0] sm:$0xff] %vm755, %v2419
        %2484 = vst.msk [vmem:[#allocation2 + $0x1a8] sm:$0xff] %vm755, %v2420
        %2485 = vst.msk [vmem:[#allocation2 + $0x1b0] sm:$0xff] %vm755, %v2421
        %2486 = vst.msk [vmem:[#allocation2 + $0x1b8] sm:$0xff] %vm755, %v2422
        %2487 = vst.msk [vmem:[#allocation2 + $0x1c0] sm:$0xff] %vm755, %v2423
        %2488 = vst.msk [vmem:[#allocation2 + $0x1c8] sm:$0xff] %vm755, %v2424
        %2489 = vst.msk [vmem:[#allocation2 + $0x1d0] sm:$0xff] %vm755, %v2425
        %2490 = vst.msk [vmem:[#allocation2 + $0x1d8] sm:$0xff] %vm755, %v2426
        %2491 = vst.msk [vmem:[#allocation2 + $0x1e0] sm:$0xff] %vm755, %v2427
        %2492 = vst.msk [vmem:[#allocation2 + $0x1e8] sm:$0xff] %vm755, %v2428
        %2493 = vst.msk [vmem:[#allocation2 + $0x1f0] sm:$0xff] %vm755, %v2429
        %2494 = vst.msk [vmem:[#allocation2 + $0x1f8] sm:$0xf] %vm819, %v2430
        %v2495 = vld [vmem:[#allocation2] sm:$0xff]
        %v2496 = vld [vmem:[#allocation2 + $0x8] sm:$0xff]
        %v2497 = vld [vmem:[#allocation2 + $0x10] sm:$0xff]
        %v2498 = vld [vmem:[#allocation2 + $0x18] sm:$0xff]
        %v2499 = vld [vmem:[#allocation2 + $0x20] sm:$0xff]
        %v2500 = vld [vmem:[#allocation2 + $0x28] sm:$0xff]
        %v2501 = vld [vmem:[#allocation2 + $0x30] sm:$0xff]
        %v2502 = vld [vmem:[#allocation2 + $0x38] sm:$0xff]
        %v2503 = vld [vmem:[#allocation2 + $0x40] sm:$0xff]
        %v2504 = vld [vmem:[#allocation2 + $0x48] sm:$0xff]
        %v2505 = vld [vmem:[#allocation2 + $0x50] sm:$0xff]
        %v2506 = vld [vmem:[#allocation2 + $0x58] sm:$0xff]
        %v2507 = vld [vmem:[#allocation2 + $0x60] sm:$0xff]
        %v2508 = vld [vmem:[#allocation2 + $0x68] sm:$0xff]
        %v2509 = vld [vmem:[#allocation2 + $0x70] sm:$0xff]
        %v2510 = vld [vmem:[#allocation2 + $0x78] sm:$0xff]
        %v2511 = vld [vmem:[#allocation2 + $0x80] sm:$0xff]
        %v2512 = vld [vmem:[#allocation2 + $0x88] sm:$0xff]
        %v2513 = vld [vmem:[#allocation2 + $0x90] sm:$0xff]
        %v2514 = vld [vmem:[#allocation2 + $0x98] sm:$0xff]
        %v2515 = vld [vmem:[#allocation2 + $0xa0] sm:$0xff]
        %v2516 = vld [vmem:[#allocation2 + $0xa8] sm:$0xff]
        %v2517 = vld [vmem:[#allocation2 + $0xb0] sm:$0xff]
        %v2518 = vld [vmem:[#allocation2 + $0xb8] sm:$0xff]
        %v2519 = vld [vmem:[#allocation2 + $0xc0] sm:$0xff]
        %v2520 = vld [vmem:[#allocation2 + $0xc8] sm:$0xff]
        %v2521 = vld [vmem:[#allocation2 + $0xd0] sm:$0xff]
        %v2522 = vld [vmem:[#allocation2 + $0xd8] sm:$0xff]
        %v2523 = vld [vmem:[#allocation2 + $0xe0] sm:$0xff]
        %v2524 = vld [vmem:[#allocation2 + $0xe8] sm:$0xff]
        %v2525 = vld [vmem:[#allocation2 + $0xf0] sm:$0xff]
        %v2526 = vld [vmem:[#allocation2 + $0xf8] sm:$0xff]
        %v2527 = vld [vmem:[#allocation2 + $0x100] sm:$0xff]
        %v2528 = vld [vmem:[#allocation2 + $0x108] sm:$0xff]
        %v2529 = vld [vmem:[#allocation2 + $0x110] sm:$0xff]
        %v2530 = vld [vmem:[#allocation2 + $0x118] sm:$0xff]
        %v2531 = vld [vmem:[#allocation2 + $0x120] sm:$0xff]
        %v2532 = vld [vmem:[#allocation2 + $0x128] sm:$0xff]
        %v2533 = vld [vmem:[#allocation2 + $0x130] sm:$0xff]
        %v2534 = vld [vmem:[#allocation2 + $0x138] sm:$0xff]
        %v2535 = vld [vmem:[#allocation2 + $0x140] sm:$0xff]
        %v2536 = vld [vmem:[#allocation2 + $0x148] sm:$0xff]
        %v2537 = vld [vmem:[#allocation2 + $0x150] sm:$0xff]
        %v2538 = vld [vmem:[#allocation2 + $0x158] sm:$0xff]
        %v2539 = vld [vmem:[#allocation2 + $0x160] sm:$0xff]
        %v2540 = vld [vmem:[#allocation2 + $0x168] sm:$0xff]
        %v2541 = vld [vmem:[#allocation2 + $0x170] sm:$0xff]
        %v2542 = vld [vmem:[#allocation2 + $0x178] sm:$0xff]
        %v2543 = vld [vmem:[#allocation2 + $0x180] sm:$0xff]
        %v2544 = vld [vmem:[#allocation2 + $0x188] sm:$0xff]
        %v2545 = vld [vmem:[#allocation2 + $0x190] sm:$0xff]
        %v2546 = vld [vmem:[#allocation2 + $0x198] sm:$0xff]
        %v2547 = vld [vmem:[#allocation2 + $0x1a0] sm:$0xff]
        %v2548 = vld [vmem:[#allocation2 + $0x1a8] sm:$0xff]
        %v2549 = vld [vmem:[#allocation2 + $0x1b0] sm:$0xff]
        %v2550 = vld [vmem:[#allocation2 + $0x1b8] sm:$0xff]
        %v2551 = vld [vmem:[#allocation2 + $0x1c0] sm:$0xff]
        %v2552 = vld [vmem:[#allocation2 + $0x1c8] sm:$0xff]
        %v2553 = vld [vmem:[#allocation2 + $0x1d0] sm:$0xff]
        %v2554 = vld [vmem:[#allocation2 + $0x1d8] sm:$0xff]
        %v2555 = vld [vmem:[#allocation2 + $0x1e0] sm:$0xff]
        %v2556 = vld [vmem:[#allocation2 + $0x1e8] sm:$0xff]
        %v2557 = vld [vmem:[#allocation2 + $0x1f0] sm:$0xff]
        %v2558 = vld [vmem:[#allocation2 + $0x1f8] sm:$0xf]
        %v2559 = vld [vmem:[%s385 + $0x4] sm:$0xff]
        %v2560 = vld [vmem:[%s385 + $0xc] sm:$0xff]
        %v2561 = vld [vmem:[%s385 + $0x14] sm:$0xff]
        %v2562 = vld [vmem:[%s385 + $0x1c] sm:$0xff]
        %v2563 = vld [vmem:[%s385 + $0x24] sm:$0xff]
        %v2564 = vld [vmem:[%s385 + $0x2c] sm:$0xff]
        %v2565 = vld [vmem:[%s385 + $0x34] sm:$0xff]
        %v2566 = vld [vmem:[%s385 + $0x3c] sm:$0xff]
        %v2567 = vld [vmem:[%s385 + $0x44] sm:$0xff]
        %v2568 = vld [vmem:[%s385 + $0x4c] sm:$0xff]
        %v2569 = vld [vmem:[%s385 + $0x54] sm:$0xff]
        %v2570 = vld [vmem:[%s385 + $0x5c] sm:$0xff]
        %v2571 = vld [vmem:[%s385 + $0x64] sm:$0xff]
        %v2572 = vld [vmem:[%s385 + $0x6c] sm:$0xff]
        %v2573 = vld [vmem:[%s385 + $0x74] sm:$0xff]
        %v2574 = vld [vmem:[%s385 + $0x7c] sm:$0xff]
        %v2575 = vld [vmem:[%s385 + $0x84] sm:$0xff]
        %v2576 = vld [vmem:[%s385 + $0x8c] sm:$0xff]
        %v2577 = vld [vmem:[%s385 + $0x94] sm:$0xff]
        %v2578 = vld [vmem:[%s385 + $0x9c] sm:$0xff]
        %v2579 = vld [vmem:[%s385 + $0xa4] sm:$0xff]
        %v2580 = vld [vmem:[%s385 + $0xac] sm:$0xff]
        %v2581 = vld [vmem:[%s385 + $0xb4] sm:$0xff]
        %v2582 = vld [vmem:[%s385 + $0xbc] sm:$0xff]
        %v2583 = vld [vmem:[%s385 + $0xc4] sm:$0xff]
        %v2584 = vld [vmem:[%s385 + $0xcc] sm:$0xff]
        %v2585 = vld [vmem:[%s385 + $0xd4] sm:$0xff]
        %v2586 = vld [vmem:[%s385 + $0xdc] sm:$0xff]
        %v2587 = vld [vmem:[%s385 + $0xe4] sm:$0xff]
        %v2588 = vld [vmem:[%s385 + $0xec] sm:$0xff]
        %v2589 = vld [vmem:[%s385 + $0xf4] sm:$0xff]
        %v2590 = vld [vmem:[%s385 + $0xfc] sm:$0xff]
        %v2591 = vld [vmem:[%s385 + $0x104] sm:$0xff]
        %v2592 = vld [vmem:[%s385 + $0x10c] sm:$0xff]
        %v2593 = vld [vmem:[%s385 + $0x114] sm:$0xff]
        %v2594 = vld [vmem:[%s385 + $0x11c] sm:$0xff]
        %v2595 = vld [vmem:[%s385 + $0x124] sm:$0xff]
        %v2596 = vld [vmem:[%s385 + $0x12c] sm:$0xff]
        %v2597 = vld [vmem:[%s385 + $0x134] sm:$0xff]
        %v2598 = vld [vmem:[%s385 + $0x13c] sm:$0xff]
        %v2599 = vld [vmem:[%s385 + $0x144] sm:$0xff]
        %v2600 = vld [vmem:[%s385 + $0x14c] sm:$0xff]
        %v2601 = vld [vmem:[%s385 + $0x154] sm:$0xff]
        %v2602 = vld [vmem:[%s385 + $0x15c] sm:$0xff]
        %v2603 = vld [vmem:[%s385 + $0x164] sm:$0xff]
        %v2604 = vld [vmem:[%s385 + $0x16c] sm:$0xff]
        %v2605 = vld [vmem:[%s385 + $0x174] sm:$0xff]
        %v2606 = vld [vmem:[%s385 + $0x17c] sm:$0xff]
        %v2607 = vld [vmem:[%s385 + $0x184] sm:$0xff]
        %v2608 = vld [vmem:[%s385 + $0x18c] sm:$0xff]
        %v2609 = vld [vmem:[%s385 + $0x194] sm:$0xff]
        %v2610 = vld [vmem:[%s385 + $0x19c] sm:$0xff]
        %v2611 = vld [vmem:[%s385 + $0x1a4] sm:$0xff]
        %v2612 = vld [vmem:[%s385 + $0x1ac] sm:$0xff]
        %v2613 = vld [vmem:[%s385 + $0x1b4] sm:$0xff]
        %v2614 = vld [vmem:[%s385 + $0x1bc] sm:$0xff]
        %v2615 = vld [vmem:[%s385 + $0x1c4] sm:$0xff]
        %v2616 = vld [vmem:[%s385 + $0x1cc] sm:$0xff]
        %v2617 = vld [vmem:[%s385 + $0x1d4] sm:$0xff]
        %v2618 = vld [vmem:[%s385 + $0x1dc] sm:$0xff]
        %v2619 = vld [vmem:[%s385 + $0x1e4] sm:$0xff]
        %v2620 = vld [vmem:[%s385 + $0x1ec] sm:$0xff]
        %v2621 = vld [vmem:[%s385 + $0x1f4] sm:$0xff]
        %v2622 = vld [vmem:[%s385 + $0x1fc] sm:$0xf]
        %v2623 = vpack.c.bf16 %v2560, %v2559
        %v2624 = vpack.c.bf16 %v2562, %v2561
        %v2625 = vpack.c.bf16 %v2564, %v2563
        %v2626 = vpack.c.bf16 %v2566, %v2565
        %v2627 = vpack.c.bf16 %v2568, %v2567
        %v2628 = vpack.c.bf16 %v2570, %v2569
        %v2629 = vpack.c.bf16 %v2572, %v2571
        %v2630 = vpack.c.bf16 %v2574, %v2573
        %v2631 = vpack.c.bf16 %v2576, %v2575
        %v2632 = vpack.c.bf16 %v2578, %v2577
        %v2633 = vpack.c.bf16 %v2580, %v2579
        %v2634 = vpack.c.bf16 %v2582, %v2581
        %v2635 = vpack.c.bf16 %v2584, %v2583
        %v2636 = vpack.c.bf16 %v2586, %v2585
        %v2637 = vpack.c.bf16 %v2588, %v2587
        %v2638 = vpack.c.bf16 %v2590, %v2589
        %v2639 = vpack.c.bf16 %v2592, %v2591
        %v2640 = vpack.c.bf16 %v2594, %v2593
        %v2641 = vpack.c.bf16 %v2596, %v2595
        %v2642 = vpack.c.bf16 %v2598, %v2597
        %v2643 = vpack.c.bf16 %v2600, %v2599
        %v2644 = vpack.c.bf16 %v2602, %v2601
        %v2645 = vpack.c.bf16 %v2604, %v2603
        %v2646 = vpack.c.bf16 %v2606, %v2605
        %v2647 = vpack.c.bf16 %v2608, %v2607
        %v2648 = vpack.c.bf16 %v2610, %v2609
        %v2649 = vpack.c.bf16 %v2612, %v2611
        %v2650 = vpack.c.bf16 %v2614, %v2613
        %v2651 = vpack.c.bf16 %v2616, %v2615
        %v2652 = vpack.c.bf16 %v2618, %v2617
        %v2653 = vpack.c.bf16 %v2620, %v2619
        %v2654 = vpack.c.bf16 %v2622, %v2621
        %s2655 = scalar_lea.vmem %s1, 16
        %v2656 = vld [vmem:[%s2655] sm:$0xf]
        %v2658 = vsel %vm485, %v2623, 0
        %v2661 = vsel %vm485, %v2624, 0
        %v2664 = vsel %vm485, %v2625, 0
        %v2667 = vsel %vm485, %v2626, 0
        %v2670 = vsel %vm485, %v2627, 0
        %v2673 = vsel %vm485, %v2628, 0
        %v2676 = vsel %vm485, %v2629, 0
        %v2679 = vsel %vm485, %v2630, 0
        %v2682 = vsel %vm485, %v2631, 0
        %v2685 = vsel %vm485, %v2632, 0
        %v2688 = vsel %vm485, %v2633, 0
        %v2691 = vsel %vm485, %v2634, 0
        %v2694 = vsel %vm485, %v2635, 0
        %v2697 = vsel %vm485, %v2636, 0
        %v2700 = vsel %vm485, %v2637, 0
        %v2703 = vsel %vm485, %v2638, 0
        %v2706 = vsel %vm485, %v2639, 0
        %v2709 = vsel %vm485, %v2640, 0
        %v2712 = vsel %vm485, %v2641, 0
        %v2715 = vsel %vm485, %v2642, 0
        %v2718 = vsel %vm485, %v2643, 0
        %v2721 = vsel %vm485, %v2644, 0
        %v2724 = vsel %vm485, %v2645, 0
        %v2727 = vsel %vm485, %v2646, 0
        %v2730 = vsel %vm485, %v2647, 0
        %v2733 = vsel %vm485, %v2648, 0
        %v2736 = vsel %vm485, %v2649, 0
        %v2739 = vsel %vm485, %v2650, 0
        %v2742 = vsel %vm485, %v2651, 0
        %v2745 = vsel %vm485, %v2652, 0
        %v2748 = vsel %vm485, %v2653, 0
        %v2751 = vsel %vm485, %v2654, 0
        %v2754 = vsel %vm582, %v2656, 0
        %2756 = vmatpush.bf16.msra.mxu0 0
        %2757 = vmatpush.bf16.msra.mxu0 0
        %2758 = vmatpush.bf16.msra.mxu0 0
        %2759 = vmatpush.bf16.msra.mxu0 0
        %2760 = vmatpush.bf16.msra.mxu0 0
        %2761 = vmatpush.bf16.msra.mxu0 0
        %2762 = vmatpush.bf16.msra.mxu0 0
        %2763 = vmatpush.bf16.msra.mxu0 %v2754
        %2764 = vmatmul.bf16.gmra.mxu0 %v2658
        %v2765 = vpop.f32.mrf.mxu0
        %v2766 = vadd.f32 0.0, %v2765
        %v2767 = vpop.f32.mrf.mxu0
        %v2768 = vadd.f32 0.0, %v2767
        %2769 = vmatmul.bf16.gmra.mxu0 %v2661
        %v2770 = vpop.f32.mrf.mxu0
        %v2771 = vadd.f32 0.0, %v2770
        %v2772 = vpop.f32.mrf.mxu0
        %v2773 = vadd.f32 0.0, %v2772
        %2774 = vmatmul.bf16.gmra.mxu0 %v2664
        %v2775 = vpop.f32.mrf.mxu0
        %v2776 = vadd.f32 0.0, %v2775
        %v2777 = vpop.f32.mrf.mxu0
        %v2778 = vadd.f32 0.0, %v2777
        %2779 = vmatmul.bf16.gmra.mxu0 %v2667
        %v2780 = vpop.f32.mrf.mxu0
        %v2781 = vadd.f32 0.0, %v2780
        %v2782 = vpop.f32.mrf.mxu0
        %v2783 = vadd.f32 0.0, %v2782
        %2784 = vmatmul.bf16.gmra.mxu0 %v2670
        %v2785 = vpop.f32.mrf.mxu0
        %v2786 = vadd.f32 0.0, %v2785
        %v2787 = vpop.f32.mrf.mxu0
        %v2788 = vadd.f32 0.0, %v2787
        %2789 = vmatmul.bf16.gmra.mxu0 %v2673
        %v2790 = vpop.f32.mrf.mxu0
        %v2791 = vadd.f32 0.0, %v2790
        %v2792 = vpop.f32.mrf.mxu0
        %v2793 = vadd.f32 0.0, %v2792
        %2794 = vmatmul.bf16.gmra.mxu0 %v2676
        %v2795 = vpop.f32.mrf.mxu0
        %v2796 = vadd.f32 0.0, %v2795
        %v2797 = vpop.f32.mrf.mxu0
        %v2798 = vadd.f32 0.0, %v2797
        %2799 = vmatmul.bf16.gmra.mxu0 %v2679
        %v2800 = vpop.f32.mrf.mxu0
        %v2801 = vadd.f32 0.0, %v2800
        %v2802 = vpop.f32.mrf.mxu0
        %v2803 = vadd.f32 0.0, %v2802
        %2804 = vmatmul.bf16.gmra.mxu0 %v2682
        %v2805 = vpop.f32.mrf.mxu0
        %v2806 = vadd.f32 0.0, %v2805
        %v2807 = vpop.f32.mrf.mxu0
        %v2808 = vadd.f32 0.0, %v2807
        %2809 = vmatmul.bf16.gmra.mxu0 %v2685
        %v2810 = vpop.f32.mrf.mxu0
        %v2811 = vadd.f32 0.0, %v2810
        %v2812 = vpop.f32.mrf.mxu0
        %v2813 = vadd.f32 0.0, %v2812
        %2814 = vmatmul.bf16.gmra.mxu0 %v2688
        %v2815 = vpop.f32.mrf.mxu0
        %v2816 = vadd.f32 0.0, %v2815
        %v2817 = vpop.f32.mrf.mxu0
        %v2818 = vadd.f32 0.0, %v2817
        %2819 = vmatmul.bf16.gmra.mxu0 %v2691
        %v2820 = vpop.f32.mrf.mxu0
        %v2821 = vadd.f32 0.0, %v2820
        %v2822 = vpop.f32.mrf.mxu0
        %v2823 = vadd.f32 0.0, %v2822
        %2824 = vmatmul.bf16.gmra.mxu0 %v2694
        %v2825 = vpop.f32.mrf.mxu0
        %v2826 = vadd.f32 0.0, %v2825
        %v2827 = vpop.f32.mrf.mxu0
        %v2828 = vadd.f32 0.0, %v2827
        %2829 = vmatmul.bf16.gmra.mxu0 %v2697
        %v2830 = vpop.f32.mrf.mxu0
        %v2831 = vadd.f32 0.0, %v2830
        %v2832 = vpop.f32.mrf.mxu0
        %v2833 = vadd.f32 0.0, %v2832
        %2834 = vmatmul.bf16.gmra.mxu0 %v2700
        %v2835 = vpop.f32.mrf.mxu0
        %v2836 = vadd.f32 0.0, %v2835
        %v2837 = vpop.f32.mrf.mxu0
        %v2838 = vadd.f32 0.0, %v2837
        %2839 = vmatmul.bf16.gmra.mxu0 %v2703
        %v2840 = vpop.f32.mrf.mxu0
        %v2841 = vadd.f32 0.0, %v2840
        %v2842 = vpop.f32.mrf.mxu0
        %v2843 = vadd.f32 0.0, %v2842
        %2844 = vmatmul.bf16.gmra.mxu0 %v2706
        %v2845 = vpop.f32.mrf.mxu0
        %v2846 = vadd.f32 0.0, %v2845
        %v2847 = vpop.f32.mrf.mxu0
        %v2848 = vadd.f32 0.0, %v2847
        %2849 = vmatmul.bf16.gmra.mxu0 %v2709
        %v2850 = vpop.f32.mrf.mxu0
        %v2851 = vadd.f32 0.0, %v2850
        %v2852 = vpop.f32.mrf.mxu0
        %v2853 = vadd.f32 0.0, %v2852
        %2854 = vmatmul.bf16.gmra.mxu0 %v2712
        %v2855 = vpop.f32.mrf.mxu0
        %v2856 = vadd.f32 0.0, %v2855
        %v2857 = vpop.f32.mrf.mxu0
        %v2858 = vadd.f32 0.0, %v2857
        %2859 = vmatmul.bf16.gmra.mxu0 %v2715
        %v2860 = vpop.f32.mrf.mxu0
        %v2861 = vadd.f32 0.0, %v2860
        %v2862 = vpop.f32.mrf.mxu0
        %v2863 = vadd.f32 0.0, %v2862
        %2864 = vmatmul.bf16.gmra.mxu0 %v2718
        %v2865 = vpop.f32.mrf.mxu0
        %v2866 = vadd.f32 0.0, %v2865
        %v2867 = vpop.f32.mrf.mxu0
        %v2868 = vadd.f32 0.0, %v2867
        %2869 = vmatmul.bf16.gmra.mxu0 %v2721
        %v2870 = vpop.f32.mrf.mxu0
        %v2871 = vadd.f32 0.0, %v2870
        %v2872 = vpop.f32.mrf.mxu0
        %v2873 = vadd.f32 0.0, %v2872
        %2874 = vmatmul.bf16.gmra.mxu0 %v2724
        %v2875 = vpop.f32.mrf.mxu0
        %v2876 = vadd.f32 0.0, %v2875
        %v2877 = vpop.f32.mrf.mxu0
        %v2878 = vadd.f32 0.0, %v2877
        %2879 = vmatmul.bf16.gmra.mxu0 %v2727
        %v2880 = vpop.f32.mrf.mxu0
        %v2881 = vadd.f32 0.0, %v2880
        %v2882 = vpop.f32.mrf.mxu0
        %v2883 = vadd.f32 0.0, %v2882
        %2884 = vmatmul.bf16.gmra.mxu0 %v2730
        %v2885 = vpop.f32.mrf.mxu0
        %v2886 = vadd.f32 0.0, %v2885
        %v2887 = vpop.f32.mrf.mxu0
        %v2888 = vadd.f32 0.0, %v2887
        %2889 = vmatmul.bf16.gmra.mxu0 %v2733
        %v2890 = vpop.f32.mrf.mxu0
        %v2891 = vadd.f32 0.0, %v2890
        %v2892 = vpop.f32.mrf.mxu0
        %v2893 = vadd.f32 0.0, %v2892
        %2894 = vmatmul.bf16.gmra.mxu0 %v2736
        %v2895 = vpop.f32.mrf.mxu0
        %v2896 = vadd.f32 0.0, %v2895
        %v2897 = vpop.f32.mrf.mxu0
        %v2898 = vadd.f32 0.0, %v2897
        %2899 = vmatmul.bf16.gmra.mxu0 %v2739
        %v2900 = vpop.f32.mrf.mxu0
        %v2901 = vadd.f32 0.0, %v2900
        %v2902 = vpop.f32.mrf.mxu0
        %v2903 = vadd.f32 0.0, %v2902
        %2904 = vmatmul.bf16.gmra.mxu0 %v2742
        %v2905 = vpop.f32.mrf.mxu0
        %v2906 = vadd.f32 0.0, %v2905
        %v2907 = vpop.f32.mrf.mxu0
        %v2908 = vadd.f32 0.0, %v2907
        %2909 = vmatmul.bf16.gmra.mxu0 %v2745
        %v2910 = vpop.f32.mrf.mxu0
        %v2911 = vadd.f32 0.0, %v2910
        %v2912 = vpop.f32.mrf.mxu0
        %v2913 = vadd.f32 0.0, %v2912
        %2914 = vmatmul.bf16.gmra.mxu0 %v2748
        %v2915 = vpop.f32.mrf.mxu0
        %v2916 = vadd.f32 0.0, %v2915
        %v2917 = vpop.f32.mrf.mxu0
        %v2918 = vadd.f32 0.0, %v2917
        %2919 = vmatmul.bf16.gmra.mxu0 %v2751
        %v2920 = vpop.f32.mrf.mxu0
        %v2921 = vadd.f32 0.0, %v2920
        %v2922 = vpop.f32.mrf.mxu0
        %v2923 = vadd.f32 0.0, %v2922
        %2924 = vdwg.mxu0
        %v2925 = vadd.f32 %v2495, %v2766
        %v2926 = vadd.f32 %v2496, %v2768
        %v2927 = vadd.f32 %v2497, %v2771
        %v2928 = vadd.f32 %v2498, %v2773
        %v2929 = vadd.f32 %v2499, %v2776
        %v2930 = vadd.f32 %v2500, %v2778
        %v2931 = vadd.f32 %v2501, %v2781
        %v2932 = vadd.f32 %v2502, %v2783
        %v2933 = vadd.f32 %v2503, %v2786
        %v2934 = vadd.f32 %v2504, %v2788
        %v2935 = vadd.f32 %v2505, %v2791
        %v2936 = vadd.f32 %v2506, %v2793
        %v2937 = vadd.f32 %v2507, %v2796
        %v2938 = vadd.f32 %v2508, %v2798
        %v2939 = vadd.f32 %v2509, %v2801
        %v2940 = vadd.f32 %v2510, %v2803
        %v2941 = vadd.f32 %v2511, %v2806
        %v2942 = vadd.f32 %v2512, %v2808
        %v2943 = vadd.f32 %v2513, %v2811
        %v2944 = vadd.f32 %v2514, %v2813
        %v2945 = vadd.f32 %v2515, %v2816
        %v2946 = vadd.f32 %v2516, %v2818
        %v2947 = vadd.f32 %v2517, %v2821
        %v2948 = vadd.f32 %v2518, %v2823
        %v2949 = vadd.f32 %v2519, %v2826
        %v2950 = vadd.f32 %v2520, %v2828
        %v2951 = vadd.f32 %v2521, %v2831
        %v2952 = vadd.f32 %v2522, %v2833
        %v2953 = vadd.f32 %v2523, %v2836
        %v2954 = vadd.f32 %v2524, %v2838
        %v2955 = vadd.f32 %v2525, %v2841
        %v2956 = vadd.f32 %v2526, %v2843
        %v2957 = vadd.f32 %v2527, %v2846
        %v2958 = vadd.f32 %v2528, %v2848
        %v2959 = vadd.f32 %v2529, %v2851
        %v2960 = vadd.f32 %v2530, %v2853
        %v2961 = vadd.f32 %v2531, %v2856
        %v2962 = vadd.f32 %v2532, %v2858
        %v2963 = vadd.f32 %v2533, %v2861
        %v2964 = vadd.f32 %v2534, %v2863
        %v2965 = vadd.f32 %v2535, %v2866
        %v2966 = vadd.f32 %v2536, %v2868
        %v2967 = vadd.f32 %v2537, %v2871
        %v2968 = vadd.f32 %v2538, %v2873
        %v2969 = vadd.f32 %v2539, %v2876
        %v2970 = vadd.f32 %v2540, %v2878
        %v2971 = vadd.f32 %v2541, %v2881
        %v2972 = vadd.f32 %v2542, %v2883
        %v2973 = vadd.f32 %v2543, %v2886
        %v2974 = vadd.f32 %v2544, %v2888
        %v2975 = vadd.f32 %v2545, %v2891
        %v2976 = vadd.f32 %v2546, %v2893
        %v2977 = vadd.f32 %v2547, %v2896
        %v2978 = vadd.f32 %v2548, %v2898
        %v2979 = vadd.f32 %v2549, %v2901
        %v2980 = vadd.f32 %v2550, %v2903
        %v2981 = vadd.f32 %v2551, %v2906
        %v2982 = vadd.f32 %v2552, %v2908
        %v2983 = vadd.f32 %v2553, %v2911
        %v2984 = vadd.f32 %v2554, %v2913
        %v2985 = vadd.f32 %v2555, %v2916
        %v2986 = vadd.f32 %v2556, %v2918
        %v2987 = vadd.f32 %v2557, %v2921
        %v2988 = vadd.f32 %v2558, %v2923
        %2989 = vst.msk [vmem:[#allocation2] sm:$0xff] %vm755, %v2925
        %2990 = vst.msk [vmem:[#allocation2 + $0x8] sm:$0xff] %vm755, %v2926
        %2991 = vst.msk [vmem:[#allocation2 + $0x10] sm:$0xff] %vm755, %v2927
        %2992 = vst.msk [vmem:[#allocation2 + $0x18] sm:$0xff] %vm755, %v2928
        %2993 = vst.msk [vmem:[#allocation2 + $0x20] sm:$0xff] %vm755, %v2929
        %2994 = vst.msk [vmem:[#allocation2 + $0x28] sm:$0xff] %vm755, %v2930
        %2995 = vst.msk [vmem:[#allocation2 + $0x30] sm:$0xff] %vm755, %v2931
        %2996 = vst.msk [vmem:[#allocation2 + $0x38] sm:$0xff] %vm755, %v2932
        %2997 = vst.msk [vmem:[#allocation2 + $0x40] sm:$0xff] %vm755, %v2933
        %2998 = vst.msk [vmem:[#allocation2 + $0x48] sm:$0xff] %vm755, %v2934
        %2999 = vst.msk [vmem:[#allocation2 + $0x50] sm:$0xff] %vm755, %v2935
        %3000 = vst.msk [vmem:[#allocation2 + $0x58] sm:$0xff] %vm755, %v2936
        %3001 = vst.msk [vmem:[#allocation2 + $0x60] sm:$0xff] %vm755, %v2937
        %3002 = vst.msk [vmem:[#allocation2 + $0x68] sm:$0xff] %vm755, %v2938
        %3003 = vst.msk [vmem:[#allocation2 + $0x70] sm:$0xff] %vm755, %v2939
        %3004 = vst.msk [vmem:[#allocation2 + $0x78] sm:$0xff] %vm755, %v2940
        %3005 = vst.msk [vmem:[#allocation2 + $0x80] sm:$0xff] %vm755, %v2941
        %3006 = vst.msk [vmem:[#allocation2 + $0x88] sm:$0xff] %vm755, %v2942
        %3007 = vst.msk [vmem:[#allocation2 + $0x90] sm:$0xff] %vm755, %v2943
        %3008 = vst.msk [vmem:[#allocation2 + $0x98] sm:$0xff] %vm755, %v2944
        %3009 = vst.msk [vmem:[#allocation2 + $0xa0] sm:$0xff] %vm755, %v2945
        %3010 = vst.msk [vmem:[#allocation2 + $0xa8] sm:$0xff] %vm755, %v2946
        %3011 = vst.msk [vmem:[#allocation2 + $0xb0] sm:$0xff] %vm755, %v2947
        %3012 = vst.msk [vmem:[#allocation2 + $0xb8] sm:$0xff] %vm755, %v2948
        %3013 = vst.msk [vmem:[#allocation2 + $0xc0] sm:$0xff] %vm755, %v2949
        %3014 = vst.msk [vmem:[#allocation2 + $0xc8] sm:$0xff] %vm755, %v2950
        %3015 = vst.msk [vmem:[#allocation2 + $0xd0] sm:$0xff] %vm755, %v2951
        %3016 = vst.msk [vmem:[#allocation2 + $0xd8] sm:$0xff] %vm755, %v2952
        %3017 = vst.msk [vmem:[#allocation2 + $0xe0] sm:$0xff] %vm755, %v2953
        %3018 = vst.msk [vmem:[#allocation2 + $0xe8] sm:$0xff] %vm755, %v2954
        %3019 = vst.msk [vmem:[#allocation2 + $0xf0] sm:$0xff] %vm755, %v2955
        %3020 = vst.msk [vmem:[#allocation2 + $0xf8] sm:$0xff] %vm755, %v2956
        %3021 = vst.msk [vmem:[#allocation2 + $0x100] sm:$0xff] %vm755, %v2957
        %3022 = vst.msk [vmem:[#allocation2 + $0x108] sm:$0xff] %vm755, %v2958
        %3023 = vst.msk [vmem:[#allocation2 + $0x110] sm:$0xff] %vm755, %v2959
        %3024 = vst.msk [vmem:[#allocation2 + $0x118] sm:$0xff] %vm755, %v2960
        %3025 = vst.msk [vmem:[#allocation2 + $0x120] sm:$0xff] %vm755, %v2961
        %3026 = vst.msk [vmem:[#allocation2 + $0x128] sm:$0xff] %vm755, %v2962
        %3027 = vst.msk [vmem:[#allocation2 + $0x130] sm:$0xff] %vm755, %v2963
        %3028 = vst.msk [vmem:[#allocation2 + $0x138] sm:$0xff] %vm755, %v2964
        %3029 = vst.msk [vmem:[#allocation2 + $0x140] sm:$0xff] %vm755, %v2965
        %3030 = vst.msk [vmem:[#allocation2 + $0x148] sm:$0xff] %vm755, %v2966
        %3031 = vst.msk [vmem:[#allocation2 + $0x150] sm:$0xff] %vm755, %v2967
        %3032 = vst.msk [vmem:[#allocation2 + $0x158] sm:$0xff] %vm755, %v2968
        %3033 = vst.msk [vmem:[#allocation2 + $0x160] sm:$0xff] %vm755, %v2969
        %3034 = vst.msk [vmem:[#allocation2 + $0x168] sm:$0xff] %vm755, %v2970
        %3035 = vst.msk [vmem:[#allocation2 + $0x170] sm:$0xff] %vm755, %v2971
        %3036 = vst.msk [vmem:[#allocation2 + $0x178] sm:$0xff] %vm755, %v2972
        %3037 = vst.msk [vmem:[#allocation2 + $0x180] sm:$0xff] %vm755, %v2973
        %3038 = vst.msk [vmem:[#allocation2 + $0x188] sm:$0xff] %vm755, %v2974
        %3039 = vst.msk [vmem:[#allocation2 + $0x190] sm:$0xff] %vm755, %v2975
        %3040 = vst.msk [vmem:[#allocation2 + $0x198] sm:$0xff] %vm755, %v2976
        %3041 = vst.msk [vmem:[#allocation2 + $0x1a0] sm:$0xff] %vm755, %v2977
        %3042 = vst.msk [vmem:[#allocation2 + $0x1a8] sm:$0xff] %vm755, %v2978
        %3043 = vst.msk [vmem:[#allocation2 + $0x1b0] sm:$0xff] %vm755, %v2979
        %3044 = vst.msk [vmem:[#allocation2 + $0x1b8] sm:$0xff] %vm755, %v2980
        %3045 = vst.msk [vmem:[#allocation2 + $0x1c0] sm:$0xff] %vm755, %v2981
        %3046 = vst.msk [vmem:[#allocation2 + $0x1c8] sm:$0xff] %vm755, %v2982
        %3047 = vst.msk [vmem:[#allocation2 + $0x1d0] sm:$0xff] %vm755, %v2983
        %3048 = vst.msk [vmem:[#allocation2 + $0x1d8] sm:$0xff] %vm755, %v2984
        %3049 = vst.msk [vmem:[#allocation2 + $0x1e0] sm:$0xff] %vm755, %v2985
        %3050 = vst.msk [vmem:[#allocation2 + $0x1e8] sm:$0xff] %vm755, %v2986
        %3051 = vst.msk [vmem:[#allocation2 + $0x1f0] sm:$0xff] %vm755, %v2987
        %3052 = vst.msk [vmem:[#allocation2 + $0x1f8] sm:$0xf] %vm819, %v2988
        %v3053 = vld [vmem:[#allocation2] ss:$2 sm:$0xff]
        %s3054 = scalar_lea.vmem [#allocation2], 16
        %v3055 = vld [vmem:[%s3054] ss:$2 sm:$0xff]
        %s3056 = scalar_lea.vmem [#allocation2], 32
        %v3057 = vld [vmem:[%s3056] ss:$2 sm:$0xff]
        %s3058 = scalar_lea.vmem [#allocation2], 48
        %v3059 = vld [vmem:[%s3058] ss:$2 sm:$0xff]
        %s3060 = scalar_lea.vmem [#allocation2], 64
        %v3061 = vld [vmem:[%s3060] ss:$2 sm:$0xff]
        %s3062 = scalar_lea.vmem [#allocation2], 80
        %v3063 = vld [vmem:[%s3062] ss:$2 sm:$0xff]
        %s3064 = scalar_lea.vmem [#allocation2], 96
        %v3065 = vld [vmem:[%s3064] ss:$2 sm:$0xff]
        %s3066 = scalar_lea.vmem [#allocation2], 112
        %v3067 = vld [vmem:[%s3066] ss:$2 sm:$0xff]
        %s3068 = scalar_lea.vmem [#allocation2], 128
        %v3069 = vld [vmem:[%s3068] ss:$2 sm:$0xff]
        %s3070 = scalar_lea.vmem [#allocation2], 144
        %v3071 = vld [vmem:[%s3070] ss:$2 sm:$0xff]
        %s3072 = scalar_lea.vmem [#allocation2], 160
        %v3073 = vld [vmem:[%s3072] ss:$2 sm:$0xff]
        %s3074 = scalar_lea.vmem [#allocation2], 176
        %v3075 = vld [vmem:[%s3074] ss:$2 sm:$0xff]
        %s3076 = scalar_lea.vmem [#allocation2], 192
        %v3077 = vld [vmem:[%s3076] ss:$2 sm:$0xff]
        %s3078 = scalar_lea.vmem [#allocation2], 208
        %v3079 = vld [vmem:[%s3078] ss:$2 sm:$0xff]
        %s3080 = scalar_lea.vmem [#allocation2], 224
        %v3081 = vld [vmem:[%s3080] ss:$2 sm:$0xff]
        %s3082 = scalar_lea.vmem [#allocation2], 240
        %v3083 = vld [vmem:[%s3082] ss:$2 sm:$0xff]
        %s3084 = scalar_lea.vmem [#allocation2], 256
        %v3085 = vld [vmem:[%s3084] ss:$2 sm:$0xff]
        %s3086 = scalar_lea.vmem [#allocation2], 272
        %v3087 = vld [vmem:[%s3086] ss:$2 sm:$0xff]
        %s3088 = scalar_lea.vmem [#allocation2], 288
        %v3089 = vld [vmem:[%s3088] ss:$2 sm:$0xff]
        %s3090 = scalar_lea.vmem [#allocation2], 304
        %v3091 = vld [vmem:[%s3090] ss:$2 sm:$0xff]
        %s3092 = scalar_lea.vmem [#allocation2], 320
        %v3093 = vld [vmem:[%s3092] ss:$2 sm:$0xff]
        %s3094 = scalar_lea.vmem [#allocation2], 336
        %v3095 = vld [vmem:[%s3094] ss:$2 sm:$0xff]
        %s3096 = scalar_lea.vmem [#allocation2], 352
        %v3097 = vld [vmem:[%s3096] ss:$2 sm:$0xff]
        %s3098 = scalar_lea.vmem [#allocation2], 368
        %v3099 = vld [vmem:[%s3098] ss:$2 sm:$0xff]
        %s3100 = scalar_lea.vmem [#allocation2], 384
        %v3101 = vld [vmem:[%s3100] ss:$2 sm:$0xff]
        %s3102 = scalar_lea.vmem [#allocation2], 400
        %v3103 = vld [vmem:[%s3102] ss:$2 sm:$0xff]
        %s3104 = scalar_lea.vmem [#allocation2], 416
        %v3105 = vld [vmem:[%s3104] ss:$2 sm:$0xff]
        %s3106 = scalar_lea.vmem [#allocation2], 432
        %v3107 = vld [vmem:[%s3106] ss:$2 sm:$0xff]
        %s3108 = scalar_lea.vmem [#allocation2], 448
        %v3109 = vld [vmem:[%s3108] ss:$2 sm:$0xff]
        %s3110 = scalar_lea.vmem [#allocation2], 464
        %v3111 = vld [vmem:[%s3110] ss:$2 sm:$0xff]
        %s3112 = scalar_lea.vmem [#allocation2], 480
        %v3113 = vld [vmem:[%s3112] ss:$2 sm:$0xff]
        %s3114 = scalar_lea.vmem [#allocation2], 496
        %v3115 = vld [vmem:[%s3114] ss:$2 sm:$0xff]
        %s3116 = scalar_lea.vmem [#allocation2], 1
        %v3117 = vld [vmem:[%s3116] ss:$2 sm:$0xff]
        %s3118 = scalar_lea.vmem [#allocation2], 17
        %v3119 = vld [vmem:[%s3118] ss:$2 sm:$0xff]
        %s3120 = scalar_lea.vmem [#allocation2], 33
        %v3121 = vld [vmem:[%s3120] ss:$2 sm:$0xff]
        %s3122 = scalar_lea.vmem [#allocation2], 49
        %v3123 = vld [vmem:[%s3122] ss:$2 sm:$0xff]
        %s3124 = scalar_lea.vmem [#allocation2], 65
        %v3125 = vld [vmem:[%s3124] ss:$2 sm:$0xff]
        %s3126 = scalar_lea.vmem [#allocation2], 81
        %v3127 = vld [vmem:[%s3126] ss:$2 sm:$0xff]
        %s3128 = scalar_lea.vmem [#allocation2], 97
        %v3129 = vld [vmem:[%s3128] ss:$2 sm:$0xff]
        %s3130 = scalar_lea.vmem [#allocation2], 113
        %v3131 = vld [vmem:[%s3130] ss:$2 sm:$0xff]
        %s3132 = scalar_lea.vmem [#allocation2], 129
        %v3133 = vld [vmem:[%s3132] ss:$2 sm:$0xff]
        %s3134 = scalar_lea.vmem [#allocation2], 145
        %v3135 = vld [vmem:[%s3134] ss:$2 sm:$0xff]
        %s3136 = scalar_lea.vmem [#allocation2], 161
        %v3137 = vld [vmem:[%s3136] ss:$2 sm:$0xff]
        %s3138 = scalar_lea.vmem [#allocation2], 177
        %v3139 = vld [vmem:[%s3138] ss:$2 sm:$0xff]
        %s3140 = scalar_lea.vmem [#allocation2], 193
        %v3141 = vld [vmem:[%s3140] ss:$2 sm:$0xff]
        %s3142 = scalar_lea.vmem [#allocation2], 209
        %v3143 = vld [vmem:[%s3142] ss:$2 sm:$0xff]
        %s3144 = scalar_lea.vmem [#allocation2], 225
        %v3145 = vld [vmem:[%s3144] ss:$2 sm:$0xff]
        %s3146 = scalar_lea.vmem [#allocation2], 241
        %v3147 = vld [vmem:[%s3146] ss:$2 sm:$0xff]
        %s3148 = scalar_lea.vmem [#allocation2], 257
        %v3149 = vld [vmem:[%s3148] ss:$2 sm:$0xff]
        %s3150 = scalar_lea.vmem [#allocation2], 273
        %v3151 = vld [vmem:[%s3150] ss:$2 sm:$0xff]
        %s3152 = scalar_lea.vmem [#allocation2], 289
        %v3153 = vld [vmem:[%s3152] ss:$2 sm:$0xff]
        %s3154 = scalar_lea.vmem [#allocation2], 305
        %v3155 = vld [vmem:[%s3154] ss:$2 sm:$0xff]
        %s3156 = scalar_lea.vmem [#allocation2], 321
        %v3157 = vld [vmem:[%s3156] ss:$2 sm:$0xff]
        %s3158 = scalar_lea.vmem [#allocation2], 337
        %v3159 = vld [vmem:[%s3158] ss:$2 sm:$0xff]
        %s3160 = scalar_lea.vmem [#allocation2], 353
        %v3161 = vld [vmem:[%s3160] ss:$2 sm:$0xff]
        %s3162 = scalar_lea.vmem [#allocation2], 369
        %v3163 = vld [vmem:[%s3162] ss:$2 sm:$0xff]
        %s3164 = scalar_lea.vmem [#allocation2], 385
        %v3165 = vld [vmem:[%s3164] ss:$2 sm:$0xff]
        %s3166 = scalar_lea.vmem [#allocation2], 401
        %v3167 = vld [vmem:[%s3166] ss:$2 sm:$0xff]
        %s3168 = scalar_lea.vmem [#allocation2], 417
        %v3169 = vld [vmem:[%s3168] ss:$2 sm:$0xff]
        %s3170 = scalar_lea.vmem [#allocation2], 433
        %v3171 = vld [vmem:[%s3170] ss:$2 sm:$0xff]
        %s3172 = scalar_lea.vmem [#allocation2], 449
        %v3173 = vld [vmem:[%s3172] ss:$2 sm:$0xff]
        %s3174 = scalar_lea.vmem [#allocation2], 465
        %v3175 = vld [vmem:[%s3174] ss:$2 sm:$0xff]
        %s3176 = scalar_lea.vmem [#allocation2], 481
        %v3177 = vld [vmem:[%s3176] ss:$2 sm:$0xff]
        %s3178 = scalar_lea.vmem [#allocation2], 497
        %v3179 = vld [vmem:[%s3178] ss:$2 sm:$0xff]
        %v3180 = vmax.f32 %v3053, %v3117
        %v3181 = vmax.f32 %v3055, %v3119
        %v3182 = vmax.f32 %v3057, %v3121
        %v3183 = vmax.f32 %v3059, %v3123
        %v3184 = vmax.f32 %v3061, %v3125
        %v3185 = vmax.f32 %v3063, %v3127
        %v3186 = vmax.f32 %v3065, %v3129
        %v3187 = vmax.f32 %v3067, %v3131
        %v3188 = vmax.f32 %v3069, %v3133
        %v3189 = vmax.f32 %v3071, %v3135
        %v3190 = vmax.f32 %v3073, %v3137
        %v3191 = vmax.f32 %v3075, %v3139
        %v3192 = vmax.f32 %v3077, %v3141
        %v3193 = vmax.f32 %v3079, %v3143
        %v3194 = vmax.f32 %v3081, %v3145
        %v3195 = vmax.f32 %v3083, %v3147
        %v3196 = vmax.f32 %v3085, %v3149
        %v3197 = vmax.f32 %v3087, %v3151
        %v3198 = vmax.f32 %v3089, %v3153
        %v3199 = vmax.f32 %v3091, %v3155
        %v3200 = vmax.f32 %v3093, %v3157
        %v3201 = vmax.f32 %v3095, %v3159
        %v3202 = vmax.f32 %v3097, %v3161
        %v3203 = vmax.f32 %v3099, %v3163
        %v3204 = vmax.f32 %v3101, %v3165
        %v3205 = vmax.f32 %v3103, %v3167
        %v3206 = vmax.f32 %v3105, %v3169
        %v3207 = vmax.f32 %v3107, %v3171
        %v3208 = vmax.f32 %v3109, %v3173
        %v3209 = vmax.f32 %v3111, %v3175
        %v3210 = vmax.f32 %v3113, %v3177
        %v3211 = vmax.f32 %v3115, %v3179
        %v3212 = vld [vmem:[%s2] sm:$0x1]
        %v3214 = vperm.slane %v3212, 0
        %v3216 = vadd.f32 %v3180, %v3214
        %v3217 = vadd.f32 %v3181, %v3214
        %v3218 = vadd.f32 %v3182, %v3214
        %v3219 = vadd.f32 %v3183, %v3214
        %v3220 = vadd.f32 %v3184, %v3214
        %v3221 = vadd.f32 %v3185, %v3214
        %v3222 = vadd.f32 %v3186, %v3214
        %v3223 = vadd.f32 %v3187, %v3214
        %v3224 = vadd.f32 %v3188, %v3214
        %v3225 = vadd.f32 %v3189, %v3214
        %v3226 = vadd.f32 %v3190, %v3214
        %v3227 = vadd.f32 %v3191, %v3214
        %v3228 = vadd.f32 %v3192, %v3214
        %v3229 = vadd.f32 %v3193, %v3214
        %v3230 = vadd.f32 %v3194, %v3214
        %v3231 = vadd.f32 %v3195, %v3214
        %v3232 = vadd.f32 %v3196, %v3214
        %v3233 = vadd.f32 %v3197, %v3214
        %v3234 = vadd.f32 %v3198, %v3214
        %v3235 = vadd.f32 %v3199, %v3214
        %v3236 = vadd.f32 %v3200, %v3214
        %v3237 = vadd.f32 %v3201, %v3214
        %v3238 = vadd.f32 %v3202, %v3214
        %v3239 = vadd.f32 %v3203, %v3214
        %v3240 = vadd.f32 %v3204, %v3214
        %v3241 = vadd.f32 %v3205, %v3214
        %v3242 = vadd.f32 %v3206, %v3214
        %v3243 = vadd.f32 %v3207, %v3214
        %v3244 = vadd.f32 %v3208, %v3214
        %v3245 = vadd.f32 %v3209, %v3214
        %v3246 = vadd.f32 %v3210, %v3214
        %v3247 = vadd.f32 %v3211, %v3214
        %v3248 = vmax.f32 %v3216, 0.0
        %v3249 = vmax.f32 %v3217, 0.0
        %v3250 = vmax.f32 %v3218, 0.0
        %v3251 = vmax.f32 %v3219, 0.0
        %v3252 = vmax.f32 %v3220, 0.0
        %v3253 = vmax.f32 %v3221, 0.0
        %v3254 = vmax.f32 %v3222, 0.0
        %v3255 = vmax.f32 %v3223, 0.0
        %v3256 = vmax.f32 %v3224, 0.0
        %v3257 = vmax.f32 %v3225, 0.0
        %v3258 = vmax.f32 %v3226, 0.0
        %v3259 = vmax.f32 %v3227, 0.0
        %v3260 = vmax.f32 %v3228, 0.0
        %v3261 = vmax.f32 %v3229, 0.0
        %v3262 = vmax.f32 %v3230, 0.0
        %v3263 = vmax.f32 %v3231, 0.0
        %v3264 = vmax.f32 %v3232, 0.0
        %v3265 = vmax.f32 %v3233, 0.0
        %v3266 = vmax.f32 %v3234, 0.0
        %v3267 = vmax.f32 %v3235, 0.0
        %v3268 = vmax.f32 %v3236, 0.0
        %v3269 = vmax.f32 %v3237, 0.0
        %v3270 = vmax.f32 %v3238, 0.0
        %v3271 = vmax.f32 %v3239, 0.0
        %v3272 = vmax.f32 %v3240, 0.0
        %v3273 = vmax.f32 %v3241, 0.0
        %v3274 = vmax.f32 %v3242, 0.0
        %v3275 = vmax.f32 %v3243, 0.0
        %v3276 = vmax.f32 %v3244, 0.0
        %v3277 = vmax.f32 %v3245, 0.0
        %v3278 = vmax.f32 %v3246, 0.0
        %v3279 = vmax.f32 %v3247, 0.0
        %3280 = vst.msk [vmem:[#allocation3] sm:$0xff] %vm755, %v3248
        %3281 = vst.msk [vmem:[#allocation3 + $0x8] sm:$0xff] %vm755, %v3249
        %3282 = vst.msk [vmem:[#allocation3 + $0x10] sm:$0xff] %vm755, %v3250
        %3283 = vst.msk [vmem:[#allocation3 + $0x18] sm:$0xff] %vm755, %v3251
        %3284 = vst.msk [vmem:[#allocation3 + $0x20] sm:$0xff] %vm755, %v3252
        %3285 = vst.msk [vmem:[#allocation3 + $0x28] sm:$0xff] %vm755, %v3253
        %3286 = vst.msk [vmem:[#allocation3 + $0x30] sm:$0xff] %vm755, %v3254
        %3287 = vst.msk [vmem:[#allocation3 + $0x38] sm:$0xff] %vm755, %v3255
        %3288 = vst.msk [vmem:[#allocation3 + $0x40] sm:$0xff] %vm755, %v3256
        %3289 = vst.msk [vmem:[#allocation3 + $0x48] sm:$0xff] %vm755, %v3257
        %3290 = vst.msk [vmem:[#allocation3 + $0x50] sm:$0xff] %vm755, %v3258
        %3291 = vst.msk [vmem:[#allocation3 + $0x58] sm:$0xff] %vm755, %v3259
        %3292 = vst.msk [vmem:[#allocation3 + $0x60] sm:$0xff] %vm755, %v3260
        %3293 = vst.msk [vmem:[#allocation3 + $0x68] sm:$0xff] %vm755, %v3261
        %3294 = vst.msk [vmem:[#allocation3 + $0x70] sm:$0xff] %vm755, %v3262
        %3295 = vst.msk [vmem:[#allocation3 + $0x78] sm:$0xff] %vm755, %v3263
        %3296 = vst.msk [vmem:[#allocation3 + $0x80] sm:$0xff] %vm755, %v3264
        %3297 = vst.msk [vmem:[#allocation3 + $0x88] sm:$0xff] %vm755, %v3265
        %3298 = vst.msk [vmem:[#allocation3 + $0x90] sm:$0xff] %vm755, %v3266
        %3299 = vst.msk [vmem:[#allocation3 + $0x98] sm:$0xff] %vm755, %v3267
        %3300 = vst.msk [vmem:[#allocation3 + $0xa0] sm:$0xff] %vm755, %v3268
        %3301 = vst.msk [vmem:[#allocation3 + $0xa8] sm:$0xff] %vm755, %v3269
        %3302 = vst.msk [vmem:[#allocation3 + $0xb0] sm:$0xff] %vm755, %v3270
        %3303 = vst.msk [vmem:[#allocation3 + $0xb8] sm:$0xff] %vm755, %v3271
        %3304 = vst.msk [vmem:[#allocation3 + $0xc0] sm:$0xff] %vm755, %v3272
        %3305 = vst.msk [vmem:[#allocation3 + $0xc8] sm:$0xff] %vm755, %v3273
        %3306 = vst.msk [vmem:[#allocation3 + $0xd0] sm:$0xff] %vm755, %v3274
        %3307 = vst.msk [vmem:[#allocation3 + $0xd8] sm:$0xff] %vm755, %v3275
        %3308 = vst.msk [vmem:[#allocation3 + $0xe0] sm:$0xff] %vm755, %v3276
        %3309 = vst.msk [vmem:[#allocation3 + $0xe8] sm:$0xff] %vm755, %v3277
        %3310 = vst.msk [vmem:[#allocation3 + $0xf0] sm:$0xff] %vm755, %v3278
        %3311 = vst.msk [vmem:[#allocation3 + $0xf8] sm:$0xff] %vm755, %v3279
        %v3312 = vld [vmem:[#allocation3] sm:$0xff]
        %v3313 = vld [vmem:[#allocation3 + $0x8] sm:$0xff]
        %v3314 = vld [vmem:[#allocation3 + $0x10] sm:$0xff]
        %v3315 = vld [vmem:[#allocation3 + $0x18] sm:$0xff]
        %v3316 = vld [vmem:[#allocation3 + $0x20] sm:$0xff]
        %v3317 = vld [vmem:[#allocation3 + $0x28] sm:$0xff]
        %v3318 = vld [vmem:[#allocation3 + $0x30] sm:$0xff]
        %v3319 = vld [vmem:[#allocation3 + $0x38] sm:$0xff]
        %v3320 = vld [vmem:[#allocation3 + $0x40] sm:$0xff]
        %v3321 = vld [vmem:[#allocation3 + $0x48] sm:$0xff]
        %v3322 = vld [vmem:[#allocation3 + $0x50] sm:$0xff]
        %v3323 = vld [vmem:[#allocation3 + $0x58] sm:$0xff]
        %v3324 = vld [vmem:[#allocation3 + $0x60] sm:$0xff]
        %v3325 = vld [vmem:[#allocation3 + $0x68] sm:$0xff]
        %v3326 = vld [vmem:[#allocation3 + $0x70] sm:$0xff]
        %v3327 = vld [vmem:[#allocation3 + $0x78] sm:$0xff]
        %v3328 = vld [vmem:[#allocation3 + $0x80] sm:$0xff]
        %v3329 = vld [vmem:[#allocation3 + $0x88] sm:$0xff]
        %v3330 = vld [vmem:[#allocation3 + $0x90] sm:$0xff]
        %v3331 = vld [vmem:[#allocation3 + $0x98] sm:$0xff]
        %v3332 = vld [vmem:[#allocation3 + $0xa0] sm:$0xff]
        %v3333 = vld [vmem:[#allocation3 + $0xa8] sm:$0xff]
        %v3334 = vld [vmem:[#allocation3 + $0xb0] sm:$0xff]
        %v3335 = vld [vmem:[#allocation3 + $0xb8] sm:$0xff]
        %v3336 = vld [vmem:[#allocation3 + $0xc0] sm:$0xff]
        %v3337 = vld [vmem:[#allocation3 + $0xc8] sm:$0xff]
        %v3338 = vld [vmem:[#allocation3 + $0xd0] sm:$0xff]
        %v3339 = vld [vmem:[#allocation3 + $0xd8] sm:$0xff]
        %v3340 = vld [vmem:[#allocation3 + $0xe0] sm:$0xff]
        %v3341 = vld [vmem:[#allocation3 + $0xe8] sm:$0xff]
        %v3342 = vld [vmem:[#allocation3 + $0xf0] sm:$0xff]
        %v3343 = vld [vmem:[#allocation3 + $0xf8] sm:$0xf]
        %v3344 = vpack.c.bf16 %v3313, %v3312
        %v3345 = vpack.c.bf16 %v3315, %v3314
        %v3346 = vpack.c.bf16 %v3317, %v3316
        %v3347 = vpack.c.bf16 %v3319, %v3318
        %v3348 = vpack.c.bf16 %v3321, %v3320
        %v3349 = vpack.c.bf16 %v3323, %v3322
        %v3350 = vpack.c.bf16 %v3325, %v3324
        %v3351 = vpack.c.bf16 %v3327, %v3326
        %v3352 = vpack.c.bf16 %v3329, %v3328
        %v3353 = vpack.c.bf16 %v3331, %v3330
        %v3354 = vpack.c.bf16 %v3333, %v3332
        %v3355 = vpack.c.bf16 %v3335, %v3334
        %v3356 = vpack.c.bf16 %v3337, %v3336
        %v3357 = vpack.c.bf16 %v3339, %v3338
        %v3358 = vpack.c.bf16 %v3341, %v3340
        %v3359 = vpack.c.bf16 %v3343, %v3342
        %v3360 = vld [vmem:[%s3] sm:$0xf]
        %v3361 = vld [vmem:[%s3 + $0x4] sm:$0xf]
        %v3362 = vld [vmem:[%s3 + $0x8] sm:$0xf]
        %v3363 = vld [vmem:[%s3 + $0xc] sm:$0xf]
        %v3364 = vld [vmem:[%s3 + $0x10] sm:$0xf]
        %v3365 = vld [vmem:[%s3 + $0x14] sm:$0xf]
        %v3366 = vld [vmem:[%s3 + $0x18] sm:$0xf]
        %v3367 = vld [vmem:[%s3 + $0x1c] sm:$0xf]
        %v3376 = vunpack.c.l.b16 %v3360
        %v3377 = vunpack.c.l.b16 %v3361
        %v3378 = vunpack.c.l.b16 %v3362
        %v3379 = vunpack.c.l.b16 %v3363
        %v3380 = vunpack.c.l.b16 %v3364
        %v3381 = vunpack.c.l.b16 %v3365
        %v3382 = vunpack.c.l.b16 %v3366
        %v3383 = vunpack.c.l.b16 %v3367
        %v3384 = vpack.c.b16 %v3377, %v3376
        %v3385 = vpack.c.b16 %v3379, %v3378
        %v3386 = vpack.c.b16 %v3381, %v3380
        %v3387 = vpack.c.b16 %v3383, %v3382
        %v3393 = vsel %vm755, %v3344, 0
        %v3396 = vsel %vm755, %v3345, 0
        %v3399 = vsel %vm755, %v3346, 0
        %v3402 = vsel %vm755, %v3347, 0
        %v3405 = vsel %vm755, %v3348, 0
        %v3408 = vsel %vm755, %v3349, 0
        %v3411 = vsel %vm755, %v3350, 0
        %v3414 = vsel %vm755, %v3351, 0
        %v3417 = vsel %vm755, %v3352, 0
        %v3420 = vsel %vm755, %v3353, 0
        %v3423 = vsel %vm755, %v3354, 0
        %v3426 = vsel %vm755, %v3355, 0
        %v3429 = vsel %vm755, %v3356, 0
        %v3432 = vsel %vm755, %v3357, 0
        %v3435 = vsel %vm755, %v3358, 0
        %v3438 = vsel %vm755, %v3359, 0
        %3440 = vmatpush.bf16.msra.mxu0 0
        %3441 = vmatpush.bf16.msra.mxu0 0
        %3442 = vmatpush.bf16.msra.mxu0 0
        %3443 = vmatpush.bf16.msra.mxu0 0
        %3444 = vmatpush.bf16.msra.mxu0 %v3387
        %3445 = vmatpush.bf16.msra.mxu0 %v3386
        %3446 = vmatpush.bf16.msra.mxu0 %v3385
        %3447 = vmatpush.bf16.msra.mxu0 %v3384
        %3448 = vmatmul.bf16.gmra.mxu0 %v3393
        %v3449 = vpop.f32.mrf.mxu0
        %v3450 = vadd.f32 0.0, %v3449
        %v3451 = vpop.f32.mrf.mxu0
        %v3452 = vadd.f32 0.0, %v3451
        %3453 = vmatmul.bf16.gmra.mxu0 %v3396
        %v3454 = vpop.f32.mrf.mxu0
        %v3455 = vadd.f32 0.0, %v3454
        %v3456 = vpop.f32.mrf.mxu0
        %v3457 = vadd.f32 0.0, %v3456
        %3458 = vmatmul.bf16.gmra.mxu0 %v3399
        %v3459 = vpop.f32.mrf.mxu0
        %v3460 = vadd.f32 0.0, %v3459
        %v3461 = vpop.f32.mrf.mxu0
        %v3462 = vadd.f32 0.0, %v3461
        %3463 = vmatmul.bf16.gmra.mxu0 %v3402
        %v3464 = vpop.f32.mrf.mxu0
        %v3465 = vadd.f32 0.0, %v3464
        %v3466 = vpop.f32.mrf.mxu0
        %v3467 = vadd.f32 0.0, %v3466
        %3468 = vmatmul.bf16.gmra.mxu0 %v3405
        %v3469 = vpop.f32.mrf.mxu0
        %v3470 = vadd.f32 0.0, %v3469
        %v3471 = vpop.f32.mrf.mxu0
        %v3472 = vadd.f32 0.0, %v3471
        %3473 = vmatmul.bf16.gmra.mxu0 %v3408
        %v3474 = vpop.f32.mrf.mxu0
        %v3475 = vadd.f32 0.0, %v3474
        %v3476 = vpop.f32.mrf.mxu0
        %v3477 = vadd.f32 0.0, %v3476
        %3478 = vmatmul.bf16.gmra.mxu0 %v3411
        %v3479 = vpop.f32.mrf.mxu0
        %v3480 = vadd.f32 0.0, %v3479
        %v3481 = vpop.f32.mrf.mxu0
        %v3482 = vadd.f32 0.0, %v3481
        %3483 = vmatmul.bf16.gmra.mxu0 %v3414
        %v3484 = vpop.f32.mrf.mxu0
        %v3485 = vadd.f32 0.0, %v3484
        %v3486 = vpop.f32.mrf.mxu0
        %v3487 = vadd.f32 0.0, %v3486
        %3488 = vmatmul.bf16.gmra.mxu0 %v3417
        %v3489 = vpop.f32.mrf.mxu0
        %v3490 = vadd.f32 0.0, %v3489
        %v3491 = vpop.f32.mrf.mxu0
        %v3492 = vadd.f32 0.0, %v3491
        %3493 = vmatmul.bf16.gmra.mxu0 %v3420
        %v3494 = vpop.f32.mrf.mxu0
        %v3495 = vadd.f32 0.0, %v3494
        %v3496 = vpop.f32.mrf.mxu0
        %v3497 = vadd.f32 0.0, %v3496
        %3498 = vmatmul.bf16.gmra.mxu0 %v3423
        %v3499 = vpop.f32.mrf.mxu0
        %v3500 = vadd.f32 0.0, %v3499
        %v3501 = vpop.f32.mrf.mxu0
        %v3502 = vadd.f32 0.0, %v3501
        %3503 = vmatmul.bf16.gmra.mxu0 %v3426
        %v3504 = vpop.f32.mrf.mxu0
        %v3505 = vadd.f32 0.0, %v3504
        %v3506 = vpop.f32.mrf.mxu0
        %v3507 = vadd.f32 0.0, %v3506
        %3508 = vmatmul.bf16.gmra.mxu0 %v3429
        %v3509 = vpop.f32.mrf.mxu0
        %v3510 = vadd.f32 0.0, %v3509
        %v3511 = vpop.f32.mrf.mxu0
        %v3512 = vadd.f32 0.0, %v3511
        %3513 = vmatmul.bf16.gmra.mxu0 %v3432
        %v3514 = vpop.f32.mrf.mxu0
        %v3515 = vadd.f32 0.0, %v3514
        %v3516 = vpop.f32.mrf.mxu0
        %v3517 = vadd.f32 0.0, %v3516
        %3518 = vmatmul.bf16.gmra.mxu0 %v3435
        %v3519 = vpop.f32.mrf.mxu0
        %v3520 = vadd.f32 0.0, %v3519
        %v3521 = vpop.f32.mrf.mxu0
        %v3522 = vadd.f32 0.0, %v3521
        %3523 = vmatmul.bf16.gmra.mxu0 %v3438
        %v3524 = vpop.f32.mrf.mxu0
        %v3525 = vadd.f32 0.0, %v3524
        %v3526 = vpop.f32.mrf.mxu0
        %v3527 = vadd.f32 0.0, %v3526
        %3528 = vdwg.mxu0
        %vm3529 = vcmask 261120
        %3530 = vst.msk [vmem:[#allocation4] sm:$0xff] %vm3529, %v3450
        %3531 = vst.msk [vmem:[#allocation4 + $0x8] sm:$0xff] %vm3529, %v3452
        %3532 = vst.msk [vmem:[#allocation4 + $0x10] sm:$0xff] %vm3529, %v3455
        %3533 = vst.msk [vmem:[#allocation4 + $0x18] sm:$0xff] %vm3529, %v3457
        %3534 = vst.msk [vmem:[#allocation4 + $0x20] sm:$0xff] %vm3529, %v3460
        %3535 = vst.msk [vmem:[#allocation4 + $0x28] sm:$0xff] %vm3529, %v3462
        %3536 = vst.msk [vmem:[#allocation4 + $0x30] sm:$0xff] %vm3529, %v3465
        %3537 = vst.msk [vmem:[#allocation4 + $0x38] sm:$0xff] %vm3529, %v3467
        %3538 = vst.msk [vmem:[#allocation4 + $0x40] sm:$0xff] %vm3529, %v3470
        %3539 = vst.msk [vmem:[#allocation4 + $0x48] sm:$0xff] %vm3529, %v3472
        %3540 = vst.msk [vmem:[#allocation4 + $0x50] sm:$0xff] %vm3529, %v3475
        %3541 = vst.msk [vmem:[#allocation4 + $0x58] sm:$0xff] %vm3529, %v3477
        %3542 = vst.msk [vmem:[#allocation4 + $0x60] sm:$0xff] %vm3529, %v3480
        %3543 = vst.msk [vmem:[#allocation4 + $0x68] sm:$0xff] %vm3529, %v3482
        %3544 = vst.msk [vmem:[#allocation4 + $0x70] sm:$0xff] %vm3529, %v3485
        %3545 = vst.msk [vmem:[#allocation4 + $0x78] sm:$0xff] %vm3529, %v3487
        %3546 = vst.msk [vmem:[#allocation4 + $0x80] sm:$0xff] %vm3529, %v3490
        %3547 = vst.msk [vmem:[#allocation4 + $0x88] sm:$0xff] %vm3529, %v3492
        %3548 = vst.msk [vmem:[#allocation4 + $0x90] sm:$0xff] %vm3529, %v3495
        %3549 = vst.msk [vmem:[#allocation4 + $0x98] sm:$0xff] %vm3529, %v3497
        %3550 = vst.msk [vmem:[#allocation4 + $0xa0] sm:$0xff] %vm3529, %v3500
        %3551 = vst.msk [vmem:[#allocation4 + $0xa8] sm:$0xff] %vm3529, %v3502
        %3552 = vst.msk [vmem:[#allocation4 + $0xb0] sm:$0xff] %vm3529, %v3505
        %3553 = vst.msk [vmem:[#allocation4 + $0xb8] sm:$0xff] %vm3529, %v3507
        %3554 = vst.msk [vmem:[#allocation4 + $0xc0] sm:$0xff] %vm3529, %v3510
        %3555 = vst.msk [vmem:[#allocation4 + $0xc8] sm:$0xff] %vm3529, %v3512
        %3556 = vst.msk [vmem:[#allocation4 + $0xd0] sm:$0xff] %vm3529, %v3515
        %3557 = vst.msk [vmem:[#allocation4 + $0xd8] sm:$0xff] %vm3529, %v3517
        %3558 = vst.msk [vmem:[#allocation4 + $0xe0] sm:$0xff] %vm3529, %v3520
        %3559 = vst.msk [vmem:[#allocation4 + $0xe8] sm:$0xff] %vm3529, %v3522
        %3560 = vst.msk [vmem:[#allocation4 + $0xf0] sm:$0xff] %vm3529, %v3525
        %vm3561 = vcmask 257024
        %3562 = vst.msk [vmem:[#allocation4 + $0xf8] sm:$0xf] %vm3561, %v3527
        %v3563 = vld [vmem:[#allocation4] sm:$0xff]
        %v3564 = vld [vmem:[#allocation4 + $0x8] sm:$0xff]
        %v3565 = vld [vmem:[#allocation4 + $0x10] sm:$0xff]
        %v3566 = vld [vmem:[#allocation4 + $0x18] sm:$0xff]
        %v3567 = vld [vmem:[#allocation4 + $0x20] sm:$0xff]
        %v3568 = vld [vmem:[#allocation4 + $0x28] sm:$0xff]
        %v3569 = vld [vmem:[#allocation4 + $0x30] sm:$0xff]
        %v3570 = vld [vmem:[#allocation4 + $0x38] sm:$0xff]
        %v3571 = vld [vmem:[#allocation4 + $0x40] sm:$0xff]
        %v3572 = vld [vmem:[#allocation4 + $0x48] sm:$0xff]
        %v3573 = vld [vmem:[#allocation4 + $0x50] sm:$0xff]
        %v3574 = vld [vmem:[#allocation4 + $0x58] sm:$0xff]
        %v3575 = vld [vmem:[#allocation4 + $0x60] sm:$0xff]
        %v3576 = vld [vmem:[#allocation4 + $0x68] sm:$0xff]
        %v3577 = vld [vmem:[#allocation4 + $0x70] sm:$0xff]
        %v3578 = vld [vmem:[#allocation4 + $0x78] sm:$0xff]
        %v3579 = vld [vmem:[#allocation4 + $0x80] sm:$0xff]
        %v3580 = vld [vmem:[#allocation4 + $0x88] sm:$0xff]
        %v3581 = vld [vmem:[#allocation4 + $0x90] sm:$0xff]
        %v3582 = vld [vmem:[#allocation4 + $0x98] sm:$0xff]
        %v3583 = vld [vmem:[#allocation4 + $0xa0] sm:$0xff]
        %v3584 = vld [vmem:[#allocation4 + $0xa8] sm:$0xff]
        %v3585 = vld [vmem:[#allocation4 + $0xb0] sm:$0xff]
        %v3586 = vld [vmem:[#allocation4 + $0xb8] sm:$0xff]
        %v3587 = vld [vmem:[#allocation4 + $0xc0] sm:$0xff]
        %v3588 = vld [vmem:[#allocation4 + $0xc8] sm:$0xff]
        %v3589 = vld [vmem:[#allocation4 + $0xd0] sm:$0xff]
        %v3590 = vld [vmem:[#allocation4 + $0xd8] sm:$0xff]
        %v3591 = vld [vmem:[#allocation4 + $0xe0] sm:$0xff]
        %v3592 = vld [vmem:[#allocation4 + $0xe8] sm:$0xff]
        %v3593 = vld [vmem:[#allocation4 + $0xf0] sm:$0xff]
        %v3594 = vld [vmem:[#allocation4 + $0xf8] sm:$0xf]
        %v3595 = vld [vmem:[#allocation3 + $0x1] sm:$0xff]
        %v3596 = vld [vmem:[#allocation3 + $0x9] sm:$0xff]
        %v3597 = vld [vmem:[#allocation3 + $0x11] sm:$0xff]
        %v3598 = vld [vmem:[#allocation3 + $0x19] sm:$0xff]
        %v3599 = vld [vmem:[#allocation3 + $0x21] sm:$0xff]
        %v3600 = vld [vmem:[#allocation3 + $0x29] sm:$0xff]
        %v3601 = vld [vmem:[#allocation3 + $0x31] sm:$0xff]
        %v3602 = vld [vmem:[#allocation3 + $0x39] sm:$0xff]
        %v3603 = vld [vmem:[#allocation3 + $0x41] sm:$0xff]
        %v3604 = vld [vmem:[#allocation3 + $0x49] sm:$0xff]
        %v3605 = vld [vmem:[#allocation3 + $0x51] sm:$0xff]
        %v3606 = vld [vmem:[#allocation3 + $0x59] sm:$0xff]
        %v3607 = vld [vmem:[#allocation3 + $0x61] sm:$0xff]
        %v3608 = vld [vmem:[#allocation3 + $0x69] sm:$0xff]
        %v3609 = vld [vmem:[#allocation3 + $0x71] sm:$0xff]
        %v3610 = vld [vmem:[#allocation3 + $0x79] sm:$0xff]
        %v3611 = vld [vmem:[#allocation3 + $0x81] sm:$0xff]
        %v3612 = vld [vmem:[#allocation3 + $0x89] sm:$0xff]
        %v3613 = vld [vmem:[#allocation3 + $0x91] sm:$0xff]
        %v3614 = vld [vmem:[#allocation3 + $0x99] sm:$0xff]
        %v3615 = vld [vmem:[#allocation3 + $0xa1] sm:$0xff]
        %v3616 = vld [vmem:[#allocation3 + $0xa9] sm:$0xff]
        %v3617 = vld [vmem:[#allocation3 + $0xb1] sm:$0xff]
        %v3618 = vld [vmem:[#allocation3 + $0xb9] sm:$0xff]
        %v3619 = vld [vmem:[#allocation3 + $0xc1] sm:$0xff]
        %v3620 = vld [vmem:[#allocation3 + $0xc9] sm:$0xff]
        %v3621 = vld [vmem:[#allocation3 + $0xd1] sm:$0xff]
        %v3622 = vld [vmem:[#allocation3 + $0xd9] sm:$0xff]
        %v3623 = vld [vmem:[#allocation3 + $0xe1] sm:$0xff]
        %v3624 = vld [vmem:[#allocation3 + $0xe9] sm:$0xff]
        %v3625 = vld [vmem:[#allocation3 + $0xf1] sm:$0xff]
        %v3626 = vld [vmem:[#allocation3 + $0xf9] sm:$0xf]
        %v3627 = vpack.c.bf16 %v3596, %v3595
        %v3628 = vpack.c.bf16 %v3598, %v3597
        %v3629 = vpack.c.bf16 %v3600, %v3599
        %v3630 = vpack.c.bf16 %v3602, %v3601
        %v3631 = vpack.c.bf16 %v3604, %v3603
        %v3632 = vpack.c.bf16 %v3606, %v3605
        %v3633 = vpack.c.bf16 %v3608, %v3607
        %v3634 = vpack.c.bf16 %v3610, %v3609
        %v3635 = vpack.c.bf16 %v3612, %v3611
        %v3636 = vpack.c.bf16 %v3614, %v3613
        %v3637 = vpack.c.bf16 %v3616, %v3615
        %v3638 = vpack.c.bf16 %v3618, %v3617
        %v3639 = vpack.c.bf16 %v3620, %v3619
        %v3640 = vpack.c.bf16 %v3622, %v3621
        %v3641 = vpack.c.bf16 %v3624, %v3623
        %v3642 = vpack.c.bf16 %v3626, %v3625
        %s3643 = scalar_lea.vmem %s3, 32
        %v3644 = vld [vmem:[%s3643] sm:$0xf]
        %v3645 = vld [vmem:[%s3643 + $0x4] sm:$0xf]
        %v3646 = vld [vmem:[%s3643 + $0x8] sm:$0xf]
        %v3647 = vld [vmem:[%s3643 + $0xc] sm:$0xf]
        %v3648 = vld [vmem:[%s3643 + $0x10] sm:$0xf]
        %v3649 = vld [vmem:[%s3643 + $0x14] sm:$0xf]
        %v3650 = vld [vmem:[%s3643 + $0x18] sm:$0xf]
        %v3651 = vld [vmem:[%s3643 + $0x1c] sm:$0xf]
        %v3660 = vunpack.c.l.b16 %v3644
        %v3661 = vunpack.c.l.b16 %v3645
        %v3662 = vunpack.c.l.b16 %v3646
        %v3663 = vunpack.c.l.b16 %v3647
        %v3664 = vunpack.c.l.b16 %v3648
        %v3665 = vunpack.c.l.b16 %v3649
        %v3666 = vunpack.c.l.b16 %v3650
        %v3667 = vunpack.c.l.b16 %v3651
        %v3668 = vpack.c.b16 %v3661, %v3660
        %v3669 = vpack.c.b16 %v3663, %v3662
        %v3670 = vpack.c.b16 %v3665, %v3664
        %v3671 = vpack.c.b16 %v3667, %v3666
        %v3677 = vsel %vm755, %v3627, 0
        %v3680 = vsel %vm755, %v3628, 0
        %v3683 = vsel %vm755, %v3629, 0
        %v3686 = vsel %vm755, %v3630, 0
        %v3689 = vsel %vm755, %v3631, 0
        %v3692 = vsel %vm755, %v3632, 0
        %v3695 = vsel %vm755, %v3633, 0
        %v3698 = vsel %vm755, %v3634, 0
        %v3701 = vsel %vm755, %v3635, 0
        %v3704 = vsel %vm755, %v3636, 0
        %v3707 = vsel %vm755, %v3637, 0
        %v3710 = vsel %vm755, %v3638, 0
        %v3713 = vsel %vm755, %v3639, 0
        %v3716 = vsel %vm755, %v3640, 0
        %v3719 = vsel %vm755, %v3641, 0
        %v3722 = vsel %vm755, %v3642, 0
        %3724 = vmatpush.bf16.msra.mxu0 0
        %3725 = vmatpush.bf16.msra.mxu0 0
        %3726 = vmatpush.bf16.msra.mxu0 0
        %3727 = vmatpush.bf16.msra.mxu0 0
        %3728 = vmatpush.bf16.msra.mxu0 %v3671
        %3729 = vmatpush.bf16.msra.mxu0 %v3670
        %3730 = vmatpush.bf16.msra.mxu0 %v3669
        %3731 = vmatpush.bf16.msra.mxu0 %v3668
        %3732 = vmatmul.bf16.gmra.mxu0 %v3677
        %v3733 = vpop.f32.mrf.mxu0
        %v3734 = vadd.f32 0.0, %v3733
        %v3735 = vpop.f32.mrf.mxu0
        %v3736 = vadd.f32 0.0, %v3735
        %3737 = vmatmul.bf16.gmra.mxu0 %v3680
        %v3738 = vpop.f32.mrf.mxu0
        %v3739 = vadd.f32 0.0, %v3738
        %v3740 = vpop.f32.mrf.mxu0
        %v3741 = vadd.f32 0.0, %v3740
        %3742 = vmatmul.bf16.gmra.mxu0 %v3683
        %v3743 = vpop.f32.mrf.mxu0
        %v3744 = vadd.f32 0.0, %v3743
        %v3745 = vpop.f32.mrf.mxu0
        %v3746 = vadd.f32 0.0, %v3745
        %3747 = vmatmul.bf16.gmra.mxu0 %v3686
        %v3748 = vpop.f32.mrf.mxu0
        %v3749 = vadd.f32 0.0, %v3748
        %v3750 = vpop.f32.mrf.mxu0
        %v3751 = vadd.f32 0.0, %v3750
        %3752 = vmatmul.bf16.gmra.mxu0 %v3689
        %v3753 = vpop.f32.mrf.mxu0
        %v3754 = vadd.f32 0.0, %v3753
        %v3755 = vpop.f32.mrf.mxu0
        %v3756 = vadd.f32 0.0, %v3755
        %3757 = vmatmul.bf16.gmra.mxu0 %v3692
        %v3758 = vpop.f32.mrf.mxu0
        %v3759 = vadd.f32 0.0, %v3758
        %v3760 = vpop.f32.mrf.mxu0
        %v3761 = vadd.f32 0.0, %v3760
        %3762 = vmatmul.bf16.gmra.mxu0 %v3695
        %v3763 = vpop.f32.mrf.mxu0
        %v3764 = vadd.f32 0.0, %v3763
        %v3765 = vpop.f32.mrf.mxu0
        %v3766 = vadd.f32 0.0, %v3765
        %3767 = vmatmul.bf16.gmra.mxu0 %v3698
        %v3768 = vpop.f32.mrf.mxu0
        %v3769 = vadd.f32 0.0, %v3768
        %v3770 = vpop.f32.mrf.mxu0
        %v3771 = vadd.f32 0.0, %v3770
        %3772 = vmatmul.bf16.gmra.mxu0 %v3701
        %v3773 = vpop.f32.mrf.mxu0
        %v3774 = vadd.f32 0.0, %v3773
        %v3775 = vpop.f32.mrf.mxu0
        %v3776 = vadd.f32 0.0, %v3775
        %3777 = vmatmul.bf16.gmra.mxu0 %v3704
        %v3778 = vpop.f32.mrf.mxu0
        %v3779 = vadd.f32 0.0, %v3778
        %v3780 = vpop.f32.mrf.mxu0
        %v3781 = vadd.f32 0.0, %v3780
        %3782 = vmatmul.bf16.gmra.mxu0 %v3707
        %v3783 = vpop.f32.mrf.mxu0
        %v3784 = vadd.f32 0.0, %v3783
        %v3785 = vpop.f32.mrf.mxu0
        %v3786 = vadd.f32 0.0, %v3785
        %3787 = vmatmul.bf16.gmra.mxu0 %v3710
        %v3788 = vpop.f32.mrf.mxu0
        %v3789 = vadd.f32 0.0, %v3788
        %v3790 = vpop.f32.mrf.mxu0
        %v3791 = vadd.f32 0.0, %v3790
        %3792 = vmatmul.bf16.gmra.mxu0 %v3713
        %v3793 = vpop.f32.mrf.mxu0
        %v3794 = vadd.f32 0.0, %v3793
        %v3795 = vpop.f32.mrf.mxu0
        %v3796 = vadd.f32 0.0, %v3795
        %3797 = vmatmul.bf16.gmra.mxu0 %v3716
        %v3798 = vpop.f32.mrf.mxu0
        %v3799 = vadd.f32 0.0, %v3798
        %v3800 = vpop.f32.mrf.mxu0
        %v3801 = vadd.f32 0.0, %v3800
        %3802 = vmatmul.bf16.gmra.mxu0 %v3719
        %v3803 = vpop.f32.mrf.mxu0
        %v3804 = vadd.f32 0.0, %v3803
        %v3805 = vpop.f32.mrf.mxu0
        %v3806 = vadd.f32 0.0, %v3805
        %3807 = vmatmul.bf16.gmra.mxu0 %v3722
        %v3808 = vpop.f32.mrf.mxu0
        %v3809 = vadd.f32 0.0, %v3808
        %v3810 = vpop.f32.mrf.mxu0
        %v3811 = vadd.f32 0.0, %v3810
        %3812 = vdwg.mxu0
        %v3813 = vadd.f32 %v3563, %v3734
        %v3814 = vadd.f32 %v3564, %v3736
        %v3815 = vadd.f32 %v3565, %v3739
        %v3816 = vadd.f32 %v3566, %v3741
        %v3817 = vadd.f32 %v3567, %v3744
        %v3818 = vadd.f32 %v3568, %v3746
        %v3819 = vadd.f32 %v3569, %v3749
        %v3820 = vadd.f32 %v3570, %v3751
        %v3821 = vadd.f32 %v3571, %v3754
        %v3822 = vadd.f32 %v3572, %v3756
        %v3823 = vadd.f32 %v3573, %v3759
        %v3824 = vadd.f32 %v3574, %v3761
        %v3825 = vadd.f32 %v3575, %v3764
        %v3826 = vadd.f32 %v3576, %v3766
        %v3827 = vadd.f32 %v3577, %v3769
        %v3828 = vadd.f32 %v3578, %v3771
        %v3829 = vadd.f32 %v3579, %v3774
        %v3830 = vadd.f32 %v3580, %v3776
        %v3831 = vadd.f32 %v3581, %v3779
        %v3832 = vadd.f32 %v3582, %v3781
        %v3833 = vadd.f32 %v3583, %v3784
        %v3834 = vadd.f32 %v3584, %v3786
        %v3835 = vadd.f32 %v3585, %v3789
        %v3836 = vadd.f32 %v3586, %v3791
        %v3837 = vadd.f32 %v3587, %v3794
        %v3838 = vadd.f32 %v3588, %v3796
        %v3839 = vadd.f32 %v3589, %v3799
        %v3840 = vadd.f32 %v3590, %v3801
        %v3841 = vadd.f32 %v3591, %v3804
        %v3842 = vadd.f32 %v3592, %v3806
        %v3843 = vadd.f32 %v3593, %v3809
        %v3844 = vadd.f32 %v3594, %v3811
        %3845 = vst.msk [vmem:[#allocation4] sm:$0xff] %vm3529, %v3813
        %3846 = vst.msk [vmem:[#allocation4 + $0x8] sm:$0xff] %vm3529, %v3814
        %3847 = vst.msk [vmem:[#allocation4 + $0x10] sm:$0xff] %vm3529, %v3815
        %3848 = vst.msk [vmem:[#allocation4 + $0x18] sm:$0xff] %vm3529, %v3816
        %3849 = vst.msk [vmem:[#allocation4 + $0x20] sm:$0xff] %vm3529, %v3817
        %3850 = vst.msk [vmem:[#allocation4 + $0x28] sm:$0xff] %vm3529, %v3818
        %3851 = vst.msk [vmem:[#allocation4 + $0x30] sm:$0xff] %vm3529, %v3819
        %3852 = vst.msk [vmem:[#allocation4 + $0x38] sm:$0xff] %vm3529, %v3820
        %3853 = vst.msk [vmem:[#allocation4 + $0x40] sm:$0xff] %vm3529, %v3821
        %3854 = vst.msk [vmem:[#allocation4 + $0x48] sm:$0xff] %vm3529, %v3822
        %3855 = vst.msk [vmem:[#allocation4 + $0x50] sm:$0xff] %vm3529, %v3823
        %3856 = vst.msk [vmem:[#allocation4 + $0x58] sm:$0xff] %vm3529, %v3824
        %3857 = vst.msk [vmem:[#allocation4 + $0x60] sm:$0xff] %vm3529, %v3825
        %3858 = vst.msk [vmem:[#allocation4 + $0x68] sm:$0xff] %vm3529, %v3826
        %3859 = vst.msk [vmem:[#allocation4 + $0x70] sm:$0xff] %vm3529, %v3827
        %3860 = vst.msk [vmem:[#allocation4 + $0x78] sm:$0xff] %vm3529, %v3828
        %3861 = vst.msk [vmem:[#allocation4 + $0x80] sm:$0xff] %vm3529, %v3829
        %3862 = vst.msk [vmem:[#allocation4 + $0x88] sm:$0xff] %vm3529, %v3830
        %3863 = vst.msk [vmem:[#allocation4 + $0x90] sm:$0xff] %vm3529, %v3831
        %3864 = vst.msk [vmem:[#allocation4 + $0x98] sm:$0xff] %vm3529, %v3832
        %3865 = vst.msk [vmem:[#allocation4 + $0xa0] sm:$0xff] %vm3529, %v3833
        %3866 = vst.msk [vmem:[#allocation4 + $0xa8] sm:$0xff] %vm3529, %v3834
        %3867 = vst.msk [vmem:[#allocation4 + $0xb0] sm:$0xff] %vm3529, %v3835
        %3868 = vst.msk [vmem:[#allocation4 + $0xb8] sm:$0xff] %vm3529, %v3836
        %3869 = vst.msk [vmem:[#allocation4 + $0xc0] sm:$0xff] %vm3529, %v3837
        %3870 = vst.msk [vmem:[#allocation4 + $0xc8] sm:$0xff] %vm3529, %v3838
        %3871 = vst.msk [vmem:[#allocation4 + $0xd0] sm:$0xff] %vm3529, %v3839
        %3872 = vst.msk [vmem:[#allocation4 + $0xd8] sm:$0xff] %vm3529, %v3840
        %3873 = vst.msk [vmem:[#allocation4 + $0xe0] sm:$0xff] %vm3529, %v3841
        %3874 = vst.msk [vmem:[#allocation4 + $0xe8] sm:$0xff] %vm3529, %v3842
        %3875 = vst.msk [vmem:[#allocation4 + $0xf0] sm:$0xff] %vm3529, %v3843
        %3876 = vst.msk [vmem:[#allocation4 + $0xf8] sm:$0xf] %vm3561, %v3844
        %v3877 = vld [vmem:[#allocation4] sm:$0xff]
        %v3878 = vld [vmem:[#allocation4 + $0x8] sm:$0xff]
        %v3879 = vld [vmem:[#allocation4 + $0x10] sm:$0xff]
        %v3880 = vld [vmem:[#allocation4 + $0x18] sm:$0xff]
        %v3881 = vld [vmem:[#allocation4 + $0x20] sm:$0xff]
        %v3882 = vld [vmem:[#allocation4 + $0x28] sm:$0xff]
        %v3883 = vld [vmem:[#allocation4 + $0x30] sm:$0xff]
        %v3884 = vld [vmem:[#allocation4 + $0x38] sm:$0xff]
        %v3885 = vld [vmem:[#allocation4 + $0x40] sm:$0xff]
        %v3886 = vld [vmem:[#allocation4 + $0x48] sm:$0xff]
        %v3887 = vld [vmem:[#allocation4 + $0x50] sm:$0xff]
        %v3888 = vld [vmem:[#allocation4 + $0x58] sm:$0xff]
        %v3889 = vld [vmem:[#allocation4 + $0x60] sm:$0xff]
        %v3890 = vld [vmem:[#allocation4 + $0x68] sm:$0xff]
        %v3891 = vld [vmem:[#allocation4 + $0x70] sm:$0xff]
        %v3892 = vld [vmem:[#allocation4 + $0x78] sm:$0xff]
        %v3893 = vld [vmem:[#allocation4 + $0x80] sm:$0xff]
        %v3894 = vld [vmem:[#allocation4 + $0x88] sm:$0xff]
        %v3895 = vld [vmem:[#allocation4 + $0x90] sm:$0xff]
        %v3896 = vld [vmem:[#allocation4 + $0x98] sm:$0xff]
        %v3897 = vld [vmem:[#allocation4 + $0xa0] sm:$0xff]
        %v3898 = vld [vmem:[#allocation4 + $0xa8] sm:$0xff]
        %v3899 = vld [vmem:[#allocation4 + $0xb0] sm:$0xff]
        %v3900 = vld [vmem:[#allocation4 + $0xb8] sm:$0xff]
        %v3901 = vld [vmem:[#allocation4 + $0xc0] sm:$0xff]
        %v3902 = vld [vmem:[#allocation4 + $0xc8] sm:$0xff]
        %v3903 = vld [vmem:[#allocation4 + $0xd0] sm:$0xff]
        %v3904 = vld [vmem:[#allocation4 + $0xd8] sm:$0xff]
        %v3905 = vld [vmem:[#allocation4 + $0xe0] sm:$0xff]
        %v3906 = vld [vmem:[#allocation4 + $0xe8] sm:$0xff]
        %v3907 = vld [vmem:[#allocation4 + $0xf0] sm:$0xff]
        %v3908 = vld [vmem:[#allocation4 + $0xf8] sm:$0xf]
        %v3909 = vld [vmem:[#allocation3 + $0x2] sm:$0xff]
        %v3910 = vld [vmem:[#allocation3 + $0xa] sm:$0xff]
        %v3911 = vld [vmem:[#allocation3 + $0x12] sm:$0xff]
        %v3912 = vld [vmem:[#allocation3 + $0x1a] sm:$0xff]
        %v3913 = vld [vmem:[#allocation3 + $0x22] sm:$0xff]
        %v3914 = vld [vmem:[#allocation3 + $0x2a] sm:$0xff]
        %v3915 = vld [vmem:[#allocation3 + $0x32] sm:$0xff]
        %v3916 = vld [vmem:[#allocation3 + $0x3a] sm:$0xff]
        %v3917 = vld [vmem:[#allocation3 + $0x42] sm:$0xff]
        %v3918 = vld [vmem:[#allocation3 + $0x4a] sm:$0xff]
        %v3919 = vld [vmem:[#allocation3 + $0x52] sm:$0xff]
        %v3920 = vld [vmem:[#allocation3 + $0x5a] sm:$0xff]
        %v3921 = vld [vmem:[#allocation3 + $0x62] sm:$0xff]
        %v3922 = vld [vmem:[#allocation3 + $0x6a] sm:$0xff]
        %v3923 = vld [vmem:[#allocation3 + $0x72] sm:$0xff]
        %v3924 = vld [vmem:[#allocation3 + $0x7a] sm:$0xff]
        %v3925 = vld [vmem:[#allocation3 + $0x82] sm:$0xff]
        %v3926 = vld [vmem:[#allocation3 + $0x8a] sm:$0xff]
        %v3927 = vld [vmem:[#allocation3 + $0x92] sm:$0xff]
        %v3928 = vld [vmem:[#allocation3 + $0x9a] sm:$0xff]
        %v3929 = vld [vmem:[#allocation3 + $0xa2] sm:$0xff]
        %v3930 = vld [vmem:[#allocation3 + $0xaa] sm:$0xff]
        %v3931 = vld [vmem:[#allocation3 + $0xb2] sm:$0xff]
        %v3932 = vld [vmem:[#allocation3 + $0xba] sm:$0xff]
        %v3933 = vld [vmem:[#allocation3 + $0xc2] sm:$0xff]
        %v3934 = vld [vmem:[#allocation3 + $0xca] sm:$0xff]
        %v3935 = vld [vmem:[#allocation3 + $0xd2] sm:$0xff]
        %v3936 = vld [vmem:[#allocation3 + $0xda] sm:$0xff]
        %v3937 = vld [vmem:[#allocation3 + $0xe2] sm:$0xff]
        %v3938 = vld [vmem:[#allocation3 + $0xea] sm:$0xff]
        %v3939 = vld [vmem:[#allocation3 + $0xf2] sm:$0xff]
        %v3940 = vld [vmem:[#allocation3 + $0xfa] sm:$0xf]
        %v3941 = vpack.c.bf16 %v3910, %v3909
        %v3942 = vpack.c.bf16 %v3912, %v3911
        %v3943 = vpack.c.bf16 %v3914, %v3913
        %v3944 = vpack.c.bf16 %v3916, %v3915
        %v3945 = vpack.c.bf16 %v3918, %v3917
        %v3946 = vpack.c.bf16 %v3920, %v3919
        %v3947 = vpack.c.bf16 %v3922, %v3921
        %v3948 = vpack.c.bf16 %v3924, %v3923
        %v3949 = vpack.c.bf16 %v3926, %v3925
        %v3950 = vpack.c.bf16 %v3928, %v3927
        %v3951 = vpack.c.bf16 %v3930, %v3929
        %v3952 = vpack.c.bf16 %v3932, %v3931
        %v3953 = vpack.c.bf16 %v3934, %v3933
        %v3954 = vpack.c.bf16 %v3936, %v3935
        %v3955 = vpack.c.bf16 %v3938, %v3937
        %v3956 = vpack.c.bf16 %v3940, %v3939
        %s3957 = scalar_lea.vmem %s3, 64
        %v3958 = vld [vmem:[%s3957] sm:$0xf]
        %v3959 = vld [vmem:[%s3957 + $0x4] sm:$0xf]
        %v3960 = vld [vmem:[%s3957 + $0x8] sm:$0xf]
        %v3961 = vld [vmem:[%s3957 + $0xc] sm:$0xf]
        %v3962 = vld [vmem:[%s3957 + $0x10] sm:$0xf]
        %v3963 = vld [vmem:[%s3957 + $0x14] sm:$0xf]
        %v3964 = vld [vmem:[%s3957 + $0x18] sm:$0xf]
        %v3965 = vld [vmem:[%s3957 + $0x1c] sm:$0xf]
        %v3974 = vunpack.c.l.b16 %v3958
        %v3975 = vunpack.c.l.b16 %v3959
        %v3976 = vunpack.c.l.b16 %v3960
        %v3977 = vunpack.c.l.b16 %v3961
        %v3978 = vunpack.c.l.b16 %v3962
        %v3979 = vunpack.c.l.b16 %v3963
        %v3980 = vunpack.c.l.b16 %v3964
        %v3981 = vunpack.c.l.b16 %v3965
        %v3982 = vpack.c.b16 %v3975, %v3974
        %v3983 = vpack.c.b16 %v3977, %v3976
        %v3984 = vpack.c.b16 %v3979, %v3978
        %v3985 = vpack.c.b16 %v3981, %v3980
        %v3991 = vsel %vm755, %v3941, 0
        %v3994 = vsel %vm755, %v3942, 0
        %v3997 = vsel %vm755, %v3943, 0
        %v4000 = vsel %vm755, %v3944, 0
        %v4003 = vsel %vm755, %v3945, 0
        %v4006 = vsel %vm755, %v3946, 0
        %v4009 = vsel %vm755, %v3947, 0
        %v4012 = vsel %vm755, %v3948, 0
        %v4015 = vsel %vm755, %v3949, 0
        %v4018 = vsel %vm755, %v3950, 0
        %v4021 = vsel %vm755, %v3951, 0
        %v4024 = vsel %vm755, %v3952, 0
        %v4027 = vsel %vm755, %v3953, 0
        %v4030 = vsel %vm755, %v3954, 0
        %v4033 = vsel %vm755, %v3955, 0
        %v4036 = vsel %vm755, %v3956, 0
        %4038 = vmatpush.bf16.msra.mxu0 0
        %4039 = vmatpush.bf16.msra.mxu0 0
        %4040 = vmatpush.bf16.msra.mxu0 0
        %4041 = vmatpush.bf16.msra.mxu0 0
        %4042 = vmatpush.bf16.msra.mxu0 %v3985
        %4043 = vmatpush.bf16.msra.mxu0 %v3984
        %4044 = vmatpush.bf16.msra.mxu0 %v3983
        %4045 = vmatpush.bf16.msra.mxu0 %v3982
        %4046 = vmatmul.bf16.gmra.mxu0 %v3991
        %v4047 = vpop.f32.mrf.mxu0
        %v4048 = vadd.f32 0.0, %v4047
        %v4049 = vpop.f32.mrf.mxu0
        %v4050 = vadd.f32 0.0, %v4049
        %4051 = vmatmul.bf16.gmra.mxu0 %v3994
        %v4052 = vpop.f32.mrf.mxu0
        %v4053 = vadd.f32 0.0, %v4052
        %v4054 = vpop.f32.mrf.mxu0
        %v4055 = vadd.f32 0.0, %v4054
        %4056 = vmatmul.bf16.gmra.mxu0 %v3997
        %v4057 = vpop.f32.mrf.mxu0
        %v4058 = vadd.f32 0.0, %v4057
        %v4059 = vpop.f32.mrf.mxu0
        %v4060 = vadd.f32 0.0, %v4059
        %4061 = vmatmul.bf16.gmra.mxu0 %v4000
        %v4062 = vpop.f32.mrf.mxu0
        %v4063 = vadd.f32 0.0, %v4062
        %v4064 = vpop.f32.mrf.mxu0
        %v4065 = vadd.f32 0.0, %v4064
        %4066 = vmatmul.bf16.gmra.mxu0 %v4003
        %v4067 = vpop.f32.mrf.mxu0
        %v4068 = vadd.f32 0.0, %v4067
        %v4069 = vpop.f32.mrf.mxu0
        %v4070 = vadd.f32 0.0, %v4069
        %4071 = vmatmul.bf16.gmra.mxu0 %v4006
        %v4072 = vpop.f32.mrf.mxu0
        %v4073 = vadd.f32 0.0, %v4072
        %v4074 = vpop.f32.mrf.mxu0
        %v4075 = vadd.f32 0.0, %v4074
        %4076 = vmatmul.bf16.gmra.mxu0 %v4009
        %v4077 = vpop.f32.mrf.mxu0
        %v4078 = vadd.f32 0.0, %v4077
        %v4079 = vpop.f32.mrf.mxu0
        %v4080 = vadd.f32 0.0, %v4079
        %4081 = vmatmul.bf16.gmra.mxu0 %v4012
        %v4082 = vpop.f32.mrf.mxu0
        %v4083 = vadd.f32 0.0, %v4082
        %v4084 = vpop.f32.mrf.mxu0
        %v4085 = vadd.f32 0.0, %v4084
        %4086 = vmatmul.bf16.gmra.mxu0 %v4015
        %v4087 = vpop.f32.mrf.mxu0
        %v4088 = vadd.f32 0.0, %v4087
        %v4089 = vpop.f32.mrf.mxu0
        %v4090 = vadd.f32 0.0, %v4089
        %4091 = vmatmul.bf16.gmra.mxu0 %v4018
        %v4092 = vpop.f32.mrf.mxu0
        %v4093 = vadd.f32 0.0, %v4092
        %v4094 = vpop.f32.mrf.mxu0
        %v4095 = vadd.f32 0.0, %v4094
        %4096 = vmatmul.bf16.gmra.mxu0 %v4021
        %v4097 = vpop.f32.mrf.mxu0
        %v4098 = vadd.f32 0.0, %v4097
        %v4099 = vpop.f32.mrf.mxu0
        %v4100 = vadd.f32 0.0, %v4099
        %4101 = vmatmul.bf16.gmra.mxu0 %v4024
        %v4102 = vpop.f32.mrf.mxu0
        %v4103 = vadd.f32 0.0, %v4102
        %v4104 = vpop.f32.mrf.mxu0
        %v4105 = vadd.f32 0.0, %v4104
        %4106 = vmatmul.bf16.gmra.mxu0 %v4027
        %v4107 = vpop.f32.mrf.mxu0
        %v4108 = vadd.f32 0.0, %v4107
        %v4109 = vpop.f32.mrf.mxu0
        %v4110 = vadd.f32 0.0, %v4109
        %4111 = vmatmul.bf16.gmra.mxu0 %v4030
        %v4112 = vpop.f32.mrf.mxu0
        %v4113 = vadd.f32 0.0, %v4112
        %v4114 = vpop.f32.mrf.mxu0
        %v4115 = vadd.f32 0.0, %v4114
        %4116 = vmatmul.bf16.gmra.mxu0 %v4033
        %v4117 = vpop.f32.mrf.mxu0
        %v4118 = vadd.f32 0.0, %v4117
        %v4119 = vpop.f32.mrf.mxu0
        %v4120 = vadd.f32 0.0, %v4119
        %4121 = vmatmul.bf16.gmra.mxu0 %v4036
        %v4122 = vpop.f32.mrf.mxu0
        %v4123 = vadd.f32 0.0, %v4122
        %v4124 = vpop.f32.mrf.mxu0
        %v4125 = vadd.f32 0.0, %v4124
        %4126 = vdwg.mxu0
        %v4127 = vadd.f32 %v3877, %v4048
        %v4128 = vadd.f32 %v3878, %v4050
        %v4129 = vadd.f32 %v3879, %v4053
        %v4130 = vadd.f32 %v3880, %v4055
        %v4131 = vadd.f32 %v3881, %v4058
        %v4132 = vadd.f32 %v3882, %v4060
        %v4133 = vadd.f32 %v3883, %v4063
        %v4134 = vadd.f32 %v3884, %v4065
        %v4135 = vadd.f32 %v3885, %v4068
        %v4136 = vadd.f32 %v3886, %v4070
        %v4137 = vadd.f32 %v3887, %v4073
        %v4138 = vadd.f32 %v3888, %v4075
        %v4139 = vadd.f32 %v3889, %v4078
        %v4140 = vadd.f32 %v3890, %v4080
        %v4141 = vadd.f32 %v3891, %v4083
        %v4142 = vadd.f32 %v3892, %v4085
        %v4143 = vadd.f32 %v3893, %v4088
        %v4144 = vadd.f32 %v3894, %v4090
        %v4145 = vadd.f32 %v3895, %v4093
        %v4146 = vadd.f32 %v3896, %v4095
        %v4147 = vadd.f32 %v3897, %v4098
        %v4148 = vadd.f32 %v3898, %v4100
        %v4149 = vadd.f32 %v3899, %v4103
        %v4150 = vadd.f32 %v3900, %v4105
        %v4151 = vadd.f32 %v3901, %v4108
        %v4152 = vadd.f32 %v3902, %v4110
        %v4153 = vadd.f32 %v3903, %v4113
        %v4154 = vadd.f32 %v3904, %v4115
        %v4155 = vadd.f32 %v3905, %v4118
        %v4156 = vadd.f32 %v3906, %v4120
        %v4157 = vadd.f32 %v3907, %v4123
        %v4158 = vadd.f32 %v3908, %v4125
        %4159 = vst.msk [vmem:[#allocation4] sm:$0xff] %vm3529, %v4127
        %4160 = vst.msk [vmem:[#allocation4 + $0x8] sm:$0xff] %vm3529, %v4128
        %4161 = vst.msk [vmem:[#allocation4 + $0x10] sm:$0xff] %vm3529, %v4129
        %4162 = vst.msk [vmem:[#allocation4 + $0x18] sm:$0xff] %vm3529, %v4130
        %4163 = vst.msk [vmem:[#allocation4 + $0x20] sm:$0xff] %vm3529, %v4131
        %4164 = vst.msk [vmem:[#allocation4 + $0x28] sm:$0xff] %vm3529, %v4132
        %4165 = vst.msk [vmem:[#allocation4 + $0x30] sm:$0xff] %vm3529, %v4133
        %4166 = vst.msk [vmem:[#allocation4 + $0x38] sm:$0xff] %vm3529, %v4134
        %4167 = vst.msk [vmem:[#allocation4 + $0x40] sm:$0xff] %vm3529, %v4135
        %4168 = vst.msk [vmem:[#allocation4 + $0x48] sm:$0xff] %vm3529, %v4136
        %4169 = vst.msk [vmem:[#allocation4 + $0x50] sm:$0xff] %vm3529, %v4137
        %4170 = vst.msk [vmem:[#allocation4 + $0x58] sm:$0xff] %vm3529, %v4138
        %4171 = vst.msk [vmem:[#allocation4 + $0x60] sm:$0xff] %vm3529, %v4139
        %4172 = vst.msk [vmem:[#allocation4 + $0x68] sm:$0xff] %vm3529, %v4140
        %4173 = vst.msk [vmem:[#allocation4 + $0x70] sm:$0xff] %vm3529, %v4141
        %4174 = vst.msk [vmem:[#allocation4 + $0x78] sm:$0xff] %vm3529, %v4142
        %4175 = vst.msk [vmem:[#allocation4 + $0x80] sm:$0xff] %vm3529, %v4143
        %4176 = vst.msk [vmem:[#allocation4 + $0x88] sm:$0xff] %vm3529, %v4144
        %4177 = vst.msk [vmem:[#allocation4 + $0x90] sm:$0xff] %vm3529, %v4145
        %4178 = vst.msk [vmem:[#allocation4 + $0x98] sm:$0xff] %vm3529, %v4146
        %4179 = vst.msk [vmem:[#allocation4 + $0xa0] sm:$0xff] %vm3529, %v4147
        %4180 = vst.msk [vmem:[#allocation4 + $0xa8] sm:$0xff] %vm3529, %v4148
        %4181 = vst.msk [vmem:[#allocation4 + $0xb0] sm:$0xff] %vm3529, %v4149
        %4182 = vst.msk [vmem:[#allocation4 + $0xb8] sm:$0xff] %vm3529, %v4150
        %4183 = vst.msk [vmem:[#allocation4 + $0xc0] sm:$0xff] %vm3529, %v4151
        %4184 = vst.msk [vmem:[#allocation4 + $0xc8] sm:$0xff] %vm3529, %v4152
        %4185 = vst.msk [vmem:[#allocation4 + $0xd0] sm:$0xff] %vm3529, %v4153
        %4186 = vst.msk [vmem:[#allocation4 + $0xd8] sm:$0xff] %vm3529, %v4154
        %4187 = vst.msk [vmem:[#allocation4 + $0xe0] sm:$0xff] %vm3529, %v4155
        %4188 = vst.msk [vmem:[#allocation4 + $0xe8] sm:$0xff] %vm3529, %v4156
        %4189 = vst.msk [vmem:[#allocation4 + $0xf0] sm:$0xff] %vm3529, %v4157
        %4190 = vst.msk [vmem:[#allocation4 + $0xf8] sm:$0xf] %vm3561, %v4158
        %v4191 = vld [vmem:[#allocation4] sm:$0xff]
        %v4192 = vld [vmem:[#allocation4 + $0x8] sm:$0xff]
        %v4193 = vld [vmem:[#allocation4 + $0x10] sm:$0xff]
        %v4194 = vld [vmem:[#allocation4 + $0x18] sm:$0xff]
        %v4195 = vld [vmem:[#allocation4 + $0x20] sm:$0xff]
        %v4196 = vld [vmem:[#allocation4 + $0x28] sm:$0xff]
        %v4197 = vld [vmem:[#allocation4 + $0x30] sm:$0xff]
        %v4198 = vld [vmem:[#allocation4 + $0x38] sm:$0xff]
        %v4199 = vld [vmem:[#allocation4 + $0x40] sm:$0xff]
        %v4200 = vld [vmem:[#allocation4 + $0x48] sm:$0xff]
        %v4201 = vld [vmem:[#allocation4 + $0x50] sm:$0xff]
        %v4202 = vld [vmem:[#allocation4 + $0x58] sm:$0xff]
        %v4203 = vld [vmem:[#allocation4 + $0x60] sm:$0xff]
        %v4204 = vld [vmem:[#allocation4 + $0x68] sm:$0xff]
        %v4205 = vld [vmem:[#allocation4 + $0x70] sm:$0xff]
        %v4206 = vld [vmem:[#allocation4 + $0x78] sm:$0xff]
        %v4207 = vld [vmem:[#allocation4 + $0x80] sm:$0xff]
        %v4208 = vld [vmem:[#allocation4 + $0x88] sm:$0xff]
        %v4209 = vld [vmem:[#allocation4 + $0x90] sm:$0xff]
        %v4210 = vld [vmem:[#allocation4 + $0x98] sm:$0xff]
        %v4211 = vld [vmem:[#allocation4 + $0xa0] sm:$0xff]
        %v4212 = vld [vmem:[#allocation4 + $0xa8] sm:$0xff]
        %v4213 = vld [vmem:[#allocation4 + $0xb0] sm:$0xff]
        %v4214 = vld [vmem:[#allocation4 + $0xb8] sm:$0xff]
        %v4215 = vld [vmem:[#allocation4 + $0xc0] sm:$0xff]
        %v4216 = vld [vmem:[#allocation4 + $0xc8] sm:$0xff]
        %v4217 = vld [vmem:[#allocation4 + $0xd0] sm:$0xff]
        %v4218 = vld [vmem:[#allocation4 + $0xd8] sm:$0xff]
        %v4219 = vld [vmem:[#allocation4 + $0xe0] sm:$0xff]
        %v4220 = vld [vmem:[#allocation4 + $0xe8] sm:$0xff]
        %v4221 = vld [vmem:[#allocation4 + $0xf0] sm:$0xff]
        %v4222 = vld [vmem:[#allocation4 + $0xf8] sm:$0xf]
        %v4223 = vld [vmem:[#allocation3 + $0x3] sm:$0xff]
        %v4224 = vld [vmem:[#allocation3 + $0xb] sm:$0xff]
        %v4225 = vld [vmem:[#allocation3 + $0x13] sm:$0xff]
        %v4226 = vld [vmem:[#allocation3 + $0x1b] sm:$0xff]
        %v4227 = vld [vmem:[#allocation3 + $0x23] sm:$0xff]
        %v4228 = vld [vmem:[#allocation3 + $0x2b] sm:$0xff]
        %v4229 = vld [vmem:[#allocation3 + $0x33] sm:$0xff]
        %v4230 = vld [vmem:[#allocation3 + $0x3b] sm:$0xff]
        %v4231 = vld [vmem:[#allocation3 + $0x43] sm:$0xff]
        %v4232 = vld [vmem:[#allocation3 + $0x4b] sm:$0xff]
        %v4233 = vld [vmem:[#allocation3 + $0x53] sm:$0xff]
        %v4234 = vld [vmem:[#allocation3 + $0x5b] sm:$0xff]
        %v4235 = vld [vmem:[#allocation3 + $0x63] sm:$0xff]
        %v4236 = vld [vmem:[#allocation3 + $0x6b] sm:$0xff]
        %v4237 = vld [vmem:[#allocation3 + $0x73] sm:$0xff]
        %v4238 = vld [vmem:[#allocation3 + $0x7b] sm:$0xff]
        %v4239 = vld [vmem:[#allocation3 + $0x83] sm:$0xff]
        %v4240 = vld [vmem:[#allocation3 + $0x8b] sm:$0xff]
        %v4241 = vld [vmem:[#allocation3 + $0x93] sm:$0xff]
        %v4242 = vld [vmem:[#allocation3 + $0x9b] sm:$0xff]
        %v4243 = vld [vmem:[#allocation3 + $0xa3] sm:$0xff]
        %v4244 = vld [vmem:[#allocation3 + $0xab] sm:$0xff]
        %v4245 = vld [vmem:[#allocation3 + $0xb3] sm:$0xff]
        %v4246 = vld [vmem:[#allocation3 + $0xbb] sm:$0xff]
        %v4247 = vld [vmem:[#allocation3 + $0xc3] sm:$0xff]
        %v4248 = vld [vmem:[#allocation3 + $0xcb] sm:$0xff]
        %v4249 = vld [vmem:[#allocation3 + $0xd3] sm:$0xff]
        %v4250 = vld [vmem:[#allocation3 + $0xdb] sm:$0xff]
        %v4251 = vld [vmem:[#allocation3 + $0xe3] sm:$0xff]
        %v4252 = vld [vmem:[#allocation3 + $0xeb] sm:$0xff]
        %v4253 = vld [vmem:[#allocation3 + $0xf3] sm:$0xff]
        %v4254 = vld [vmem:[#allocation3 + $0xfb] sm:$0xf]
        %v4255 = vpack.c.bf16 %v4224, %v4223
        %v4256 = vpack.c.bf16 %v4226, %v4225
        %v4257 = vpack.c.bf16 %v4228, %v4227
        %v4258 = vpack.c.bf16 %v4230, %v4229
        %v4259 = vpack.c.bf16 %v4232, %v4231
        %v4260 = vpack.c.bf16 %v4234, %v4233
        %v4261 = vpack.c.bf16 %v4236, %v4235
        %v4262 = vpack.c.bf16 %v4238, %v4237
        %v4263 = vpack.c.bf16 %v4240, %v4239
        %v4264 = vpack.c.bf16 %v4242, %v4241
        %v4265 = vpack.c.bf16 %v4244, %v4243
        %v4266 = vpack.c.bf16 %v4246, %v4245
        %v4267 = vpack.c.bf16 %v4248, %v4247
        %v4268 = vpack.c.bf16 %v4250, %v4249
        %v4269 = vpack.c.bf16 %v4252, %v4251
        %v4270 = vpack.c.bf16 %v4254, %v4253
        %s4271 = scalar_lea.vmem %s3, 96
        %v4272 = vld [vmem:[%s4271] sm:$0xf]
        %v4273 = vld [vmem:[%s4271 + $0x4] sm:$0xf]
        %v4274 = vld [vmem:[%s4271 + $0x8] sm:$0xf]
        %v4275 = vld [vmem:[%s4271 + $0xc] sm:$0xf]
        %v4276 = vld [vmem:[%s4271 + $0x10] sm:$0xf]
        %v4277 = vld [vmem:[%s4271 + $0x14] sm:$0xf]
        %v4278 = vld [vmem:[%s4271 + $0x18] sm:$0xf]
        %v4279 = vld [vmem:[%s4271 + $0x1c] sm:$0xf]
        %v4288 = vunpack.c.l.b16 %v4272
        %v4289 = vunpack.c.l.b16 %v4273
        %v4290 = vunpack.c.l.b16 %v4274
        %v4291 = vunpack.c.l.b16 %v4275
        %v4292 = vunpack.c.l.b16 %v4276
        %v4293 = vunpack.c.l.b16 %v4277
        %v4294 = vunpack.c.l.b16 %v4278
        %v4295 = vunpack.c.l.b16 %v4279
        %v4296 = vpack.c.b16 %v4289, %v4288
        %v4297 = vpack.c.b16 %v4291, %v4290
        %v4298 = vpack.c.b16 %v4293, %v4292
        %v4299 = vpack.c.b16 %v4295, %v4294
        %v4305 = vsel %vm755, %v4255, 0
        %v4308 = vsel %vm755, %v4256, 0
        %v4311 = vsel %vm755, %v4257, 0
        %v4314 = vsel %vm755, %v4258, 0
        %v4317 = vsel %vm755, %v4259, 0
        %v4320 = vsel %vm755, %v4260, 0
        %v4323 = vsel %vm755, %v4261, 0
        %v4326 = vsel %vm755, %v4262, 0
        %v4329 = vsel %vm755, %v4263, 0
        %v4332 = vsel %vm755, %v4264, 0
        %v4335 = vsel %vm755, %v4265, 0
        %v4338 = vsel %vm755, %v4266, 0
        %v4341 = vsel %vm755, %v4267, 0
        %v4344 = vsel %vm755, %v4268, 0
        %v4347 = vsel %vm755, %v4269, 0
        %v4350 = vsel %vm755, %v4270, 0
        %4352 = vmatpush.bf16.msra.mxu0 0
        %4353 = vmatpush.bf16.msra.mxu0 0
        %4354 = vmatpush.bf16.msra.mxu0 0
        %4355 = vmatpush.bf16.msra.mxu0 0
        %4356 = vmatpush.bf16.msra.mxu0 %v4299
        %4357 = vmatpush.bf16.msra.mxu0 %v4298
        %4358 = vmatpush.bf16.msra.mxu0 %v4297
        %4359 = vmatpush.bf16.msra.mxu0 %v4296
        %4360 = vmatmul.bf16.gmra.mxu0 %v4305
        %v4361 = vpop.f32.mrf.mxu0
        %v4362 = vadd.f32 0.0, %v4361
        %v4363 = vpop.f32.mrf.mxu0
        %v4364 = vadd.f32 0.0, %v4363
        %4365 = vmatmul.bf16.gmra.mxu0 %v4308
        %v4366 = vpop.f32.mrf.mxu0
        %v4367 = vadd.f32 0.0, %v4366
        %v4368 = vpop.f32.mrf.mxu0
        %v4369 = vadd.f32 0.0, %v4368
        %4370 = vmatmul.bf16.gmra.mxu0 %v4311
        %v4371 = vpop.f32.mrf.mxu0
        %v4372 = vadd.f32 0.0, %v4371
        %v4373 = vpop.f32.mrf.mxu0
        %v4374 = vadd.f32 0.0, %v4373
        %4375 = vmatmul.bf16.gmra.mxu0 %v4314
        %v4376 = vpop.f32.mrf.mxu0
        %v4377 = vadd.f32 0.0, %v4376
        %v4378 = vpop.f32.mrf.mxu0
        %v4379 = vadd.f32 0.0, %v4378
        %4380 = vmatmul.bf16.gmra.mxu0 %v4317
        %v4381 = vpop.f32.mrf.mxu0
        %v4382 = vadd.f32 0.0, %v4381
        %v4383 = vpop.f32.mrf.mxu0
        %v4384 = vadd.f32 0.0, %v4383
        %4385 = vmatmul.bf16.gmra.mxu0 %v4320
        %v4386 = vpop.f32.mrf.mxu0
        %v4387 = vadd.f32 0.0, %v4386
        %v4388 = vpop.f32.mrf.mxu0
        %v4389 = vadd.f32 0.0, %v4388
        %4390 = vmatmul.bf16.gmra.mxu0 %v4323
        %v4391 = vpop.f32.mrf.mxu0
        %v4392 = vadd.f32 0.0, %v4391
        %v4393 = vpop.f32.mrf.mxu0
        %v4394 = vadd.f32 0.0, %v4393
        %4395 = vmatmul.bf16.gmra.mxu0 %v4326
        %v4396 = vpop.f32.mrf.mxu0
        %v4397 = vadd.f32 0.0, %v4396
        %v4398 = vpop.f32.mrf.mxu0
        %v4399 = vadd.f32 0.0, %v4398
        %4400 = vmatmul.bf16.gmra.mxu0 %v4329
        %v4401 = vpop.f32.mrf.mxu0
        %v4402 = vadd.f32 0.0, %v4401
        %v4403 = vpop.f32.mrf.mxu0
        %v4404 = vadd.f32 0.0, %v4403
        %4405 = vmatmul.bf16.gmra.mxu0 %v4332
        %v4406 = vpop.f32.mrf.mxu0
        %v4407 = vadd.f32 0.0, %v4406
        %v4408 = vpop.f32.mrf.mxu0
        %v4409 = vadd.f32 0.0, %v4408
        %4410 = vmatmul.bf16.gmra.mxu0 %v4335
        %v4411 = vpop.f32.mrf.mxu0
        %v4412 = vadd.f32 0.0, %v4411
        %v4413 = vpop.f32.mrf.mxu0
        %v4414 = vadd.f32 0.0, %v4413
        %4415 = vmatmul.bf16.gmra.mxu0 %v4338
        %v4416 = vpop.f32.mrf.mxu0
        %v4417 = vadd.f32 0.0, %v4416
        %v4418 = vpop.f32.mrf.mxu0
        %v4419 = vadd.f32 0.0, %v4418
        %4420 = vmatmul.bf16.gmra.mxu0 %v4341
        %v4421 = vpop.f32.mrf.mxu0
        %v4422 = vadd.f32 0.0, %v4421
        %v4423 = vpop.f32.mrf.mxu0
        %v4424 = vadd.f32 0.0, %v4423
        %4425 = vmatmul.bf16.gmra.mxu0 %v4344
        %v4426 = vpop.f32.mrf.mxu0
        %v4427 = vadd.f32 0.0, %v4426
        %v4428 = vpop.f32.mrf.mxu0
        %v4429 = vadd.f32 0.0, %v4428
        %4430 = vmatmul.bf16.gmra.mxu0 %v4347
        %v4431 = vpop.f32.mrf.mxu0
        %v4432 = vadd.f32 0.0, %v4431
        %v4433 = vpop.f32.mrf.mxu0
        %v4434 = vadd.f32 0.0, %v4433
        %4435 = vmatmul.bf16.gmra.mxu0 %v4350
        %v4436 = vpop.f32.mrf.mxu0
        %v4437 = vadd.f32 0.0, %v4436
        %v4438 = vpop.f32.mrf.mxu0
        %v4439 = vadd.f32 0.0, %v4438
        %4440 = vdwg.mxu0
        %v4441 = vadd.f32 %v4191, %v4362
        %v4442 = vadd.f32 %v4192, %v4364
        %v4443 = vadd.f32 %v4193, %v4367
        %v4444 = vadd.f32 %v4194, %v4369
        %v4445 = vadd.f32 %v4195, %v4372
        %v4446 = vadd.f32 %v4196, %v4374
        %v4447 = vadd.f32 %v4197, %v4377
        %v4448 = vadd.f32 %v4198, %v4379
        %v4449 = vadd.f32 %v4199, %v4382
        %v4450 = vadd.f32 %v4200, %v4384
        %v4451 = vadd.f32 %v4201, %v4387
        %v4452 = vadd.f32 %v4202, %v4389
        %v4453 = vadd.f32 %v4203, %v4392
        %v4454 = vadd.f32 %v4204, %v4394
        %v4455 = vadd.f32 %v4205, %v4397
        %v4456 = vadd.f32 %v4206, %v4399
        %v4457 = vadd.f32 %v4207, %v4402
        %v4458 = vadd.f32 %v4208, %v4404
        %v4459 = vadd.f32 %v4209, %v4407
        %v4460 = vadd.f32 %v4210, %v4409
        %v4461 = vadd.f32 %v4211, %v4412
        %v4462 = vadd.f32 %v4212, %v4414
        %v4463 = vadd.f32 %v4213, %v4417
        %v4464 = vadd.f32 %v4214, %v4419
        %v4465 = vadd.f32 %v4215, %v4422
        %v4466 = vadd.f32 %v4216, %v4424
        %v4467 = vadd.f32 %v4217, %v4427
        %v4468 = vadd.f32 %v4218, %v4429
        %v4469 = vadd.f32 %v4219, %v4432
        %v4470 = vadd.f32 %v4220, %v4434
        %v4471 = vadd.f32 %v4221, %v4437
        %v4472 = vadd.f32 %v4222, %v4439
        %4473 = vst.msk [vmem:[#allocation4] sm:$0xff] %vm3529, %v4441
        %4474 = vst.msk [vmem:[#allocation4 + $0x8] sm:$0xff] %vm3529, %v4442
        %4475 = vst.msk [vmem:[#allocation4 + $0x10] sm:$0xff] %vm3529, %v4443
        %4476 = vst.msk [vmem:[#allocation4 + $0x18] sm:$0xff] %vm3529, %v4444
        %4477 = vst.msk [vmem:[#allocation4 + $0x20] sm:$0xff] %vm3529, %v4445
        %4478 = vst.msk [vmem:[#allocation4 + $0x28] sm:$0xff] %vm3529, %v4446
        %4479 = vst.msk [vmem:[#allocation4 + $0x30] sm:$0xff] %vm3529, %v4447
        %4480 = vst.msk [vmem:[#allocation4 + $0x38] sm:$0xff] %vm3529, %v4448
        %4481 = vst.msk [vmem:[#allocation4 + $0x40] sm:$0xff] %vm3529, %v4449
        %4482 = vst.msk [vmem:[#allocation4 + $0x48] sm:$0xff] %vm3529, %v4450
        %4483 = vst.msk [vmem:[#allocation4 + $0x50] sm:$0xff] %vm3529, %v4451
        %4484 = vst.msk [vmem:[#allocation4 + $0x58] sm:$0xff] %vm3529, %v4452
        %4485 = vst.msk [vmem:[#allocation4 + $0x60] sm:$0xff] %vm3529, %v4453
        %4486 = vst.msk [vmem:[#allocation4 + $0x68] sm:$0xff] %vm3529, %v4454
        %4487 = vst.msk [vmem:[#allocation4 + $0x70] sm:$0xff] %vm3529, %v4455
        %4488 = vst.msk [vmem:[#allocation4 + $0x78] sm:$0xff] %vm3529, %v4456
        %4489 = vst.msk [vmem:[#allocation4 + $0x80] sm:$0xff] %vm3529, %v4457
        %4490 = vst.msk [vmem:[#allocation4 + $0x88] sm:$0xff] %vm3529, %v4458
        %4491 = vst.msk [vmem:[#allocation4 + $0x90] sm:$0xff] %vm3529, %v4459
        %4492 = vst.msk [vmem:[#allocation4 + $0x98] sm:$0xff] %vm3529, %v4460
        %4493 = vst.msk [vmem:[#allocation4 + $0xa0] sm:$0xff] %vm3529, %v4461
        %4494 = vst.msk [vmem:[#allocation4 + $0xa8] sm:$0xff] %vm3529, %v4462
        %4495 = vst.msk [vmem:[#allocation4 + $0xb0] sm:$0xff] %vm3529, %v4463
        %4496 = vst.msk [vmem:[#allocation4 + $0xb8] sm:$0xff] %vm3529, %v4464
        %4497 = vst.msk [vmem:[#allocation4 + $0xc0] sm:$0xff] %vm3529, %v4465
        %4498 = vst.msk [vmem:[#allocation4 + $0xc8] sm:$0xff] %vm3529, %v4466
        %4499 = vst.msk [vmem:[#allocation4 + $0xd0] sm:$0xff] %vm3529, %v4467
        %4500 = vst.msk [vmem:[#allocation4 + $0xd8] sm:$0xff] %vm3529, %v4468
        %4501 = vst.msk [vmem:[#allocation4 + $0xe0] sm:$0xff] %vm3529, %v4469
        %4502 = vst.msk [vmem:[#allocation4 + $0xe8] sm:$0xff] %vm3529, %v4470
        %4503 = vst.msk [vmem:[#allocation4 + $0xf0] sm:$0xff] %vm3529, %v4471
        %4504 = vst.msk [vmem:[#allocation4 + $0xf8] sm:$0xf] %vm3561, %v4472
        %v4505 = vld [vmem:[#allocation4] sm:$0xff]
        %v4506 = vld [vmem:[#allocation4 + $0x8] sm:$0xff]
        %v4507 = vld [vmem:[#allocation4 + $0x10] sm:$0xff]
        %v4508 = vld [vmem:[#allocation4 + $0x18] sm:$0xff]
        %v4509 = vld [vmem:[#allocation4 + $0x20] sm:$0xff]
        %v4510 = vld [vmem:[#allocation4 + $0x28] sm:$0xff]
        %v4511 = vld [vmem:[#allocation4 + $0x30] sm:$0xff]
        %v4512 = vld [vmem:[#allocation4 + $0x38] sm:$0xff]
        %v4513 = vld [vmem:[#allocation4 + $0x40] sm:$0xff]
        %v4514 = vld [vmem:[#allocation4 + $0x48] sm:$0xff]
        %v4515 = vld [vmem:[#allocation4 + $0x50] sm:$0xff]
        %v4516 = vld [vmem:[#allocation4 + $0x58] sm:$0xff]
        %v4517 = vld [vmem:[#allocation4 + $0x60] sm:$0xff]
        %v4518 = vld [vmem:[#allocation4 + $0x68] sm:$0xff]
        %v4519 = vld [vmem:[#allocation4 + $0x70] sm:$0xff]
        %v4520 = vld [vmem:[#allocation4 + $0x78] sm:$0xff]
        %v4521 = vld [vmem:[#allocation4 + $0x80] sm:$0xff]
        %v4522 = vld [vmem:[#allocation4 + $0x88] sm:$0xff]
        %v4523 = vld [vmem:[#allocation4 + $0x90] sm:$0xff]
        %v4524 = vld [vmem:[#allocation4 + $0x98] sm:$0xff]
        %v4525 = vld [vmem:[#allocation4 + $0xa0] sm:$0xff]
        %v4526 = vld [vmem:[#allocation4 + $0xa8] sm:$0xff]
        %v4527 = vld [vmem:[#allocation4 + $0xb0] sm:$0xff]
        %v4528 = vld [vmem:[#allocation4 + $0xb8] sm:$0xff]
        %v4529 = vld [vmem:[#allocation4 + $0xc0] sm:$0xff]
        %v4530 = vld [vmem:[#allocation4 + $0xc8] sm:$0xff]
        %v4531 = vld [vmem:[#allocation4 + $0xd0] sm:$0xff]
        %v4532 = vld [vmem:[#allocation4 + $0xd8] sm:$0xff]
        %v4533 = vld [vmem:[#allocation4 + $0xe0] sm:$0xff]
        %v4534 = vld [vmem:[#allocation4 + $0xe8] sm:$0xff]
        %v4535 = vld [vmem:[#allocation4 + $0xf0] sm:$0xff]
        %v4536 = vld [vmem:[#allocation4 + $0xf8] sm:$0xf]
        %v4537 = vld [vmem:[#allocation3 + $0x4] sm:$0xff]
        %v4538 = vld [vmem:[#allocation3 + $0xc] sm:$0xff]
        %v4539 = vld [vmem:[#allocation3 + $0x14] sm:$0xff]
        %v4540 = vld [vmem:[#allocation3 + $0x1c] sm:$0xff]
        %v4541 = vld [vmem:[#allocation3 + $0x24] sm:$0xff]
        %v4542 = vld [vmem:[#allocation3 + $0x2c] sm:$0xff]
        %v4543 = vld [vmem:[#allocation3 + $0x34] sm:$0xff]
        %v4544 = vld [vmem:[#allocation3 + $0x3c] sm:$0xff]
        %v4545 = vld [vmem:[#allocation3 + $0x44] sm:$0xff]
        %v4546 = vld [vmem:[#allocation3 + $0x4c] sm:$0xff]
        %v4547 = vld [vmem:[#allocation3 + $0x54] sm:$0xff]
        %v4548 = vld [vmem:[#allocation3 + $0x5c] sm:$0xff]
        %v4549 = vld [vmem:[#allocation3 + $0x64] sm:$0xff]
        %v4550 = vld [vmem:[#allocation3 + $0x6c] sm:$0xff]
        %v4551 = vld [vmem:[#allocation3 + $0x74] sm:$0xff]
        %v4552 = vld [vmem:[#allocation3 + $0x7c] sm:$0xff]
        %v4553 = vld [vmem:[#allocation3 + $0x84] sm:$0xff]
        %v4554 = vld [vmem:[#allocation3 + $0x8c] sm:$0xff]
        %v4555 = vld [vmem:[#allocation3 + $0x94] sm:$0xff]
        %v4556 = vld [vmem:[#allocation3 + $0x9c] sm:$0xff]
        %v4557 = vld [vmem:[#allocation3 + $0xa4] sm:$0xff]
        %v4558 = vld [vmem:[#allocation3 + $0xac] sm:$0xff]
        %v4559 = vld [vmem:[#allocation3 + $0xb4] sm:$0xff]
        %v4560 = vld [vmem:[#allocation3 + $0xbc] sm:$0xff]
        %v4561 = vld [vmem:[#allocation3 + $0xc4] sm:$0xff]
        %v4562 = vld [vmem:[#allocation3 + $0xcc] sm:$0xff]
        %v4563 = vld [vmem:[#allocation3 + $0xd4] sm:$0xff]
        %v4564 = vld [vmem:[#allocation3 + $0xdc] sm:$0xff]
        %v4565 = vld [vmem:[#allocation3 + $0xe4] sm:$0xff]
        %v4566 = vld [vmem:[#allocation3 + $0xec] sm:$0xff]
        %v4567 = vld [vmem:[#allocation3 + $0xf4] sm:$0xff]
        %v4568 = vld [vmem:[#allocation3 + $0xfc] sm:$0xf]
        %v4569 = vpack.c.bf16 %v4538, %v4537
        %v4570 = vpack.c.bf16 %v4540, %v4539
        %v4571 = vpack.c.bf16 %v4542, %v4541
        %v4572 = vpack.c.bf16 %v4544, %v4543
        %v4573 = vpack.c.bf16 %v4546, %v4545
        %v4574 = vpack.c.bf16 %v4548, %v4547
        %v4575 = vpack.c.bf16 %v4550, %v4549
        %v4576 = vpack.c.bf16 %v4552, %v4551
        %v4577 = vpack.c.bf16 %v4554, %v4553
        %v4578 = vpack.c.bf16 %v4556, %v4555
        %v4579 = vpack.c.bf16 %v4558, %v4557
        %v4580 = vpack.c.bf16 %v4560, %v4559
        %v4581 = vpack.c.bf16 %v4562, %v4561
        %v4582 = vpack.c.bf16 %v4564, %v4563
        %v4583 = vpack.c.bf16 %v4566, %v4565
        %v4584 = vpack.c.bf16 %v4568, %v4567
        %s4585 = scalar_lea.vmem %s3, 128
        %v4586 = vld [vmem:[%s4585] sm:$0xf]
        %v4587 = vld [vmem:[%s4585 + $0x4] sm:$0xf]
        %v4588 = vld [vmem:[%s4585 + $0x8] sm:$0xf]
        %v4589 = vld [vmem:[%s4585 + $0xc] sm:$0xf]
        %v4590 = vld [vmem:[%s4585 + $0x10] sm:$0xf]
        %v4591 = vld [vmem:[%s4585 + $0x14] sm:$0xf]
        %v4592 = vld [vmem:[%s4585 + $0x18] sm:$0xf]
        %v4593 = vld [vmem:[%s4585 + $0x1c] sm:$0xf]
        %v4602 = vunpack.c.l.b16 %v4586
        %v4603 = vunpack.c.l.b16 %v4587
        %v4604 = vunpack.c.l.b16 %v4588
        %v4605 = vunpack.c.l.b16 %v4589
        %v4606 = vunpack.c.l.b16 %v4590
        %v4607 = vunpack.c.l.b16 %v4591
        %v4608 = vunpack.c.l.b16 %v4592
        %v4609 = vunpack.c.l.b16 %v4593
        %v4610 = vpack.c.b16 %v4603, %v4602
        %v4611 = vpack.c.b16 %v4605, %v4604
        %v4612 = vpack.c.b16 %v4607, %v4606
        %v4613 = vpack.c.b16 %v4609, %v4608
        %v4619 = vsel %vm755, %v4569, 0
        %v4622 = vsel %vm755, %v4570, 0
        %v4625 = vsel %vm755, %v4571, 0
        %v4628 = vsel %vm755, %v4572, 0
        %v4631 = vsel %vm755, %v4573, 0
        %v4634 = vsel %vm755, %v4574, 0
        %v4637 = vsel %vm755, %v4575, 0
        %v4640 = vsel %vm755, %v4576, 0
        %v4643 = vsel %vm755, %v4577, 0
        %v4646 = vsel %vm755, %v4578, 0
        %v4649 = vsel %vm755, %v4579, 0
        %v4652 = vsel %vm755, %v4580, 0
        %v4655 = vsel %vm755, %v4581, 0
        %v4658 = vsel %vm755, %v4582, 0
        %v4661 = vsel %vm755, %v4583, 0
        %v4664 = vsel %vm755, %v4584, 0
        %4666 = vmatpush.bf16.msra.mxu0 0
        %4667 = vmatpush.bf16.msra.mxu0 0
        %4668 = vmatpush.bf16.msra.mxu0 0
        %4669 = vmatpush.bf16.msra.mxu0 0
        %4670 = vmatpush.bf16.msra.mxu0 %v4613
        %4671 = vmatpush.bf16.msra.mxu0 %v4612
        %4672 = vmatpush.bf16.msra.mxu0 %v4611
        %4673 = vmatpush.bf16.msra.mxu0 %v4610
        %4674 = vmatmul.bf16.gmra.mxu0 %v4619
        %v4675 = vpop.f32.mrf.mxu0
        %v4676 = vadd.f32 0.0, %v4675
        %v4677 = vpop.f32.mrf.mxu0
        %v4678 = vadd.f32 0.0, %v4677
        %4679 = vmatmul.bf16.gmra.mxu0 %v4622
        %v4680 = vpop.f32.mrf.mxu0
        %v4681 = vadd.f32 0.0, %v4680
        %v4682 = vpop.f32.mrf.mxu0
        %v4683 = vadd.f32 0.0, %v4682
        %4684 = vmatmul.bf16.gmra.mxu0 %v4625
        %v4685 = vpop.f32.mrf.mxu0
        %v4686 = vadd.f32 0.0, %v4685
        %v4687 = vpop.f32.mrf.mxu0
        %v4688 = vadd.f32 0.0, %v4687
        %4689 = vmatmul.bf16.gmra.mxu0 %v4628
        %v4690 = vpop.f32.mrf.mxu0
        %v4691 = vadd.f32 0.0, %v4690
        %v4692 = vpop.f32.mrf.mxu0
        %v4693 = vadd.f32 0.0, %v4692
        %4694 = vmatmul.bf16.gmra.mxu0 %v4631
        %v4695 = vpop.f32.mrf.mxu0
        %v4696 = vadd.f32 0.0, %v4695
        %v4697 = vpop.f32.mrf.mxu0
        %v4698 = vadd.f32 0.0, %v4697
        %4699 = vmatmul.bf16.gmra.mxu0 %v4634
        %v4700 = vpop.f32.mrf.mxu0
        %v4701 = vadd.f32 0.0, %v4700
        %v4702 = vpop.f32.mrf.mxu0
        %v4703 = vadd.f32 0.0, %v4702
        %4704 = vmatmul.bf16.gmra.mxu0 %v4637
        %v4705 = vpop.f32.mrf.mxu0
        %v4706 = vadd.f32 0.0, %v4705
        %v4707 = vpop.f32.mrf.mxu0
        %v4708 = vadd.f32 0.0, %v4707
        %4709 = vmatmul.bf16.gmra.mxu0 %v4640
        %v4710 = vpop.f32.mrf.mxu0
        %v4711 = vadd.f32 0.0, %v4710
        %v4712 = vpop.f32.mrf.mxu0
        %v4713 = vadd.f32 0.0, %v4712
        %4714 = vmatmul.bf16.gmra.mxu0 %v4643
        %v4715 = vpop.f32.mrf.mxu0
        %v4716 = vadd.f32 0.0, %v4715
        %v4717 = vpop.f32.mrf.mxu0
        %v4718 = vadd.f32 0.0, %v4717
        %4719 = vmatmul.bf16.gmra.mxu0 %v4646
        %v4720 = vpop.f32.mrf.mxu0
        %v4721 = vadd.f32 0.0, %v4720
        %v4722 = vpop.f32.mrf.mxu0
        %v4723 = vadd.f32 0.0, %v4722
        %4724 = vmatmul.bf16.gmra.mxu0 %v4649
        %v4725 = vpop.f32.mrf.mxu0
        %v4726 = vadd.f32 0.0, %v4725
        %v4727 = vpop.f32.mrf.mxu0
        %v4728 = vadd.f32 0.0, %v4727
        %4729 = vmatmul.bf16.gmra.mxu0 %v4652
        %v4730 = vpop.f32.mrf.mxu0
        %v4731 = vadd.f32 0.0, %v4730
        %v4732 = vpop.f32.mrf.mxu0
        %v4733 = vadd.f32 0.0, %v4732
        %4734 = vmatmul.bf16.gmra.mxu0 %v4655
        %v4735 = vpop.f32.mrf.mxu0
        %v4736 = vadd.f32 0.0, %v4735
        %v4737 = vpop.f32.mrf.mxu0
        %v4738 = vadd.f32 0.0, %v4737
        %4739 = vmatmul.bf16.gmra.mxu0 %v4658
        %v4740 = vpop.f32.mrf.mxu0
        %v4741 = vadd.f32 0.0, %v4740
        %v4742 = vpop.f32.mrf.mxu0
        %v4743 = vadd.f32 0.0, %v4742
        %4744 = vmatmul.bf16.gmra.mxu0 %v4661
        %v4745 = vpop.f32.mrf.mxu0
        %v4746 = vadd.f32 0.0, %v4745
        %v4747 = vpop.f32.mrf.mxu0
        %v4748 = vadd.f32 0.0, %v4747
        %4749 = vmatmul.bf16.gmra.mxu0 %v4664
        %v4750 = vpop.f32.mrf.mxu0
        %v4751 = vadd.f32 0.0, %v4750
        %v4752 = vpop.f32.mrf.mxu0
        %v4753 = vadd.f32 0.0, %v4752
        %4754 = vdwg.mxu0
        %v4755 = vadd.f32 %v4505, %v4676
        %v4756 = vadd.f32 %v4506, %v4678
        %v4757 = vadd.f32 %v4507, %v4681
        %v4758 = vadd.f32 %v4508, %v4683
        %v4759 = vadd.f32 %v4509, %v4686
        %v4760 = vadd.f32 %v4510, %v4688
        %v4761 = vadd.f32 %v4511, %v4691
        %v4762 = vadd.f32 %v4512, %v4693
        %v4763 = vadd.f32 %v4513, %v4696
        %v4764 = vadd.f32 %v4514, %v4698
        %v4765 = vadd.f32 %v4515, %v4701
        %v4766 = vadd.f32 %v4516, %v4703
        %v4767 = vadd.f32 %v4517, %v4706
        %v4768 = vadd.f32 %v4518, %v4708
        %v4769 = vadd.f32 %v4519, %v4711
        %v4770 = vadd.f32 %v4520, %v4713
        %v4771 = vadd.f32 %v4521, %v4716
        %v4772 = vadd.f32 %v4522, %v4718
        %v4773 = vadd.f32 %v4523, %v4721
        %v4774 = vadd.f32 %v4524, %v4723
        %v4775 = vadd.f32 %v4525, %v4726
        %v4776 = vadd.f32 %v4526, %v4728
        %v4777 = vadd.f32 %v4527, %v4731
        %v4778 = vadd.f32 %v4528, %v4733
        %v4779 = vadd.f32 %v4529, %v4736
        %v4780 = vadd.f32 %v4530, %v4738
        %v4781 = vadd.f32 %v4531, %v4741
        %v4782 = vadd.f32 %v4532, %v4743
        %v4783 = vadd.f32 %v4533, %v4746
        %v4784 = vadd.f32 %v4534, %v4748
        %v4785 = vadd.f32 %v4535, %v4751
        %v4786 = vadd.f32 %v4536, %v4753
        %4787 = vst.msk [vmem:[#allocation4] sm:$0xff] %vm3529, %v4755
        %4788 = vst.msk [vmem:[#allocation4 + $0x8] sm:$0xff] %vm3529, %v4756
        %4789 = vst.msk [vmem:[#allocation4 + $0x10] sm:$0xff] %vm3529, %v4757
        %4790 = vst.msk [vmem:[#allocation4 + $0x18] sm:$0xff] %vm3529, %v4758
        %4791 = vst.msk [vmem:[#allocation4 + $0x20] sm:$0xff] %vm3529, %v4759
        %4792 = vst.msk [vmem:[#allocation4 + $0x28] sm:$0xff] %vm3529, %v4760
        %4793 = vst.msk [vmem:[#allocation4 + $0x30] sm:$0xff] %vm3529, %v4761
        %4794 = vst.msk [vmem:[#allocation4 + $0x38] sm:$0xff] %vm3529, %v4762
        %4795 = vst.msk [vmem:[#allocation4 + $0x40] sm:$0xff] %vm3529, %v4763
        %4796 = vst.msk [vmem:[#allocation4 + $0x48] sm:$0xff] %vm3529, %v4764
        %4797 = vst.msk [vmem:[#allocation4 + $0x50] sm:$0xff] %vm3529, %v4765
        %4798 = vst.msk [vmem:[#allocation4 + $0x58] sm:$0xff] %vm3529, %v4766
        %4799 = vst.msk [vmem:[#allocation4 + $0x60] sm:$0xff] %vm3529, %v4767
        %4800 = vst.msk [vmem:[#allocation4 + $0x68] sm:$0xff] %vm3529, %v4768
        %4801 = vst.msk [vmem:[#allocation4 + $0x70] sm:$0xff] %vm3529, %v4769
        %4802 = vst.msk [vmem:[#allocation4 + $0x78] sm:$0xff] %vm3529, %v4770
        %4803 = vst.msk [vmem:[#allocation4 + $0x80] sm:$0xff] %vm3529, %v4771
        %4804 = vst.msk [vmem:[#allocation4 + $0x88] sm:$0xff] %vm3529, %v4772
        %4805 = vst.msk [vmem:[#allocation4 + $0x90] sm:$0xff] %vm3529, %v4773
        %4806 = vst.msk [vmem:[#allocation4 + $0x98] sm:$0xff] %vm3529, %v4774
        %4807 = vst.msk [vmem:[#allocation4 + $0xa0] sm:$0xff] %vm3529, %v4775
        %4808 = vst.msk [vmem:[#allocation4 + $0xa8] sm:$0xff] %vm3529, %v4776
        %4809 = vst.msk [vmem:[#allocation4 + $0xb0] sm:$0xff] %vm3529, %v4777
        %4810 = vst.msk [vmem:[#allocation4 + $0xb8] sm:$0xff] %vm3529, %v4778
        %4811 = vst.msk [vmem:[#allocation4 + $0xc0] sm:$0xff] %vm3529, %v4779
        %4812 = vst.msk [vmem:[#allocation4 + $0xc8] sm:$0xff] %vm3529, %v4780
        %4813 = vst.msk [vmem:[#allocation4 + $0xd0] sm:$0xff] %vm3529, %v4781
        %4814 = vst.msk [vmem:[#allocation4 + $0xd8] sm:$0xff] %vm3529, %v4782
        %4815 = vst.msk [vmem:[#allocation4 + $0xe0] sm:$0xff] %vm3529, %v4783
        %4816 = vst.msk [vmem:[#allocation4 + $0xe8] sm:$0xff] %vm3529, %v4784
        %4817 = vst.msk [vmem:[#allocation4 + $0xf0] sm:$0xff] %vm3529, %v4785
        %4818 = vst.msk [vmem:[#allocation4 + $0xf8] sm:$0xf] %vm3561, %v4786
        %v4819 = vld [vmem:[#allocation4] ss:$2 sm:$0xff]
        %s4820 = scalar_lea.vmem [#allocation4], 16
        %v4821 = vld [vmem:[%s4820] ss:$2 sm:$0xff]
        %s4822 = scalar_lea.vmem [#allocation4], 32
        %v4823 = vld [vmem:[%s4822] ss:$2 sm:$0xff]
        %s4824 = scalar_lea.vmem [#allocation4], 48
        %v4825 = vld [vmem:[%s4824] ss:$2 sm:$0xff]
        %s4826 = scalar_lea.vmem [#allocation4], 64
        %v4827 = vld [vmem:[%s4826] ss:$2 sm:$0xff]
        %s4828 = scalar_lea.vmem [#allocation4], 80
        %v4829 = vld [vmem:[%s4828] ss:$2 sm:$0xff]
        %s4830 = scalar_lea.vmem [#allocation4], 96
        %v4831 = vld [vmem:[%s4830] ss:$2 sm:$0xff]
        %s4832 = scalar_lea.vmem [#allocation4], 112
        %v4833 = vld [vmem:[%s4832] ss:$2 sm:$0xff]
        %s4834 = scalar_lea.vmem [#allocation4], 128
        %v4835 = vld [vmem:[%s4834] ss:$2 sm:$0xff]
        %s4836 = scalar_lea.vmem [#allocation4], 144
        %v4837 = vld [vmem:[%s4836] ss:$2 sm:$0xff]
        %s4838 = scalar_lea.vmem [#allocation4], 160
        %v4839 = vld [vmem:[%s4838] ss:$2 sm:$0xff]
        %s4840 = scalar_lea.vmem [#allocation4], 176
        %v4841 = vld [vmem:[%s4840] ss:$2 sm:$0xff]
        %s4842 = scalar_lea.vmem [#allocation4], 192
        %v4843 = vld [vmem:[%s4842] ss:$2 sm:$0xff]
        %s4844 = scalar_lea.vmem [#allocation4], 208
        %v4845 = vld [vmem:[%s4844] ss:$2 sm:$0xff]
        %s4846 = scalar_lea.vmem [#allocation4], 224
        %v4847 = vld [vmem:[%s4846] ss:$2 sm:$0xff]
        %s4848 = scalar_lea.vmem [#allocation4], 240
        %v4849 = vld [vmem:[%s4848] ss:$2 sm:$0xff]
        %s4850 = scalar_lea.vmem [#allocation4], 1
        %v4851 = vld [vmem:[%s4850] ss:$2 sm:$0xff]
        %s4852 = scalar_lea.vmem [#allocation4], 17
        %v4853 = vld [vmem:[%s4852] ss:$2 sm:$0xff]
        %s4854 = scalar_lea.vmem [#allocation4], 33
        %v4855 = vld [vmem:[%s4854] ss:$2 sm:$0xff]
        %s4856 = scalar_lea.vmem [#allocation4], 49
        %v4857 = vld [vmem:[%s4856] ss:$2 sm:$0xff]
        %s4858 = scalar_lea.vmem [#allocation4], 65
        %v4859 = vld [vmem:[%s4858] ss:$2 sm:$0xff]
        %s4860 = scalar_lea.vmem [#allocation4], 81
        %v4861 = vld [vmem:[%s4860] ss:$2 sm:$0xff]
        %s4862 = scalar_lea.vmem [#allocation4], 97
        %v4863 = vld [vmem:[%s4862] ss:$2 sm:$0xff]
        %s4864 = scalar_lea.vmem [#allocation4], 113
        %v4865 = vld [vmem:[%s4864] ss:$2 sm:$0xff]
        %s4866 = scalar_lea.vmem [#allocation4], 129
        %v4867 = vld [vmem:[%s4866] ss:$2 sm:$0xff]
        %s4868 = scalar_lea.vmem [#allocation4], 145
        %v4869 = vld [vmem:[%s4868] ss:$2 sm:$0xff]
        %s4870 = scalar_lea.vmem [#allocation4], 161
        %v4871 = vld [vmem:[%s4870] ss:$2 sm:$0xff]
        %s4872 = scalar_lea.vmem [#allocation4], 177
        %v4873 = vld [vmem:[%s4872] ss:$2 sm:$0xff]
        %s4874 = scalar_lea.vmem [#allocation4], 193
        %v4875 = vld [vmem:[%s4874] ss:$2 sm:$0xff]
        %s4876 = scalar_lea.vmem [#allocation4], 209
        %v4877 = vld [vmem:[%s4876] ss:$2 sm:$0xff]
        %s4878 = scalar_lea.vmem [#allocation4], 225
        %v4879 = vld [vmem:[%s4878] ss:$2 sm:$0xff]
        %s4880 = scalar_lea.vmem [#allocation4], 241
        %v4881 = vld [vmem:[%s4880] ss:$2 sm:$0xff]
        %v4882 = vmax.f32 %v4819, %v4851
        %v4883 = vmax.f32 %v4821, %v4853
        %v4884 = vmax.f32 %v4823, %v4855
        %v4885 = vmax.f32 %v4825, %v4857
        %v4886 = vmax.f32 %v4827, %v4859
        %v4887 = vmax.f32 %v4829, %v4861
        %v4888 = vmax.f32 %v4831, %v4863
        %v4889 = vmax.f32 %v4833, %v4865
        %v4890 = vmax.f32 %v4835, %v4867
        %v4891 = vmax.f32 %v4837, %v4869
        %v4892 = vmax.f32 %v4839, %v4871
        %v4893 = vmax.f32 %v4841, %v4873
        %v4894 = vmax.f32 %v4843, %v4875
        %v4895 = vmax.f32 %v4845, %v4877
        %v4896 = vmax.f32 %v4847, %v4879
        %v4897 = vmax.f32 %v4849, %v4881
        %v4898 = vld [vmem:[%s4] sm:$0x1]
        %v4900 = vperm.slane %v4898, 0
        %v4902 = vadd.f32 %v4882, %v4900
        %v4903 = vadd.f32 %v4883, %v4900
        %v4904 = vadd.f32 %v4884, %v4900
        %v4905 = vadd.f32 %v4885, %v4900
        %v4906 = vadd.f32 %v4886, %v4900
        %v4907 = vadd.f32 %v4887, %v4900
        %v4908 = vadd.f32 %v4888, %v4900
        %v4909 = vadd.f32 %v4889, %v4900
        %v4910 = vadd.f32 %v4890, %v4900
        %v4911 = vadd.f32 %v4891, %v4900
        %v4912 = vadd.f32 %v4892, %v4900
        %v4913 = vadd.f32 %v4893, %v4900
        %v4914 = vadd.f32 %v4894, %v4900
        %v4915 = vadd.f32 %v4895, %v4900
        %v4916 = vadd.f32 %v4896, %v4900
        %v4917 = vadd.f32 %v4897, %v4900
        %v4918 = vmax.f32 %v4902, 0.0
        %v4919 = vmax.f32 %v4903, 0.0
        %v4920 = vmax.f32 %v4904, 0.0
        %v4921 = vmax.f32 %v4905, 0.0
        %v4922 = vmax.f32 %v4906, 0.0
        %v4923 = vmax.f32 %v4907, 0.0
        %v4924 = vmax.f32 %v4908, 0.0
        %v4925 = vmax.f32 %v4909, 0.0
        %v4926 = vmax.f32 %v4910, 0.0
        %v4927 = vmax.f32 %v4911, 0.0
        %v4928 = vmax.f32 %v4912, 0.0
        %v4929 = vmax.f32 %v4913, 0.0
        %v4930 = vmax.f32 %v4914, 0.0
        %v4931 = vmax.f32 %v4915, 0.0
        %v4932 = vmax.f32 %v4916, 0.0
        %v4933 = vmax.f32 %v4917, 0.0
        %4934 = vst.msk [vmem:[#allocation5] sm:$0xff] %vm3529, %v4918
        %4935 = vst.msk [vmem:[#allocation5 + $0x8] sm:$0xff] %vm3529, %v4919
        %4936 = vst.msk [vmem:[#allocation5 + $0x10] sm:$0xff] %vm3529, %v4920
        %4937 = vst.msk [vmem:[#allocation5 + $0x18] sm:$0xff] %vm3529, %v4921
        %4938 = vst.msk [vmem:[#allocation5 + $0x20] sm:$0xff] %vm3529, %v4922
        %4939 = vst.msk [vmem:[#allocation5 + $0x28] sm:$0xff] %vm3529, %v4923
        %4940 = vst.msk [vmem:[#allocation5 + $0x30] sm:$0xff] %vm3529, %v4924
        %4941 = vst.msk [vmem:[#allocation5 + $0x38] sm:$0xff] %vm3529, %v4925
        %4942 = vst.msk [vmem:[#allocation5 + $0x40] sm:$0xff] %vm3529, %v4926
        %4943 = vst.msk [vmem:[#allocation5 + $0x48] sm:$0xff] %vm3529, %v4927
        %4944 = vst.msk [vmem:[#allocation5 + $0x50] sm:$0xff] %vm3529, %v4928
        %4945 = vst.msk [vmem:[#allocation5 + $0x58] sm:$0xff] %vm3529, %v4929
        %4946 = vst.msk [vmem:[#allocation5 + $0x60] sm:$0xff] %vm3529, %v4930
        %4947 = vst.msk [vmem:[#allocation5 + $0x68] sm:$0xff] %vm3529, %v4931
        %4948 = vst.msk [vmem:[#allocation5 + $0x70] sm:$0xff] %vm3529, %v4932
        %4949 = vst.msk [vmem:[#allocation5 + $0x78] sm:$0xff] %vm3529, %v4933
        %v4950 = vld [vmem:[#allocation5] sm:$0xff]
        %v4951 = vld [vmem:[#allocation5 + $0x8] sm:$0xff]
        %v4952 = vld [vmem:[#allocation5 + $0x10] sm:$0xff]
        %v4953 = vld [vmem:[#allocation5 + $0x18] sm:$0xff]
        %v4954 = vld [vmem:[#allocation5 + $0x20] sm:$0xff]
        %v4955 = vld [vmem:[#allocation5 + $0x28] sm:$0xff]
        %v4956 = vld [vmem:[#allocation5 + $0x30] sm:$0xff]
        %v4957 = vld [vmem:[#allocation5 + $0x38] sm:$0xff]
        %v4958 = vld [vmem:[#allocation5 + $0x40] sm:$0xff]
        %v4959 = vld [vmem:[#allocation5 + $0x48] sm:$0xff]
        %v4960 = vld [vmem:[#allocation5 + $0x50] sm:$0xff]
        %v4961 = vld [vmem:[#allocation5 + $0x58] sm:$0xff]
        %v4962 = vld [vmem:[#allocation5 + $0x60] sm:$0xff]
        %v4963 = vld [vmem:[#allocation5 + $0x68] sm:$0xff]
        %v4964 = vld [vmem:[#allocation5 + $0x70] sm:$0xff]
        %v4965 = vld [vmem:[#allocation5 + $0x78] sm:$0xf]
        %v4966 = vpack.c.bf16 %v4951, %v4950
        %v4967 = vpack.c.bf16 %v4953, %v4952
        %v4968 = vpack.c.bf16 %v4955, %v4954
        %v4969 = vpack.c.bf16 %v4957, %v4956
        %v4970 = vpack.c.bf16 %v4959, %v4958
        %v4971 = vpack.c.bf16 %v4961, %v4960
        %v4972 = vpack.c.bf16 %v4963, %v4962
        %v4973 = vpack.c.bf16 %v4965, %v4964
        %v4974 = vld [vmem:[%s5] sm:$0xf]
        %v4975 = vld [vmem:[%s5 + $0x4] sm:$0xf]
        %v4976 = vld [vmem:[%s5 + $0x8] sm:$0xf]
        %v4977 = vld [vmem:[%s5 + $0xc] sm:$0xf]
        %v4982 = vunpack.c.l.b16 %v4974
        %v4983 = vunpack.c.l.b16 %v4975
        %v4984 = vunpack.c.l.b16 %v4976
        %v4985 = vunpack.c.l.b16 %v4977
        %v4986 = vpack.c.b16 %v4983, %v4982
        %v4987 = vpack.c.b16 %v4985, %v4984
        %v4991 = vsel %vm3529, %v4966, 0
        %v4994 = vsel %vm3529, %v4967, 0
        %v4997 = vsel %vm3529, %v4968, 0
        %v5000 = vsel %vm3529, %v4969, 0
        %v5003 = vsel %vm3529, %v4970, 0
        %v5006 = vsel %vm3529, %v4971, 0
        %v5009 = vsel %vm3529, %v4972, 0
        %v5012 = vsel %vm3529, %v4973, 0
        %5014 = vmatpush.bf16.msra.mxu0 0
        %5015 = vmatpush.bf16.msra.mxu0 0
        %5016 = vmatpush.bf16.msra.mxu0 0
        %5017 = vmatpush.bf16.msra.mxu0 0
        %5018 = vmatpush.bf16.msra.mxu0 0
        %5019 = vmatpush.bf16.msra.mxu0 0
        %5020 = vmatpush.bf16.msra.mxu0 %v4987
        %5021 = vmatpush.bf16.msra.mxu0 %v4986
        %5022 = vmatmul.bf16.gmra.mxu0 %v4991
        %v5023 = vpop.f32.mrf.mxu0
        %v5024 = vadd.f32 0.0, %v5023
        %v5025 = vpop.f32.mrf.mxu0
        %v5026 = vadd.f32 0.0, %v5025
        %5027 = vmatmul.bf16.gmra.mxu0 %v4994
        %v5028 = vpop.f32.mrf.mxu0
        %v5029 = vadd.f32 0.0, %v5028
        %v5030 = vpop.f32.mrf.mxu0
        %v5031 = vadd.f32 0.0, %v5030
        %5032 = vmatmul.bf16.gmra.mxu0 %v4997
        %v5033 = vpop.f32.mrf.mxu0
        %v5034 = vadd.f32 0.0, %v5033
        %v5035 = vpop.f32.mrf.mxu0
        %v5036 = vadd.f32 0.0, %v5035
        %5037 = vmatmul.bf16.gmra.mxu0 %v5000
        %v5038 = vpop.f32.mrf.mxu0
        %v5039 = vadd.f32 0.0, %v5038
        %v5040 = vpop.f32.mrf.mxu0
        %v5041 = vadd.f32 0.0, %v5040
        %5042 = vmatmul.bf16.gmra.mxu0 %v5003
        %v5043 = vpop.f32.mrf.mxu0
        %v5044 = vadd.f32 0.0, %v5043
        %v5045 = vpop.f32.mrf.mxu0
        %v5046 = vadd.f32 0.0, %v5045
        %5047 = vmatmul.bf16.gmra.mxu0 %v5006
        %v5048 = vpop.f32.mrf.mxu0
        %v5049 = vadd.f32 0.0, %v5048
        %v5050 = vpop.f32.mrf.mxu0
        %v5051 = vadd.f32 0.0, %v5050
        %5052 = vmatmul.bf16.gmra.mxu0 %v5009
        %v5053 = vpop.f32.mrf.mxu0
        %v5054 = vadd.f32 0.0, %v5053
        %v5055 = vpop.f32.mrf.mxu0
        %v5056 = vadd.f32 0.0, %v5055
        %5057 = vmatmul.bf16.gmra.mxu0 %v5012
        %v5058 = vpop.f32.mrf.mxu0
        %v5059 = vadd.f32 0.0, %v5058
        %v5060 = vpop.f32.mrf.mxu0
        %v5061 = vadd.f32 0.0, %v5060
        %5062 = vdwg.mxu0
        %5063 = vst.msk [vmem:[#allocation6] sm:$0xff] %vm3529, %v5024
        %5064 = vst.msk [vmem:[#allocation6 + $0x8] sm:$0xff] %vm3529, %v5026
        %5065 = vst.msk [vmem:[#allocation6 + $0x10] sm:$0xff] %vm3529, %v5029
        %5066 = vst.msk [vmem:[#allocation6 + $0x18] sm:$0xff] %vm3529, %v5031
        %5067 = vst.msk [vmem:[#allocation6 + $0x20] sm:$0xff] %vm3529, %v5034
        %5068 = vst.msk [vmem:[#allocation6 + $0x28] sm:$0xff] %vm3529, %v5036
        %5069 = vst.msk [vmem:[#allocation6 + $0x30] sm:$0xff] %vm3529, %v5039
        %5070 = vst.msk [vmem:[#allocation6 + $0x38] sm:$0xff] %vm3529, %v5041
        %5071 = vst.msk [vmem:[#allocation6 + $0x40] sm:$0xff] %vm3529, %v5044
        %5072 = vst.msk [vmem:[#allocation6 + $0x48] sm:$0xff] %vm3529, %v5046
        %5073 = vst.msk [vmem:[#allocation6 + $0x50] sm:$0xff] %vm3529, %v5049
        %5074 = vst.msk [vmem:[#allocation6 + $0x58] sm:$0xff] %vm3529, %v5051
        %5075 = vst.msk [vmem:[#allocation6 + $0x60] sm:$0xff] %vm3529, %v5054
        %5076 = vst.msk [vmem:[#allocation6 + $0x68] sm:$0xff] %vm3529, %v5056
        %5077 = vst.msk [vmem:[#allocation6 + $0x70] sm:$0xff] %vm3529, %v5059
        %5078 = vst.msk [vmem:[#allocation6 + $0x78] sm:$0xf] %vm3561, %v5061
        %v5079 = vld [vmem:[#allocation6] sm:$0xff]
        %v5080 = vld [vmem:[#allocation6 + $0x8] sm:$0xff]
        %v5081 = vld [vmem:[#allocation6 + $0x10] sm:$0xff]
        %v5082 = vld [vmem:[#allocation6 + $0x18] sm:$0xff]
        %v5083 = vld [vmem:[#allocation6 + $0x20] sm:$0xff]
        %v5084 = vld [vmem:[#allocation6 + $0x28] sm:$0xff]
        %v5085 = vld [vmem:[#allocation6 + $0x30] sm:$0xff]
        %v5086 = vld [vmem:[#allocation6 + $0x38] sm:$0xff]
        %v5087 = vld [vmem:[#allocation6 + $0x40] sm:$0xff]
        %v5088 = vld [vmem:[#allocation6 + $0x48] sm:$0xff]
        %v5089 = vld [vmem:[#allocation6 + $0x50] sm:$0xff]
        %v5090 = vld [vmem:[#allocation6 + $0x58] sm:$0xff]
        %v5091 = vld [vmem:[#allocation6 + $0x60] sm:$0xff]
        %v5092 = vld [vmem:[#allocation6 + $0x68] sm:$0xff]
        %v5093 = vld [vmem:[#allocation6 + $0x70] sm:$0xff]
        %v5094 = vld [vmem:[#allocation6 + $0x78] sm:$0xf]
        %v5095 = vld [vmem:[#allocation5 + $0x1] sm:$0xff]
        %v5096 = vld [vmem:[#allocation5 + $0x9] sm:$0xff]
        %v5097 = vld [vmem:[#allocation5 + $0x11] sm:$0xff]
        %v5098 = vld [vmem:[#allocation5 + $0x19] sm:$0xff]
        %v5099 = vld [vmem:[#allocation5 + $0x21] sm:$0xff]
        %v5100 = vld [vmem:[#allocation5 + $0x29] sm:$0xff]
        %v5101 = vld [vmem:[#allocation5 + $0x31] sm:$0xff]
        %v5102 = vld [vmem:[#allocation5 + $0x39] sm:$0xff]
        %v5103 = vld [vmem:[#allocation5 + $0x41] sm:$0xff]
        %v5104 = vld [vmem:[#allocation5 + $0x49] sm:$0xff]
        %v5105 = vld [vmem:[#allocation5 + $0x51] sm:$0xff]
        %v5106 = vld [vmem:[#allocation5 + $0x59] sm:$0xff]
        %v5107 = vld [vmem:[#allocation5 + $0x61] sm:$0xff]
        %v5108 = vld [vmem:[#allocation5 + $0x69] sm:$0xff]
        %v5109 = vld [vmem:[#allocation5 + $0x71] sm:$0xff]
        %v5110 = vld [vmem:[#allocation5 + $0x79] sm:$0xf]
        %v5111 = vpack.c.bf16 %v5096, %v5095
        %v5112 = vpack.c.bf16 %v5098, %v5097
        %v5113 = vpack.c.bf16 %v5100, %v5099
        %v5114 = vpack.c.bf16 %v5102, %v5101
        %v5115 = vpack.c.bf16 %v5104, %v5103
        %v5116 = vpack.c.bf16 %v5106, %v5105
        %v5117 = vpack.c.bf16 %v5108, %v5107
        %v5118 = vpack.c.bf16 %v5110, %v5109
        %s5119 = scalar_lea.vmem %s5, 16
        %v5120 = vld [vmem:[%s5119] sm:$0xf]
        %v5121 = vld [vmem:[%s5119 + $0x4] sm:$0xf]
        %v5122 = vld [vmem:[%s5119 + $0x8] sm:$0xf]
        %v5123 = vld [vmem:[%s5119 + $0xc] sm:$0xf]
        %v5128 = vunpack.c.l.b16 %v5120
        %v5129 = vunpack.c.l.b16 %v5121
        %v5130 = vunpack.c.l.b16 %v5122
        %v5131 = vunpack.c.l.b16 %v5123
        %v5132 = vpack.c.b16 %v5129, %v5128
        %v5133 = vpack.c.b16 %v5131, %v5130
        %v5137 = vsel %vm3529, %v5111, 0
        %v5140 = vsel %vm3529, %v5112, 0
        %v5143 = vsel %vm3529, %v5113, 0
        %v5146 = vsel %vm3529, %v5114, 0
        %v5149 = vsel %vm3529, %v5115, 0
        %v5152 = vsel %vm3529, %v5116, 0
        %v5155 = vsel %vm3529, %v5117, 0
        %v5158 = vsel %vm3529, %v5118, 0
        %5160 = vmatpush.bf16.msra.mxu0 0
        %5161 = vmatpush.bf16.msra.mxu0 0
        %5162 = vmatpush.bf16.msra.mxu0 0
        %5163 = vmatpush.bf16.msra.mxu0 0
        %5164 = vmatpush.bf16.msra.mxu0 0
        %5165 = vmatpush.bf16.msra.mxu0 0
        %5166 = vmatpush.bf16.msra.mxu0 %v5133
        %5167 = vmatpush.bf16.msra.mxu0 %v5132
        %5168 = vmatmul.bf16.gmra.mxu0 %v5137
        %v5169 = vpop.f32.mrf.mxu0
        %v5170 = vadd.f32 0.0, %v5169
        %v5171 = vpop.f32.mrf.mxu0
        %v5172 = vadd.f32 0.0, %v5171
        %5173 = vmatmul.bf16.gmra.mxu0 %v5140
        %v5174 = vpop.f32.mrf.mxu0
        %v5175 = vadd.f32 0.0, %v5174
        %v5176 = vpop.f32.mrf.mxu0
        %v5177 = vadd.f32 0.0, %v5176
        %5178 = vmatmul.bf16.gmra.mxu0 %v5143
        %v5179 = vpop.f32.mrf.mxu0
        %v5180 = vadd.f32 0.0, %v5179
        %v5181 = vpop.f32.mrf.mxu0
        %v5182 = vadd.f32 0.0, %v5181
        %5183 = vmatmul.bf16.gmra.mxu0 %v5146
        %v5184 = vpop.f32.mrf.mxu0
        %v5185 = vadd.f32 0.0, %v5184
        %v5186 = vpop.f32.mrf.mxu0
        %v5187 = vadd.f32 0.0, %v5186
        %5188 = vmatmul.bf16.gmra.mxu0 %v5149
        %v5189 = vpop.f32.mrf.mxu0
        %v5190 = vadd.f32 0.0, %v5189
        %v5191 = vpop.f32.mrf.mxu0
        %v5192 = vadd.f32 0.0, %v5191
        %5193 = vmatmul.bf16.gmra.mxu0 %v5152
        %v5194 = vpop.f32.mrf.mxu0
        %v5195 = vadd.f32 0.0, %v5194
        %v5196 = vpop.f32.mrf.mxu0
        %v5197 = vadd.f32 0.0, %v5196
        %5198 = vmatmul.bf16.gmra.mxu0 %v5155
        %v5199 = vpop.f32.mrf.mxu0
        %v5200 = vadd.f32 0.0, %v5199
        %v5201 = vpop.f32.mrf.mxu0
        %v5202 = vadd.f32 0.0, %v5201
        %5203 = vmatmul.bf16.gmra.mxu0 %v5158
        %v5204 = vpop.f32.mrf.mxu0
        %v5205 = vadd.f32 0.0, %v5204
        %v5206 = vpop.f32.mrf.mxu0
        %v5207 = vadd.f32 0.0, %v5206
        %5208 = vdwg.mxu0
        %v5209 = vadd.f32 %v5079, %v5170
        %v5210 = vadd.f32 %v5080, %v5172
        %v5211 = vadd.f32 %v5081, %v5175
        %v5212 = vadd.f32 %v5082, %v5177
        %v5213 = vadd.f32 %v5083, %v5180
        %v5214 = vadd.f32 %v5084, %v5182
        %v5215 = vadd.f32 %v5085, %v5185
        %v5216 = vadd.f32 %v5086, %v5187
        %v5217 = vadd.f32 %v5087, %v5190
        %v5218 = vadd.f32 %v5088, %v5192
        %v5219 = vadd.f32 %v5089, %v5195
        %v5220 = vadd.f32 %v5090, %v5197
        %v5221 = vadd.f32 %v5091, %v5200
        %v5222 = vadd.f32 %v5092, %v5202
        %v5223 = vadd.f32 %v5093, %v5205
        %v5224 = vadd.f32 %v5094, %v5207
        %5225 = vst.msk [vmem:[#allocation6] sm:$0xff] %vm3529, %v5209
        %5226 = vst.msk [vmem:[#allocation6 + $0x8] sm:$0xff] %vm3529, %v5210
        %5227 = vst.msk [vmem:[#allocation6 + $0x10] sm:$0xff] %vm3529, %v5211
        %5228 = vst.msk [vmem:[#allocation6 + $0x18] sm:$0xff] %vm3529, %v5212
        %5229 = vst.msk [vmem:[#allocation6 + $0x20] sm:$0xff] %vm3529, %v5213
        %5230 = vst.msk [vmem:[#allocation6 + $0x28] sm:$0xff] %vm3529, %v5214
        %5231 = vst.msk [vmem:[#allocation6 + $0x30] sm:$0xff] %vm3529, %v5215
        %5232 = vst.msk [vmem:[#allocation6 + $0x38] sm:$0xff] %vm3529, %v5216
        %5233 = vst.msk [vmem:[#allocation6 + $0x40] sm:$0xff] %vm3529, %v5217
        %5234 = vst.msk [vmem:[#allocation6 + $0x48] sm:$0xff] %vm3529, %v5218
        %5235 = vst.msk [vmem:[#allocation6 + $0x50] sm:$0xff] %vm3529, %v5219
        %5236 = vst.msk [vmem:[#allocation6 + $0x58] sm:$0xff] %vm3529, %v5220
        %5237 = vst.msk [vmem:[#allocation6 + $0x60] sm:$0xff] %vm3529, %v5221
        %5238 = vst.msk [vmem:[#allocation6 + $0x68] sm:$0xff] %vm3529, %v5222
        %5239 = vst.msk [vmem:[#allocation6 + $0x70] sm:$0xff] %vm3529, %v5223
        %5240 = vst.msk [vmem:[#allocation6 + $0x78] sm:$0xf] %vm3561, %v5224
        %v5241 = vld [vmem:[#allocation6] sm:$0xff]
        %v5242 = vld [vmem:[#allocation6 + $0x8] sm:$0xff]
        %v5243 = vld [vmem:[#allocation6 + $0x10] sm:$0xff]
        %v5244 = vld [vmem:[#allocation6 + $0x18] sm:$0xff]
        %v5245 = vld [vmem:[#allocation6 + $0x20] sm:$0xff]
        %v5246 = vld [vmem:[#allocation6 + $0x28] sm:$0xff]
        %v5247 = vld [vmem:[#allocation6 + $0x30] sm:$0xff]
        %v5248 = vld [vmem:[#allocation6 + $0x38] sm:$0xff]
        %v5249 = vld [vmem:[#allocation6 + $0x40] sm:$0xff]
        %v5250 = vld [vmem:[#allocation6 + $0x48] sm:$0xff]
        %v5251 = vld [vmem:[#allocation6 + $0x50] sm:$0xff]
        %v5252 = vld [vmem:[#allocation6 + $0x58] sm:$0xff]
        %v5253 = vld [vmem:[#allocation6 + $0x60] sm:$0xff]
        %v5254 = vld [vmem:[#allocation6 + $0x68] sm:$0xff]
        %v5255 = vld [vmem:[#allocation6 + $0x70] sm:$0xff]
        %v5256 = vld [vmem:[#allocation6 + $0x78] sm:$0xf]
        %v5257 = vld [vmem:[#allocation5 + $0x2] sm:$0xff]
        %v5258 = vld [vmem:[#allocation5 + $0xa] sm:$0xff]
        %v5259 = vld [vmem:[#allocation5 + $0x12] sm:$0xff]
        %v5260 = vld [vmem:[#allocation5 + $0x1a] sm:$0xff]
        %v5261 = vld [vmem:[#allocation5 + $0x22] sm:$0xff]
        %v5262 = vld [vmem:[#allocation5 + $0x2a] sm:$0xff]
        %v5263 = vld [vmem:[#allocation5 + $0x32] sm:$0xff]
        %v5264 = vld [vmem:[#allocation5 + $0x3a] sm:$0xff]
        %v5265 = vld [vmem:[#allocation5 + $0x42] sm:$0xff]
        %v5266 = vld [vmem:[#allocation5 + $0x4a] sm:$0xff]
        %v5267 = vld [vmem:[#allocation5 + $0x52] sm:$0xff]
        %v5268 = vld [vmem:[#allocation5 + $0x5a] sm:$0xff]
        %v5269 = vld [vmem:[#allocation5 + $0x62] sm:$0xff]
        %v5270 = vld [vmem:[#allocation5 + $0x6a] sm:$0xff]
        %v5271 = vld [vmem:[#allocation5 + $0x72] sm:$0xff]
        %v5272 = vld [vmem:[#allocation5 + $0x7a] sm:$0xf]
        %v5273 = vpack.c.bf16 %v5258, %v5257
        %v5274 = vpack.c.bf16 %v5260, %v5259
        %v5275 = vpack.c.bf16 %v5262, %v5261
        %v5276 = vpack.c.bf16 %v5264, %v5263
        %v5277 = vpack.c.bf16 %v5266, %v5265
        %v5278 = vpack.c.bf16 %v5268, %v5267
        %v5279 = vpack.c.bf16 %v5270, %v5269
        %v5280 = vpack.c.bf16 %v5272, %v5271
        %s5281 = scalar_lea.vmem %s5, 32
        %v5282 = vld [vmem:[%s5281] sm:$0xf]
        %v5283 = vld [vmem:[%s5281 + $0x4] sm:$0xf]
        %v5284 = vld [vmem:[%s5281 + $0x8] sm:$0xf]
        %v5285 = vld [vmem:[%s5281 + $0xc] sm:$0xf]
        %v5290 = vunpack.c.l.b16 %v5282
        %v5291 = vunpack.c.l.b16 %v5283
        %v5292 = vunpack.c.l.b16 %v5284
        %v5293 = vunpack.c.l.b16 %v5285
        %v5294 = vpack.c.b16 %v5291, %v5290
        %v5295 = vpack.c.b16 %v5293, %v5292
        %v5299 = vsel %vm3529, %v5273, 0
        %v5302 = vsel %vm3529, %v5274, 0
        %v5305 = vsel %vm3529, %v5275, 0
        %v5308 = vsel %vm3529, %v5276, 0
        %v5311 = vsel %vm3529, %v5277, 0
        %v5314 = vsel %vm3529, %v5278, 0
        %v5317 = vsel %vm3529, %v5279, 0
        %v5320 = vsel %vm3529, %v5280, 0
        %5322 = vmatpush.bf16.msra.mxu0 0
        %5323 = vmatpush.bf16.msra.mxu0 0
        %5324 = vmatpush.bf16.msra.mxu0 0
        %5325 = vmatpush.bf16.msra.mxu0 0
        %5326 = vmatpush.bf16.msra.mxu0 0
        %5327 = vmatpush.bf16.msra.mxu0 0
        %5328 = vmatpush.bf16.msra.mxu0 %v5295
        %5329 = vmatpush.bf16.msra.mxu0 %v5294
        %5330 = vmatmul.bf16.gmra.mxu0 %v5299
        %v5331 = vpop.f32.mrf.mxu0
        %v5332 = vadd.f32 0.0, %v5331
        %v5333 = vpop.f32.mrf.mxu0
        %v5334 = vadd.f32 0.0, %v5333
        %5335 = vmatmul.bf16.gmra.mxu0 %v5302
        %v5336 = vpop.f32.mrf.mxu0
        %v5337 = vadd.f32 0.0, %v5336
        %v5338 = vpop.f32.mrf.mxu0
        %v5339 = vadd.f32 0.0, %v5338
        %5340 = vmatmul.bf16.gmra.mxu0 %v5305
        %v5341 = vpop.f32.mrf.mxu0
        %v5342 = vadd.f32 0.0, %v5341
        %v5343 = vpop.f32.mrf.mxu0
        %v5344 = vadd.f32 0.0, %v5343
        %5345 = vmatmul.bf16.gmra.mxu0 %v5308
        %v5346 = vpop.f32.mrf.mxu0
        %v5347 = vadd.f32 0.0, %v5346
        %v5348 = vpop.f32.mrf.mxu0
        %v5349 = vadd.f32 0.0, %v5348
        %5350 = vmatmul.bf16.gmra.mxu0 %v5311
        %v5351 = vpop.f32.mrf.mxu0
        %v5352 = vadd.f32 0.0, %v5351
        %v5353 = vpop.f32.mrf.mxu0
        %v5354 = vadd.f32 0.0, %v5353
        %5355 = vmatmul.bf16.gmra.mxu0 %v5314
        %v5356 = vpop.f32.mrf.mxu0
        %v5357 = vadd.f32 0.0, %v5356
        %v5358 = vpop.f32.mrf.mxu0
        %v5359 = vadd.f32 0.0, %v5358
        %5360 = vmatmul.bf16.gmra.mxu0 %v5317
        %v5361 = vpop.f32.mrf.mxu0
        %v5362 = vadd.f32 0.0, %v5361
        %v5363 = vpop.f32.mrf.mxu0
        %v5364 = vadd.f32 0.0, %v5363
        %5365 = vmatmul.bf16.gmra.mxu0 %v5320
        %v5366 = vpop.f32.mrf.mxu0
        %v5367 = vadd.f32 0.0, %v5366
        %v5368 = vpop.f32.mrf.mxu0
        %v5369 = vadd.f32 0.0, %v5368
        %5370 = vdwg.mxu0
        %v5371 = vadd.f32 %v5241, %v5332
        %v5372 = vadd.f32 %v5242, %v5334
        %v5373 = vadd.f32 %v5243, %v5337
        %v5374 = vadd.f32 %v5244, %v5339
        %v5375 = vadd.f32 %v5245, %v5342
        %v5376 = vadd.f32 %v5246, %v5344
        %v5377 = vadd.f32 %v5247, %v5347
        %v5378 = vadd.f32 %v5248, %v5349
        %v5379 = vadd.f32 %v5249, %v5352
        %v5380 = vadd.f32 %v5250, %v5354
        %v5381 = vadd.f32 %v5251, %v5357
        %v5382 = vadd.f32 %v5252, %v5359
        %v5383 = vadd.f32 %v5253, %v5362
        %v5384 = vadd.f32 %v5254, %v5364
        %v5385 = vadd.f32 %v5255, %v5367
        %v5386 = vadd.f32 %v5256, %v5369
        %5387 = vst.msk [vmem:[#allocation6] sm:$0xff] %vm3529, %v5371
        %5388 = vst.msk [vmem:[#allocation6 + $0x8] sm:$0xff] %vm3529, %v5372
        %5389 = vst.msk [vmem:[#allocation6 + $0x10] sm:$0xff] %vm3529, %v5373
        %5390 = vst.msk [vmem:[#allocation6 + $0x18] sm:$0xff] %vm3529, %v5374
        %5391 = vst.msk [vmem:[#allocation6 + $0x20] sm:$0xff] %vm3529, %v5375
        %5392 = vst.msk [vmem:[#allocation6 + $0x28] sm:$0xff] %vm3529, %v5376
        %5393 = vst.msk [vmem:[#allocation6 + $0x30] sm:$0xff] %vm3529, %v5377
        %5394 = vst.msk [vmem:[#allocation6 + $0x38] sm:$0xff] %vm3529, %v5378
        %5395 = vst.msk [vmem:[#allocation6 + $0x40] sm:$0xff] %vm3529, %v5379
        %5396 = vst.msk [vmem:[#allocation6 + $0x48] sm:$0xff] %vm3529, %v5380
        %5397 = vst.msk [vmem:[#allocation6 + $0x50] sm:$0xff] %vm3529, %v5381
        %5398 = vst.msk [vmem:[#allocation6 + $0x58] sm:$0xff] %vm3529, %v5382
        %5399 = vst.msk [vmem:[#allocation6 + $0x60] sm:$0xff] %vm3529, %v5383
        %5400 = vst.msk [vmem:[#allocation6 + $0x68] sm:$0xff] %vm3529, %v5384
        %5401 = vst.msk [vmem:[#allocation6 + $0x70] sm:$0xff] %vm3529, %v5385
        %5402 = vst.msk [vmem:[#allocation6 + $0x78] sm:$0xf] %vm3561, %v5386
        %v5403 = vld [vmem:[#allocation6] sm:$0xff]
        %v5404 = vld [vmem:[#allocation6 + $0x8] sm:$0xff]
        %v5405 = vld [vmem:[#allocation6 + $0x10] sm:$0xff]
        %v5406 = vld [vmem:[#allocation6 + $0x18] sm:$0xff]
        %v5407 = vld [vmem:[#allocation6 + $0x20] sm:$0xff]
        %v5408 = vld [vmem:[#allocation6 + $0x28] sm:$0xff]
        %v5409 = vld [vmem:[#allocation6 + $0x30] sm:$0xff]
        %v5410 = vld [vmem:[#allocation6 + $0x38] sm:$0xff]
        %v5411 = vld [vmem:[#allocation6 + $0x40] sm:$0xff]
        %v5412 = vld [vmem:[#allocation6 + $0x48] sm:$0xff]
        %v5413 = vld [vmem:[#allocation6 + $0x50] sm:$0xff]
        %v5414 = vld [vmem:[#allocation6 + $0x58] sm:$0xff]
        %v5415 = vld [vmem:[#allocation6 + $0x60] sm:$0xff]
        %v5416 = vld [vmem:[#allocation6 + $0x68] sm:$0xff]
        %v5417 = vld [vmem:[#allocation6 + $0x70] sm:$0xff]
        %v5418 = vld [vmem:[#allocation6 + $0x78] sm:$0xf]
        %v5419 = vld [vmem:[#allocation5 + $0x3] sm:$0xff]
        %v5420 = vld [vmem:[#allocation5 + $0xb] sm:$0xff]
        %v5421 = vld [vmem:[#allocation5 + $0x13] sm:$0xff]
        %v5422 = vld [vmem:[#allocation5 + $0x1b] sm:$0xff]
        %v5423 = vld [vmem:[#allocation5 + $0x23] sm:$0xff]
        %v5424 = vld [vmem:[#allocation5 + $0x2b] sm:$0xff]
        %v5425 = vld [vmem:[#allocation5 + $0x33] sm:$0xff]
        %v5426 = vld [vmem:[#allocation5 + $0x3b] sm:$0xff]
        %v5427 = vld [vmem:[#allocation5 + $0x43] sm:$0xff]
        %v5428 = vld [vmem:[#allocation5 + $0x4b] sm:$0xff]
        %v5429 = vld [vmem:[#allocation5 + $0x53] sm:$0xff]
        %v5430 = vld [vmem:[#allocation5 + $0x5b] sm:$0xff]
        %v5431 = vld [vmem:[#allocation5 + $0x63] sm:$0xff]
        %v5432 = vld [vmem:[#allocation5 + $0x6b] sm:$0xff]
        %v5433 = vld [vmem:[#allocation5 + $0x73] sm:$0xff]
        %v5434 = vld [vmem:[#allocation5 + $0x7b] sm:$0xf]
        %v5435 = vpack.c.bf16 %v5420, %v5419
        %v5436 = vpack.c.bf16 %v5422, %v5421
        %v5437 = vpack.c.bf16 %v5424, %v5423
        %v5438 = vpack.c.bf16 %v5426, %v5425
        %v5439 = vpack.c.bf16 %v5428, %v5427
        %v5440 = vpack.c.bf16 %v5430, %v5429
        %v5441 = vpack.c.bf16 %v5432, %v5431
        %v5442 = vpack.c.bf16 %v5434, %v5433
        %s5443 = scalar_lea.vmem %s5, 48
        %v5444 = vld [vmem:[%s5443] sm:$0xf]
        %v5445 = vld [vmem:[%s5443 + $0x4] sm:$0xf]
        %v5446 = vld [vmem:[%s5443 + $0x8] sm:$0xf]
        %v5447 = vld [vmem:[%s5443 + $0xc] sm:$0xf]
        %v5452 = vunpack.c.l.b16 %v5444
        %v5453 = vunpack.c.l.b16 %v5445
        %v5454 = vunpack.c.l.b16 %v5446
        %v5455 = vunpack.c.l.b16 %v5447
        %v5456 = vpack.c.b16 %v5453, %v5452
        %v5457 = vpack.c.b16 %v5455, %v5454
        %v5461 = vsel %vm3529, %v5435, 0
        %v5464 = vsel %vm3529, %v5436, 0
        %v5467 = vsel %vm3529, %v5437, 0
        %v5470 = vsel %vm3529, %v5438, 0
        %v5473 = vsel %vm3529, %v5439, 0
        %v5476 = vsel %vm3529, %v5440, 0
        %v5479 = vsel %vm3529, %v5441, 0
        %v5482 = vsel %vm3529, %v5442, 0
        %5484 = vmatpush.bf16.msra.mxu0 0
        %5485 = vmatpush.bf16.msra.mxu0 0
        %5486 = vmatpush.bf16.msra.mxu0 0
        %5487 = vmatpush.bf16.msra.mxu0 0
        %5488 = vmatpush.bf16.msra.mxu0 0
        %5489 = vmatpush.bf16.msra.mxu0 0
        %5490 = vmatpush.bf16.msra.mxu0 %v5457
        %5491 = vmatpush.bf16.msra.mxu0 %v5456
        %5492 = vmatmul.bf16.gmra.mxu0 %v5461
        %v5493 = vpop.f32.mrf.mxu0
        %v5494 = vadd.f32 0.0, %v5493
        %v5495 = vpop.f32.mrf.mxu0
        %v5496 = vadd.f32 0.0, %v5495
        %5497 = vmatmul.bf16.gmra.mxu0 %v5464
        %v5498 = vpop.f32.mrf.mxu0
        %v5499 = vadd.f32 0.0, %v5498
        %v5500 = vpop.f32.mrf.mxu0
        %v5501 = vadd.f32 0.0, %v5500
        %5502 = vmatmul.bf16.gmra.mxu0 %v5467
        %v5503 = vpop.f32.mrf.mxu0
        %v5504 = vadd.f32 0.0, %v5503
        %v5505 = vpop.f32.mrf.mxu0
        %v5506 = vadd.f32 0.0, %v5505
        %5507 = vmatmul.bf16.gmra.mxu0 %v5470
        %v5508 = vpop.f32.mrf.mxu0
        %v5509 = vadd.f32 0.0, %v5508
        %v5510 = vpop.f32.mrf.mxu0
        %v5511 = vadd.f32 0.0, %v5510
        %5512 = vmatmul.bf16.gmra.mxu0 %v5473
        %v5513 = vpop.f32.mrf.mxu0
        %v5514 = vadd.f32 0.0, %v5513
        %v5515 = vpop.f32.mrf.mxu0
        %v5516 = vadd.f32 0.0, %v5515
        %5517 = vmatmul.bf16.gmra.mxu0 %v5476
        %v5518 = vpop.f32.mrf.mxu0
        %v5519 = vadd.f32 0.0, %v5518
        %v5520 = vpop.f32.mrf.mxu0
        %v5521 = vadd.f32 0.0, %v5520
        %5522 = vmatmul.bf16.gmra.mxu0 %v5479
        %v5523 = vpop.f32.mrf.mxu0
        %v5524 = vadd.f32 0.0, %v5523
        %v5525 = vpop.f32.mrf.mxu0
        %v5526 = vadd.f32 0.0, %v5525
        %5527 = vmatmul.bf16.gmra.mxu0 %v5482
        %v5528 = vpop.f32.mrf.mxu0
        %v5529 = vadd.f32 0.0, %v5528
        %v5530 = vpop.f32.mrf.mxu0
        %v5531 = vadd.f32 0.0, %v5530
        %5532 = vdwg.mxu0
        %v5533 = vadd.f32 %v5403, %v5494
        %v5534 = vadd.f32 %v5404, %v5496
        %v5535 = vadd.f32 %v5405, %v5499
        %v5536 = vadd.f32 %v5406, %v5501
        %v5537 = vadd.f32 %v5407, %v5504
        %v5538 = vadd.f32 %v5408, %v5506
        %v5539 = vadd.f32 %v5409, %v5509
        %v5540 = vadd.f32 %v5410, %v5511
        %v5541 = vadd.f32 %v5411, %v5514
        %v5542 = vadd.f32 %v5412, %v5516
        %v5543 = vadd.f32 %v5413, %v5519
        %v5544 = vadd.f32 %v5414, %v5521
        %v5545 = vadd.f32 %v5415, %v5524
        %v5546 = vadd.f32 %v5416, %v5526
        %v5547 = vadd.f32 %v5417, %v5529
        %v5548 = vadd.f32 %v5418, %v5531
        %5549 = vst.msk [vmem:[#allocation6] sm:$0xff] %vm3529, %v5533
        %5550 = vst.msk [vmem:[#allocation6 + $0x8] sm:$0xff] %vm3529, %v5534
        %5551 = vst.msk [vmem:[#allocation6 + $0x10] sm:$0xff] %vm3529, %v5535
        %5552 = vst.msk [vmem:[#allocation6 + $0x18] sm:$0xff] %vm3529, %v5536
        %5553 = vst.msk [vmem:[#allocation6 + $0x20] sm:$0xff] %vm3529, %v5537
        %5554 = vst.msk [vmem:[#allocation6 + $0x28] sm:$0xff] %vm3529, %v5538
        %5555 = vst.msk [vmem:[#allocation6 + $0x30] sm:$0xff] %vm3529, %v5539
        %5556 = vst.msk [vmem:[#allocation6 + $0x38] sm:$0xff] %vm3529, %v5540
        %5557 = vst.msk [vmem:[#allocation6 + $0x40] sm:$0xff] %vm3529, %v5541
        %5558 = vst.msk [vmem:[#allocation6 + $0x48] sm:$0xff] %vm3529, %v5542
        %5559 = vst.msk [vmem:[#allocation6 + $0x50] sm:$0xff] %vm3529, %v5543
        %5560 = vst.msk [vmem:[#allocation6 + $0x58] sm:$0xff] %vm3529, %v5544
        %5561 = vst.msk [vmem:[#allocation6 + $0x60] sm:$0xff] %vm3529, %v5545
        %5562 = vst.msk [vmem:[#allocation6 + $0x68] sm:$0xff] %vm3529, %v5546
        %5563 = vst.msk [vmem:[#allocation6 + $0x70] sm:$0xff] %vm3529, %v5547
        %5564 = vst.msk [vmem:[#allocation6 + $0x78] sm:$0xf] %vm3561, %v5548
        %v5565 = vld [vmem:[#allocation6] sm:$0xff]
        %v5566 = vld [vmem:[#allocation6 + $0x8] sm:$0xff]
        %v5567 = vld [vmem:[#allocation6 + $0x10] sm:$0xff]
        %v5568 = vld [vmem:[#allocation6 + $0x18] sm:$0xff]
        %v5569 = vld [vmem:[#allocation6 + $0x20] sm:$0xff]
        %v5570 = vld [vmem:[#allocation6 + $0x28] sm:$0xff]
        %v5571 = vld [vmem:[#allocation6 + $0x30] sm:$0xff]
        %v5572 = vld [vmem:[#allocation6 + $0x38] sm:$0xff]
        %v5573 = vld [vmem:[#allocation6 + $0x40] sm:$0xff]
        %v5574 = vld [vmem:[#allocation6 + $0x48] sm:$0xff]
        %v5575 = vld [vmem:[#allocation6 + $0x50] sm:$0xff]
        %v5576 = vld [vmem:[#allocation6 + $0x58] sm:$0xff]
        %v5577 = vld [vmem:[#allocation6 + $0x60] sm:$0xff]
        %v5578 = vld [vmem:[#allocation6 + $0x68] sm:$0xff]
        %v5579 = vld [vmem:[#allocation6 + $0x70] sm:$0xff]
        %v5580 = vld [vmem:[#allocation6 + $0x78] sm:$0xf]
        %v5581 = vld [vmem:[#allocation5 + $0x4] sm:$0xff]
        %v5582 = vld [vmem:[#allocation5 + $0xc] sm:$0xff]
        %v5583 = vld [vmem:[#allocation5 + $0x14] sm:$0xff]
        %v5584 = vld [vmem:[#allocation5 + $0x1c] sm:$0xff]
        %v5585 = vld [vmem:[#allocation5 + $0x24] sm:$0xff]
        %v5586 = vld [vmem:[#allocation5 + $0x2c] sm:$0xff]
        %v5587 = vld [vmem:[#allocation5 + $0x34] sm:$0xff]
        %v5588 = vld [vmem:[#allocation5 + $0x3c] sm:$0xff]
        %v5589 = vld [vmem:[#allocation5 + $0x44] sm:$0xff]
        %v5590 = vld [vmem:[#allocation5 + $0x4c] sm:$0xff]
        %v5591 = vld [vmem:[#allocation5 + $0x54] sm:$0xff]
        %v5592 = vld [vmem:[#allocation5 + $0x5c] sm:$0xff]
        %v5593 = vld [vmem:[#allocation5 + $0x64] sm:$0xff]
        %v5594 = vld [vmem:[#allocation5 + $0x6c] sm:$0xff]
        %v5595 = vld [vmem:[#allocation5 + $0x74] sm:$0xff]
        %v5596 = vld [vmem:[#allocation5 + $0x7c] sm:$0xf]
        %v5597 = vpack.c.bf16 %v5582, %v5581
        %v5598 = vpack.c.bf16 %v5584, %v5583
        %v5599 = vpack.c.bf16 %v5586, %v5585
        %v5600 = vpack.c.bf16 %v5588, %v5587
        %v5601 = vpack.c.bf16 %v5590, %v5589
        %v5602 = vpack.c.bf16 %v5592, %v5591
        %v5603 = vpack.c.bf16 %v5594, %v5593
        %v5604 = vpack.c.bf16 %v5596, %v5595
        %s5605 = scalar_lea.vmem %s5, 64
        %v5606 = vld [vmem:[%s5605] sm:$0xf]
        %v5607 = vld [vmem:[%s5605 + $0x4] sm:$0xf]
        %v5608 = vld [vmem:[%s5605 + $0x8] sm:$0xf]
        %v5609 = vld [vmem:[%s5605 + $0xc] sm:$0xf]
        %v5614 = vunpack.c.l.b16 %v5606
        %v5615 = vunpack.c.l.b16 %v5607
        %v5616 = vunpack.c.l.b16 %v5608
        %v5617 = vunpack.c.l.b16 %v5609
        %v5618 = vpack.c.b16 %v5615, %v5614
        %v5619 = vpack.c.b16 %v5617, %v5616
        %v5623 = vsel %vm3529, %v5597, 0
        %v5626 = vsel %vm3529, %v5598, 0
        %v5629 = vsel %vm3529, %v5599, 0
        %v5632 = vsel %vm3529, %v5600, 0
        %v5635 = vsel %vm3529, %v5601, 0
        %v5638 = vsel %vm3529, %v5602, 0
        %v5641 = vsel %vm3529, %v5603, 0
        %v5644 = vsel %vm3529, %v5604, 0
        %5646 = vmatpush.bf16.msra.mxu0 0
        %5647 = vmatpush.bf16.msra.mxu0 0
        %5648 = vmatpush.bf16.msra.mxu0 0
        %5649 = vmatpush.bf16.msra.mxu0 0
        %5650 = vmatpush.bf16.msra.mxu0 0
        %5651 = vmatpush.bf16.msra.mxu0 0
        %5652 = vmatpush.bf16.msra.mxu0 %v5619
        %5653 = vmatpush.bf16.msra.mxu0 %v5618
        %5654 = vmatmul.bf16.gmra.mxu0 %v5623
        %v5655 = vpop.f32.mrf.mxu0
        %v5656 = vadd.f32 0.0, %v5655
        %v5657 = vpop.f32.mrf.mxu0
        %v5658 = vadd.f32 0.0, %v5657
        %5659 = vmatmul.bf16.gmra.mxu0 %v5626
        %v5660 = vpop.f32.mrf.mxu0
        %v5661 = vadd.f32 0.0, %v5660
        %v5662 = vpop.f32.mrf.mxu0
        %v5663 = vadd.f32 0.0, %v5662
        %5664 = vmatmul.bf16.gmra.mxu0 %v5629
        %v5665 = vpop.f32.mrf.mxu0
        %v5666 = vadd.f32 0.0, %v5665
        %v5667 = vpop.f32.mrf.mxu0
        %v5668 = vadd.f32 0.0, %v5667
        %5669 = vmatmul.bf16.gmra.mxu0 %v5632
        %v5670 = vpop.f32.mrf.mxu0
        %v5671 = vadd.f32 0.0, %v5670
        %v5672 = vpop.f32.mrf.mxu0
        %v5673 = vadd.f32 0.0, %v5672
        %5674 = vmatmul.bf16.gmra.mxu0 %v5635
        %v5675 = vpop.f32.mrf.mxu0
        %v5676 = vadd.f32 0.0, %v5675
        %v5677 = vpop.f32.mrf.mxu0
        %v5678 = vadd.f32 0.0, %v5677
        %5679 = vmatmul.bf16.gmra.mxu0 %v5638
        %v5680 = vpop.f32.mrf.mxu0
        %v5681 = vadd.f32 0.0, %v5680
        %v5682 = vpop.f32.mrf.mxu0
        %v5683 = vadd.f32 0.0, %v5682
        %5684 = vmatmul.bf16.gmra.mxu0 %v5641
        %v5685 = vpop.f32.mrf.mxu0
        %v5686 = vadd.f32 0.0, %v5685
        %v5687 = vpop.f32.mrf.mxu0
        %v5688 = vadd.f32 0.0, %v5687
        %5689 = vmatmul.bf16.gmra.mxu0 %v5644
        %v5690 = vpop.f32.mrf.mxu0
        %v5691 = vadd.f32 0.0, %v5690
        %v5692 = vpop.f32.mrf.mxu0
        %v5693 = vadd.f32 0.0, %v5692
        %5694 = vdwg.mxu0
        %v5695 = vadd.f32 %v5565, %v5656
        %v5696 = vadd.f32 %v5566, %v5658
        %v5697 = vadd.f32 %v5567, %v5661
        %v5698 = vadd.f32 %v5568, %v5663
        %v5699 = vadd.f32 %v5569, %v5666
        %v5700 = vadd.f32 %v5570, %v5668
        %v5701 = vadd.f32 %v5571, %v5671
        %v5702 = vadd.f32 %v5572, %v5673
        %v5703 = vadd.f32 %v5573, %v5676
        %v5704 = vadd.f32 %v5574, %v5678
        %v5705 = vadd.f32 %v5575, %v5681
        %v5706 = vadd.f32 %v5576, %v5683
        %v5707 = vadd.f32 %v5577, %v5686
        %v5708 = vadd.f32 %v5578, %v5688
        %v5709 = vadd.f32 %v5579, %v5691
        %v5710 = vadd.f32 %v5580, %v5693
        %5711 = vst.msk [vmem:[#allocation6] sm:$0xff] %vm3529, %v5695
        %5712 = vst.msk [vmem:[#allocation6 + $0x8] sm:$0xff] %vm3529, %v5696
        %5713 = vst.msk [vmem:[#allocation6 + $0x10] sm:$0xff] %vm3529, %v5697
        %5714 = vst.msk [vmem:[#allocation6 + $0x18] sm:$0xff] %vm3529, %v5698
        %5715 = vst.msk [vmem:[#allocation6 + $0x20] sm:$0xff] %vm3529, %v5699
        %5716 = vst.msk [vmem:[#allocation6 + $0x28] sm:$0xff] %vm3529, %v5700
        %5717 = vst.msk [vmem:[#allocation6 + $0x30] sm:$0xff] %vm3529, %v5701
        %5718 = vst.msk [vmem:[#allocation6 + $0x38] sm:$0xff] %vm3529, %v5702
        %5719 = vst.msk [vmem:[#allocation6 + $0x40] sm:$0xff] %vm3529, %v5703
        %5720 = vst.msk [vmem:[#allocation6 + $0x48] sm:$0xff] %vm3529, %v5704
        %5721 = vst.msk [vmem:[#allocation6 + $0x50] sm:$0xff] %vm3529, %v5705
        %5722 = vst.msk [vmem:[#allocation6 + $0x58] sm:$0xff] %vm3529, %v5706
        %5723 = vst.msk [vmem:[#allocation6 + $0x60] sm:$0xff] %vm3529, %v5707
        %5724 = vst.msk [vmem:[#allocation6 + $0x68] sm:$0xff] %vm3529, %v5708
        %5725 = vst.msk [vmem:[#allocation6 + $0x70] sm:$0xff] %vm3529, %v5709
        %5726 = vst.msk [vmem:[#allocation6 + $0x78] sm:$0xf] %vm3561, %v5710
        %v5727 = vld [vmem:[#allocation6] ss:$16 sm:$0x3]
        %v5728 = vld [vmem:[#allocation6] ss:$16 sm:$0xc]
        %v5729 = vor.u32 %v5727, %v5728
        %v5730 = vld [vmem:[#allocation6] ss:$16 sm:$0x30]
        %v5731 = vor.u32 %v5729, %v5730
        %v5732 = vld [vmem:[#allocation6] ss:$16 sm:$0xc0]
        %v5733 = vor.u32 %v5731, %v5732
        %s5734 = scalar_lea.vmem [#allocation6], 1
        %v5735 = vld [vmem:[%s5734] ss:$16 sm:$0x3]
        %v5736 = vld [vmem:[%s5734] ss:$16 sm:$0xc]
        %v5737 = vor.u32 %v5735, %v5736
        %v5738 = vld [vmem:[%s5734] ss:$16 sm:$0x30]
        %v5739 = vor.u32 %v5737, %v5738
        %v5740 = vld [vmem:[%s5734] ss:$16 sm:$0xc0]
        %v5741 = vor.u32 %v5739, %v5740
        %v5742 = vmax.f32 %v5733, %v5741
        %v5743 = vld [vmem:[%s6] sm:$0x1]
        %v5745 = vperm.slane %v5743, 0
        %v5747 = vadd.f32 %v5742, %v5745
        %v5748 = vmax.f32 %v5747, 0.0
        %v5749 = vpack.c.bf16 %v5748, %v5748
        %s5750 = scalar_lea.vmem [#allocation6], 2
        %v5751 = vld [vmem:[%s5750] ss:$16 sm:$0x3]
        %v5752 = vld [vmem:[%s5750] ss:$16 sm:$0xc]
        %v5753 = vor.u32 %v5751, %v5752
        %v5754 = vld [vmem:[%s5750] ss:$16 sm:$0x30]
        %v5755 = vor.u32 %v5753, %v5754
        %v5756 = vld [vmem:[%s5750] ss:$16 sm:$0xc0]
        %v5757 = vor.u32 %v5755, %v5756
        %s5758 = scalar_lea.vmem [#allocation6], 3
        %v5759 = vld [vmem:[%s5758] ss:$16 sm:$0x3]
        %v5760 = vld [vmem:[%s5758] ss:$16 sm:$0xc]
        %v5761 = vor.u32 %v5759, %v5760
        %v5762 = vld [vmem:[%s5758] ss:$16 sm:$0x30]
        %v5763 = vor.u32 %v5761, %v5762
        %v5764 = vld [vmem:[%s5758] ss:$16 sm:$0xc0]
        %v5765 = vor.u32 %v5763, %v5764
        %v5766 = vmax.f32 %v5757, %v5765
        %v5767 = vadd.f32 %v5766, %v5745
        %v5768 = vmax.f32 %v5767, 0.0
        %v5769 = vpack.c.bf16 %v5768, %v5768
        %s5770 = scalar_lea.vmem [#allocation6], 4
        %v5771 = vld [vmem:[%s5770] ss:$16 sm:$0x3]
        %v5772 = vld [vmem:[%s5770] ss:$16 sm:$0xc]
        %v5773 = vor.u32 %v5771, %v5772
        %v5774 = vld [vmem:[%s5770] ss:$16 sm:$0x30]
        %v5775 = vor.u32 %v5773, %v5774
        %v5776 = vld [vmem:[%s5770] ss:$16 sm:$0xc0]
        %v5777 = vor.u32 %v5775, %v5776
        %s5778 = scalar_lea.vmem [#allocation6], 5
        %v5779 = vld [vmem:[%s5778] ss:$16 sm:$0x3]
        %v5780 = vld [vmem:[%s5778] ss:$16 sm:$0xc]
        %v5781 = vor.u32 %v5779, %v5780
        %v5782 = vld [vmem:[%s5778] ss:$16 sm:$0x30]
        %v5783 = vor.u32 %v5781, %v5782
        %v5784 = vld [vmem:[%s5778] ss:$16 sm:$0xc0]
        %v5785 = vor.u32 %v5783, %v5784
        %v5786 = vmax.f32 %v5777, %v5785
        %v5787 = vadd.f32 %v5786, %v5745
        %v5788 = vmax.f32 %v5787, 0.0
        %v5789 = vpack.c.bf16 %v5788, %v5788
        %s5790 = scalar_lea.vmem [#allocation6], 6
        %v5791 = vld [vmem:[%s5790] ss:$16 sm:$0x3]
        %v5792 = vld [vmem:[%s5790] ss:$16 sm:$0xc]
        %v5793 = vor.u32 %v5791, %v5792
        %v5794 = vld [vmem:[%s5790] ss:$16 sm:$0x30]
        %v5795 = vor.u32 %v5793, %v5794
        %v5796 = vld [vmem:[%s5790] ss:$16 sm:$0xc0]
        %v5797 = vor.u32 %v5795, %v5796
        %s5798 = scalar_lea.vmem [#allocation6], 7
        %v5799 = vld [vmem:[%s5798] ss:$16 sm:$0x3]
        %v5800 = vld [vmem:[%s5798] ss:$16 sm:$0xc]
        %v5801 = vor.u32 %v5799, %v5800
        %v5802 = vld [vmem:[%s5798] ss:$16 sm:$0x30]
        %v5803 = vor.u32 %v5801, %v5802
        %v5804 = vld [vmem:[%s5798] ss:$16 sm:$0xc0]
        %v5805 = vor.u32 %v5803, %v5804
        %v5806 = vmax.f32 %v5797, %v5805
        %v5807 = vadd.f32 %v5806, %v5745
        %v5808 = vmax.f32 %v5807, 0.0
        %v5809 = vpack.c.bf16 %v5808, %v5808
        %v5811 = vunpack.c.l.b16 %v5769
        %v5812 = vpack.c.b16 %v5811, %v5811
        %5813 = vrot.lane.b32.xlu0 %v5812, 32
        %v5814 = vpop.permute.xlu0 %5813
        %v5816 = vunpack.c.l.b16 %v5789
        %v5817 = vpack.c.b16 %v5816, %v5816
        %5818 = vrot.lane.b32.xlu0 %v5817, 64
        %v5819 = vpop.permute.xlu0 %5818
        %v5821 = vunpack.c.l.b16 %v5809
        %v5822 = vpack.c.b16 %v5821, %v5821
        %5823 = vrot.lane.b32.xlu0 %v5822, 96
        %v5824 = vpop.permute.xlu0 %5823
        %v5827 = vsel %vm3529, %v5749, %v5814
        %v5829 = vsel %vm755, %v5827, %v5819
        %vm5830 = vcmask 785408
        %v5832 = vsel %vm5830, %v5829, %v5824
        %v5834 = vld [vmem:[%s7] sm:$0xf]
        %v5835 = vld [vmem:[%s7 + $0x4] sm:$0xf]
        %v5836 = vld [vmem:[%s7 + $0x8] sm:$0xf]
        %v5837 = vld [vmem:[%s7 + $0xc] sm:$0xf]
        %v5838 = vld [vmem:[%s7 + $0x10] sm:$0xf]
        %v5839 = vld [vmem:[%s7 + $0x14] sm:$0xf]
        %v5840 = vld [vmem:[%s7 + $0x18] sm:$0xf]
        %v5841 = vld [vmem:[%s7 + $0x1c] sm:$0xf]
        %v5842 = vld [vmem:[%s7 + $0x20] sm:$0xf]
        %v5843 = vld [vmem:[%s7 + $0x24] sm:$0xf]
        %v5844 = vld [vmem:[%s7 + $0x28] sm:$0xf]
        %v5845 = vld [vmem:[%s7 + $0x2c] sm:$0xf]
        %v5846 = vld [vmem:[%s7 + $0x30] sm:$0xf]
        %v5847 = vld [vmem:[%s7 + $0x34] sm:$0xf]
        %v5848 = vld [vmem:[%s7 + $0x38] sm:$0xf]
        %v5849 = vld [vmem:[%s7 + $0x3c] sm:$0xf]
        %v5850 = vld [vmem:[%s8] sm:$0x1]
        %v5852 = vperm.slane %v5850, 0
        %v5870 = vunpack.c.l.b16 %v5834
        %v5871 = vunpack.c.l.b16 %v5835
        %v5872 = vunpack.c.l.b16 %v5836
        %v5873 = vunpack.c.l.b16 %v5837
        %v5874 = vunpack.c.l.b16 %v5838
        %v5875 = vunpack.c.l.b16 %v5839
        %v5876 = vunpack.c.l.b16 %v5840
        %v5877 = vunpack.c.l.b16 %v5841
        %v5878 = vunpack.c.l.b16 %v5842
        %v5879 = vunpack.c.l.b16 %v5843
        %v5880 = vunpack.c.l.b16 %v5844
        %v5881 = vunpack.c.l.b16 %v5845
        %v5882 = vunpack.c.l.b16 %v5846
        %v5883 = vunpack.c.l.b16 %v5847
        %v5884 = vunpack.c.l.b16 %v5848
        %v5885 = vunpack.c.l.b16 %v5849
        %v5886 = vpack.c.b16 %v5871, %v5870
        %v5887 = vpack.c.b16 %v5873, %v5872
        %v5888 = vpack.c.b16 %v5875, %v5874
        %v5889 = vpack.c.b16 %v5877, %v5876
        %v5890 = vpack.c.b16 %v5879, %v5878
        %v5891 = vpack.c.b16 %v5881, %v5880
        %v5892 = vpack.c.b16 %v5883, %v5882
        %v5893 = vpack.c.b16 %v5885, %v5884
        %5902 = vmatpush.bf16.msra.mxu0 %v5893
        %5903 = vmatpush.bf16.msra.mxu0 %v5892
        %5904 = vmatpush.bf16.msra.mxu0 %v5891
        %5905 = vmatpush.bf16.msra.mxu0 %v5890
        %5906 = vmatpush.bf16.msra.mxu0 %v5889
        %5907 = vmatpush.bf16.msra.mxu0 %v5888
        %5908 = vmatpush.bf16.msra.mxu0 %v5887
        %5909 = vmatpush.bf16.msra.mxu0 %v5886
        %5910 = vmatmul.bf16.gmra.mxu0 %v5832
        %v5911 = vpop.f32.mrf.mxu0
        %v5912 = vadd.f32 %v5852, %v5911
        %v5913 = vpop.f32.mrf.mxu0
        %5914 = vdwg.mxu0
        %v5915 = vmax.f32 %v5912, 0.0
        %v5916 = vpack.c.bf16 %v5915, %v5915
        %v5917 = vld [vmem:[%s9] sm:$0xf]
        %v5918 = vld [vmem:[%s9 + $0x4] sm:$0xf]
        %v5919 = vld [vmem:[%s9 + $0x8] sm:$0xf]
        %v5920 = vld [vmem:[%s9 + $0xc] sm:$0xf]
        %v5921 = vld [vmem:[%s9 + $0x10] sm:$0xf]
        %v5922 = vld [vmem:[%s9 + $0x14] sm:$0xf]
        %v5923 = vld [vmem:[%s9 + $0x18] sm:$0xf]
        %v5924 = vld [vmem:[%s9 + $0x1c] sm:$0xf]
        %v5925 = vld [vmem:[%s9 + $0x20] sm:$0xf]
        %v5926 = vld [vmem:[%s9 + $0x24] sm:$0xf]
        %v5927 = vld [vmem:[%s9 + $0x28] sm:$0xf]
        %v5928 = vld [vmem:[%s9 + $0x2c] sm:$0xf]
        %v5929 = vld [vmem:[%s9 + $0x30] sm:$0xf]
        %v5930 = vld [vmem:[%s9 + $0x34] sm:$0xf]
        %v5931 = vld [vmem:[%s9 + $0x38] sm:$0xf]
        %v5932 = vld [vmem:[%s9 + $0x3c] sm:$0xf]
        %v5949 = vunpack.c.l.b16 %v5917
        %v5950 = vunpack.c.l.b16 %v5918
        %v5951 = vunpack.c.l.b16 %v5919
        %v5952 = vunpack.c.l.b16 %v5920
        %v5953 = vunpack.c.l.b16 %v5921
        %v5954 = vunpack.c.l.b16 %v5922
        %v5955 = vunpack.c.l.b16 %v5923
        %v5956 = vunpack.c.l.b16 %v5924
        %v5957 = vunpack.c.l.b16 %v5925
        %v5958 = vunpack.c.l.b16 %v5926
        %v5959 = vunpack.c.l.b16 %v5927
        %v5960 = vunpack.c.l.b16 %v5928
        %v5961 = vunpack.c.l.b16 %v5929
        %v5962 = vunpack.c.l.b16 %v5930
        %v5963 = vunpack.c.l.b16 %v5931
        %v5964 = vunpack.c.l.b16 %v5932
        %v5965 = vpack.c.b16 %v5950, %v5949
        %v5966 = vpack.c.b16 %v5952, %v5951
        %v5967 = vpack.c.b16 %v5954, %v5953
        %v5968 = vpack.c.b16 %v5956, %v5955
        %v5969 = vpack.c.b16 %v5958, %v5957
        %v5970 = vpack.c.b16 %v5960, %v5959
        %v5971 = vpack.c.b16 %v5962, %v5961
        %v5972 = vpack.c.b16 %v5964, %v5963
        %5981 = vmatpush.bf16.msra.mxu0 %v5972
        %5982 = vmatpush.bf16.msra.mxu0 %v5971
        %5983 = vmatpush.bf16.msra.mxu0 %v5970
        %5984 = vmatpush.bf16.msra.mxu0 %v5969
        %5985 = vmatpush.bf16.msra.mxu0 %v5968
        %5986 = vmatpush.bf16.msra.mxu0 %v5967
        %5987 = vmatpush.bf16.msra.mxu0 %v5966
        %5988 = vmatpush.bf16.msra.mxu0 %v5965
        %5989 = vmatmul.bf16.gmra.mxu0 %v5916
        %v5990 = vpop.f32.mrf.mxu0
        %v5991 = vadd.f32 0.0, %v5990
        %v5992 = vpop.f32.mrf.mxu0
        %5993 = vdwg.mxu0
        %v5994 = vadd.f32 %v5915, %v5991
        %v5995 = vld [vmem:[%s10] sm:$0x1]
        %v5997 = vperm.slane %v5995, 0
        %v5999 = vadd.f32 %v5994, %v5997
        %6000 = vst [vmem:[%s380] sm:$0xff] %v5999
        %s6001 = sand.u32 %s269, 1
        %s6002 = scalar_lea.sflag [#allocation8], %s6001
        %s6003 = sand.u32 %s269, 1
        %s6004 = smul.addr %s6003, 8
        %s6005 = scalar_lea.vmem [#allocation7], %s6004
        // Predicated region
        $region65: #{mf_cnn_forward.1} parent=63 // pred_check
          %p6006 = pneg %p279
        $region66: #{mf_cnn_forward.1} parent=63 // pred_check_branch
          %6008 = sbr.rel (%p6006) target = $region68
        $region67: #{mf_cnn_forward.1} parent=63 // pred_region
          %6010 = vsyncadd %s6002, 0
          %s6011 = smul.addr %s25, 8
          %s6012 = scalar_lea.hbm %s11, %s6011
          %s6014 = sshll.u32 %s6005, 4
          %s6015 = int_to_ptr.vmem [resolvable:$true] %s6014
          %s6016 = sshll.u32 %s6012, 4
          %s6017 = int_to_ptr.hbm [resolvable:$true] %s6016
          %6019 = dma.vmem_to_hbm [thread:$0]  %s6015, 128, %s6017, %s6002
        $region68: #{mf_cnn_forward.1} parent=63 // pred_fallthru
          _
      $region64: #{mf_cnn_forward.1} parent=5 // pred_fallthru
        _
      %p6020 = scmp.le.s32.totalorder 2, %s20
      // Predicated region
      $region69: #{mf_cnn_forward.1} parent=5 // pred_check
        %p6021 = pneg %p6020
      $region70: #{mf_cnn_forward.1} parent=5 // pred_check_branch
        %6023 = sbr.rel (%p6021) target = $region72
      $region71: #{mf_cnn_forward.1} parent=5 // pred_region
        %s6024 = ssub.s32 %s20, 2
        // Predicated region
        $region73: #{mf_cnn_forward.1} parent=71 // pred_check
          %p6025 = pneg %p285
        $region74: #{mf_cnn_forward.1} parent=71 // pred_check_branch
          %6027 = sbr.rel (%p6025) target = $region76
        $region75: #{mf_cnn_forward.1} parent=71 // pred_region
          %s6028 = sand.u32 %s270, 1
          %s6029 = scalar_lea.sflag [#allocation8], %s6028
          %s6030 = sand.u32 %s270, 1
          %s6031 = smul.addr %s6030, 8
          %s6032 = scalar_lea.vmem [#allocation7], %s6031
          %6034 = dma.done %s6029, 128
        $region76: #{mf_cnn_forward.1} parent=71 // pred_fallthru
          _
      $region72: #{mf_cnn_forward.1} parent=5 // pred_fallthru
        _
    $region6: #{mf_cnn_forward.1} parent=1 // loop_footer
      %s24 = sadd.s32 1, %s20
    $region7: #{mf_cnn_forward.1} parent=1 // loop_footer_branch
      %19 = sbr.rel target = $region3
    $region8: #{mf_cnn_forward.1} parent=1 // loop_exit
      _
    %6035 = vsyncpa [#allocation8], 1
    %s6036 = scalar_lea.sflag [#allocation8], 1
    %6037 = vsyncpa %s6036, 1

</llo_original>
